<compile_context>
chip_gen: v7x
topology: tpu7x:2x2x1
jax: 0.10.0
libtpu: 0.0.40
codegen_flags: <defaults>
</compile_context>

<pallas_src>
import functools

import jax
import jax.numpy as jnp
from jax.experimental import pallas as pl
from jax.experimental.pallas import tpu as pltpu

H_DIM = 400
IN_DIM = 2


def _mlp_kernel(xT_ref, w1_ref, b1_ref, w2_ref, b2_ref, w3_ref, b3_ref,
                w4_ref, b4_ref, o_ref, *, ew_dtype):
    """Fused 4-layer MLP on one batch tile; batch lives in the lane dimension."""
    f32 = jnp.float32
    xT = xT_ref[...].astype(ew_dtype)                  # (2, tm)
    w1 = w1_ref[...]                                   # (H, 2) ew_dtype

    # Layer 1, K=2: degenerate matmul -> VPU broadcast-FMAs (off the MXU).
    h = w1[:, 0:1] * xT[0:1, :] + w1[:, 1:2] * xT[1:2, :] + b1_ref[...]
    h = jnp.maximum(h, 0.0).astype(w2_ref.dtype)       # (H, tm)

    # Layers 2 & 3: (400,400) @ (400,tm) bf16 MXU matmuls, f32 accumulation.
    h = jnp.dot(w2_ref[...], h, preferred_element_type=f32)
    h = jnp.maximum(h.astype(ew_dtype) + b2_ref[...], 0.0).astype(w3_ref.dtype)

    h = jnp.dot(w3_ref[...], h, preferred_element_type=f32)
    h = jnp.maximum(h.astype(ew_dtype) + b3_ref[...], 0.0)

    # Layer 4, N=1: VPU multiply + sublane (XLU) reduction, kept in f32 for
    # accuracy (and because v5e has no bf16 VALU/EUP).  Result is already
    # lane-dense (1, tm) -> unmasked stores.
    logit = jnp.sum(h.astype(f32) * w4_ref[...], axis=0, keepdims=True)
    o_ref[...] = jax.nn.sigmoid(logit + b4_ref[...]).astype(o_ref.dtype)


def _default_elementwise_dtype():
    """bf16 VPU math on chips with a bf16 VALU (v6e/v7x); f32 on v5e & older."""
    try:
        kind = jax.devices()[0].device_kind.lower()
    except Exception:
        return jnp.float32
    if any(v in kind for v in ("v2", "v3", "v4", "v5")):
        return jnp.float32
    return jnp.bfloat16


def _pick_tm(batch, max_tm=2048):
    """Batch-lane tile: multiple of 128, <= max_tm, and >= 2 grid steps when
    the padded batch allows so v7x's two TensorCores both get a share."""
    padded = -(-batch // 128) * 128
    if padded > max_tm:
        return max_tm
    if padded >= 256:
        return -(-(padded // 2) // 128) * 128          # 2 lane-aligned tiles
    return 128


def discriminator_forward(x, params, *, tm=None, weight_dtype=jnp.bfloat16,
                          elementwise_dtype=None):
    """x: (B, 2) float32 -> (B,) float32, matching Discriminator.forward.

    tm:                batch tile (lane) size, multiple of 128; None -> auto.
    weight_dtype:      dtype of the MXU operands for the two 400x400 layers.
                       bf16 (default) uses the bf16-native MXU; pass
                       jnp.float32 for an exact-precision path.
    elementwise_dtype: dtype of layer-1 / bias-add / ReLU VPU math.
                       None -> bf16 on v6e/v7x, f32 on v5e and older.
    """
    B = x.shape[0]
    if tm is None:
        tm = _pick_tm(B)
    assert tm % 128 == 0, "tm must be a multiple of 128 (lane width)"

    if elementwise_dtype is None:
        if jnp.dtype(weight_dtype) == jnp.dtype(jnp.float32):
            elementwise_dtype = jnp.float32            # exact path: all-f32
        else:
            elementwise_dtype = _default_elementwise_dtype()

    w1, b1, w2, b2, w3, b3, w4, b4 = params
    w1, b1, b2, b3 = (t.astype(elementwise_dtype) for t in (w1, b1, b2, b3))
    w2, w3 = (t.astype(weight_dtype) for t in (w2, w3))
    w4, b4 = (t.astype(jnp.float32) for t in (w4, b4))

    num_tiles = pl.cdiv(B, tm)
    b_pad = num_tiles * tm
    # Pad the batch (extra columns sliced off below) and put batch in lanes.
    xT = jnp.pad(x, ((0, b_pad - B), (0, 0))).T        # (2, b_pad)

    inv = lambda shape: pl.BlockSpec(shape, lambda i: (0, 0))  # grid-invariant

    out = pl.pallas_call(
        functools.partial(_mlp_kernel, ew_dtype=elementwise_dtype),
        out_shape=jax.ShapeDtypeStruct((1, b_pad), jnp.float32),
        grid=(num_tiles,),
        in_specs=[
            pl.BlockSpec((IN_DIM, tm), lambda i: (0, i)),      # x tile (lanes=batch)
            inv((H_DIM, IN_DIM)), inv((H_DIM, 1)),             # W1, b1
            inv((H_DIM, H_DIM)),  inv((H_DIM, 1)),             # W2, b2
            inv((H_DIM, H_DIM)),  inv((H_DIM, 1)),             # W3, b3
            inv((H_DIM, 1)),      inv((1, 1)),                 # W4 (column), b4
        ],
        out_specs=pl.BlockSpec((1, tm), lambda i: (0, i)),     # lane-dense out
        compiler_params=pltpu.CompilerParams(
            dimension_semantics=("parallel",),   # batch tiles shard across TCs (v7x)
            vmem_limit_bytes=32 * 1024 * 1024,
        ),
    )(xT, w1, b1, w2, b2, w3, b3, w4, b4)

    return out.reshape(-1)[:B]                          # == output.view(-1)


def init_params(key, dtype=jnp.float32):
    """PyTorch-style uniform(-1/sqrt(fan_in), +1/sqrt(fan_in)) init.

    Layout: W1..W3 are (out, in) (PyTorch native); biases are (out, 1) columns;
    W4 is stored as an (H, 1) column (PyTorch's (1, H) transposed) so the
    kernel's feature-major math  h_new = W @ h + b,  logit = sum_k W4[k] h[k]
    matches nn.Linear exactly.
    """
    layer_defs = [
        ((H_DIM, IN_DIM), (H_DIM, 1), IN_DIM),   # Linear(2, 400)
        ((H_DIM, H_DIM),  (H_DIM, 1), H_DIM),    # Linear(400, 400)
        ((H_DIM, H_DIM),  (H_DIM, 1), H_DIM),    # Linear(400, 400)
        ((H_DIM, 1),      (1, 1),     H_DIM),    # Linear(400, 1) (W transposed)
    ]
    params = []
    for w_shape, b_shape, fan_in in layer_defs:
        key, kw, kb = jax.random.split(key, 3)
        bound = float(fan_in) ** -0.5
        params.append(jax.random.uniform(kw, w_shape, dtype, -bound, bound))
        params.append(jax.random.uniform(kb, b_shape, dtype, -bound, bound))
    return tuple(params)


def reference_forward(x, params):
    """Pure-JAX f32 reference with the exact PyTorch module semantics."""
    w1, b1, w2, b2, w3, b3, w4, b4 = params
    h = jnp.maximum(x @ w1.T + b1.reshape(1, -1), 0.0)
    h = jnp.maximum(h @ w2.T + b2.reshape(1, -1), 0.0)
    h = jnp.maximum(h @ w3.T + b3.reshape(1, -1), 0.0)
    return jax.nn.sigmoid(h @ w4 + b4.reshape(1, -1)).reshape(-1)


if __name__ == "__main__":
    key = jax.random.PRNGKey(0)
    key, kx = jax.random.split(key)
    params = init_params(key)

    # B=1000 exercises padding + a 2-tile grid (keeps both v7x TCs busy);
    # B=7 exercises the tiny-batch / single-tile path.
    for B in (1000, 7):
        x = jax.random.normal(jax.random.fold_in(kx, B), (B, IN_DIM), jnp.float32)
        ref = reference_forward(x, params)

        # Exact-precision path (all-f32): tight tolerance.
        out_f32 = jax.block_until_ready(
            discriminator_forward(x, params, weight_dtype=jnp.float32))
        assert out_f32.shape == (B,), out_f32.shape
        assert jnp.allclose(out_f32, ref, atol=1e-5, rtol=1e-4), f"f32 mismatch, B={B}"

        # Default fast path (bf16 MXU operands; bf16 VPU math on v6e/v7x).
        # Sigmoid outputs live in (0,1), so an absolute tolerance is the right check.
        out_bf16 = jax.block_until_ready(discriminator_forward(x, params))
        assert out_bf16.shape == (B,), out_bf16.shape
        assert jnp.allclose(out_bf16, ref, atol=2e-2), f"bf16 mismatch, B={B}"

    print("KERNEL_OK")
</pallas_src>

<mosaic_0001>
module attributes {stable_mosaic.version = 11 : i64} {
  func.func @_mlp_kernel(%arg0: i32, %arg1: memref<2x512xf32, #tpu.memory_space<vmem>>, %arg2: memref<400x2xf32, #tpu.memory_space<vmem>>, %arg3: memref<400x1xf32, #tpu.memory_space<vmem>>, %arg4: memref<400x400xf32, #tpu.memory_space<vmem>>, %arg5: memref<400x1xf32, #tpu.memory_space<vmem>>, %arg6: memref<400x400xf32, #tpu.memory_space<vmem>>, %arg7: memref<400x1xf32, #tpu.memory_space<vmem>>, %arg8: memref<400x1xf32, #tpu.memory_space<vmem>>, %arg9: memref<1x1xf32, #tpu.memory_space<vmem>>, %arg10: memref<1x512xf32, #tpu.memory_space<vmem>>) attributes {dimension_semantics = [#tpu.dimension_semantics<parallel>], iteration_bounds = array<i64: 2>, scalar_prefetch = 0 : i64, scratch_operands = 0 : i64, tpu.core_type = #tpu.core_type<tc>, window_params = [{transform_indices = @transform_0, window_bounds = array<i64: 2, 512>}, {pipeline_mode = #tpu.pipeline_mode<synchronous>, transform_indices = @transform_1, window_bounds = array<i64: 400, 2>}, {pipeline_mode = #tpu.pipeline_mode<synchronous>, transform_indices = @transform_2, window_bounds = array<i64: 400, 1>}, {pipeline_mode = #tpu.pipeline_mode<synchronous>, transform_indices = @transform_3, window_bounds = array<i64: 400, 400>}, {pipeline_mode = #tpu.pipeline_mode<synchronous>, transform_indices = @transform_4, window_bounds = array<i64: 400, 1>}, {pipeline_mode = #tpu.pipeline_mode<synchronous>, transform_indices = @transform_5, window_bounds = array<i64: 400, 400>}, {pipeline_mode = #tpu.pipeline_mode<synchronous>, transform_indices = @transform_6, window_bounds = array<i64: 400, 1>}, {pipeline_mode = #tpu.pipeline_mode<synchronous>, transform_indices = @transform_7, window_bounds = array<i64: 400, 1>}, {pipeline_mode = #tpu.pipeline_mode<synchronous>, transform_indices = @transform_8, window_bounds = array<i64: 1, 1>}, {transform_indices = @transform_9, window_bounds = array<i64: 1, 512>}]} {
    %c0 = arith.constant 0 : index
    %c0_0 = arith.constant 0 : index
    %0 = vector.load %arg1[%c0, %c0_0] : memref<2x512xf32, #tpu.memory_space<vmem>>, vector<2x512xf32>
    %c0_1 = arith.constant 0 : index
    %c0_2 = arith.constant 0 : index
    %1 = vector.load %arg2[%c0_1, %c0_2] : memref<400x2xf32, #tpu.memory_space<vmem>>, vector<400x2xf32>
    %2 = vector.extract_strided_slice %1 {offsets = [0, 0], sizes = [400, 1], strides = [1, 1]} : vector<400x2xf32> to vector<400x1xf32>
    %3 = vector.extract_strided_slice %0 {offsets = [0, 0], sizes = [1, 512], strides = [1, 1]} : vector<2x512xf32> to vector<1x512xf32>
    %4 = vector.broadcast %2 : vector<400x1xf32> to vector<400x512xf32>
    %5 = vector.broadcast %3 : vector<1x512xf32> to vector<400x512xf32>
    %6 = arith.mulf %4, %5 : vector<400x512xf32>
    %7 = vector.extract_strided_slice %1 {offsets = [0, 1], sizes = [400, 1], strides = [1, 1]} : vector<400x2xf32> to vector<400x1xf32>
    %8 = vector.extract_strided_slice %0 {offsets = [1, 0], sizes = [1, 512], strides = [1, 1]} : vector<2x512xf32> to vector<1x512xf32>
    %9 = vector.broadcast %7 : vector<400x1xf32> to vector<400x512xf32>
    %10 = vector.broadcast %8 : vector<1x512xf32> to vector<400x512xf32>
    %11 = arith.mulf %9, %10 : vector<400x512xf32>
    %12 = arith.addf %6, %11 : vector<400x512xf32>
    %c0_3 = arith.constant 0 : index
    %c0_4 = arith.constant 0 : index
    %13 = vector.load %arg3[%c0_3, %c0_4] : memref<400x1xf32, #tpu.memory_space<vmem>>, vector<400x1xf32>
    %14 = vector.broadcast %13 : vector<400x1xf32> to vector<400x512xf32>
    %15 = arith.addf %12, %14 : vector<400x512xf32>
    %cst = arith.constant 0.000000e+00 : f32
    %16 = vector.broadcast %cst : f32 to vector<400x512xf32>
    %17 = arith.maximumf %15, %16 : vector<400x512xf32>
    %c0_5 = arith.constant 0 : index
    %c0_6 = arith.constant 0 : index
    %18 = vector.load %arg4[%c0_5, %c0_6] : memref<400x400xf32, #tpu.memory_space<vmem>>, vector<400x400xf32>
    %cst_7 = arith.constant dense<0.000000e+00> : vector<400x512xf32>
    %19 = tpu.matmul %18, %17, %cst_7 {dimension_numbers = #tpu.dot_dimension_numbers<[1], [0], [0], [1], [0, 0, 1, 1], [], []>} : vector<400x400xf32>, vector<400x512xf32>, vector<400x512xf32> -> vector<400x512xf32>
    %c0_8 = arith.constant 0 : index
    %c0_9 = arith.constant 0 : index
    %20 = vector.load %arg5[%c0_8, %c0_9] : memref<400x1xf32, #tpu.memory_space<vmem>>, vector<400x1xf32>
    %21 = vector.broadcast %20 : vector<400x1xf32> to vector<400x512xf32>
    %22 = arith.addf %19, %21 : vector<400x512xf32>
    %cst_10 = arith.constant 0.000000e+00 : f32
    %23 = vector.broadcast %cst_10 : f32 to vector<400x512xf32>
    %24 = arith.maximumf %22, %23 : vector<400x512xf32>
    %c0_11 = arith.constant 0 : index
    %c0_12 = arith.constant 0 : index
    %25 = vector.load %arg6[%c0_11, %c0_12] : memref<400x400xf32, #tpu.memory_space<vmem>>, vector<400x400xf32>
    %cst_13 = arith.constant dense<0.000000e+00> : vector<400x512xf32>
    %26 = tpu.matmul %25, %24, %cst_13 {dimension_numbers = #tpu.dot_dimension_numbers<[1], [0], [0], [1], [0, 0, 1, 1], [], []>} : vector<400x400xf32>, vector<400x512xf32>, vector<400x512xf32> -> vector<400x512xf32>
    %c0_14 = arith.constant 0 : index
    %c0_15 = arith.constant 0 : index
    %27 = vector.load %arg7[%c0_14, %c0_15] : memref<400x1xf32, #tpu.memory_space<vmem>>, vector<400x1xf32>
    %28 = vector.broadcast %27 : vector<400x1xf32> to vector<400x512xf32>
    %29 = arith.addf %26, %28 : vector<400x512xf32>
    %cst_16 = arith.constant 0.000000e+00 : f32
    %30 = vector.broadcast %cst_16 : f32 to vector<400x512xf32>
    %31 = arith.maximumf %29, %30 : vector<400x512xf32>
    %c0_17 = arith.constant 0 : index
    %c0_18 = arith.constant 0 : index
    %32 = vector.load %arg8[%c0_17, %c0_18] : memref<400x1xf32, #tpu.memory_space<vmem>>, vector<400x1xf32>
    %33 = vector.broadcast %32 : vector<400x1xf32> to vector<400x512xf32>
    %34 = arith.mulf %31, %33 : vector<400x512xf32>
    %cst_19 = arith.constant dense<0.000000e+00> : vector<512xf32>
    %35 = vector.multi_reduction <add>, %34, %cst_19 [0] : vector<400x512xf32> to vector<512xf32>
    %36 = vector.shape_cast %35 : vector<512xf32> to vector<1x512xf32>
    %c0_20 = arith.constant 0 : index
    %c0_21 = arith.constant 0 : index
    %37 = vector.load %arg9[%c0_20, %c0_21] : memref<1x1xf32, #tpu.memory_space<vmem>>, vector<1x1xf32>
    %38 = vector.broadcast %37 : vector<1x1xf32> to vector<1x512xf32>
    %39 = arith.addf %36, %38 : vector<1x512xf32>
    %40 = arith.negf %39 : vector<1x512xf32>
    %41 = math.exp %40 : vector<1x512xf32>
    %cst_22 = arith.constant 1.000000e+00 : f32
    %42 = vector.broadcast %cst_22 : f32 to vector<1x512xf32>
    %43 = arith.addf %42, %41 : vector<1x512xf32>
    %44 = arith.divf %42, %43 : vector<1x512xf32>
    %c0_23 = arith.constant 0 : index
    %c0_24 = arith.constant 0 : index
    %45 = vector.load %arg10[%c0_23, %c0_24] : memref<1x512xf32, #tpu.memory_space<vmem>>, vector<1x512xf32>
    tpu.vector_store %arg10[%c0_23, %c0_24], %44 {strides = array<i32>} : memref<1x512xf32, #tpu.memory_space<vmem>>, vector<1x512xf32>,
    return
  }
  func.func @transform_0(%arg0: i32) -> (i32, i32) {
    %c0_i32 = arith.constant 0 : i32
    %c0_i32_0 = arith.constant 0 : i32
    return %c0_i32, %arg0 : i32, i32
  }
  func.func @transform_1(%arg0: i32) -> (i32, i32) {
    %c0_i32 = arith.constant 0 : i32
    %c0_i32_0 = arith.constant 0 : i32
    %c0_i32_1 = arith.constant 0 : i32
    return %c0_i32, %c0_i32_0 : i32, i32
  }
  func.func @transform_2(%arg0: i32) -> (i32, i32) {
    %c0_i32 = arith.constant 0 : i32
    %c0_i32_0 = arith.constant 0 : i32
    %c0_i32_1 = arith.constant 0 : i32
    return %c0_i32, %c0_i32_0 : i32, i32
  }
  func.func @transform_3(%arg0: i32) -> (i32, i32) {
    %c0_i32 = arith.constant 0 : i32
    %c0_i32_0 = arith.constant 0 : i32
    %c0_i32_1 = arith.constant 0 : i32
    return %c0_i32, %c0_i32_0 : i32, i32
  }
  func.func @transform_4(%arg0: i32) -> (i32, i32) {
    %c0_i32 = arith.constant 0 : i32
    %c0_i32_0 = arith.constant 0 : i32
    %c0_i32_1 = arith.constant 0 : i32
    return %c0_i32, %c0_i32_0 : i32, i32
  }
  func.func @transform_5(%arg0: i32) -> (i32, i32) {
    %c0_i32 = arith.constant 0 : i32
    %c0_i32_0 = arith.constant 0 : i32
    %c0_i32_1 = arith.constant 0 : i32
    return %c0_i32, %c0_i32_0 : i32, i32
  }
  func.func @transform_6(%arg0: i32) -> (i32, i32) {
    %c0_i32 = arith.constant 0 : i32
    %c0_i32_0 = arith.constant 0 : i32
    %c0_i32_1 = arith.constant 0 : i32
    return %c0_i32, %c0_i32_0 : i32, i32
  }
  func.func @transform_7(%arg0: i32) -> (i32, i32) {
    %c0_i32 = arith.constant 0 : i32
    %c0_i32_0 = arith.constant 0 : i32
    %c0_i32_1 = arith.constant 0 : i32
    return %c0_i32, %c0_i32_0 : i32, i32
  }
  func.func @transform_8(%arg0: i32) -> (i32, i32) {
    %c0_i32 = arith.constant 0 : i32
    %c0_i32_0 = arith.constant 0 : i32
    %c0_i32_1 = arith.constant 0 : i32
    return %c0_i32, %c0_i32_0 : i32, i32
  }
  func.func @transform_9(%arg0: i32) -> (i32, i32) {
    %c0_i32 = arith.constant 0 : i32
    %c0_i32_0 = arith.constant 0 : i32
    return %c0_i32, %arg0 : i32, i32
  }
}

</mosaic_0001>

<llo_original>
// kernel: tpu_custom_call.1
$region0: #{tpu_custom_call.1}
  #allocation0 [shape = 'u32[]', space=smem, size = 0x4, offset = 0x4, fixed_abs, tag = 'smem constant byte address 0x4 - core index']
  #allocation1 [shape = 'u32[144,128]{1,0:T(1,128)}', space=vmem, size = 0x12000, scoped, tag = 'internal scratch']
  #allocation2 [shape = 'f32[1,1]{1,0:T(1,128)S(1)}', space=vmem, size = 0x200, scoped, tag = 'scoped memory for tpu_custom_call.1']
  %s0 = inlined_call_operand.vmem [shape: f32[2,1024], index: 0, kind: input, shape index: {}]
  %s1 = inlined_call_operand.vmem [shape: f32[400,2], index: 1, kind: input, shape index: {}]
  %s2 = inlined_call_operand.vmem [shape: f32[400,1], index: 2, kind: input, shape index: {}]
  %s3 = inlined_call_operand.vmem [shape: f32[400,400], index: 3, kind: input, shape index: {}]
  %s4 = inlined_call_operand.vmem [shape: f32[400,1], index: 4, kind: input, shape index: {}]
  %s5 = inlined_call_operand.hbm [shape: f32[400,400], index: 5, kind: input, shape index: {}]
  %s6 = inlined_call_operand.vmem [shape: f32[400,1], index: 6, kind: input, shape index: {}]
  %s7 = inlined_call_operand.vmem [shape: f32[400,1], index: 7, kind: input, shape index: {}]
  %s8 = inlined_call_operand.<no memory space> [shape: f32[1,1], index: 8, kind: input, shape index: {}]
  %s9 = inlined_call_operand.hbm [shape: f32[1,1024], index: 9, kind: output, shape index: {}]
  %s10 = sld [smem:[#allocation0]]
  $region73: #{tpu_custom_call.1} parent=0
    _
  %s12 = ssub.s32 1, %s10
  %s13 = scalar_select 0, %s12, %s10
  %v14 = vstv %s8
  %15 = vst [vmem:[#allocation2] sm:$0x1] %v14
  $region1: #{tpu_custom_call.1} parent=0
    #allocation3 [shape = 'u8[819200]{0}', space=vmem, size = 0xc8000, scoped, tag = 'input window, operand 5, single buffered']
    #allocation4 [shape = 's32[2]{0}', space=sflag, size = 0x8, scoped, tag = 'scoped memory for tpu_custom_call.1']
    #allocation5 [shape = 's32[2]{0}', space=sflag, size = 0x8, scoped, tag = 'scoped memory for tpu_custom_call.1']
    #allocation6 [shape = 'u8[4096]{0}', space=vmem, size = 0x1000, scoped, tag = 'output window, operand 0']
    %16 = vsyncpa [#allocation4], 0
    %17 = vsyncpa [#allocation5], 0
    %s18 = scalar_lea.sflag [#allocation5], 1
    %19 = vsyncpa %s18, 0
    loop: start=0, step=1, limit=4
    $region2: #{tpu_custom_call.1} parent=1 // loop_pre_header
      _
    $region3: #{tpu_custom_call.1} parent=1 // loop_header
      %s21 = sphi 0, %s25
      %p22 = scmp.ge.s32.totalorder %s21, 4
      %s31 = sphi 0, %s33
      %s34 = sphi 0, %s31
      %s35 = sphi 0, %s34
      %s51 = sphi 0, %s35
      %s55 = sphi 0, %s55
      %s57 = sphi 0, %s55
      %s58 = sphi 0, %s57
      %s72 = sphi 0, %s58
      %s76 = sphi 0, %s76
      %s78 = sphi 0, %s76
      %s79 = sphi 0, %s78
      %s93 = sphi 0, %s79
      %s97 = sphi 0, %s97
      %s99 = sphi 0, %s97
      %s100 = sphi 0, %s99
      %s114 = sphi 0, %s100
      %s118 = sphi 0, %s118
      %s120 = sphi 0, %s118
      %s121 = sphi 0, %s120
      %s135 = sphi 0, %s121
      %s139 = sphi 0, %s139
      %s141 = sphi 0, %s139
      %s142 = sphi 0, %s141
      %s156 = sphi 0, %s142
      %s160 = sphi 0, %s160
      %s162 = sphi 0, %s160
      %s163 = sphi 0, %s162
      %s177 = sphi 0, %s163
      %s181 = sphi 0, %s181
      %s183 = sphi 0, %s181
      %s184 = sphi 0, %s183
      %s198 = sphi 0, %s184
      %s202 = sphi 0, %s202
      %s204 = sphi 0, %s202
      %s205 = sphi 0, %s204
      %s219 = sphi 0, %s205
      %s225 = sphi 0, %s227
      %s228 = sphi 0, %s225
      %s229 = sphi 0, %s228
      %s245 = sphi 0, %s229
    $region4: #{tpu_custom_call.1} parent=1 // loop_header_branch
      %24 = sbr.rel (%p22) target = $region8
    $region5: #{tpu_custom_call.1} parent=1 // loop_body
      %s26 = ssub.s32 %s21, 1
      %s27 = ssub.s32 %s21, 2
      %s28 = sadd.s32 %s21, 1
      %s29 = ssub.s32 %s21, %s28
      %p30 = scmp.eq.s32.totalorder %s29, 0
      %s32 = sadd.s32 %s31, 1
      %s33 = scalar_select %p30, %s31, %s32
      %p36 = pneg %p30
      %p37 = scmp.eq.s32.totalorder %s21, 1
      %p38 = por %p36, %p37
      %p39 = scmp.ne.s32.totalorder %s31, %s34
      %p40 = scmp.eq.s32.totalorder %s21, 0
      %p41 = por %p39, %p40
      %p42 = scmp.ne.s32.totalorder %s31, %s34
      %p43 = scmp.eq.s32.totalorder %s26, 1
      %p44 = por %p42, %p43
      %p45 = scmp.ne.s32.totalorder %s34, %s35
      %p46 = scmp.eq.s32.totalorder %s26, 0
      %p47 = por %p45, %p46
      %p48 = scmp.ne.s32.totalorder %s34, %s35
      %p49 = scmp.eq.s32.totalorder %s27, 1
      %p50 = por %p48, %p49
      %p52 = scmp.ne.s32.totalorder %s35, %s51
      %p53 = scmp.eq.s32.totalorder %s27, 0
      %p54 = por %p52, %p53
      %s56 = sadd.s32 %s55, 1
      %p59 = scmp.eq.s32.totalorder %s21, 1
      %p60 = scmp.ne.s32.totalorder %s55, %s57
      %p61 = scmp.eq.s32.totalorder %s21, 0
      %p62 = por %p60, %p61
      %p63 = scmp.ne.s32.totalorder %s55, %s57
      %p64 = scmp.eq.s32.totalorder %s26, 1
      %p65 = por %p63, %p64
      %p66 = scmp.ne.s32.totalorder %s57, %s58
      %p67 = scmp.eq.s32.totalorder %s26, 0
      %p68 = por %p66, %p67
      %p69 = scmp.ne.s32.totalorder %s57, %s58
      %p70 = scmp.eq.s32.totalorder %s27, 1
      %p71 = por %p69, %p70
      %p73 = scmp.ne.s32.totalorder %s58, %s72
      %p74 = scmp.eq.s32.totalorder %s27, 0
      %p75 = por %p73, %p74
      %s77 = sadd.s32 %s76, 1
      %p80 = scmp.eq.s32.totalorder %s21, 1
      %p81 = scmp.ne.s32.totalorder %s76, %s78
      %p82 = scmp.eq.s32.totalorder %s21, 0
      %p83 = por %p81, %p82
      %p84 = scmp.ne.s32.totalorder %s76, %s78
      %p85 = scmp.eq.s32.totalorder %s26, 1
      %p86 = por %p84, %p85
      %p87 = scmp.ne.s32.totalorder %s78, %s79
      %p88 = scmp.eq.s32.totalorder %s26, 0
      %p89 = por %p87, %p88
      %p90 = scmp.ne.s32.totalorder %s78, %s79
      %p91 = scmp.eq.s32.totalorder %s27, 1
      %p92 = por %p90, %p91
      %p94 = scmp.ne.s32.totalorder %s79, %s93
      %p95 = scmp.eq.s32.totalorder %s27, 0
      %p96 = por %p94, %p95
      %s98 = sadd.s32 %s97, 1
      %p101 = scmp.eq.s32.totalorder %s21, 1
      %p102 = scmp.ne.s32.totalorder %s97, %s99
      %p103 = scmp.eq.s32.totalorder %s21, 0
      %p104 = por %p102, %p103
      %p105 = scmp.ne.s32.totalorder %s97, %s99
      %p106 = scmp.eq.s32.totalorder %s26, 1
      %p107 = por %p105, %p106
      %p108 = scmp.ne.s32.totalorder %s99, %s100
      %p109 = scmp.eq.s32.totalorder %s26, 0
      %p110 = por %p108, %p109
      %p111 = scmp.ne.s32.totalorder %s99, %s100
      %p112 = scmp.eq.s32.totalorder %s27, 1
      %p113 = por %p111, %p112
      %p115 = scmp.ne.s32.totalorder %s100, %s114
      %p116 = scmp.eq.s32.totalorder %s27, 0
      %p117 = por %p115, %p116
      %s119 = sadd.s32 %s118, 1
      %p122 = scmp.eq.s32.totalorder %s21, 1
      %p123 = scmp.ne.s32.totalorder %s118, %s120
      %p124 = scmp.eq.s32.totalorder %s21, 0
      %p125 = por %p123, %p124
      %p126 = scmp.ne.s32.totalorder %s118, %s120
      %p127 = scmp.eq.s32.totalorder %s26, 1
      %p128 = por %p126, %p127
      %p129 = scmp.ne.s32.totalorder %s120, %s121
      %p130 = scmp.eq.s32.totalorder %s26, 0
      %p131 = por %p129, %p130
      %p132 = scmp.ne.s32.totalorder %s120, %s121
      %p133 = scmp.eq.s32.totalorder %s27, 1
      %p134 = por %p132, %p133
      %p136 = scmp.ne.s32.totalorder %s121, %s135
      %p137 = scmp.eq.s32.totalorder %s27, 0
      %p138 = por %p136, %p137
      %s140 = sadd.s32 %s139, 1
      %p143 = scmp.eq.s32.totalorder %s21, 1
      %p144 = scmp.ne.s32.totalorder %s139, %s141
      %p145 = scmp.eq.s32.totalorder %s21, 0
      %p146 = por %p144, %p145
      %p147 = scmp.ne.s32.totalorder %s139, %s141
      %p148 = scmp.eq.s32.totalorder %s26, 1
      %p149 = por %p147, %p148
      %p150 = scmp.ne.s32.totalorder %s141, %s142
      %p151 = scmp.eq.s32.totalorder %s26, 0
      %p152 = por %p150, %p151
      %p153 = scmp.ne.s32.totalorder %s141, %s142
      %p154 = scmp.eq.s32.totalorder %s27, 1
      %p155 = por %p153, %p154
      %p157 = scmp.ne.s32.totalorder %s142, %s156
      %p158 = scmp.eq.s32.totalorder %s27, 0
      %p159 = por %p157, %p158
      %s161 = sadd.s32 %s160, 1
      %p164 = scmp.eq.s32.totalorder %s21, 1
      %p165 = scmp.ne.s32.totalorder %s160, %s162
      %p166 = scmp.eq.s32.totalorder %s21, 0
      %p167 = por %p165, %p166
      %p168 = scmp.ne.s32.totalorder %s160, %s162
      %p169 = scmp.eq.s32.totalorder %s26, 1
      %p170 = por %p168, %p169
      %p171 = scmp.ne.s32.totalorder %s162, %s163
      %p172 = scmp.eq.s32.totalorder %s26, 0
      %p173 = por %p171, %p172
      %p174 = scmp.ne.s32.totalorder %s162, %s163
      %p175 = scmp.eq.s32.totalorder %s27, 1
      %p176 = por %p174, %p175
      %p178 = scmp.ne.s32.totalorder %s163, %s177
      %p179 = scmp.eq.s32.totalorder %s27, 0
      %p180 = por %p178, %p179
      %s182 = sadd.s32 %s181, 1
      %p185 = scmp.eq.s32.totalorder %s21, 1
      %p186 = scmp.ne.s32.totalorder %s181, %s183
      %p187 = scmp.eq.s32.totalorder %s21, 0
      %p188 = por %p186, %p187
      %p189 = scmp.ne.s32.totalorder %s181, %s183
      %p190 = scmp.eq.s32.totalorder %s26, 1
      %p191 = por %p189, %p190
      %p192 = scmp.ne.s32.totalorder %s183, %s184
      %p193 = scmp.eq.s32.totalorder %s26, 0
      %p194 = por %p192, %p193
      %p195 = scmp.ne.s32.totalorder %s183, %s184
      %p196 = scmp.eq.s32.totalorder %s27, 1
      %p197 = por %p195, %p196
      %p199 = scmp.ne.s32.totalorder %s184, %s198
      %p200 = scmp.eq.s32.totalorder %s27, 0
      %p201 = por %p199, %p200
      %s203 = sadd.s32 %s202, 1
      %p206 = scmp.eq.s32.totalorder %s21, 1
      %p207 = scmp.ne.s32.totalorder %s202, %s204
      %p208 = scmp.eq.s32.totalorder %s21, 0
      %p209 = por %p207, %p208
      %p210 = scmp.ne.s32.totalorder %s202, %s204
      %p211 = scmp.eq.s32.totalorder %s26, 1
      %p212 = por %p210, %p211
      %p213 = scmp.ne.s32.totalorder %s204, %s205
      %p214 = scmp.eq.s32.totalorder %s26, 0
      %p215 = por %p213, %p214
      %p216 = scmp.ne.s32.totalorder %s204, %s205
      %p217 = scmp.eq.s32.totalorder %s27, 1
      %p218 = por %p216, %p217
      %p220 = scmp.ne.s32.totalorder %s205, %s219
      %p221 = scmp.eq.s32.totalorder %s27, 0
      %p222 = por %p220, %p221
      %s223 = ssub.s32 %s21, %s28
      %p224 = scmp.eq.s32.totalorder %s223, 0
      %s226 = sadd.s32 %s225, 1
      %s227 = scalar_select %p224, %s225, %s226
      %p230 = pneg %p224
      %p231 = scmp.eq.s32.totalorder %s21, 1
      %p232 = por %p230, %p231
      %p233 = scmp.ne.s32.totalorder %s225, %s228
      %p234 = scmp.eq.s32.totalorder %s21, 0
      %p235 = por %p233, %p234
      %p236 = scmp.ne.s32.totalorder %s225, %s228
      %p237 = scmp.eq.s32.totalorder %s26, 1
      %p238 = por %p236, %p237
      %p239 = scmp.ne.s32.totalorder %s228, %s229
      %p240 = scmp.eq.s32.totalorder %s26, 0
      %p241 = por %p239, %p240
      %p242 = scmp.ne.s32.totalorder %s228, %s229
      %p243 = scmp.eq.s32.totalorder %s27, 1
      %p244 = por %p242, %p243
      %p246 = scmp.ne.s32.totalorder %s229, %s245
      %p247 = scmp.eq.s32.totalorder %s27, 0
      %p248 = por %p246, %p247
      %p249 = scmp.le.s32.totalorder 1, %s21
      %p250 = scmp.lt.s32.totalorder %s21, 3
      %p251 = pnand %p249, %p250
      %p252 = pneg %p251
      // Predicated region
      $region9: #{tpu_custom_call.1} parent=5 // pred_check
        _
      $region10: #{tpu_custom_call.1} parent=5 // pred_check_branch
        %254 = sbr.rel (%p251) target = $region12
      $region11: #{tpu_custom_call.1} parent=5 // pred_region
        %s255 = ssub.s32 %s21, 1
        // Predicated region
        $region13: #{tpu_custom_call.1} parent=11 // pred_check
          %p256 = pneg %p68
        $region14: #{tpu_custom_call.1} parent=11 // pred_check_branch
          %258 = sbr.rel (%p256) target = $region16
        $region15: #{tpu_custom_call.1} parent=11 // pred_region
          _
        $region16: #{tpu_custom_call.1} parent=11 // pred_fallthru
          _
        // Predicated region
        $region17: #{tpu_custom_call.1} parent=11 // pred_check
          %p259 = pneg %p89
        $region18: #{tpu_custom_call.1} parent=11 // pred_check_branch
          %261 = sbr.rel (%p259) target = $region20
        $region19: #{tpu_custom_call.1} parent=11 // pred_region
          _
        $region20: #{tpu_custom_call.1} parent=11 // pred_fallthru
          _
        // Predicated region
        $region21: #{tpu_custom_call.1} parent=11 // pred_check
          %p262 = pneg %p110
        $region22: #{tpu_custom_call.1} parent=11 // pred_check_branch
          %264 = sbr.rel (%p262) target = $region24
        $region23: #{tpu_custom_call.1} parent=11 // pred_region
          _
        $region24: #{tpu_custom_call.1} parent=11 // pred_fallthru
          _
        // Predicated region
        $region25: #{tpu_custom_call.1} parent=11 // pred_check
          %p265 = pneg %p131
        $region26: #{tpu_custom_call.1} parent=11 // pred_check_branch
          %267 = sbr.rel (%p265) target = $region28
        $region27: #{tpu_custom_call.1} parent=11 // pred_region
          _
        $region28: #{tpu_custom_call.1} parent=11 // pred_fallthru
          _
        // Predicated region
        $region29: #{tpu_custom_call.1} parent=11 // pred_check
          %p268 = pneg %p152
        $region30: #{tpu_custom_call.1} parent=11 // pred_check_branch
          %270 = sbr.rel (%p268) target = $region32
        $region31: #{tpu_custom_call.1} parent=11 // pred_region
          %s272 = ssub.s32 25600, 25600
          %273 = vsyncadd [#allocation4], %s272
          %s274 = sshll.u32 [#allocation3], 4
          %s275 = int_to_ptr.vmem [resolvable:$true] %s274
          %280 = dma.hbm_to_vmem [thread:$0]  %s5, 25600, %s275, [#allocation4], 512, 512, 32
        $region32: #{tpu_custom_call.1} parent=11 // pred_fallthru
          _
        // Predicated region
        $region33: #{tpu_custom_call.1} parent=11 // pred_check
          %p281 = pneg %p173
        $region34: #{tpu_custom_call.1} parent=11 // pred_check_branch
          %283 = sbr.rel (%p281) target = $region36
        $region35: #{tpu_custom_call.1} parent=11 // pred_region
          _
        $region36: #{tpu_custom_call.1} parent=11 // pred_fallthru
          _
        // Predicated region
        $region37: #{tpu_custom_call.1} parent=11 // pred_check
          %p284 = pneg %p194
        $region38: #{tpu_custom_call.1} parent=11 // pred_check_branch
          %286 = sbr.rel (%p284) target = $region40
        $region39: #{tpu_custom_call.1} parent=11 // pred_region
          _
        $region40: #{tpu_custom_call.1} parent=11 // pred_fallthru
          _
        // Predicated region
        $region41: #{tpu_custom_call.1} parent=11 // pred_check
          %p287 = pneg %p215
        $region42: #{tpu_custom_call.1} parent=11 // pred_check_branch
          %289 = sbr.rel (%p287) target = $region44
        $region43: #{tpu_custom_call.1} parent=11 // pred_region
          _
        $region44: #{tpu_custom_call.1} parent=11 // pred_fallthru
          _
      $region12: #{tpu_custom_call.1} parent=5 // pred_fallthru
        _
      %p290 = scmp.lt.s32.totalorder %s21, 2
      // Predicated region
      $region45: #{tpu_custom_call.1} parent=5 // pred_check
        %p291 = pneg %p290
      $region46: #{tpu_custom_call.1} parent=5 // pred_check_branch
        %293 = sbr.rel (%p291) target = $region48
      $region47: #{tpu_custom_call.1} parent=5 // pred_region
        // Predicated region
        $region49: #{tpu_custom_call.1} parent=47 // pred_check
          %p294 = pneg %p41
        $region50: #{tpu_custom_call.1} parent=47 // pred_check_branch
          %296 = sbr.rel (%p294) target = $region52
        $region51: #{tpu_custom_call.1} parent=47 // pred_region
          %s297 = smul.u32 4, %s21
          %p298 = scmp.lt.s32.totalorder %s297, 7
          %s299 = scalar_select %p298, %s297, 7
          %s300 = smul.addr %s299, 2
          %s301 = scalar_lea.vmem %s0, %s300
          %s302 = smul.u32 4, %s21
        $region52: #{tpu_custom_call.1} parent=47 // pred_fallthru
          _
      $region48: #{tpu_custom_call.1} parent=5 // pred_fallthru
        _
      %p303 = scmp.le.s32.totalorder 1, %s21
      %p304 = scmp.lt.s32.totalorder %s21, 3
      %p305 = pnand %p303, %p304
      %p306 = pneg %p305
      // Predicated region
      $region53: #{tpu_custom_call.1} parent=5 // pred_check
        _
      $region54: #{tpu_custom_call.1} parent=5 // pred_check_branch
        %308 = sbr.rel (%p305) target = $region56
      $region55: #{tpu_custom_call.1} parent=5 // pred_region
        %s309 = ssub.s32 %s21, 1
        // Predicated region
        $region57: #{tpu_custom_call.1} parent=55 // pred_check
          %p310 = pneg %p152
        $region58: #{tpu_custom_call.1} parent=55 // pred_check_branch
          %312 = sbr.rel (%p310) target = $region60
        $region59: #{tpu_custom_call.1} parent=55 // pred_region
          %313 = dma.done [#allocation4], 25600
        $region60: #{tpu_custom_call.1} parent=55 // pred_fallthru
          _
        %s314 = smul.u32 4, %s26
        %p315 = scmp.lt.s32.totalorder %s314, 7
        %s316 = scalar_select %p315, %s314, 7
        %s317 = smul.addr %s316, 2
        %s318 = scalar_lea.vmem %s0, %s317
        %p319 = pneg %p47
        %p320 = pneg %p44
        %p321 = pneg %p68
        %p322 = pneg %p65
        %p323 = pneg %p89
        %p324 = pneg %p86
        %p325 = pneg %p110
        %p326 = pneg %p107
        %p327 = pneg %p131
        %p328 = pneg %p128
        %p329 = pneg %p152
        %p330 = pneg %p149
        %p331 = pneg %p173
        %p332 = pneg %p170
        %p333 = pneg %p194
        %p334 = pneg %p191
        %p335 = pneg %p215
        %p336 = pneg %p212
        %p337 = pneg %p241
        %p338 = pneg %p238
        %s339 = sand.u32 %s228, 1
        %s340 = scalar_lea.sflag [#allocation5], %s339
        %s341 = sand.u32 %s228, 1
        %s342 = smul.addr %s341, 4
        %s343 = scalar_lea.vmem [#allocation6], %s342
        %s344 = smul.u32 4, %s26
        %p345 = scmp.lt.s32.totalorder %s344, 7
        %s346 = scalar_select %p345, %s344, 7
        %s347 = smul.addr %s346, 2
        %s348 = scalar_lea.vmem %s0, %s347
        %s349 = smul.u32 4, %s26
        %s350 = smul.u32 4, %s26
        %v351 = vld [vmem:[%s348] sm:$0xff]
        %v352 = vld [vmem:[%s1] sm:$0xff]
        %v353 = vld [vmem:[%s1 + $0x8] sm:$0xff]
        %v354 = vld [vmem:[%s1 + $0x10] sm:$0xff]
        %v355 = vld [vmem:[%s1 + $0x18] sm:$0xff]
        %v356 = vld [vmem:[%s1 + $0x20] sm:$0xff]
        %v357 = vld [vmem:[%s1 + $0x28] sm:$0xff]
        %v358 = vld [vmem:[%s1 + $0x30] sm:$0xff]
        %v359 = vld [vmem:[%s1 + $0x38] sm:$0xff]
        %v360 = vld [vmem:[%s1 + $0x40] sm:$0xff]
        %v361 = vld [vmem:[%s1 + $0x48] sm:$0xff]
        %v362 = vld [vmem:[%s1 + $0x50] sm:$0xff]
        %v363 = vld [vmem:[%s1 + $0x58] sm:$0xff]
        %v364 = vld [vmem:[%s1 + $0x60] sm:$0xff]
        %v365 = vld [vmem:[%s1 + $0x68] sm:$0xff]
        %v366 = vld [vmem:[%s1 + $0x70] sm:$0xff]
        %v367 = vld [vmem:[%s1 + $0x78] sm:$0xff]
        %v368 = vld [vmem:[%s1 + $0x80] sm:$0xff]
        %v369 = vld [vmem:[%s1 + $0x88] sm:$0xff]
        %v370 = vld [vmem:[%s1 + $0x90] sm:$0xff]
        %v371 = vld [vmem:[%s1 + $0x98] sm:$0xff]
        %v372 = vld [vmem:[%s1 + $0xa0] sm:$0xff]
        %v373 = vld [vmem:[%s1 + $0xa8] sm:$0xff]
        %v374 = vld [vmem:[%s1 + $0xb0] sm:$0xff]
        %v375 = vld [vmem:[%s1 + $0xb8] sm:$0xff]
        %v376 = vld [vmem:[%s1 + $0xc0] sm:$0xff]
        %v377 = vld [vmem:[%s1 + $0xc8] sm:$0xff]
        %v378 = vld [vmem:[%s1 + $0xd0] sm:$0xff]
        %v379 = vld [vmem:[%s1 + $0xd8] sm:$0xff]
        %v380 = vld [vmem:[%s1 + $0xe0] sm:$0xff]
        %v381 = vld [vmem:[%s1 + $0xe8] sm:$0xff]
        %v382 = vld [vmem:[%s1 + $0xf0] sm:$0xff]
        %v383 = vld [vmem:[%s1 + $0xf8] sm:$0xff]
        %v384 = vld [vmem:[%s1 + $0x100] sm:$0xff]
        %v385 = vld [vmem:[%s1 + $0x108] sm:$0xff]
        %v386 = vld [vmem:[%s1 + $0x110] sm:$0xff]
        %v387 = vld [vmem:[%s1 + $0x118] sm:$0xff]
        %v388 = vld [vmem:[%s1 + $0x120] sm:$0xff]
        %v389 = vld [vmem:[%s1 + $0x128] sm:$0xff]
        %v390 = vld [vmem:[%s1 + $0x130] sm:$0xff]
        %v391 = vld [vmem:[%s1 + $0x138] sm:$0xff]
        %v392 = vld [vmem:[%s1 + $0x140] sm:$0xff]
        %v393 = vld [vmem:[%s1 + $0x148] sm:$0xff]
        %v394 = vld [vmem:[%s1 + $0x150] sm:$0xff]
        %v395 = vld [vmem:[%s1 + $0x158] sm:$0xff]
        %v396 = vld [vmem:[%s1 + $0x160] sm:$0xff]
        %v397 = vld [vmem:[%s1 + $0x168] sm:$0xff]
        %v398 = vld [vmem:[%s1 + $0x170] sm:$0xff]
        %v399 = vld [vmem:[%s1 + $0x178] sm:$0xff]
        %v400 = vld [vmem:[%s1 + $0x180] sm:$0xff]
        %v401 = vld [vmem:[%s1 + $0x188] sm:$0xff]
        %403 = vset.pattern.permute.xlu0 0
        %404 = vperm.xlu0 %403, %v352
        %v405 = vpop.permute.xlu0 %404
        %408 = vset.pattern.permute.xlu0 0
        %409 = vperm.xlu0 %408, %v353
        %v410 = vpop.permute.xlu0 %409
        %413 = vset.pattern.permute.xlu0 0
        %414 = vperm.xlu0 %413, %v354
        %v415 = vpop.permute.xlu0 %414
        %418 = vset.pattern.permute.xlu0 0
        %419 = vperm.xlu0 %418, %v355
        %v420 = vpop.permute.xlu0 %419
        %423 = vset.pattern.permute.xlu0 0
        %424 = vperm.xlu0 %423, %v356
        %v425 = vpop.permute.xlu0 %424
        %428 = vset.pattern.permute.xlu0 0
        %429 = vperm.xlu0 %428, %v357
        %v430 = vpop.permute.xlu0 %429
        %433 = vset.pattern.permute.xlu0 0
        %434 = vperm.xlu0 %433, %v358
        %v435 = vpop.permute.xlu0 %434
        %438 = vset.pattern.permute.xlu0 0
        %439 = vperm.xlu0 %438, %v359
        %v440 = vpop.permute.xlu0 %439
        %443 = vset.pattern.permute.xlu0 0
        %444 = vperm.xlu0 %443, %v360
        %v445 = vpop.permute.xlu0 %444
        %448 = vset.pattern.permute.xlu0 0
        %449 = vperm.xlu0 %448, %v361
        %v450 = vpop.permute.xlu0 %449
        %453 = vset.pattern.permute.xlu0 0
        %454 = vperm.xlu0 %453, %v362
        %v455 = vpop.permute.xlu0 %454
        %458 = vset.pattern.permute.xlu0 0
        %459 = vperm.xlu0 %458, %v363
        %v460 = vpop.permute.xlu0 %459
        %463 = vset.pattern.permute.xlu0 0
        %464 = vperm.xlu0 %463, %v364
        %v465 = vpop.permute.xlu0 %464
        %468 = vset.pattern.permute.xlu0 0
        %469 = vperm.xlu0 %468, %v365
        %v470 = vpop.permute.xlu0 %469
        %473 = vset.pattern.permute.xlu0 0
        %474 = vperm.xlu0 %473, %v366
        %v475 = vpop.permute.xlu0 %474
        %478 = vset.pattern.permute.xlu0 0
        %479 = vperm.xlu0 %478, %v367
        %v480 = vpop.permute.xlu0 %479
        %483 = vset.pattern.permute.xlu0 0
        %484 = vperm.xlu0 %483, %v368
        %v485 = vpop.permute.xlu0 %484
        %488 = vset.pattern.permute.xlu0 0
        %489 = vperm.xlu0 %488, %v369
        %v490 = vpop.permute.xlu0 %489
        %493 = vset.pattern.permute.xlu0 0
        %494 = vperm.xlu0 %493, %v370
        %v495 = vpop.permute.xlu0 %494
        %498 = vset.pattern.permute.xlu0 0
        %499 = vperm.xlu0 %498, %v371
        %v500 = vpop.permute.xlu0 %499
        %503 = vset.pattern.permute.xlu0 0
        %504 = vperm.xlu0 %503, %v372
        %v505 = vpop.permute.xlu0 %504
        %508 = vset.pattern.permute.xlu0 0
        %509 = vperm.xlu0 %508, %v373
        %v510 = vpop.permute.xlu0 %509
        %513 = vset.pattern.permute.xlu0 0
        %514 = vperm.xlu0 %513, %v374
        %v515 = vpop.permute.xlu0 %514
        %518 = vset.pattern.permute.xlu0 0
        %519 = vperm.xlu0 %518, %v375
        %v520 = vpop.permute.xlu0 %519
        %523 = vset.pattern.permute.xlu0 0
        %524 = vperm.xlu0 %523, %v376
        %v525 = vpop.permute.xlu0 %524
        %528 = vset.pattern.permute.xlu0 0
        %529 = vperm.xlu0 %528, %v377
        %v530 = vpop.permute.xlu0 %529
        %533 = vset.pattern.permute.xlu0 0
        %534 = vperm.xlu0 %533, %v378
        %v535 = vpop.permute.xlu0 %534
        %538 = vset.pattern.permute.xlu0 0
        %539 = vperm.xlu0 %538, %v379
        %v540 = vpop.permute.xlu0 %539
        %543 = vset.pattern.permute.xlu0 0
        %544 = vperm.xlu0 %543, %v380
        %v545 = vpop.permute.xlu0 %544
        %548 = vset.pattern.permute.xlu0 0
        %549 = vperm.xlu0 %548, %v381
        %v550 = vpop.permute.xlu0 %549
        %553 = vset.pattern.permute.xlu0 0
        %554 = vperm.xlu0 %553, %v382
        %v555 = vpop.permute.xlu0 %554
        %558 = vset.pattern.permute.xlu0 0
        %559 = vperm.xlu0 %558, %v383
        %v560 = vpop.permute.xlu0 %559
        %563 = vset.pattern.permute.xlu0 0
        %564 = vperm.xlu0 %563, %v384
        %v565 = vpop.permute.xlu0 %564
        %568 = vset.pattern.permute.xlu0 0
        %569 = vperm.xlu0 %568, %v385
        %v570 = vpop.permute.xlu0 %569
        %573 = vset.pattern.permute.xlu0 0
        %574 = vperm.xlu0 %573, %v386
        %v575 = vpop.permute.xlu0 %574
        %578 = vset.pattern.permute.xlu0 0
        %579 = vperm.xlu0 %578, %v387
        %v580 = vpop.permute.xlu0 %579
        %583 = vset.pattern.permute.xlu0 0
        %584 = vperm.xlu0 %583, %v388
        %v585 = vpop.permute.xlu0 %584
        %588 = vset.pattern.permute.xlu0 0
        %589 = vperm.xlu0 %588, %v389
        %v590 = vpop.permute.xlu0 %589
        %593 = vset.pattern.permute.xlu0 0
        %594 = vperm.xlu0 %593, %v390
        %v595 = vpop.permute.xlu0 %594
        %598 = vset.pattern.permute.xlu0 0
        %599 = vperm.xlu0 %598, %v391
        %v600 = vpop.permute.xlu0 %599
        %603 = vset.pattern.permute.xlu0 0
        %604 = vperm.xlu0 %603, %v392
        %v605 = vpop.permute.xlu0 %604
        %608 = vset.pattern.permute.xlu0 0
        %609 = vperm.xlu0 %608, %v393
        %v610 = vpop.permute.xlu0 %609
        %613 = vset.pattern.permute.xlu0 0
        %614 = vperm.xlu0 %613, %v394
        %v615 = vpop.permute.xlu0 %614
        %618 = vset.pattern.permute.xlu0 0
        %619 = vperm.xlu0 %618, %v395
        %v620 = vpop.permute.xlu0 %619
        %623 = vset.pattern.permute.xlu0 0
        %624 = vperm.xlu0 %623, %v396
        %v625 = vpop.permute.xlu0 %624
        %628 = vset.pattern.permute.xlu0 0
        %629 = vperm.xlu0 %628, %v397
        %v630 = vpop.permute.xlu0 %629
        %633 = vset.pattern.permute.xlu0 0
        %634 = vperm.xlu0 %633, %v398
        %v635 = vpop.permute.xlu0 %634
        %638 = vset.pattern.permute.xlu0 0
        %639 = vperm.xlu0 %638, %v399
        %v640 = vpop.permute.xlu0 %639
        %643 = vset.pattern.permute.xlu0 0
        %644 = vperm.xlu0 %643, %v400
        %v645 = vpop.permute.xlu0 %644
        %648 = vset.pattern.permute.xlu0 0
        %649 = vperm.xlu0 %648, %v401
        %v650 = vpop.permute.xlu0 %649
        %v653 = vlaneseq
        %v654 = vshrl.u32 %v653, 7
        %v655 = vsub.s32 0, %v654
        %v656 = vrot.slane %v351, %v655
        %v657 = vlaneseq
        %v658 = vshrl.u32 %v657, 7
        %v659 = vsub.s32 2, %v658
        %v660 = vrot.slane %v351, %v659
        %v661 = vlaneseq
        %v662 = vshrl.u32 %v661, 7
        %v663 = vsub.s32 4, %v662
        %v664 = vrot.slane %v351, %v663
        %v665 = vlaneseq
        %v666 = vshrl.u32 %v665, 7
        %v667 = vsub.s32 6, %v666
        %v668 = vrot.slane %v351, %v667
        %v673 = vlaneseq
        %v674 = vshrl.u32 %v673, 7
        %v675 = vsub.s32 0, %v674
        %v676 = vrot.slane %v656, %v675
        %v677 = vlaneseq
        %v678 = vshrl.u32 %v677, 7
        %v679 = vsub.s32 0, %v678
        %v680 = vrot.slane %v660, %v679
        %v681 = vlaneseq
        %v682 = vshrl.u32 %v681, 7
        %v683 = vsub.s32 0, %v682
        %v684 = vrot.slane %v664, %v683
        %v685 = vlaneseq
        %v686 = vshrl.u32 %v685, 7
        %v687 = vsub.s32 0, %v686
        %v688 = vrot.slane %v668, %v687
        %v689 = vmul.f32 %v405, %v676
        %v690 = vmul.f32 %v405, %v680
        %v691 = vmul.f32 %v405, %v684
        %v692 = vmul.f32 %v405, %v688
        %v693 = vmul.f32 %v410, %v676
        %v694 = vmul.f32 %v410, %v680
        %v695 = vmul.f32 %v410, %v684
        %v696 = vmul.f32 %v410, %v688
        %v697 = vmul.f32 %v415, %v676
        %v698 = vmul.f32 %v415, %v680
        %v699 = vmul.f32 %v415, %v684
        %v700 = vmul.f32 %v415, %v688
        %v701 = vmul.f32 %v420, %v676
        %v702 = vmul.f32 %v420, %v680
        %v703 = vmul.f32 %v420, %v684
        %v704 = vmul.f32 %v420, %v688
        %v705 = vmul.f32 %v425, %v676
        %v706 = vmul.f32 %v425, %v680
        %v707 = vmul.f32 %v425, %v684
        %v708 = vmul.f32 %v425, %v688
        %v709 = vmul.f32 %v430, %v676
        %v710 = vmul.f32 %v430, %v680
        %v711 = vmul.f32 %v430, %v684
        %v712 = vmul.f32 %v430, %v688
        %v713 = vmul.f32 %v435, %v676
        %v714 = vmul.f32 %v435, %v680
        %v715 = vmul.f32 %v435, %v684
        %v716 = vmul.f32 %v435, %v688
        %v717 = vmul.f32 %v440, %v676
        %v718 = vmul.f32 %v440, %v680
        %v719 = vmul.f32 %v440, %v684
        %v720 = vmul.f32 %v440, %v688
        %v721 = vmul.f32 %v445, %v676
        %v722 = vmul.f32 %v445, %v680
        %v723 = vmul.f32 %v445, %v684
        %v724 = vmul.f32 %v445, %v688
        %v725 = vmul.f32 %v450, %v676
        %v726 = vmul.f32 %v450, %v680
        %v727 = vmul.f32 %v450, %v684
        %v728 = vmul.f32 %v450, %v688
        %v729 = vmul.f32 %v455, %v676
        %v730 = vmul.f32 %v455, %v680
        %v731 = vmul.f32 %v455, %v684
        %v732 = vmul.f32 %v455, %v688
        %v733 = vmul.f32 %v460, %v676
        %v734 = vmul.f32 %v460, %v680
        %v735 = vmul.f32 %v460, %v684
        %v736 = vmul.f32 %v460, %v688
        %v737 = vmul.f32 %v465, %v676
        %v738 = vmul.f32 %v465, %v680
        %v739 = vmul.f32 %v465, %v684
        %v740 = vmul.f32 %v465, %v688
        %v741 = vmul.f32 %v470, %v676
        %v742 = vmul.f32 %v470, %v680
        %v743 = vmul.f32 %v470, %v684
        %v744 = vmul.f32 %v470, %v688
        %v745 = vmul.f32 %v475, %v676
        %v746 = vmul.f32 %v475, %v680
        %v747 = vmul.f32 %v475, %v684
        %v748 = vmul.f32 %v475, %v688
        %v749 = vmul.f32 %v480, %v676
        %v750 = vmul.f32 %v480, %v680
        %v751 = vmul.f32 %v480, %v684
        %v752 = vmul.f32 %v480, %v688
        %v753 = vmul.f32 %v485, %v676
        %v754 = vmul.f32 %v485, %v680
        %v755 = vmul.f32 %v485, %v684
        %v756 = vmul.f32 %v485, %v688
        %v757 = vmul.f32 %v490, %v676
        %v758 = vmul.f32 %v490, %v680
        %v759 = vmul.f32 %v490, %v684
        %v760 = vmul.f32 %v490, %v688
        %v761 = vmul.f32 %v495, %v676
        %v762 = vmul.f32 %v495, %v680
        %v763 = vmul.f32 %v495, %v684
        %v764 = vmul.f32 %v495, %v688
        %v765 = vmul.f32 %v500, %v676
        %v766 = vmul.f32 %v500, %v680
        %v767 = vmul.f32 %v500, %v684
        %v768 = vmul.f32 %v500, %v688
        %v769 = vmul.f32 %v505, %v676
        %v770 = vmul.f32 %v505, %v680
        %v771 = vmul.f32 %v505, %v684
        %v772 = vmul.f32 %v505, %v688
        %v773 = vmul.f32 %v510, %v676
        %v774 = vmul.f32 %v510, %v680
        %v775 = vmul.f32 %v510, %v684
        %v776 = vmul.f32 %v510, %v688
        %v777 = vmul.f32 %v515, %v676
        %v778 = vmul.f32 %v515, %v680
        %v779 = vmul.f32 %v515, %v684
        %v780 = vmul.f32 %v515, %v688
        %v781 = vmul.f32 %v520, %v676
        %v782 = vmul.f32 %v520, %v680
        %v783 = vmul.f32 %v520, %v684
        %v784 = vmul.f32 %v520, %v688
        %v785 = vmul.f32 %v525, %v676
        %v786 = vmul.f32 %v525, %v680
        %v787 = vmul.f32 %v525, %v684
        %v788 = vmul.f32 %v525, %v688
        %v789 = vmul.f32 %v530, %v676
        %v790 = vmul.f32 %v530, %v680
        %v791 = vmul.f32 %v530, %v684
        %v792 = vmul.f32 %v530, %v688
        %v793 = vmul.f32 %v535, %v676
        %v794 = vmul.f32 %v535, %v680
        %v795 = vmul.f32 %v535, %v684
        %v796 = vmul.f32 %v535, %v688
        %v797 = vmul.f32 %v540, %v676
        %v798 = vmul.f32 %v540, %v680
        %v799 = vmul.f32 %v540, %v684
        %v800 = vmul.f32 %v540, %v688
        %v801 = vmul.f32 %v545, %v676
        %v802 = vmul.f32 %v545, %v680
        %v803 = vmul.f32 %v545, %v684
        %v804 = vmul.f32 %v545, %v688
        %v805 = vmul.f32 %v550, %v676
        %v806 = vmul.f32 %v550, %v680
        %v807 = vmul.f32 %v550, %v684
        %v808 = vmul.f32 %v550, %v688
        %v809 = vmul.f32 %v555, %v676
        %v810 = vmul.f32 %v555, %v680
        %v811 = vmul.f32 %v555, %v684
        %v812 = vmul.f32 %v555, %v688
        %v813 = vmul.f32 %v560, %v676
        %v814 = vmul.f32 %v560, %v680
        %v815 = vmul.f32 %v560, %v684
        %v816 = vmul.f32 %v560, %v688
        %v817 = vmul.f32 %v565, %v676
        %v818 = vmul.f32 %v565, %v680
        %v819 = vmul.f32 %v565, %v684
        %v820 = vmul.f32 %v565, %v688
        %v821 = vmul.f32 %v570, %v676
        %v822 = vmul.f32 %v570, %v680
        %v823 = vmul.f32 %v570, %v684
        %v824 = vmul.f32 %v570, %v688
        %v825 = vmul.f32 %v575, %v676
        %v826 = vmul.f32 %v575, %v680
        %v827 = vmul.f32 %v575, %v684
        %v828 = vmul.f32 %v575, %v688
        %v829 = vmul.f32 %v580, %v676
        %v830 = vmul.f32 %v580, %v680
        %v831 = vmul.f32 %v580, %v684
        %v832 = vmul.f32 %v580, %v688
        %v833 = vmul.f32 %v585, %v676
        %v834 = vmul.f32 %v585, %v680
        %v835 = vmul.f32 %v585, %v684
        %v836 = vmul.f32 %v585, %v688
        %v837 = vmul.f32 %v590, %v676
        %v838 = vmul.f32 %v590, %v680
        %v839 = vmul.f32 %v590, %v684
        %v840 = vmul.f32 %v590, %v688
        %v841 = vmul.f32 %v595, %v676
        %v842 = vmul.f32 %v595, %v680
        %v843 = vmul.f32 %v595, %v684
        %v844 = vmul.f32 %v595, %v688
        %v845 = vmul.f32 %v600, %v676
        %v846 = vmul.f32 %v600, %v680
        %v847 = vmul.f32 %v600, %v684
        %v848 = vmul.f32 %v600, %v688
        %v849 = vmul.f32 %v605, %v676
        %v850 = vmul.f32 %v605, %v680
        %v851 = vmul.f32 %v605, %v684
        %v852 = vmul.f32 %v605, %v688
        %v853 = vmul.f32 %v610, %v676
        %v854 = vmul.f32 %v610, %v680
        %v855 = vmul.f32 %v610, %v684
        %v856 = vmul.f32 %v610, %v688
        %v857 = vmul.f32 %v615, %v676
        %v858 = vmul.f32 %v615, %v680
        %v859 = vmul.f32 %v615, %v684
        %v860 = vmul.f32 %v615, %v688
        %v861 = vmul.f32 %v620, %v676
        %v862 = vmul.f32 %v620, %v680
        %v863 = vmul.f32 %v620, %v684
        %v864 = vmul.f32 %v620, %v688
        %v865 = vmul.f32 %v625, %v676
        %v866 = vmul.f32 %v625, %v680
        %v867 = vmul.f32 %v625, %v684
        %v868 = vmul.f32 %v625, %v688
        %v869 = vmul.f32 %v630, %v676
        %v870 = vmul.f32 %v630, %v680
        %v871 = vmul.f32 %v630, %v684
        %v872 = vmul.f32 %v630, %v688
        %v873 = vmul.f32 %v635, %v676
        %v874 = vmul.f32 %v635, %v680
        %v875 = vmul.f32 %v635, %v684
        %v876 = vmul.f32 %v635, %v688
        %v877 = vmul.f32 %v640, %v676
        %v878 = vmul.f32 %v640, %v680
        %v879 = vmul.f32 %v640, %v684
        %v880 = vmul.f32 %v640, %v688
        %v881 = vmul.f32 %v645, %v676
        %v882 = vmul.f32 %v645, %v680
        %v883 = vmul.f32 %v645, %v684
        %v884 = vmul.f32 %v645, %v688
        %v885 = vmul.f32 %v650, %v676
        %v886 = vmul.f32 %v650, %v680
        %v887 = vmul.f32 %v650, %v684
        %v888 = vmul.f32 %v650, %v688
        %889 = vset.pattern.permute.xlu0 1
        %890 = vperm.xlu0 %889, %v352
        %v891 = vpop.permute.xlu0 %890
        %893 = vset.pattern.permute.xlu0 1
        %894 = vperm.xlu0 %893, %v353
        %v895 = vpop.permute.xlu0 %894
        %897 = vset.pattern.permute.xlu0 1
        %898 = vperm.xlu0 %897, %v354
        %v899 = vpop.permute.xlu0 %898
        %901 = vset.pattern.permute.xlu0 1
        %902 = vperm.xlu0 %901, %v355
        %v903 = vpop.permute.xlu0 %902
        %905 = vset.pattern.permute.xlu0 1
        %906 = vperm.xlu0 %905, %v356
        %v907 = vpop.permute.xlu0 %906
        %909 = vset.pattern.permute.xlu0 1
        %910 = vperm.xlu0 %909, %v357
        %v911 = vpop.permute.xlu0 %910
        %913 = vset.pattern.permute.xlu0 1
        %914 = vperm.xlu0 %913, %v358
        %v915 = vpop.permute.xlu0 %914
        %917 = vset.pattern.permute.xlu0 1
        %918 = vperm.xlu0 %917, %v359
        %v919 = vpop.permute.xlu0 %918
        %921 = vset.pattern.permute.xlu0 1
        %922 = vperm.xlu0 %921, %v360
        %v923 = vpop.permute.xlu0 %922
        %925 = vset.pattern.permute.xlu0 1
        %926 = vperm.xlu0 %925, %v361
        %v927 = vpop.permute.xlu0 %926
        %929 = vset.pattern.permute.xlu0 1
        %930 = vperm.xlu0 %929, %v362
        %v931 = vpop.permute.xlu0 %930
        %933 = vset.pattern.permute.xlu0 1
        %934 = vperm.xlu0 %933, %v363
        %v935 = vpop.permute.xlu0 %934
        %937 = vset.pattern.permute.xlu0 1
        %938 = vperm.xlu0 %937, %v364
        %v939 = vpop.permute.xlu0 %938
        %941 = vset.pattern.permute.xlu0 1
        %942 = vperm.xlu0 %941, %v365
        %v943 = vpop.permute.xlu0 %942
        %945 = vset.pattern.permute.xlu0 1
        %946 = vperm.xlu0 %945, %v366
        %v947 = vpop.permute.xlu0 %946
        %949 = vset.pattern.permute.xlu0 1
        %950 = vperm.xlu0 %949, %v367
        %v951 = vpop.permute.xlu0 %950
        %953 = vset.pattern.permute.xlu0 1
        %954 = vperm.xlu0 %953, %v368
        %v955 = vpop.permute.xlu0 %954
        %957 = vset.pattern.permute.xlu0 1
        %958 = vperm.xlu0 %957, %v369
        %v959 = vpop.permute.xlu0 %958
        %961 = vset.pattern.permute.xlu0 1
        %962 = vperm.xlu0 %961, %v370
        %v963 = vpop.permute.xlu0 %962
        %965 = vset.pattern.permute.xlu0 1
        %966 = vperm.xlu0 %965, %v371
        %v967 = vpop.permute.xlu0 %966
        %969 = vset.pattern.permute.xlu0 1
        %970 = vperm.xlu0 %969, %v372
        %v971 = vpop.permute.xlu0 %970
        %973 = vset.pattern.permute.xlu0 1
        %974 = vperm.xlu0 %973, %v373
        %v975 = vpop.permute.xlu0 %974
        %977 = vset.pattern.permute.xlu0 1
        %978 = vperm.xlu0 %977, %v374
        %v979 = vpop.permute.xlu0 %978
        %981 = vset.pattern.permute.xlu0 1
        %982 = vperm.xlu0 %981, %v375
        %v983 = vpop.permute.xlu0 %982
        %985 = vset.pattern.permute.xlu0 1
        %986 = vperm.xlu0 %985, %v376
        %v987 = vpop.permute.xlu0 %986
        %989 = vset.pattern.permute.xlu0 1
        %990 = vperm.xlu0 %989, %v377
        %v991 = vpop.permute.xlu0 %990
        %993 = vset.pattern.permute.xlu0 1
        %994 = vperm.xlu0 %993, %v378
        %v995 = vpop.permute.xlu0 %994
        %997 = vset.pattern.permute.xlu0 1
        %998 = vperm.xlu0 %997, %v379
        %v999 = vpop.permute.xlu0 %998
        %1001 = vset.pattern.permute.xlu0 1
        %1002 = vperm.xlu0 %1001, %v380
        %v1003 = vpop.permute.xlu0 %1002
        %1005 = vset.pattern.permute.xlu0 1
        %1006 = vperm.xlu0 %1005, %v381
        %v1007 = vpop.permute.xlu0 %1006
        %1009 = vset.pattern.permute.xlu0 1
        %1010 = vperm.xlu0 %1009, %v382
        %v1011 = vpop.permute.xlu0 %1010
        %1013 = vset.pattern.permute.xlu0 1
        %1014 = vperm.xlu0 %1013, %v383
        %v1015 = vpop.permute.xlu0 %1014
        %1017 = vset.pattern.permute.xlu0 1
        %1018 = vperm.xlu0 %1017, %v384
        %v1019 = vpop.permute.xlu0 %1018
        %1021 = vset.pattern.permute.xlu0 1
        %1022 = vperm.xlu0 %1021, %v385
        %v1023 = vpop.permute.xlu0 %1022
        %1025 = vset.pattern.permute.xlu0 1
        %1026 = vperm.xlu0 %1025, %v386
        %v1027 = vpop.permute.xlu0 %1026
        %1029 = vset.pattern.permute.xlu0 1
        %1030 = vperm.xlu0 %1029, %v387
        %v1031 = vpop.permute.xlu0 %1030
        %1033 = vset.pattern.permute.xlu0 1
        %1034 = vperm.xlu0 %1033, %v388
        %v1035 = vpop.permute.xlu0 %1034
        %1037 = vset.pattern.permute.xlu0 1
        %1038 = vperm.xlu0 %1037, %v389
        %v1039 = vpop.permute.xlu0 %1038
        %1041 = vset.pattern.permute.xlu0 1
        %1042 = vperm.xlu0 %1041, %v390
        %v1043 = vpop.permute.xlu0 %1042
        %1045 = vset.pattern.permute.xlu0 1
        %1046 = vperm.xlu0 %1045, %v391
        %v1047 = vpop.permute.xlu0 %1046
        %1049 = vset.pattern.permute.xlu0 1
        %1050 = vperm.xlu0 %1049, %v392
        %v1051 = vpop.permute.xlu0 %1050
        %1053 = vset.pattern.permute.xlu0 1
        %1054 = vperm.xlu0 %1053, %v393
        %v1055 = vpop.permute.xlu0 %1054
        %1057 = vset.pattern.permute.xlu0 1
        %1058 = vperm.xlu0 %1057, %v394
        %v1059 = vpop.permute.xlu0 %1058
        %1061 = vset.pattern.permute.xlu0 1
        %1062 = vperm.xlu0 %1061, %v395
        %v1063 = vpop.permute.xlu0 %1062
        %1065 = vset.pattern.permute.xlu0 1
        %1066 = vperm.xlu0 %1065, %v396
        %v1067 = vpop.permute.xlu0 %1066
        %1069 = vset.pattern.permute.xlu0 1
        %1070 = vperm.xlu0 %1069, %v397
        %v1071 = vpop.permute.xlu0 %1070
        %1073 = vset.pattern.permute.xlu0 1
        %1074 = vperm.xlu0 %1073, %v398
        %v1075 = vpop.permute.xlu0 %1074
        %1077 = vset.pattern.permute.xlu0 1
        %1078 = vperm.xlu0 %1077, %v399
        %v1079 = vpop.permute.xlu0 %1078
        %1081 = vset.pattern.permute.xlu0 1
        %1082 = vperm.xlu0 %1081, %v400
        %v1083 = vpop.permute.xlu0 %1082
        %1085 = vset.pattern.permute.xlu0 1
        %1086 = vperm.xlu0 %1085, %v401
        %v1087 = vpop.permute.xlu0 %1086
        %v1089 = vlaneseq
        %v1090 = vshrl.u32 %v1089, 7
        %v1091 = vsub.s32 1, %v1090
        %v1092 = vrot.slane %v351, %v1091
        %v1093 = vlaneseq
        %v1094 = vshrl.u32 %v1093, 7
        %v1095 = vsub.s32 3, %v1094
        %v1096 = vrot.slane %v351, %v1095
        %v1097 = vlaneseq
        %v1098 = vshrl.u32 %v1097, 7
        %v1099 = vsub.s32 5, %v1098
        %v1100 = vrot.slane %v351, %v1099
        %v1101 = vlaneseq
        %v1102 = vshrl.u32 %v1101, 7
        %v1103 = vsub.s32 7, %v1102
        %v1104 = vrot.slane %v351, %v1103
        %v1109 = vlaneseq
        %v1110 = vshrl.u32 %v1109, 7
        %v1111 = vsub.s32 1, %v1110
        %v1112 = vrot.slane %v1092, %v1111
        %v1113 = vlaneseq
        %v1114 = vshrl.u32 %v1113, 7
        %v1115 = vsub.s32 1, %v1114
        %v1116 = vrot.slane %v1096, %v1115
        %v1117 = vlaneseq
        %v1118 = vshrl.u32 %v1117, 7
        %v1119 = vsub.s32 1, %v1118
        %v1120 = vrot.slane %v1100, %v1119
        %v1121 = vlaneseq
        %v1122 = vshrl.u32 %v1121, 7
        %v1123 = vsub.s32 1, %v1122
        %v1124 = vrot.slane %v1104, %v1123
        %v1125 = vmul.f32 %v891, %v1112
        %v1126 = vmul.f32 %v891, %v1116
        %v1127 = vmul.f32 %v891, %v1120
        %v1128 = vmul.f32 %v891, %v1124
        %v1129 = vmul.f32 %v895, %v1112
        %v1130 = vmul.f32 %v895, %v1116
        %v1131 = vmul.f32 %v895, %v1120
        %v1132 = vmul.f32 %v895, %v1124
        %v1133 = vmul.f32 %v899, %v1112
        %v1134 = vmul.f32 %v899, %v1116
        %v1135 = vmul.f32 %v899, %v1120
        %v1136 = vmul.f32 %v899, %v1124
        %v1137 = vmul.f32 %v903, %v1112
        %v1138 = vmul.f32 %v903, %v1116
        %v1139 = vmul.f32 %v903, %v1120
        %v1140 = vmul.f32 %v903, %v1124
        %v1141 = vmul.f32 %v907, %v1112
        %v1142 = vmul.f32 %v907, %v1116
        %v1143 = vmul.f32 %v907, %v1120
        %v1144 = vmul.f32 %v907, %v1124
        %v1145 = vmul.f32 %v911, %v1112
        %v1146 = vmul.f32 %v911, %v1116
        %v1147 = vmul.f32 %v911, %v1120
        %v1148 = vmul.f32 %v911, %v1124
        %v1149 = vmul.f32 %v915, %v1112
        %v1150 = vmul.f32 %v915, %v1116
        %v1151 = vmul.f32 %v915, %v1120
        %v1152 = vmul.f32 %v915, %v1124
        %v1153 = vmul.f32 %v919, %v1112
        %v1154 = vmul.f32 %v919, %v1116
        %v1155 = vmul.f32 %v919, %v1120
        %v1156 = vmul.f32 %v919, %v1124
        %v1157 = vmul.f32 %v923, %v1112
        %v1158 = vmul.f32 %v923, %v1116
        %v1159 = vmul.f32 %v923, %v1120
        %v1160 = vmul.f32 %v923, %v1124
        %v1161 = vmul.f32 %v927, %v1112
        %v1162 = vmul.f32 %v927, %v1116
        %v1163 = vmul.f32 %v927, %v1120
        %v1164 = vmul.f32 %v927, %v1124
        %v1165 = vmul.f32 %v931, %v1112
        %v1166 = vmul.f32 %v931, %v1116
        %v1167 = vmul.f32 %v931, %v1120
        %v1168 = vmul.f32 %v931, %v1124
        %v1169 = vmul.f32 %v935, %v1112
        %v1170 = vmul.f32 %v935, %v1116
        %v1171 = vmul.f32 %v935, %v1120
        %v1172 = vmul.f32 %v935, %v1124
        %v1173 = vmul.f32 %v939, %v1112
        %v1174 = vmul.f32 %v939, %v1116
        %v1175 = vmul.f32 %v939, %v1120
        %v1176 = vmul.f32 %v939, %v1124
        %v1177 = vmul.f32 %v943, %v1112
        %v1178 = vmul.f32 %v943, %v1116
        %v1179 = vmul.f32 %v943, %v1120
        %v1180 = vmul.f32 %v943, %v1124
        %v1181 = vmul.f32 %v947, %v1112
        %v1182 = vmul.f32 %v947, %v1116
        %v1183 = vmul.f32 %v947, %v1120
        %v1184 = vmul.f32 %v947, %v1124
        %v1185 = vmul.f32 %v951, %v1112
        %v1186 = vmul.f32 %v951, %v1116
        %v1187 = vmul.f32 %v951, %v1120
        %v1188 = vmul.f32 %v951, %v1124
        %v1189 = vmul.f32 %v955, %v1112
        %v1190 = vmul.f32 %v955, %v1116
        %v1191 = vmul.f32 %v955, %v1120
        %v1192 = vmul.f32 %v955, %v1124
        %v1193 = vmul.f32 %v959, %v1112
        %v1194 = vmul.f32 %v959, %v1116
        %v1195 = vmul.f32 %v959, %v1120
        %v1196 = vmul.f32 %v959, %v1124
        %v1197 = vmul.f32 %v963, %v1112
        %v1198 = vmul.f32 %v963, %v1116
        %v1199 = vmul.f32 %v963, %v1120
        %v1200 = vmul.f32 %v963, %v1124
        %v1201 = vmul.f32 %v967, %v1112
        %v1202 = vmul.f32 %v967, %v1116
        %v1203 = vmul.f32 %v967, %v1120
        %v1204 = vmul.f32 %v967, %v1124
        %v1205 = vmul.f32 %v971, %v1112
        %v1206 = vmul.f32 %v971, %v1116
        %v1207 = vmul.f32 %v971, %v1120
        %v1208 = vmul.f32 %v971, %v1124
        %v1209 = vmul.f32 %v975, %v1112
        %v1210 = vmul.f32 %v975, %v1116
        %v1211 = vmul.f32 %v975, %v1120
        %v1212 = vmul.f32 %v975, %v1124
        %v1213 = vmul.f32 %v979, %v1112
        %v1214 = vmul.f32 %v979, %v1116
        %v1215 = vmul.f32 %v979, %v1120
        %v1216 = vmul.f32 %v979, %v1124
        %v1217 = vmul.f32 %v983, %v1112
        %v1218 = vmul.f32 %v983, %v1116
        %v1219 = vmul.f32 %v983, %v1120
        %v1220 = vmul.f32 %v983, %v1124
        %v1221 = vmul.f32 %v987, %v1112
        %v1222 = vmul.f32 %v987, %v1116
        %v1223 = vmul.f32 %v987, %v1120
        %v1224 = vmul.f32 %v987, %v1124
        %v1225 = vmul.f32 %v991, %v1112
        %v1226 = vmul.f32 %v991, %v1116
        %v1227 = vmul.f32 %v991, %v1120
        %v1228 = vmul.f32 %v991, %v1124
        %v1229 = vmul.f32 %v995, %v1112
        %v1230 = vmul.f32 %v995, %v1116
        %v1231 = vmul.f32 %v995, %v1120
        %v1232 = vmul.f32 %v995, %v1124
        %v1233 = vmul.f32 %v999, %v1112
        %v1234 = vmul.f32 %v999, %v1116
        %v1235 = vmul.f32 %v999, %v1120
        %v1236 = vmul.f32 %v999, %v1124
        %v1237 = vmul.f32 %v1003, %v1112
        %v1238 = vmul.f32 %v1003, %v1116
        %v1239 = vmul.f32 %v1003, %v1120
        %v1240 = vmul.f32 %v1003, %v1124
        %v1241 = vmul.f32 %v1007, %v1112
        %v1242 = vmul.f32 %v1007, %v1116
        %v1243 = vmul.f32 %v1007, %v1120
        %v1244 = vmul.f32 %v1007, %v1124
        %v1245 = vmul.f32 %v1011, %v1112
        %v1246 = vmul.f32 %v1011, %v1116
        %v1247 = vmul.f32 %v1011, %v1120
        %v1248 = vmul.f32 %v1011, %v1124
        %v1249 = vmul.f32 %v1015, %v1112
        %v1250 = vmul.f32 %v1015, %v1116
        %v1251 = vmul.f32 %v1015, %v1120
        %v1252 = vmul.f32 %v1015, %v1124
        %v1253 = vmul.f32 %v1019, %v1112
        %v1254 = vmul.f32 %v1019, %v1116
        %v1255 = vmul.f32 %v1019, %v1120
        %v1256 = vmul.f32 %v1019, %v1124
        %v1257 = vmul.f32 %v1023, %v1112
        %v1258 = vmul.f32 %v1023, %v1116
        %v1259 = vmul.f32 %v1023, %v1120
        %v1260 = vmul.f32 %v1023, %v1124
        %v1261 = vmul.f32 %v1027, %v1112
        %v1262 = vmul.f32 %v1027, %v1116
        %v1263 = vmul.f32 %v1027, %v1120
        %v1264 = vmul.f32 %v1027, %v1124
        %v1265 = vmul.f32 %v1031, %v1112
        %v1266 = vmul.f32 %v1031, %v1116
        %v1267 = vmul.f32 %v1031, %v1120
        %v1268 = vmul.f32 %v1031, %v1124
        %v1269 = vmul.f32 %v1035, %v1112
        %v1270 = vmul.f32 %v1035, %v1116
        %v1271 = vmul.f32 %v1035, %v1120
        %v1272 = vmul.f32 %v1035, %v1124
        %v1273 = vmul.f32 %v1039, %v1112
        %v1274 = vmul.f32 %v1039, %v1116
        %v1275 = vmul.f32 %v1039, %v1120
        %v1276 = vmul.f32 %v1039, %v1124
        %v1277 = vmul.f32 %v1043, %v1112
        %v1278 = vmul.f32 %v1043, %v1116
        %v1279 = vmul.f32 %v1043, %v1120
        %v1280 = vmul.f32 %v1043, %v1124
        %v1281 = vmul.f32 %v1047, %v1112
        %v1282 = vmul.f32 %v1047, %v1116
        %v1283 = vmul.f32 %v1047, %v1120
        %v1284 = vmul.f32 %v1047, %v1124
        %v1285 = vmul.f32 %v1051, %v1112
        %v1286 = vmul.f32 %v1051, %v1116
        %v1287 = vmul.f32 %v1051, %v1120
        %v1288 = vmul.f32 %v1051, %v1124
        %v1289 = vmul.f32 %v1055, %v1112
        %v1290 = vmul.f32 %v1055, %v1116
        %v1291 = vmul.f32 %v1055, %v1120
        %v1292 = vmul.f32 %v1055, %v1124
        %v1293 = vmul.f32 %v1059, %v1112
        %v1294 = vmul.f32 %v1059, %v1116
        %v1295 = vmul.f32 %v1059, %v1120
        %v1296 = vmul.f32 %v1059, %v1124
        %v1297 = vmul.f32 %v1063, %v1112
        %v1298 = vmul.f32 %v1063, %v1116
        %v1299 = vmul.f32 %v1063, %v1120
        %v1300 = vmul.f32 %v1063, %v1124
        %v1301 = vmul.f32 %v1067, %v1112
        %v1302 = vmul.f32 %v1067, %v1116
        %v1303 = vmul.f32 %v1067, %v1120
        %v1304 = vmul.f32 %v1067, %v1124
        %v1305 = vmul.f32 %v1071, %v1112
        %v1306 = vmul.f32 %v1071, %v1116
        %v1307 = vmul.f32 %v1071, %v1120
        %v1308 = vmul.f32 %v1071, %v1124
        %v1309 = vmul.f32 %v1075, %v1112
        %v1310 = vmul.f32 %v1075, %v1116
        %v1311 = vmul.f32 %v1075, %v1120
        %v1312 = vmul.f32 %v1075, %v1124
        %v1313 = vmul.f32 %v1079, %v1112
        %v1314 = vmul.f32 %v1079, %v1116
        %v1315 = vmul.f32 %v1079, %v1120
        %v1316 = vmul.f32 %v1079, %v1124
        %v1317 = vmul.f32 %v1083, %v1112
        %v1318 = vmul.f32 %v1083, %v1116
        %v1319 = vmul.f32 %v1083, %v1120
        %v1320 = vmul.f32 %v1083, %v1124
        %v1321 = vmul.f32 %v1087, %v1112
        %v1322 = vmul.f32 %v1087, %v1116
        %v1323 = vmul.f32 %v1087, %v1120
        %v1324 = vmul.f32 %v1087, %v1124
        %v1325 = vadd.f32 %v689, %v1125
        %v1326 = vadd.f32 %v690, %v1126
        %v1327 = vadd.f32 %v691, %v1127
        %v1328 = vadd.f32 %v692, %v1128
        %v1329 = vadd.f32 %v693, %v1129
        %v1330 = vadd.f32 %v694, %v1130
        %v1331 = vadd.f32 %v695, %v1131
        %v1332 = vadd.f32 %v696, %v1132
        %v1333 = vadd.f32 %v697, %v1133
        %v1334 = vadd.f32 %v698, %v1134
        %v1335 = vadd.f32 %v699, %v1135
        %v1336 = vadd.f32 %v700, %v1136
        %v1337 = vadd.f32 %v701, %v1137
        %v1338 = vadd.f32 %v702, %v1138
        %v1339 = vadd.f32 %v703, %v1139
        %v1340 = vadd.f32 %v704, %v1140
        %v1341 = vadd.f32 %v705, %v1141
        %v1342 = vadd.f32 %v706, %v1142
        %v1343 = vadd.f32 %v707, %v1143
        %v1344 = vadd.f32 %v708, %v1144
        %v1345 = vadd.f32 %v709, %v1145
        %v1346 = vadd.f32 %v710, %v1146
        %v1347 = vadd.f32 %v711, %v1147
        %v1348 = vadd.f32 %v712, %v1148
        %v1349 = vadd.f32 %v713, %v1149
        %v1350 = vadd.f32 %v714, %v1150
        %v1351 = vadd.f32 %v715, %v1151
        %v1352 = vadd.f32 %v716, %v1152
        %v1353 = vadd.f32 %v717, %v1153
        %v1354 = vadd.f32 %v718, %v1154
        %v1355 = vadd.f32 %v719, %v1155
        %v1356 = vadd.f32 %v720, %v1156
        %v1357 = vadd.f32 %v721, %v1157
        %v1358 = vadd.f32 %v722, %v1158
        %v1359 = vadd.f32 %v723, %v1159
        %v1360 = vadd.f32 %v724, %v1160
        %v1361 = vadd.f32 %v725, %v1161
        %v1362 = vadd.f32 %v726, %v1162
        %v1363 = vadd.f32 %v727, %v1163
        %v1364 = vadd.f32 %v728, %v1164
        %v1365 = vadd.f32 %v729, %v1165
        %v1366 = vadd.f32 %v730, %v1166
        %v1367 = vadd.f32 %v731, %v1167
        %v1368 = vadd.f32 %v732, %v1168
        %v1369 = vadd.f32 %v733, %v1169
        %v1370 = vadd.f32 %v734, %v1170
        %v1371 = vadd.f32 %v735, %v1171
        %v1372 = vadd.f32 %v736, %v1172
        %v1373 = vadd.f32 %v737, %v1173
        %v1374 = vadd.f32 %v738, %v1174
        %v1375 = vadd.f32 %v739, %v1175
        %v1376 = vadd.f32 %v740, %v1176
        %v1377 = vadd.f32 %v741, %v1177
        %v1378 = vadd.f32 %v742, %v1178
        %v1379 = vadd.f32 %v743, %v1179
        %v1380 = vadd.f32 %v744, %v1180
        %v1381 = vadd.f32 %v745, %v1181
        %v1382 = vadd.f32 %v746, %v1182
        %v1383 = vadd.f32 %v747, %v1183
        %v1384 = vadd.f32 %v748, %v1184
        %v1385 = vadd.f32 %v749, %v1185
        %v1386 = vadd.f32 %v750, %v1186
        %v1387 = vadd.f32 %v751, %v1187
        %v1388 = vadd.f32 %v752, %v1188
        %v1389 = vadd.f32 %v753, %v1189
        %v1390 = vadd.f32 %v754, %v1190
        %v1391 = vadd.f32 %v755, %v1191
        %v1392 = vadd.f32 %v756, %v1192
        %v1393 = vadd.f32 %v757, %v1193
        %v1394 = vadd.f32 %v758, %v1194
        %v1395 = vadd.f32 %v759, %v1195
        %v1396 = vadd.f32 %v760, %v1196
        %v1397 = vadd.f32 %v761, %v1197
        %v1398 = vadd.f32 %v762, %v1198
        %v1399 = vadd.f32 %v763, %v1199
        %v1400 = vadd.f32 %v764, %v1200
        %v1401 = vadd.f32 %v765, %v1201
        %v1402 = vadd.f32 %v766, %v1202
        %v1403 = vadd.f32 %v767, %v1203
        %v1404 = vadd.f32 %v768, %v1204
        %v1405 = vadd.f32 %v769, %v1205
        %v1406 = vadd.f32 %v770, %v1206
        %v1407 = vadd.f32 %v771, %v1207
        %v1408 = vadd.f32 %v772, %v1208
        %v1409 = vadd.f32 %v773, %v1209
        %v1410 = vadd.f32 %v774, %v1210
        %v1411 = vadd.f32 %v775, %v1211
        %v1412 = vadd.f32 %v776, %v1212
        %v1413 = vadd.f32 %v777, %v1213
        %v1414 = vadd.f32 %v778, %v1214
        %v1415 = vadd.f32 %v779, %v1215
        %v1416 = vadd.f32 %v780, %v1216
        %v1417 = vadd.f32 %v781, %v1217
        %v1418 = vadd.f32 %v782, %v1218
        %v1419 = vadd.f32 %v783, %v1219
        %v1420 = vadd.f32 %v784, %v1220
        %v1421 = vadd.f32 %v785, %v1221
        %v1422 = vadd.f32 %v786, %v1222
        %v1423 = vadd.f32 %v787, %v1223
        %v1424 = vadd.f32 %v788, %v1224
        %v1425 = vadd.f32 %v789, %v1225
        %v1426 = vadd.f32 %v790, %v1226
        %v1427 = vadd.f32 %v791, %v1227
        %v1428 = vadd.f32 %v792, %v1228
        %v1429 = vadd.f32 %v793, %v1229
        %v1430 = vadd.f32 %v794, %v1230
        %v1431 = vadd.f32 %v795, %v1231
        %v1432 = vadd.f32 %v796, %v1232
        %v1433 = vadd.f32 %v797, %v1233
        %v1434 = vadd.f32 %v798, %v1234
        %v1435 = vadd.f32 %v799, %v1235
        %v1436 = vadd.f32 %v800, %v1236
        %v1437 = vadd.f32 %v801, %v1237
        %v1438 = vadd.f32 %v802, %v1238
        %v1439 = vadd.f32 %v803, %v1239
        %v1440 = vadd.f32 %v804, %v1240
        %v1441 = vadd.f32 %v805, %v1241
        %v1442 = vadd.f32 %v806, %v1242
        %v1443 = vadd.f32 %v807, %v1243
        %v1444 = vadd.f32 %v808, %v1244
        %v1445 = vadd.f32 %v809, %v1245
        %v1446 = vadd.f32 %v810, %v1246
        %v1447 = vadd.f32 %v811, %v1247
        %v1448 = vadd.f32 %v812, %v1248
        %v1449 = vadd.f32 %v813, %v1249
        %v1450 = vadd.f32 %v814, %v1250
        %v1451 = vadd.f32 %v815, %v1251
        %v1452 = vadd.f32 %v816, %v1252
        %v1453 = vadd.f32 %v817, %v1253
        %v1454 = vadd.f32 %v818, %v1254
        %v1455 = vadd.f32 %v819, %v1255
        %v1456 = vadd.f32 %v820, %v1256
        %v1457 = vadd.f32 %v821, %v1257
        %v1458 = vadd.f32 %v822, %v1258
        %v1459 = vadd.f32 %v823, %v1259
        %v1460 = vadd.f32 %v824, %v1260
        %v1461 = vadd.f32 %v825, %v1261
        %v1462 = vadd.f32 %v826, %v1262
        %v1463 = vadd.f32 %v827, %v1263
        %v1464 = vadd.f32 %v828, %v1264
        %v1465 = vadd.f32 %v829, %v1265
        %v1466 = vadd.f32 %v830, %v1266
        %v1467 = vadd.f32 %v831, %v1267
        %v1468 = vadd.f32 %v832, %v1268
        %v1469 = vadd.f32 %v833, %v1269
        %v1470 = vadd.f32 %v834, %v1270
        %v1471 = vadd.f32 %v835, %v1271
        %v1472 = vadd.f32 %v836, %v1272
        %v1473 = vadd.f32 %v837, %v1273
        %v1474 = vadd.f32 %v838, %v1274
        %v1475 = vadd.f32 %v839, %v1275
        %v1476 = vadd.f32 %v840, %v1276
        %v1477 = vadd.f32 %v841, %v1277
        %v1478 = vadd.f32 %v842, %v1278
        %v1479 = vadd.f32 %v843, %v1279
        %v1480 = vadd.f32 %v844, %v1280
        %v1481 = vadd.f32 %v845, %v1281
        %v1482 = vadd.f32 %v846, %v1282
        %v1483 = vadd.f32 %v847, %v1283
        %v1484 = vadd.f32 %v848, %v1284
        %v1485 = vadd.f32 %v849, %v1285
        %v1486 = vadd.f32 %v850, %v1286
        %v1487 = vadd.f32 %v851, %v1287
        %v1488 = vadd.f32 %v852, %v1288
        %v1489 = vadd.f32 %v853, %v1289
        %v1490 = vadd.f32 %v854, %v1290
        %v1491 = vadd.f32 %v855, %v1291
        %v1492 = vadd.f32 %v856, %v1292
        %v1493 = vadd.f32 %v857, %v1293
        %v1494 = vadd.f32 %v858, %v1294
        %v1495 = vadd.f32 %v859, %v1295
        %v1496 = vadd.f32 %v860, %v1296
        %v1497 = vadd.f32 %v861, %v1297
        %v1498 = vadd.f32 %v862, %v1298
        %v1499 = vadd.f32 %v863, %v1299
        %v1500 = vadd.f32 %v864, %v1300
        %v1501 = vadd.f32 %v865, %v1301
        %v1502 = vadd.f32 %v866, %v1302
        %v1503 = vadd.f32 %v867, %v1303
        %v1504 = vadd.f32 %v868, %v1304
        %v1505 = vadd.f32 %v869, %v1305
        %v1506 = vadd.f32 %v870, %v1306
        %v1507 = vadd.f32 %v871, %v1307
        %v1508 = vadd.f32 %v872, %v1308
        %v1509 = vadd.f32 %v873, %v1309
        %v1510 = vadd.f32 %v874, %v1310
        %v1511 = vadd.f32 %v875, %v1311
        %v1512 = vadd.f32 %v876, %v1312
        %v1513 = vadd.f32 %v877, %v1313
        %v1514 = vadd.f32 %v878, %v1314
        %v1515 = vadd.f32 %v879, %v1315
        %v1516 = vadd.f32 %v880, %v1316
        %v1517 = vadd.f32 %v881, %v1317
        %v1518 = vadd.f32 %v882, %v1318
        %v1519 = vadd.f32 %v883, %v1319
        %v1520 = vadd.f32 %v884, %v1320
        %v1521 = vadd.f32 %v885, %v1321
        %v1522 = vadd.f32 %v886, %v1322
        %v1523 = vadd.f32 %v887, %v1323
        %v1524 = vadd.f32 %v888, %v1324
        %v1525 = vld [vmem:[%s2] sm:$0xff]
        %v1526 = vld [vmem:[%s2 + $0x8] sm:$0xff]
        %v1527 = vld [vmem:[%s2 + $0x10] sm:$0xff]
        %v1528 = vld [vmem:[%s2 + $0x18] sm:$0xff]
        %v1529 = vld [vmem:[%s2 + $0x20] sm:$0xff]
        %v1530 = vld [vmem:[%s2 + $0x28] sm:$0xff]
        %v1531 = vld [vmem:[%s2 + $0x30] sm:$0xff]
        %v1532 = vld [vmem:[%s2 + $0x38] sm:$0xff]
        %v1533 = vld [vmem:[%s2 + $0x40] sm:$0xff]
        %v1534 = vld [vmem:[%s2 + $0x48] sm:$0xff]
        %v1535 = vld [vmem:[%s2 + $0x50] sm:$0xff]
        %v1536 = vld [vmem:[%s2 + $0x58] sm:$0xff]
        %v1537 = vld [vmem:[%s2 + $0x60] sm:$0xff]
        %v1538 = vld [vmem:[%s2 + $0x68] sm:$0xff]
        %v1539 = vld [vmem:[%s2 + $0x70] sm:$0xff]
        %v1540 = vld [vmem:[%s2 + $0x78] sm:$0xff]
        %v1541 = vld [vmem:[%s2 + $0x80] sm:$0xff]
        %v1542 = vld [vmem:[%s2 + $0x88] sm:$0xff]
        %v1543 = vld [vmem:[%s2 + $0x90] sm:$0xff]
        %v1544 = vld [vmem:[%s2 + $0x98] sm:$0xff]
        %v1545 = vld [vmem:[%s2 + $0xa0] sm:$0xff]
        %v1546 = vld [vmem:[%s2 + $0xa8] sm:$0xff]
        %v1547 = vld [vmem:[%s2 + $0xb0] sm:$0xff]
        %v1548 = vld [vmem:[%s2 + $0xb8] sm:$0xff]
        %v1549 = vld [vmem:[%s2 + $0xc0] sm:$0xff]
        %v1550 = vld [vmem:[%s2 + $0xc8] sm:$0xff]
        %v1551 = vld [vmem:[%s2 + $0xd0] sm:$0xff]
        %v1552 = vld [vmem:[%s2 + $0xd8] sm:$0xff]
        %v1553 = vld [vmem:[%s2 + $0xe0] sm:$0xff]
        %v1554 = vld [vmem:[%s2 + $0xe8] sm:$0xff]
        %v1555 = vld [vmem:[%s2 + $0xf0] sm:$0xff]
        %v1556 = vld [vmem:[%s2 + $0xf8] sm:$0xff]
        %v1557 = vld [vmem:[%s2 + $0x100] sm:$0xff]
        %v1558 = vld [vmem:[%s2 + $0x108] sm:$0xff]
        %v1559 = vld [vmem:[%s2 + $0x110] sm:$0xff]
        %v1560 = vld [vmem:[%s2 + $0x118] sm:$0xff]
        %v1561 = vld [vmem:[%s2 + $0x120] sm:$0xff]
        %v1562 = vld [vmem:[%s2 + $0x128] sm:$0xff]
        %v1563 = vld [vmem:[%s2 + $0x130] sm:$0xff]
        %v1564 = vld [vmem:[%s2 + $0x138] sm:$0xff]
        %v1565 = vld [vmem:[%s2 + $0x140] sm:$0xff]
        %v1566 = vld [vmem:[%s2 + $0x148] sm:$0xff]
        %v1567 = vld [vmem:[%s2 + $0x150] sm:$0xff]
        %v1568 = vld [vmem:[%s2 + $0x158] sm:$0xff]
        %v1569 = vld [vmem:[%s2 + $0x160] sm:$0xff]
        %v1570 = vld [vmem:[%s2 + $0x168] sm:$0xff]
        %v1571 = vld [vmem:[%s2 + $0x170] sm:$0xff]
        %v1572 = vld [vmem:[%s2 + $0x178] sm:$0xff]
        %v1573 = vld [vmem:[%s2 + $0x180] sm:$0xff]
        %v1574 = vld [vmem:[%s2 + $0x188] sm:$0xff]
        %1576 = vset.pattern.permute.xlu0 0
        %1577 = vperm.xlu0 %1576, %v1525
        %v1578 = vpop.permute.xlu0 %1577
        %1581 = vset.pattern.permute.xlu0 0
        %1582 = vperm.xlu0 %1581, %v1526
        %v1583 = vpop.permute.xlu0 %1582
        %1586 = vset.pattern.permute.xlu0 0
        %1587 = vperm.xlu0 %1586, %v1527
        %v1588 = vpop.permute.xlu0 %1587
        %1591 = vset.pattern.permute.xlu0 0
        %1592 = vperm.xlu0 %1591, %v1528
        %v1593 = vpop.permute.xlu0 %1592
        %1596 = vset.pattern.permute.xlu0 0
        %1597 = vperm.xlu0 %1596, %v1529
        %v1598 = vpop.permute.xlu0 %1597
        %1601 = vset.pattern.permute.xlu0 0
        %1602 = vperm.xlu0 %1601, %v1530
        %v1603 = vpop.permute.xlu0 %1602
        %1606 = vset.pattern.permute.xlu0 0
        %1607 = vperm.xlu0 %1606, %v1531
        %v1608 = vpop.permute.xlu0 %1607
        %1611 = vset.pattern.permute.xlu0 0
        %1612 = vperm.xlu0 %1611, %v1532
        %v1613 = vpop.permute.xlu0 %1612
        %1616 = vset.pattern.permute.xlu0 0
        %1617 = vperm.xlu0 %1616, %v1533
        %v1618 = vpop.permute.xlu0 %1617
        %1621 = vset.pattern.permute.xlu0 0
        %1622 = vperm.xlu0 %1621, %v1534
        %v1623 = vpop.permute.xlu0 %1622
        %1626 = vset.pattern.permute.xlu0 0
        %1627 = vperm.xlu0 %1626, %v1535
        %v1628 = vpop.permute.xlu0 %1627
        %1631 = vset.pattern.permute.xlu0 0
        %1632 = vperm.xlu0 %1631, %v1536
        %v1633 = vpop.permute.xlu0 %1632
        %1636 = vset.pattern.permute.xlu0 0
        %1637 = vperm.xlu0 %1636, %v1537
        %v1638 = vpop.permute.xlu0 %1637
        %1641 = vset.pattern.permute.xlu0 0
        %1642 = vperm.xlu0 %1641, %v1538
        %v1643 = vpop.permute.xlu0 %1642
        %1646 = vset.pattern.permute.xlu0 0
        %1647 = vperm.xlu0 %1646, %v1539
        %v1648 = vpop.permute.xlu0 %1647
        %1651 = vset.pattern.permute.xlu0 0
        %1652 = vperm.xlu0 %1651, %v1540
        %v1653 = vpop.permute.xlu0 %1652
        %1656 = vset.pattern.permute.xlu0 0
        %1657 = vperm.xlu0 %1656, %v1541
        %v1658 = vpop.permute.xlu0 %1657
        %1661 = vset.pattern.permute.xlu0 0
        %1662 = vperm.xlu0 %1661, %v1542
        %v1663 = vpop.permute.xlu0 %1662
        %1666 = vset.pattern.permute.xlu0 0
        %1667 = vperm.xlu0 %1666, %v1543
        %v1668 = vpop.permute.xlu0 %1667
        %1671 = vset.pattern.permute.xlu0 0
        %1672 = vperm.xlu0 %1671, %v1544
        %v1673 = vpop.permute.xlu0 %1672
        %1676 = vset.pattern.permute.xlu0 0
        %1677 = vperm.xlu0 %1676, %v1545
        %v1678 = vpop.permute.xlu0 %1677
        %1681 = vset.pattern.permute.xlu0 0
        %1682 = vperm.xlu0 %1681, %v1546
        %v1683 = vpop.permute.xlu0 %1682
        %1686 = vset.pattern.permute.xlu0 0
        %1687 = vperm.xlu0 %1686, %v1547
        %v1688 = vpop.permute.xlu0 %1687
        %1691 = vset.pattern.permute.xlu0 0
        %1692 = vperm.xlu0 %1691, %v1548
        %v1693 = vpop.permute.xlu0 %1692
        %1696 = vset.pattern.permute.xlu0 0
        %1697 = vperm.xlu0 %1696, %v1549
        %v1698 = vpop.permute.xlu0 %1697
        %1701 = vset.pattern.permute.xlu0 0
        %1702 = vperm.xlu0 %1701, %v1550
        %v1703 = vpop.permute.xlu0 %1702
        %1706 = vset.pattern.permute.xlu0 0
        %1707 = vperm.xlu0 %1706, %v1551
        %v1708 = vpop.permute.xlu0 %1707
        %1711 = vset.pattern.permute.xlu0 0
        %1712 = vperm.xlu0 %1711, %v1552
        %v1713 = vpop.permute.xlu0 %1712
        %1716 = vset.pattern.permute.xlu0 0
        %1717 = vperm.xlu0 %1716, %v1553
        %v1718 = vpop.permute.xlu0 %1717
        %1721 = vset.pattern.permute.xlu0 0
        %1722 = vperm.xlu0 %1721, %v1554
        %v1723 = vpop.permute.xlu0 %1722
        %1726 = vset.pattern.permute.xlu0 0
        %1727 = vperm.xlu0 %1726, %v1555
        %v1728 = vpop.permute.xlu0 %1727
        %1731 = vset.pattern.permute.xlu0 0
        %1732 = vperm.xlu0 %1731, %v1556
        %v1733 = vpop.permute.xlu0 %1732
        %1736 = vset.pattern.permute.xlu0 0
        %1737 = vperm.xlu0 %1736, %v1557
        %v1738 = vpop.permute.xlu0 %1737
        %1741 = vset.pattern.permute.xlu0 0
        %1742 = vperm.xlu0 %1741, %v1558
        %v1743 = vpop.permute.xlu0 %1742
        %1746 = vset.pattern.permute.xlu0 0
        %1747 = vperm.xlu0 %1746, %v1559
        %v1748 = vpop.permute.xlu0 %1747
        %1751 = vset.pattern.permute.xlu0 0
        %1752 = vperm.xlu0 %1751, %v1560
        %v1753 = vpop.permute.xlu0 %1752
        %1756 = vset.pattern.permute.xlu0 0
        %1757 = vperm.xlu0 %1756, %v1561
        %v1758 = vpop.permute.xlu0 %1757
        %1761 = vset.pattern.permute.xlu0 0
        %1762 = vperm.xlu0 %1761, %v1562
        %v1763 = vpop.permute.xlu0 %1762
        %1766 = vset.pattern.permute.xlu0 0
        %1767 = vperm.xlu0 %1766, %v1563
        %v1768 = vpop.permute.xlu0 %1767
        %1771 = vset.pattern.permute.xlu0 0
        %1772 = vperm.xlu0 %1771, %v1564
        %v1773 = vpop.permute.xlu0 %1772
        %1776 = vset.pattern.permute.xlu0 0
        %1777 = vperm.xlu0 %1776, %v1565
        %v1778 = vpop.permute.xlu0 %1777
        %1781 = vset.pattern.permute.xlu0 0
        %1782 = vperm.xlu0 %1781, %v1566
        %v1783 = vpop.permute.xlu0 %1782
        %1786 = vset.pattern.permute.xlu0 0
        %1787 = vperm.xlu0 %1786, %v1567
        %v1788 = vpop.permute.xlu0 %1787
        %1791 = vset.pattern.permute.xlu0 0
        %1792 = vperm.xlu0 %1791, %v1568
        %v1793 = vpop.permute.xlu0 %1792
        %1796 = vset.pattern.permute.xlu0 0
        %1797 = vperm.xlu0 %1796, %v1569
        %v1798 = vpop.permute.xlu0 %1797
        %1801 = vset.pattern.permute.xlu0 0
        %1802 = vperm.xlu0 %1801, %v1570
        %v1803 = vpop.permute.xlu0 %1802
        %1806 = vset.pattern.permute.xlu0 0
        %1807 = vperm.xlu0 %1806, %v1571
        %v1808 = vpop.permute.xlu0 %1807
        %1811 = vset.pattern.permute.xlu0 0
        %1812 = vperm.xlu0 %1811, %v1572
        %v1813 = vpop.permute.xlu0 %1812
        %1816 = vset.pattern.permute.xlu0 0
        %1817 = vperm.xlu0 %1816, %v1573
        %v1818 = vpop.permute.xlu0 %1817
        %1821 = vset.pattern.permute.xlu0 0
        %1822 = vperm.xlu0 %1821, %v1574
        %v1823 = vpop.permute.xlu0 %1822
        %v1825 = vadd.f32 %v1325, %v1578
        %v1826 = vadd.f32 %v1326, %v1578
        %v1827 = vadd.f32 %v1327, %v1578
        %v1828 = vadd.f32 %v1328, %v1578
        %v1829 = vadd.f32 %v1329, %v1583
        %v1830 = vadd.f32 %v1330, %v1583
        %v1831 = vadd.f32 %v1331, %v1583
        %v1832 = vadd.f32 %v1332, %v1583
        %v1833 = vadd.f32 %v1333, %v1588
        %v1834 = vadd.f32 %v1334, %v1588
        %v1835 = vadd.f32 %v1335, %v1588
        %v1836 = vadd.f32 %v1336, %v1588
        %v1837 = vadd.f32 %v1337, %v1593
        %v1838 = vadd.f32 %v1338, %v1593
        %v1839 = vadd.f32 %v1339, %v1593
        %v1840 = vadd.f32 %v1340, %v1593
        %v1841 = vadd.f32 %v1341, %v1598
        %v1842 = vadd.f32 %v1342, %v1598
        %v1843 = vadd.f32 %v1343, %v1598
        %v1844 = vadd.f32 %v1344, %v1598
        %v1845 = vadd.f32 %v1345, %v1603
        %v1846 = vadd.f32 %v1346, %v1603
        %v1847 = vadd.f32 %v1347, %v1603
        %v1848 = vadd.f32 %v1348, %v1603
        %v1849 = vadd.f32 %v1349, %v1608
        %v1850 = vadd.f32 %v1350, %v1608
        %v1851 = vadd.f32 %v1351, %v1608
        %v1852 = vadd.f32 %v1352, %v1608
        %v1853 = vadd.f32 %v1353, %v1613
        %v1854 = vadd.f32 %v1354, %v1613
        %v1855 = vadd.f32 %v1355, %v1613
        %v1856 = vadd.f32 %v1356, %v1613
        %v1857 = vadd.f32 %v1357, %v1618
        %v1858 = vadd.f32 %v1358, %v1618
        %v1859 = vadd.f32 %v1359, %v1618
        %v1860 = vadd.f32 %v1360, %v1618
        %v1861 = vadd.f32 %v1361, %v1623
        %v1862 = vadd.f32 %v1362, %v1623
        %v1863 = vadd.f32 %v1363, %v1623
        %v1864 = vadd.f32 %v1364, %v1623
        %v1865 = vadd.f32 %v1365, %v1628
        %v1866 = vadd.f32 %v1366, %v1628
        %v1867 = vadd.f32 %v1367, %v1628
        %v1868 = vadd.f32 %v1368, %v1628
        %v1869 = vadd.f32 %v1369, %v1633
        %v1870 = vadd.f32 %v1370, %v1633
        %v1871 = vadd.f32 %v1371, %v1633
        %v1872 = vadd.f32 %v1372, %v1633
        %v1873 = vadd.f32 %v1373, %v1638
        %v1874 = vadd.f32 %v1374, %v1638
        %v1875 = vadd.f32 %v1375, %v1638
        %v1876 = vadd.f32 %v1376, %v1638
        %v1877 = vadd.f32 %v1377, %v1643
        %v1878 = vadd.f32 %v1378, %v1643
        %v1879 = vadd.f32 %v1379, %v1643
        %v1880 = vadd.f32 %v1380, %v1643
        %v1881 = vadd.f32 %v1381, %v1648
        %v1882 = vadd.f32 %v1382, %v1648
        %v1883 = vadd.f32 %v1383, %v1648
        %v1884 = vadd.f32 %v1384, %v1648
        %v1885 = vadd.f32 %v1385, %v1653
        %v1886 = vadd.f32 %v1386, %v1653
        %v1887 = vadd.f32 %v1387, %v1653
        %v1888 = vadd.f32 %v1388, %v1653
        %v1889 = vadd.f32 %v1389, %v1658
        %v1890 = vadd.f32 %v1390, %v1658
        %v1891 = vadd.f32 %v1391, %v1658
        %v1892 = vadd.f32 %v1392, %v1658
        %v1893 = vadd.f32 %v1393, %v1663
        %v1894 = vadd.f32 %v1394, %v1663
        %v1895 = vadd.f32 %v1395, %v1663
        %v1896 = vadd.f32 %v1396, %v1663
        %v1897 = vadd.f32 %v1397, %v1668
        %v1898 = vadd.f32 %v1398, %v1668
        %v1899 = vadd.f32 %v1399, %v1668
        %v1900 = vadd.f32 %v1400, %v1668
        %v1901 = vadd.f32 %v1401, %v1673
        %v1902 = vadd.f32 %v1402, %v1673
        %v1903 = vadd.f32 %v1403, %v1673
        %v1904 = vadd.f32 %v1404, %v1673
        %v1905 = vadd.f32 %v1405, %v1678
        %v1906 = vadd.f32 %v1406, %v1678
        %v1907 = vadd.f32 %v1407, %v1678
        %v1908 = vadd.f32 %v1408, %v1678
        %v1909 = vadd.f32 %v1409, %v1683
        %v1910 = vadd.f32 %v1410, %v1683
        %v1911 = vadd.f32 %v1411, %v1683
        %v1912 = vadd.f32 %v1412, %v1683
        %v1913 = vadd.f32 %v1413, %v1688
        %v1914 = vadd.f32 %v1414, %v1688
        %v1915 = vadd.f32 %v1415, %v1688
        %v1916 = vadd.f32 %v1416, %v1688
        %v1917 = vadd.f32 %v1417, %v1693
        %v1918 = vadd.f32 %v1418, %v1693
        %v1919 = vadd.f32 %v1419, %v1693
        %v1920 = vadd.f32 %v1420, %v1693
        %v1921 = vadd.f32 %v1421, %v1698
        %v1922 = vadd.f32 %v1422, %v1698
        %v1923 = vadd.f32 %v1423, %v1698
        %v1924 = vadd.f32 %v1424, %v1698
        %v1925 = vadd.f32 %v1425, %v1703
        %v1926 = vadd.f32 %v1426, %v1703
        %v1927 = vadd.f32 %v1427, %v1703
        %v1928 = vadd.f32 %v1428, %v1703
        %v1929 = vadd.f32 %v1429, %v1708
        %v1930 = vadd.f32 %v1430, %v1708
        %v1931 = vadd.f32 %v1431, %v1708
        %v1932 = vadd.f32 %v1432, %v1708
        %v1933 = vadd.f32 %v1433, %v1713
        %v1934 = vadd.f32 %v1434, %v1713
        %v1935 = vadd.f32 %v1435, %v1713
        %v1936 = vadd.f32 %v1436, %v1713
        %v1937 = vadd.f32 %v1437, %v1718
        %v1938 = vadd.f32 %v1438, %v1718
        %v1939 = vadd.f32 %v1439, %v1718
        %v1940 = vadd.f32 %v1440, %v1718
        %v1941 = vadd.f32 %v1441, %v1723
        %v1942 = vadd.f32 %v1442, %v1723
        %v1943 = vadd.f32 %v1443, %v1723
        %v1944 = vadd.f32 %v1444, %v1723
        %v1945 = vadd.f32 %v1445, %v1728
        %v1946 = vadd.f32 %v1446, %v1728
        %v1947 = vadd.f32 %v1447, %v1728
        %v1948 = vadd.f32 %v1448, %v1728
        %v1949 = vadd.f32 %v1449, %v1733
        %v1950 = vadd.f32 %v1450, %v1733
        %v1951 = vadd.f32 %v1451, %v1733
        %v1952 = vadd.f32 %v1452, %v1733
        %v1953 = vadd.f32 %v1453, %v1738
        %v1954 = vadd.f32 %v1454, %v1738
        %v1955 = vadd.f32 %v1455, %v1738
        %v1956 = vadd.f32 %v1456, %v1738
        %v1957 = vadd.f32 %v1457, %v1743
        %v1958 = vadd.f32 %v1458, %v1743
        %v1959 = vadd.f32 %v1459, %v1743
        %v1960 = vadd.f32 %v1460, %v1743
        %v1961 = vadd.f32 %v1461, %v1748
        %v1962 = vadd.f32 %v1462, %v1748
        %v1963 = vadd.f32 %v1463, %v1748
        %v1964 = vadd.f32 %v1464, %v1748
        %v1965 = vadd.f32 %v1465, %v1753
        %v1966 = vadd.f32 %v1466, %v1753
        %v1967 = vadd.f32 %v1467, %v1753
        %v1968 = vadd.f32 %v1468, %v1753
        %v1969 = vadd.f32 %v1469, %v1758
        %v1970 = vadd.f32 %v1470, %v1758
        %v1971 = vadd.f32 %v1471, %v1758
        %v1972 = vadd.f32 %v1472, %v1758
        %v1973 = vadd.f32 %v1473, %v1763
        %v1974 = vadd.f32 %v1474, %v1763
        %v1975 = vadd.f32 %v1475, %v1763
        %v1976 = vadd.f32 %v1476, %v1763
        %v1977 = vadd.f32 %v1477, %v1768
        %v1978 = vadd.f32 %v1478, %v1768
        %v1979 = vadd.f32 %v1479, %v1768
        %v1980 = vadd.f32 %v1480, %v1768
        %v1981 = vadd.f32 %v1481, %v1773
        %v1982 = vadd.f32 %v1482, %v1773
        %v1983 = vadd.f32 %v1483, %v1773
        %v1984 = vadd.f32 %v1484, %v1773
        %v1985 = vadd.f32 %v1485, %v1778
        %v1986 = vadd.f32 %v1486, %v1778
        %v1987 = vadd.f32 %v1487, %v1778
        %v1988 = vadd.f32 %v1488, %v1778
        %v1989 = vadd.f32 %v1489, %v1783
        %v1990 = vadd.f32 %v1490, %v1783
        %v1991 = vadd.f32 %v1491, %v1783
        %v1992 = vadd.f32 %v1492, %v1783
        %v1993 = vadd.f32 %v1493, %v1788
        %v1994 = vadd.f32 %v1494, %v1788
        %v1995 = vadd.f32 %v1495, %v1788
        %v1996 = vadd.f32 %v1496, %v1788
        %v1997 = vadd.f32 %v1497, %v1793
        %v1998 = vadd.f32 %v1498, %v1793
        %v1999 = vadd.f32 %v1499, %v1793
        %v2000 = vadd.f32 %v1500, %v1793
        %v2001 = vadd.f32 %v1501, %v1798
        %v2002 = vadd.f32 %v1502, %v1798
        %v2003 = vadd.f32 %v1503, %v1798
        %v2004 = vadd.f32 %v1504, %v1798
        %v2005 = vadd.f32 %v1505, %v1803
        %v2006 = vadd.f32 %v1506, %v1803
        %v2007 = vadd.f32 %v1507, %v1803
        %v2008 = vadd.f32 %v1508, %v1803
        %v2009 = vadd.f32 %v1509, %v1808
        %v2010 = vadd.f32 %v1510, %v1808
        %v2011 = vadd.f32 %v1511, %v1808
        %v2012 = vadd.f32 %v1512, %v1808
        %v2013 = vadd.f32 %v1513, %v1813
        %v2014 = vadd.f32 %v1514, %v1813
        %v2015 = vadd.f32 %v1515, %v1813
        %v2016 = vadd.f32 %v1516, %v1813
        %v2017 = vadd.f32 %v1517, %v1818
        %v2018 = vadd.f32 %v1518, %v1818
        %v2019 = vadd.f32 %v1519, %v1818
        %v2020 = vadd.f32 %v1520, %v1818
        %v2021 = vadd.f32 %v1521, %v1823
        %v2022 = vadd.f32 %v1522, %v1823
        %v2023 = vadd.f32 %v1523, %v1823
        %v2024 = vadd.f32 %v1524, %v1823
        %v2025 = vmax.f32 %v1825, 0.0
        %v2026 = vmax.f32 %v1826, 0.0
        %v2027 = vmax.f32 %v1827, 0.0
        %v2028 = vmax.f32 %v1828, 0.0
        %v2029 = vmax.f32 %v1829, 0.0
        %v2030 = vmax.f32 %v1830, 0.0
        %v2031 = vmax.f32 %v1831, 0.0
        %v2032 = vmax.f32 %v1832, 0.0
        %v2033 = vmax.f32 %v1833, 0.0
        %v2034 = vmax.f32 %v1834, 0.0
        %v2035 = vmax.f32 %v1835, 0.0
        %v2036 = vmax.f32 %v1836, 0.0
        %v2037 = vmax.f32 %v1837, 0.0
        %v2038 = vmax.f32 %v1838, 0.0
        %v2039 = vmax.f32 %v1839, 0.0
        %v2040 = vmax.f32 %v1840, 0.0
        %v2041 = vmax.f32 %v1841, 0.0
        %v2042 = vmax.f32 %v1842, 0.0
        %v2043 = vmax.f32 %v1843, 0.0
        %v2044 = vmax.f32 %v1844, 0.0
        %v2045 = vmax.f32 %v1845, 0.0
        %v2046 = vmax.f32 %v1846, 0.0
        %v2047 = vmax.f32 %v1847, 0.0
        %v2048 = vmax.f32 %v1848, 0.0
        %v2049 = vmax.f32 %v1849, 0.0
        %v2050 = vmax.f32 %v1850, 0.0
        %v2051 = vmax.f32 %v1851, 0.0
        %v2052 = vmax.f32 %v1852, 0.0
        %v2053 = vmax.f32 %v1853, 0.0
        %v2054 = vmax.f32 %v1854, 0.0
        %v2055 = vmax.f32 %v1855, 0.0
        %v2056 = vmax.f32 %v1856, 0.0
        %v2057 = vmax.f32 %v1857, 0.0
        %v2058 = vmax.f32 %v1858, 0.0
        %v2059 = vmax.f32 %v1859, 0.0
        %v2060 = vmax.f32 %v1860, 0.0
        %v2061 = vmax.f32 %v1861, 0.0
        %v2062 = vmax.f32 %v1862, 0.0
        %v2063 = vmax.f32 %v1863, 0.0
        %v2064 = vmax.f32 %v1864, 0.0
        %v2065 = vmax.f32 %v1865, 0.0
        %v2066 = vmax.f32 %v1866, 0.0
        %v2067 = vmax.f32 %v1867, 0.0
        %v2068 = vmax.f32 %v1868, 0.0
        %v2069 = vmax.f32 %v1869, 0.0
        %v2070 = vmax.f32 %v1870, 0.0
        %v2071 = vmax.f32 %v1871, 0.0
        %v2072 = vmax.f32 %v1872, 0.0
        %v2073 = vmax.f32 %v1873, 0.0
        %v2074 = vmax.f32 %v1874, 0.0
        %v2075 = vmax.f32 %v1875, 0.0
        %v2076 = vmax.f32 %v1876, 0.0
        %v2077 = vmax.f32 %v1877, 0.0
        %v2078 = vmax.f32 %v1878, 0.0
        %v2079 = vmax.f32 %v1879, 0.0
        %v2080 = vmax.f32 %v1880, 0.0
        %v2081 = vmax.f32 %v1881, 0.0
        %v2082 = vmax.f32 %v1882, 0.0
        %v2083 = vmax.f32 %v1883, 0.0
        %v2084 = vmax.f32 %v1884, 0.0
        %v2085 = vmax.f32 %v1885, 0.0
        %v2086 = vmax.f32 %v1886, 0.0
        %v2087 = vmax.f32 %v1887, 0.0
        %v2088 = vmax.f32 %v1888, 0.0
        %v2089 = vmax.f32 %v1889, 0.0
        %v2090 = vmax.f32 %v1890, 0.0
        %v2091 = vmax.f32 %v1891, 0.0
        %v2092 = vmax.f32 %v1892, 0.0
        %v2093 = vmax.f32 %v1893, 0.0
        %v2094 = vmax.f32 %v1894, 0.0
        %v2095 = vmax.f32 %v1895, 0.0
        %v2096 = vmax.f32 %v1896, 0.0
        %v2097 = vmax.f32 %v1897, 0.0
        %v2098 = vmax.f32 %v1898, 0.0
        %v2099 = vmax.f32 %v1899, 0.0
        %v2100 = vmax.f32 %v1900, 0.0
        %v2101 = vmax.f32 %v1901, 0.0
        %v2102 = vmax.f32 %v1902, 0.0
        %v2103 = vmax.f32 %v1903, 0.0
        %v2104 = vmax.f32 %v1904, 0.0
        %v2105 = vmax.f32 %v1905, 0.0
        %v2106 = vmax.f32 %v1906, 0.0
        %v2107 = vmax.f32 %v1907, 0.0
        %v2108 = vmax.f32 %v1908, 0.0
        %v2109 = vmax.f32 %v1909, 0.0
        %v2110 = vmax.f32 %v1910, 0.0
        %v2111 = vmax.f32 %v1911, 0.0
        %v2112 = vmax.f32 %v1912, 0.0
        %v2113 = vmax.f32 %v1913, 0.0
        %v2114 = vmax.f32 %v1914, 0.0
        %v2115 = vmax.f32 %v1915, 0.0
        %v2116 = vmax.f32 %v1916, 0.0
        %v2117 = vmax.f32 %v1917, 0.0
        %v2118 = vmax.f32 %v1918, 0.0
        %v2119 = vmax.f32 %v1919, 0.0
        %v2120 = vmax.f32 %v1920, 0.0
        %v2121 = vmax.f32 %v1921, 0.0
        %v2122 = vmax.f32 %v1922, 0.0
        %v2123 = vmax.f32 %v1923, 0.0
        %v2124 = vmax.f32 %v1924, 0.0
        %v2125 = vmax.f32 %v1925, 0.0
        %v2126 = vmax.f32 %v1926, 0.0
        %v2127 = vmax.f32 %v1927, 0.0
        %v2128 = vmax.f32 %v1928, 0.0
        %v2129 = vmax.f32 %v1929, 0.0
        %v2130 = vmax.f32 %v1930, 0.0
        %v2131 = vmax.f32 %v1931, 0.0
        %v2132 = vmax.f32 %v1932, 0.0
        %v2133 = vmax.f32 %v1933, 0.0
        %v2134 = vmax.f32 %v1934, 0.0
        %v2135 = vmax.f32 %v1935, 0.0
        %v2136 = vmax.f32 %v1936, 0.0
        %v2137 = vmax.f32 %v1937, 0.0
        %v2138 = vmax.f32 %v1938, 0.0
        %v2139 = vmax.f32 %v1939, 0.0
        %v2140 = vmax.f32 %v1940, 0.0
        %v2141 = vmax.f32 %v1941, 0.0
        %v2142 = vmax.f32 %v1942, 0.0
        %v2143 = vmax.f32 %v1943, 0.0
        %v2144 = vmax.f32 %v1944, 0.0
        %v2145 = vmax.f32 %v1945, 0.0
        %v2146 = vmax.f32 %v1946, 0.0
        %v2147 = vmax.f32 %v1947, 0.0
        %v2148 = vmax.f32 %v1948, 0.0
        %v2149 = vmax.f32 %v1949, 0.0
        %v2150 = vmax.f32 %v1950, 0.0
        %v2151 = vmax.f32 %v1951, 0.0
        %v2152 = vmax.f32 %v1952, 0.0
        %v2153 = vmax.f32 %v1953, 0.0
        %v2154 = vmax.f32 %v1954, 0.0
        %v2155 = vmax.f32 %v1955, 0.0
        %v2156 = vmax.f32 %v1956, 0.0
        %v2157 = vmax.f32 %v1957, 0.0
        %v2158 = vmax.f32 %v1958, 0.0
        %v2159 = vmax.f32 %v1959, 0.0
        %v2160 = vmax.f32 %v1960, 0.0
        %v2161 = vmax.f32 %v1961, 0.0
        %v2162 = vmax.f32 %v1962, 0.0
        %v2163 = vmax.f32 %v1963, 0.0
        %v2164 = vmax.f32 %v1964, 0.0
        %v2165 = vmax.f32 %v1965, 0.0
        %v2166 = vmax.f32 %v1966, 0.0
        %v2167 = vmax.f32 %v1967, 0.0
        %v2168 = vmax.f32 %v1968, 0.0
        %v2169 = vmax.f32 %v1969, 0.0
        %v2170 = vmax.f32 %v1970, 0.0
        %v2171 = vmax.f32 %v1971, 0.0
        %v2172 = vmax.f32 %v1972, 0.0
        %v2173 = vmax.f32 %v1973, 0.0
        %v2174 = vmax.f32 %v1974, 0.0
        %v2175 = vmax.f32 %v1975, 0.0
        %v2176 = vmax.f32 %v1976, 0.0
        %v2177 = vmax.f32 %v1977, 0.0
        %v2178 = vmax.f32 %v1978, 0.0
        %v2179 = vmax.f32 %v1979, 0.0
        %v2180 = vmax.f32 %v1980, 0.0
        %v2181 = vmax.f32 %v1981, 0.0
        %v2182 = vmax.f32 %v1982, 0.0
        %v2183 = vmax.f32 %v1983, 0.0
        %v2184 = vmax.f32 %v1984, 0.0
        %v2185 = vmax.f32 %v1985, 0.0
        %v2186 = vmax.f32 %v1986, 0.0
        %v2187 = vmax.f32 %v1987, 0.0
        %v2188 = vmax.f32 %v1988, 0.0
        %v2189 = vmax.f32 %v1989, 0.0
        %v2190 = vmax.f32 %v1990, 0.0
        %v2191 = vmax.f32 %v1991, 0.0
        %v2192 = vmax.f32 %v1992, 0.0
        %v2193 = vmax.f32 %v1993, 0.0
        %v2194 = vmax.f32 %v1994, 0.0
        %v2195 = vmax.f32 %v1995, 0.0
        %v2196 = vmax.f32 %v1996, 0.0
        %v2197 = vmax.f32 %v1997, 0.0
        %v2198 = vmax.f32 %v1998, 0.0
        %v2199 = vmax.f32 %v1999, 0.0
        %v2200 = vmax.f32 %v2000, 0.0
        %v2201 = vmax.f32 %v2001, 0.0
        %v2202 = vmax.f32 %v2002, 0.0
        %v2203 = vmax.f32 %v2003, 0.0
        %v2204 = vmax.f32 %v2004, 0.0
        %v2205 = vmax.f32 %v2005, 0.0
        %v2206 = vmax.f32 %v2006, 0.0
        %v2207 = vmax.f32 %v2007, 0.0
        %v2208 = vmax.f32 %v2008, 0.0
        %v2209 = vmax.f32 %v2009, 0.0
        %v2210 = vmax.f32 %v2010, 0.0
        %v2211 = vmax.f32 %v2011, 0.0
        %v2212 = vmax.f32 %v2012, 0.0
        %v2213 = vmax.f32 %v2013, 0.0
        %v2214 = vmax.f32 %v2014, 0.0
        %v2215 = vmax.f32 %v2015, 0.0
        %v2216 = vmax.f32 %v2016, 0.0
        %v2217 = vmax.f32 %v2017, 0.0
        %v2218 = vmax.f32 %v2018, 0.0
        %v2219 = vmax.f32 %v2019, 0.0
        %v2220 = vmax.f32 %v2020, 0.0
        %v2221 = vmax.f32 %v2021, 0.0
        %v2222 = vmax.f32 %v2022, 0.0
        %v2223 = vmax.f32 %v2023, 0.0
        %v2224 = vmax.f32 %v2024, 0.0
        %v2225 = vld [vmem:[%s3] sm:$0xff]
        %v2226 = vld [vmem:[%s3 + $0x8] sm:$0xff]
        %v2227 = vld [vmem:[%s3 + $0x10] sm:$0xff]
        %v2228 = vld [vmem:[%s3 + $0x18] sm:$0xff]
        %v2229 = vld [vmem:[%s3 + $0x20] sm:$0xff]
        %v2230 = vld [vmem:[%s3 + $0x28] sm:$0xff]
        %v2231 = vld [vmem:[%s3 + $0x30] sm:$0xff]
        %v2232 = vld [vmem:[%s3 + $0x38] sm:$0xff]
        %v2233 = vld [vmem:[%s3 + $0x40] sm:$0xff]
        %v2234 = vld [vmem:[%s3 + $0x48] sm:$0xff]
        %v2235 = vld [vmem:[%s3 + $0x50] sm:$0xff]
        %v2236 = vld [vmem:[%s3 + $0x58] sm:$0xff]
        %v2237 = vld [vmem:[%s3 + $0x60] sm:$0xff]
        %v2238 = vld [vmem:[%s3 + $0x68] sm:$0xff]
        %v2239 = vld [vmem:[%s3 + $0x70] sm:$0xff]
        %v2240 = vld [vmem:[%s3 + $0x78] sm:$0xff]
        %v2241 = vld [vmem:[%s3 + $0x80] sm:$0xff]
        %v2242 = vld [vmem:[%s3 + $0x88] sm:$0xff]
        %v2243 = vld [vmem:[%s3 + $0x90] sm:$0xff]
        %v2244 = vld [vmem:[%s3 + $0x98] sm:$0xff]
        %v2245 = vld [vmem:[%s3 + $0xa0] sm:$0xff]
        %v2246 = vld [vmem:[%s3 + $0xa8] sm:$0xff]
        %v2247 = vld [vmem:[%s3 + $0xb0] sm:$0xff]
        %v2248 = vld [vmem:[%s3 + $0xb8] sm:$0xff]
        %v2249 = vld [vmem:[%s3 + $0xc0] sm:$0xff]
        %v2250 = vld [vmem:[%s3 + $0xc8] sm:$0xff]
        %v2251 = vld [vmem:[%s3 + $0xd0] sm:$0xff]
        %v2252 = vld [vmem:[%s3 + $0xd8] sm:$0xff]
        %v2253 = vld [vmem:[%s3 + $0xe0] sm:$0xff]
        %v2254 = vld [vmem:[%s3 + $0xe8] sm:$0xff]
        %v2255 = vld [vmem:[%s3 + $0xf0] sm:$0xff]
        %v2256 = vld [vmem:[%s3 + $0xf8] sm:$0xff]
        %v2257 = vld [vmem:[%s3 + $0x100] sm:$0xff]
        %v2258 = vld [vmem:[%s3 + $0x108] sm:$0xff]
        %v2259 = vld [vmem:[%s3 + $0x110] sm:$0xff]
        %v2260 = vld [vmem:[%s3 + $0x118] sm:$0xff]
        %v2261 = vld [vmem:[%s3 + $0x120] sm:$0xff]
        %v2262 = vld [vmem:[%s3 + $0x128] sm:$0xff]
        %v2263 = vld [vmem:[%s3 + $0x130] sm:$0xff]
        %v2264 = vld [vmem:[%s3 + $0x138] sm:$0xff]
        %v2265 = vld [vmem:[%s3 + $0x140] sm:$0xff]
        %v2266 = vld [vmem:[%s3 + $0x148] sm:$0xff]
        %v2267 = vld [vmem:[%s3 + $0x150] sm:$0xff]
        %v2268 = vld [vmem:[%s3 + $0x158] sm:$0xff]
        %v2269 = vld [vmem:[%s3 + $0x160] sm:$0xff]
        %v2270 = vld [vmem:[%s3 + $0x168] sm:$0xff]
        %v2271 = vld [vmem:[%s3 + $0x170] sm:$0xff]
        %v2272 = vld [vmem:[%s3 + $0x178] sm:$0xff]
        %v2273 = vld [vmem:[%s3 + $0x180] sm:$0xff]
        %v2274 = vld [vmem:[%s3 + $0x188] sm:$0xff]
        %v2275 = vld [vmem:[%s3 + $0x190] sm:$0xff]
        %v2276 = vld [vmem:[%s3 + $0x198] sm:$0xff]
        %v2277 = vld [vmem:[%s3 + $0x1a0] sm:$0xff]
        %v2278 = vld [vmem:[%s3 + $0x1a8] sm:$0xff]
        %v2279 = vld [vmem:[%s3 + $0x1b0] sm:$0xff]
        %v2280 = vld [vmem:[%s3 + $0x1b8] sm:$0xff]
        %v2281 = vld [vmem:[%s3 + $0x1c0] sm:$0xff]
        %v2282 = vld [vmem:[%s3 + $0x1c8] sm:$0xff]
        %v2283 = vld [vmem:[%s3 + $0x1d0] sm:$0xff]
        %v2284 = vld [vmem:[%s3 + $0x1d8] sm:$0xff]
        %v2285 = vld [vmem:[%s3 + $0x1e0] sm:$0xff]
        %v2286 = vld [vmem:[%s3 + $0x1e8] sm:$0xff]
        %v2287 = vld [vmem:[%s3 + $0x1f0] sm:$0xff]
        %v2288 = vld [vmem:[%s3 + $0x1f8] sm:$0xff]
        %v2289 = vld [vmem:[%s3 + $0x200] sm:$0xff]
        %v2290 = vld [vmem:[%s3 + $0x208] sm:$0xff]
        %v2291 = vld [vmem:[%s3 + $0x210] sm:$0xff]
        %v2292 = vld [vmem:[%s3 + $0x218] sm:$0xff]
        %v2293 = vld [vmem:[%s3 + $0x220] sm:$0xff]
        %v2294 = vld [vmem:[%s3 + $0x228] sm:$0xff]
        %v2295 = vld [vmem:[%s3 + $0x230] sm:$0xff]
        %v2296 = vld [vmem:[%s3 + $0x238] sm:$0xff]
        %v2297 = vld [vmem:[%s3 + $0x240] sm:$0xff]
        %v2298 = vld [vmem:[%s3 + $0x248] sm:$0xff]
        %v2299 = vld [vmem:[%s3 + $0x250] sm:$0xff]
        %v2300 = vld [vmem:[%s3 + $0x258] sm:$0xff]
        %v2301 = vld [vmem:[%s3 + $0x260] sm:$0xff]
        %v2302 = vld [vmem:[%s3 + $0x268] sm:$0xff]
        %v2303 = vld [vmem:[%s3 + $0x270] sm:$0xff]
        %v2304 = vld [vmem:[%s3 + $0x278] sm:$0xff]
        %v2305 = vld [vmem:[%s3 + $0x280] sm:$0xff]
        %v2306 = vld [vmem:[%s3 + $0x288] sm:$0xff]
        %v2307 = vld [vmem:[%s3 + $0x290] sm:$0xff]
        %v2308 = vld [vmem:[%s3 + $0x298] sm:$0xff]
        %v2309 = vld [vmem:[%s3 + $0x2a0] sm:$0xff]
        %v2310 = vld [vmem:[%s3 + $0x2a8] sm:$0xff]
        %v2311 = vld [vmem:[%s3 + $0x2b0] sm:$0xff]
        %v2312 = vld [vmem:[%s3 + $0x2b8] sm:$0xff]
        %v2313 = vld [vmem:[%s3 + $0x2c0] sm:$0xff]
        %v2314 = vld [vmem:[%s3 + $0x2c8] sm:$0xff]
        %v2315 = vld [vmem:[%s3 + $0x2d0] sm:$0xff]
        %v2316 = vld [vmem:[%s3 + $0x2d8] sm:$0xff]
        %v2317 = vld [vmem:[%s3 + $0x2e0] sm:$0xff]
        %v2318 = vld [vmem:[%s3 + $0x2e8] sm:$0xff]
        %v2319 = vld [vmem:[%s3 + $0x2f0] sm:$0xff]
        %v2320 = vld [vmem:[%s3 + $0x2f8] sm:$0xff]
        %v2321 = vld [vmem:[%s3 + $0x300] sm:$0xff]
        %v2322 = vld [vmem:[%s3 + $0x308] sm:$0xff]
        %v2323 = vld [vmem:[%s3 + $0x310] sm:$0xff]
        %v2324 = vld [vmem:[%s3 + $0x318] sm:$0xff]
        %v2325 = vld [vmem:[%s3 + $0x320] sm:$0xff]
        %v2326 = vld [vmem:[%s3 + $0x328] sm:$0xff]
        %v2327 = vld [vmem:[%s3 + $0x330] sm:$0xff]
        %v2328 = vld [vmem:[%s3 + $0x338] sm:$0xff]
        %v2329 = vld [vmem:[%s3 + $0x340] sm:$0xff]
        %v2330 = vld [vmem:[%s3 + $0x348] sm:$0xff]
        %v2331 = vld [vmem:[%s3 + $0x350] sm:$0xff]
        %v2332 = vld [vmem:[%s3 + $0x358] sm:$0xff]
        %v2333 = vld [vmem:[%s3 + $0x360] sm:$0xff]
        %v2334 = vld [vmem:[%s3 + $0x368] sm:$0xff]
        %v2335 = vld [vmem:[%s3 + $0x370] sm:$0xff]
        %v2336 = vld [vmem:[%s3 + $0x378] sm:$0xff]
        %v2337 = vld [vmem:[%s3 + $0x380] sm:$0xff]
        %v2338 = vld [vmem:[%s3 + $0x388] sm:$0xff]
        %v2339 = vld [vmem:[%s3 + $0x390] sm:$0xff]
        %v2340 = vld [vmem:[%s3 + $0x398] sm:$0xff]
        %v2341 = vld [vmem:[%s3 + $0x3a0] sm:$0xff]
        %v2342 = vld [vmem:[%s3 + $0x3a8] sm:$0xff]
        %v2343 = vld [vmem:[%s3 + $0x3b0] sm:$0xff]
        %v2344 = vld [vmem:[%s3 + $0x3b8] sm:$0xff]
        %v2345 = vld [vmem:[%s3 + $0x3c0] sm:$0xff]
        %v2346 = vld [vmem:[%s3 + $0x3c8] sm:$0xff]
        %v2347 = vld [vmem:[%s3 + $0x3d0] sm:$0xff]
        %v2348 = vld [vmem:[%s3 + $0x3d8] sm:$0xff]
        %v2349 = vld [vmem:[%s3 + $0x3e0] sm:$0xff]
        %v2350 = vld [vmem:[%s3 + $0x3e8] sm:$0xff]
        %v2351 = vld [vmem:[%s3 + $0x3f0] sm:$0xff]
        %v2352 = vld [vmem:[%s3 + $0x3f8] sm:$0xff]
        %v2353 = vld [vmem:[%s3 + $0x400] sm:$0xff]
        %v2354 = vld [vmem:[%s3 + $0x408] sm:$0xff]
        %v2355 = vld [vmem:[%s3 + $0x410] sm:$0xff]
        %v2356 = vld [vmem:[%s3 + $0x418] sm:$0xff]
        %v2357 = vld [vmem:[%s3 + $0x420] sm:$0xff]
        %v2358 = vld [vmem:[%s3 + $0x428] sm:$0xff]
        %v2359 = vld [vmem:[%s3 + $0x430] sm:$0xff]
        %v2360 = vld [vmem:[%s3 + $0x438] sm:$0xff]
        %v2361 = vld [vmem:[%s3 + $0x440] sm:$0xff]
        %v2362 = vld [vmem:[%s3 + $0x448] sm:$0xff]
        %v2363 = vld [vmem:[%s3 + $0x450] sm:$0xff]
        %v2364 = vld [vmem:[%s3 + $0x458] sm:$0xff]
        %v2365 = vld [vmem:[%s3 + $0x460] sm:$0xff]
        %v2366 = vld [vmem:[%s3 + $0x468] sm:$0xff]
        %v2367 = vld [vmem:[%s3 + $0x470] sm:$0xff]
        %v2368 = vld [vmem:[%s3 + $0x478] sm:$0xff]
        %v2369 = vld [vmem:[%s3 + $0x480] sm:$0xff]
        %v2370 = vld [vmem:[%s3 + $0x488] sm:$0xff]
        %v2371 = vld [vmem:[%s3 + $0x490] sm:$0xff]
        %v2372 = vld [vmem:[%s3 + $0x498] sm:$0xff]
        %v2373 = vld [vmem:[%s3 + $0x4a0] sm:$0xff]
        %v2374 = vld [vmem:[%s3 + $0x4a8] sm:$0xff]
        %v2375 = vld [vmem:[%s3 + $0x4b0] sm:$0xff]
        %v2376 = vld [vmem:[%s3 + $0x4b8] sm:$0xff]
        %v2377 = vld [vmem:[%s3 + $0x4c0] sm:$0xff]
        %v2378 = vld [vmem:[%s3 + $0x4c8] sm:$0xff]
        %v2379 = vld [vmem:[%s3 + $0x4d0] sm:$0xff]
        %v2380 = vld [vmem:[%s3 + $0x4d8] sm:$0xff]
        %v2381 = vld [vmem:[%s3 + $0x4e0] sm:$0xff]
        %v2382 = vld [vmem:[%s3 + $0x4e8] sm:$0xff]
        %v2383 = vld [vmem:[%s3 + $0x4f0] sm:$0xff]
        %v2384 = vld [vmem:[%s3 + $0x4f8] sm:$0xff]
        %v2385 = vld [vmem:[%s3 + $0x500] sm:$0xff]
        %v2386 = vld [vmem:[%s3 + $0x508] sm:$0xff]
        %v2387 = vld [vmem:[%s3 + $0x510] sm:$0xff]
        %v2388 = vld [vmem:[%s3 + $0x518] sm:$0xff]
        %v2389 = vld [vmem:[%s3 + $0x520] sm:$0xff]
        %v2390 = vld [vmem:[%s3 + $0x528] sm:$0xff]
        %v2391 = vld [vmem:[%s3 + $0x530] sm:$0xff]
        %v2392 = vld [vmem:[%s3 + $0x538] sm:$0xff]
        %v2393 = vld [vmem:[%s3 + $0x540] sm:$0xff]
        %v2394 = vld [vmem:[%s3 + $0x548] sm:$0xff]
        %v2395 = vld [vmem:[%s3 + $0x550] sm:$0xff]
        %v2396 = vld [vmem:[%s3 + $0x558] sm:$0xff]
        %v2397 = vld [vmem:[%s3 + $0x560] sm:$0xff]
        %v2398 = vld [vmem:[%s3 + $0x568] sm:$0xff]
        %v2399 = vld [vmem:[%s3 + $0x570] sm:$0xff]
        %v2400 = vld [vmem:[%s3 + $0x578] sm:$0xff]
        %v2401 = vld [vmem:[%s3 + $0x580] sm:$0xff]
        %v2402 = vld [vmem:[%s3 + $0x588] sm:$0xff]
        %v2403 = vld [vmem:[%s3 + $0x590] sm:$0xff]
        %v2404 = vld [vmem:[%s3 + $0x598] sm:$0xff]
        %v2405 = vld [vmem:[%s3 + $0x5a0] sm:$0xff]
        %v2406 = vld [vmem:[%s3 + $0x5a8] sm:$0xff]
        %v2407 = vld [vmem:[%s3 + $0x5b0] sm:$0xff]
        %v2408 = vld [vmem:[%s3 + $0x5b8] sm:$0xff]
        %v2409 = vld [vmem:[%s3 + $0x5c0] sm:$0xff]
        %v2410 = vld [vmem:[%s3 + $0x5c8] sm:$0xff]
        %v2411 = vld [vmem:[%s3 + $0x5d0] sm:$0xff]
        %v2412 = vld [vmem:[%s3 + $0x5d8] sm:$0xff]
        %v2413 = vld [vmem:[%s3 + $0x5e0] sm:$0xff]
        %v2414 = vld [vmem:[%s3 + $0x5e8] sm:$0xff]
        %v2415 = vld [vmem:[%s3 + $0x5f0] sm:$0xff]
        %v2416 = vld [vmem:[%s3 + $0x5f8] sm:$0xff]
        %v2417 = vld [vmem:[%s3 + $0x600] sm:$0xff]
        %v2418 = vld [vmem:[%s3 + $0x608] sm:$0xff]
        %v2419 = vld [vmem:[%s3 + $0x610] sm:$0xff]
        %v2420 = vld [vmem:[%s3 + $0x618] sm:$0xff]
        %v2421 = vld [vmem:[%s3 + $0x620] sm:$0xff]
        %v2422 = vld [vmem:[%s3 + $0x628] sm:$0xff]
        %v2423 = vld [vmem:[%s3 + $0x630] sm:$0xff]
        %v2424 = vld [vmem:[%s3 + $0x638] sm:$0xff]
        %v2425 = vld [vmem:[%s4] sm:$0xff]
        %v2426 = vld [vmem:[%s4 + $0x8] sm:$0xff]
        %v2427 = vld [vmem:[%s4 + $0x10] sm:$0xff]
        %v2428 = vld [vmem:[%s4 + $0x18] sm:$0xff]
        %v2429 = vld [vmem:[%s4 + $0x20] sm:$0xff]
        %v2430 = vld [vmem:[%s4 + $0x28] sm:$0xff]
        %v2431 = vld [vmem:[%s4 + $0x30] sm:$0xff]
        %v2432 = vld [vmem:[%s4 + $0x38] sm:$0xff]
        %v2433 = vld [vmem:[%s4 + $0x40] sm:$0xff]
        %v2434 = vld [vmem:[%s4 + $0x48] sm:$0xff]
        %v2435 = vld [vmem:[%s4 + $0x50] sm:$0xff]
        %v2436 = vld [vmem:[%s4 + $0x58] sm:$0xff]
        %v2437 = vld [vmem:[%s4 + $0x60] sm:$0xff]
        %v2438 = vld [vmem:[%s4 + $0x68] sm:$0xff]
        %v2439 = vld [vmem:[%s4 + $0x70] sm:$0xff]
        %v2440 = vld [vmem:[%s4 + $0x78] sm:$0xff]
        %v2441 = vld [vmem:[%s4 + $0x80] sm:$0xff]
        %v2442 = vld [vmem:[%s4 + $0x88] sm:$0xff]
        %v2443 = vld [vmem:[%s4 + $0x90] sm:$0xff]
        %v2444 = vld [vmem:[%s4 + $0x98] sm:$0xff]
        %v2445 = vld [vmem:[%s4 + $0xa0] sm:$0xff]
        %v2446 = vld [vmem:[%s4 + $0xa8] sm:$0xff]
        %v2447 = vld [vmem:[%s4 + $0xb0] sm:$0xff]
        %v2448 = vld [vmem:[%s4 + $0xb8] sm:$0xff]
        %v2449 = vld [vmem:[%s4 + $0xc0] sm:$0xff]
        %v2450 = vld [vmem:[%s4 + $0xc8] sm:$0xff]
        %v2451 = vld [vmem:[%s4 + $0xd0] sm:$0xff]
        %v2452 = vld [vmem:[%s4 + $0xd8] sm:$0xff]
        %v2453 = vld [vmem:[%s4 + $0xe0] sm:$0xff]
        %v2454 = vld [vmem:[%s4 + $0xe8] sm:$0xff]
        %v2455 = vld [vmem:[%s4 + $0xf0] sm:$0xff]
        %v2456 = vld [vmem:[%s4 + $0xf8] sm:$0xff]
        %v2457 = vld [vmem:[%s4 + $0x100] sm:$0xff]
        %v2458 = vld [vmem:[%s4 + $0x108] sm:$0xff]
        %v2459 = vld [vmem:[%s4 + $0x110] sm:$0xff]
        %v2460 = vld [vmem:[%s4 + $0x118] sm:$0xff]
        %v2461 = vld [vmem:[%s4 + $0x120] sm:$0xff]
        %v2462 = vld [vmem:[%s4 + $0x128] sm:$0xff]
        %v2463 = vld [vmem:[%s4 + $0x130] sm:$0xff]
        %v2464 = vld [vmem:[%s4 + $0x138] sm:$0xff]
        %v2465 = vld [vmem:[%s4 + $0x140] sm:$0xff]
        %v2466 = vld [vmem:[%s4 + $0x148] sm:$0xff]
        %v2467 = vld [vmem:[%s4 + $0x150] sm:$0xff]
        %v2468 = vld [vmem:[%s4 + $0x158] sm:$0xff]
        %v2469 = vld [vmem:[%s4 + $0x160] sm:$0xff]
        %v2470 = vld [vmem:[%s4 + $0x168] sm:$0xff]
        %v2471 = vld [vmem:[%s4 + $0x170] sm:$0xff]
        %v2472 = vld [vmem:[%s4 + $0x178] sm:$0xff]
        %v2473 = vld [vmem:[%s4 + $0x180] sm:$0xff]
        %v2474 = vld [vmem:[%s4 + $0x188] sm:$0xff]
        %2476 = vset.pattern.permute.xlu0 0
        %2477 = vperm.xlu0 %2476, %v2425
        %v2478 = vpop.permute.xlu0 %2477
        %2481 = vset.pattern.permute.xlu0 0
        %2482 = vperm.xlu0 %2481, %v2426
        %v2483 = vpop.permute.xlu0 %2482
        %2486 = vset.pattern.permute.xlu0 0
        %2487 = vperm.xlu0 %2486, %v2427
        %v2488 = vpop.permute.xlu0 %2487
        %2491 = vset.pattern.permute.xlu0 0
        %2492 = vperm.xlu0 %2491, %v2428
        %v2493 = vpop.permute.xlu0 %2492
        %2496 = vset.pattern.permute.xlu0 0
        %2497 = vperm.xlu0 %2496, %v2429
        %v2498 = vpop.permute.xlu0 %2497
        %2501 = vset.pattern.permute.xlu0 0
        %2502 = vperm.xlu0 %2501, %v2430
        %v2503 = vpop.permute.xlu0 %2502
        %2506 = vset.pattern.permute.xlu0 0
        %2507 = vperm.xlu0 %2506, %v2431
        %v2508 = vpop.permute.xlu0 %2507
        %2511 = vset.pattern.permute.xlu0 0
        %2512 = vperm.xlu0 %2511, %v2432
        %v2513 = vpop.permute.xlu0 %2512
        %2516 = vset.pattern.permute.xlu0 0
        %2517 = vperm.xlu0 %2516, %v2433
        %v2518 = vpop.permute.xlu0 %2517
        %2521 = vset.pattern.permute.xlu0 0
        %2522 = vperm.xlu0 %2521, %v2434
        %v2523 = vpop.permute.xlu0 %2522
        %2526 = vset.pattern.permute.xlu0 0
        %2527 = vperm.xlu0 %2526, %v2435
        %v2528 = vpop.permute.xlu0 %2527
        %2531 = vset.pattern.permute.xlu0 0
        %2532 = vperm.xlu0 %2531, %v2436
        %v2533 = vpop.permute.xlu0 %2532
        %2536 = vset.pattern.permute.xlu0 0
        %2537 = vperm.xlu0 %2536, %v2437
        %v2538 = vpop.permute.xlu0 %2537
        %2541 = vset.pattern.permute.xlu0 0
        %2542 = vperm.xlu0 %2541, %v2438
        %v2543 = vpop.permute.xlu0 %2542
        %2546 = vset.pattern.permute.xlu0 0
        %2547 = vperm.xlu0 %2546, %v2439
        %v2548 = vpop.permute.xlu0 %2547
        %2551 = vset.pattern.permute.xlu0 0
        %2552 = vperm.xlu0 %2551, %v2440
        %v2553 = vpop.permute.xlu0 %2552
        %2556 = vset.pattern.permute.xlu0 0
        %2557 = vperm.xlu0 %2556, %v2441
        %v2558 = vpop.permute.xlu0 %2557
        %2561 = vset.pattern.permute.xlu0 0
        %2562 = vperm.xlu0 %2561, %v2442
        %v2563 = vpop.permute.xlu0 %2562
        %2566 = vset.pattern.permute.xlu0 0
        %2567 = vperm.xlu0 %2566, %v2443
        %v2568 = vpop.permute.xlu0 %2567
        %2571 = vset.pattern.permute.xlu0 0
        %2572 = vperm.xlu0 %2571, %v2444
        %v2573 = vpop.permute.xlu0 %2572
        %2576 = vset.pattern.permute.xlu0 0
        %2577 = vperm.xlu0 %2576, %v2445
        %v2578 = vpop.permute.xlu0 %2577
        %2581 = vset.pattern.permute.xlu0 0
        %2582 = vperm.xlu0 %2581, %v2446
        %v2583 = vpop.permute.xlu0 %2582
        %2586 = vset.pattern.permute.xlu0 0
        %2587 = vperm.xlu0 %2586, %v2447
        %v2588 = vpop.permute.xlu0 %2587
        %2591 = vset.pattern.permute.xlu0 0
        %2592 = vperm.xlu0 %2591, %v2448
        %v2593 = vpop.permute.xlu0 %2592
        %2596 = vset.pattern.permute.xlu0 0
        %2597 = vperm.xlu0 %2596, %v2449
        %v2598 = vpop.permute.xlu0 %2597
        %2601 = vset.pattern.permute.xlu0 0
        %2602 = vperm.xlu0 %2601, %v2450
        %v2603 = vpop.permute.xlu0 %2602
        %2606 = vset.pattern.permute.xlu0 0
        %2607 = vperm.xlu0 %2606, %v2451
        %v2608 = vpop.permute.xlu0 %2607
        %2611 = vset.pattern.permute.xlu0 0
        %2612 = vperm.xlu0 %2611, %v2452
        %v2613 = vpop.permute.xlu0 %2612
        %2616 = vset.pattern.permute.xlu0 0
        %2617 = vperm.xlu0 %2616, %v2453
        %v2618 = vpop.permute.xlu0 %2617
        %2621 = vset.pattern.permute.xlu0 0
        %2622 = vperm.xlu0 %2621, %v2454
        %v2623 = vpop.permute.xlu0 %2622
        %2626 = vset.pattern.permute.xlu0 0
        %2627 = vperm.xlu0 %2626, %v2455
        %v2628 = vpop.permute.xlu0 %2627
        %2631 = vset.pattern.permute.xlu0 0
        %2632 = vperm.xlu0 %2631, %v2456
        %v2633 = vpop.permute.xlu0 %2632
        %2636 = vset.pattern.permute.xlu0 0
        %2637 = vperm.xlu0 %2636, %v2457
        %v2638 = vpop.permute.xlu0 %2637
        %2641 = vset.pattern.permute.xlu0 0
        %2642 = vperm.xlu0 %2641, %v2458
        %v2643 = vpop.permute.xlu0 %2642
        %2646 = vset.pattern.permute.xlu0 0
        %2647 = vperm.xlu0 %2646, %v2459
        %v2648 = vpop.permute.xlu0 %2647
        %2651 = vset.pattern.permute.xlu0 0
        %2652 = vperm.xlu0 %2651, %v2460
        %v2653 = vpop.permute.xlu0 %2652
        %2656 = vset.pattern.permute.xlu0 0
        %2657 = vperm.xlu0 %2656, %v2461
        %v2658 = vpop.permute.xlu0 %2657
        %2661 = vset.pattern.permute.xlu0 0
        %2662 = vperm.xlu0 %2661, %v2462
        %v2663 = vpop.permute.xlu0 %2662
        %2666 = vset.pattern.permute.xlu0 0
        %2667 = vperm.xlu0 %2666, %v2463
        %v2668 = vpop.permute.xlu0 %2667
        %2671 = vset.pattern.permute.xlu0 0
        %2672 = vperm.xlu0 %2671, %v2464
        %v2673 = vpop.permute.xlu0 %2672
        %2676 = vset.pattern.permute.xlu0 0
        %2677 = vperm.xlu0 %2676, %v2465
        %v2678 = vpop.permute.xlu0 %2677
        %2681 = vset.pattern.permute.xlu0 0
        %2682 = vperm.xlu0 %2681, %v2466
        %v2683 = vpop.permute.xlu0 %2682
        %2686 = vset.pattern.permute.xlu0 0
        %2687 = vperm.xlu0 %2686, %v2467
        %v2688 = vpop.permute.xlu0 %2687
        %2691 = vset.pattern.permute.xlu0 0
        %2692 = vperm.xlu0 %2691, %v2468
        %v2693 = vpop.permute.xlu0 %2692
        %2696 = vset.pattern.permute.xlu0 0
        %2697 = vperm.xlu0 %2696, %v2469
        %v2698 = vpop.permute.xlu0 %2697
        %2701 = vset.pattern.permute.xlu0 0
        %2702 = vperm.xlu0 %2701, %v2470
        %v2703 = vpop.permute.xlu0 %2702
        %2706 = vset.pattern.permute.xlu0 0
        %2707 = vperm.xlu0 %2706, %v2471
        %v2708 = vpop.permute.xlu0 %2707
        %2711 = vset.pattern.permute.xlu0 0
        %2712 = vperm.xlu0 %2711, %v2472
        %v2713 = vpop.permute.xlu0 %2712
        %2716 = vset.pattern.permute.xlu0 0
        %2717 = vperm.xlu0 %2716, %v2473
        %v2718 = vpop.permute.xlu0 %2717
        %2721 = vset.pattern.permute.xlu0 0
        %2722 = vperm.xlu0 %2721, %v2474
        %v2723 = vpop.permute.xlu0 %2722
        %vm2725 = vcmask 130048
        %v2727 = vsel %vm2725, %v2228, 0
        %v2730 = vsel %vm2725, %v2232, 0
        %v2733 = vsel %vm2725, %v2236, 0
        %v2736 = vsel %vm2725, %v2240, 0
        %v2739 = vsel %vm2725, %v2244, 0
        %v2742 = vsel %vm2725, %v2248, 0
        %v2745 = vsel %vm2725, %v2252, 0
        %v2748 = vsel %vm2725, %v2256, 0
        %v2751 = vsel %vm2725, %v2260, 0
        %v2754 = vsel %vm2725, %v2264, 0
        %v2757 = vsel %vm2725, %v2268, 0
        %v2760 = vsel %vm2725, %v2272, 0
        %v2763 = vsel %vm2725, %v2276, 0
        %v2766 = vsel %vm2725, %v2280, 0
        %v2769 = vsel %vm2725, %v2284, 0
        %v2772 = vsel %vm2725, %v2288, 0
        %v2775 = vsel %vm2725, %v2292, 0
        %v2778 = vsel %vm2725, %v2296, 0
        %v2781 = vsel %vm2725, %v2300, 0
        %v2784 = vsel %vm2725, %v2304, 0
        %v2787 = vsel %vm2725, %v2308, 0
        %v2790 = vsel %vm2725, %v2312, 0
        %v2793 = vsel %vm2725, %v2316, 0
        %v2796 = vsel %vm2725, %v2320, 0
        %v2799 = vsel %vm2725, %v2324, 0
        %v2802 = vsel %vm2725, %v2328, 0
        %v2805 = vsel %vm2725, %v2332, 0
        %v2808 = vsel %vm2725, %v2336, 0
        %v2811 = vsel %vm2725, %v2340, 0
        %v2814 = vsel %vm2725, %v2344, 0
        %v2817 = vsel %vm2725, %v2348, 0
        %v2820 = vsel %vm2725, %v2352, 0
        %v2823 = vsel %vm2725, %v2356, 0
        %v2826 = vsel %vm2725, %v2360, 0
        %v2829 = vsel %vm2725, %v2364, 0
        %v2832 = vsel %vm2725, %v2368, 0
        %v2835 = vsel %vm2725, %v2372, 0
        %v2838 = vsel %vm2725, %v2376, 0
        %v2841 = vsel %vm2725, %v2380, 0
        %v2844 = vsel %vm2725, %v2384, 0
        %v2847 = vsel %vm2725, %v2388, 0
        %v2850 = vsel %vm2725, %v2392, 0
        %v2853 = vsel %vm2725, %v2396, 0
        %v2856 = vsel %vm2725, %v2400, 0
        %v2859 = vsel %vm2725, %v2404, 0
        %v2862 = vsel %vm2725, %v2408, 0
        %v2865 = vsel %vm2725, %v2412, 0
        %v2868 = vsel %vm2725, %v2416, 0
        %v2871 = vsel %vm2725, %v2420, 0
        %v2874 = vsel %vm2725, %v2424, 0
        %2876 = vmatprep.subr.mxu0 %v2026
        %2877 = vmatpush1.msra.mxu0 %v2025
        %2878 = vmatprep.subr.mxu0 %v2030
        %2879 = vmatpush1.msra.mxu0 %v2029
        %2880 = vmatprep.subr.mxu0 %v2034
        %2881 = vmatpush1.msra.mxu0 %v2033
        %2882 = vmatprep.subr.mxu0 %v2038
        %2883 = vmatpush1.msra.mxu0 %v2037
        %2884 = vmatprep.subr.mxu0 %v2042
        %2885 = vmatpush1.msra.mxu0 %v2041
        %2886 = vmatprep.subr.mxu0 %v2046
        %2887 = vmatpush1.msra.mxu0 %v2045
        %2888 = vmatprep.subr.mxu0 %v2050
        %2889 = vmatpush1.msra.mxu0 %v2049
        %2890 = vmatprep.subr.mxu0 %v2054
        %2891 = vmatpush1.msra.mxu0 %v2053
        %2892 = vmatprep.subr.mxu0 %v2058
        %2893 = vmatpush1.msra.mxu0 %v2057
        %2894 = vmatprep.subr.mxu0 %v2062
        %2895 = vmatpush1.msra.mxu0 %v2061
        %2896 = vmatprep.subr.mxu0 %v2066
        %2897 = vmatpush1.msra.mxu0 %v2065
        %2898 = vmatprep.subr.mxu0 %v2070
        %2899 = vmatpush1.msra.mxu0 %v2069
        %2900 = vmatprep.subr.mxu0 %v2074
        %2901 = vmatpush1.msra.mxu0 %v2073
        %2902 = vmatprep.subr.mxu0 %v2078
        %2903 = vmatpush1.msra.mxu0 %v2077
        %2904 = vmatprep.subr.mxu0 %v2082
        %2905 = vmatpush1.msra.mxu0 %v2081
        %2906 = vmatprep.subr.mxu0 %v2086
        %2907 = vmatpush1.msra.mxu0 %v2085
        %2908 = vmatprep.subr.mxu0 %v2090
        %2909 = vmatpush1.msra.mxu0 %v2089
        %2910 = vmatprep.subr.mxu0 %v2094
        %2911 = vmatpush1.msra.mxu0 %v2093
        %2912 = vmatprep.subr.mxu0 %v2098
        %2913 = vmatpush1.msra.mxu0 %v2097
        %2914 = vmatprep.subr.mxu0 %v2102
        %2915 = vmatpush1.msra.mxu0 %v2101
        %2916 = vmatprep.subr.mxu0 %v2106
        %2917 = vmatpush1.msra.mxu0 %v2105
        %2918 = vmatprep.subr.mxu0 %v2110
        %2919 = vmatpush1.msra.mxu0 %v2109
        %2920 = vmatprep.subr.mxu0 %v2114
        %2921 = vmatpush1.msra.mxu0 %v2113
        %2922 = vmatprep.subr.mxu0 %v2118
        %2923 = vmatpush1.msra.mxu0 %v2117
        %2924 = vmatprep.subr.mxu0 %v2122
        %2925 = vmatpush1.msra.mxu0 %v2121
        %2926 = vmatprep.subr.mxu0 %v2126
        %2927 = vmatpush1.msra.mxu0 %v2125
        %2928 = vmatprep.subr.mxu0 %v2130
        %2929 = vmatpush1.msra.mxu0 %v2129
        %2930 = vmatprep.subr.mxu0 %v2134
        %2931 = vmatpush1.msra.mxu0 %v2133
        %2932 = vmatprep.subr.mxu0 %v2138
        %2933 = vmatpush1.msra.mxu0 %v2137
        %2934 = vmatprep.subr.mxu0 %v2142
        %2935 = vmatpush1.msra.mxu0 %v2141
        %2936 = vmatprep.subr.mxu0 %v2146
        %2937 = vmatpush1.msra.mxu0 %v2145
        %2938 = vmatprep.subr.mxu0 %v2150
        %2939 = vmatpush1.msra.mxu0 %v2149
        %2940 = vmatprep.mubr.f32.mxu0 %v2226
        %2941 = vmatmul.mubr.f32.gmra.mrb[0].mxu0 %v2225
        %v2942 = vpop.f32.mrb[0].mxu0
        %v2943 = vadd.f32 %v2478, %v2942
        %v2944 = vpop.f32.mrb[0].mxu0
        %v2945 = vadd.f32 %v2478, %v2944
        %2946 = vmatprep.mubr.f32.mxu0 %v2230
        %2947 = vmatmul.mubr.f32.gmra.mrb[0].mxu0 %v2229
        %v2948 = vpop.f32.mrb[0].mxu0
        %v2949 = vadd.f32 %v2483, %v2948
        %v2950 = vpop.f32.mrb[0].mxu0
        %v2951 = vadd.f32 %v2483, %v2950
        %2952 = vmatprep.mubr.f32.mxu0 %v2234
        %2953 = vmatmul.mubr.f32.gmra.mrb[0].mxu0 %v2233
        %v2954 = vpop.f32.mrb[0].mxu0
        %v2955 = vadd.f32 %v2488, %v2954
        %v2956 = vpop.f32.mrb[0].mxu0
        %v2957 = vadd.f32 %v2488, %v2956
        %2958 = vmatprep.mubr.f32.mxu0 %v2238
        %2959 = vmatmul.mubr.f32.gmra.mrb[0].mxu0 %v2237
        %v2960 = vpop.f32.mrb[0].mxu0
        %v2961 = vadd.f32 %v2493, %v2960
        %v2962 = vpop.f32.mrb[0].mxu0
        %v2963 = vadd.f32 %v2493, %v2962
        %2964 = vmatprep.mubr.f32.mxu0 %v2242
        %2965 = vmatmul.mubr.f32.gmra.mrb[0].mxu0 %v2241
        %v2966 = vpop.f32.mrb[0].mxu0
        %v2967 = vadd.f32 %v2498, %v2966
        %v2968 = vpop.f32.mrb[0].mxu0
        %v2969 = vadd.f32 %v2498, %v2968
        %2970 = vmatprep.mubr.f32.mxu0 %v2246
        %2971 = vmatmul.mubr.f32.gmra.mrb[0].mxu0 %v2245
        %v2972 = vpop.f32.mrb[0].mxu0
        %v2973 = vadd.f32 %v2503, %v2972
        %v2974 = vpop.f32.mrb[0].mxu0
        %v2975 = vadd.f32 %v2503, %v2974
        %2976 = vmatprep.mubr.f32.mxu0 %v2250
        %2977 = vmatmul.mubr.f32.gmra.mrb[0].mxu0 %v2249
        %v2978 = vpop.f32.mrb[0].mxu0
        %v2979 = vadd.f32 %v2508, %v2978
        %v2980 = vpop.f32.mrb[0].mxu0
        %v2981 = vadd.f32 %v2508, %v2980
        %2982 = vmatprep.mubr.f32.mxu0 %v2254
        %2983 = vmatmul.mubr.f32.gmra.mrb[0].mxu0 %v2253
        %v2984 = vpop.f32.mrb[0].mxu0
        %v2985 = vadd.f32 %v2513, %v2984
        %v2986 = vpop.f32.mrb[0].mxu0
        %v2987 = vadd.f32 %v2513, %v2986
        %2988 = vmatprep.mubr.f32.mxu0 %v2258
        %2989 = vmatmul.mubr.f32.gmra.mrb[0].mxu0 %v2257
        %v2990 = vpop.f32.mrb[0].mxu0
        %v2991 = vadd.f32 %v2518, %v2990
        %v2992 = vpop.f32.mrb[0].mxu0
        %v2993 = vadd.f32 %v2518, %v2992
        %2994 = vmatprep.mubr.f32.mxu0 %v2262
        %2995 = vmatmul.mubr.f32.gmra.mrb[0].mxu0 %v2261
        %v2996 = vpop.f32.mrb[0].mxu0
        %v2997 = vadd.f32 %v2523, %v2996
        %v2998 = vpop.f32.mrb[0].mxu0
        %v2999 = vadd.f32 %v2523, %v2998
        %3000 = vmatprep.mubr.f32.mxu0 %v2266
        %3001 = vmatmul.mubr.f32.gmra.mrb[0].mxu0 %v2265
        %v3002 = vpop.f32.mrb[0].mxu0
        %v3003 = vadd.f32 %v2528, %v3002
        %v3004 = vpop.f32.mrb[0].mxu0
        %v3005 = vadd.f32 %v2528, %v3004
        %3006 = vmatprep.mubr.f32.mxu0 %v2270
        %3007 = vmatmul.mubr.f32.gmra.mrb[0].mxu0 %v2269
        %v3008 = vpop.f32.mrb[0].mxu0
        %v3009 = vadd.f32 %v2533, %v3008
        %v3010 = vpop.f32.mrb[0].mxu0
        %v3011 = vadd.f32 %v2533, %v3010
        %3012 = vmatprep.mubr.f32.mxu0 %v2274
        %3013 = vmatmul.mubr.f32.gmra.mrb[0].mxu0 %v2273
        %v3014 = vpop.f32.mrb[0].mxu0
        %v3015 = vadd.f32 %v2538, %v3014
        %v3016 = vpop.f32.mrb[0].mxu0
        %v3017 = vadd.f32 %v2538, %v3016
        %3018 = vmatprep.mubr.f32.mxu0 %v2278
        %3019 = vmatmul.mubr.f32.gmra.mrb[0].mxu0 %v2277
        %v3020 = vpop.f32.mrb[0].mxu0
        %v3021 = vadd.f32 %v2543, %v3020
        %v3022 = vpop.f32.mrb[0].mxu0
        %v3023 = vadd.f32 %v2543, %v3022
        %3024 = vmatprep.mubr.f32.mxu0 %v2282
        %3025 = vmatmul.mubr.f32.gmra.mrb[0].mxu0 %v2281
        %v3026 = vpop.f32.mrb[0].mxu0
        %v3027 = vadd.f32 %v2548, %v3026
        %v3028 = vpop.f32.mrb[0].mxu0
        %v3029 = vadd.f32 %v2548, %v3028
        %3030 = vmatprep.mubr.f32.mxu0 %v2286
        %3031 = vmatmul.mubr.f32.gmra.mrb[0].mxu0 %v2285
        %v3032 = vpop.f32.mrb[0].mxu0
        %v3033 = vadd.f32 %v2553, %v3032
        %v3034 = vpop.f32.mrb[0].mxu0
        %v3035 = vadd.f32 %v2553, %v3034
        %3036 = vmatprep.mubr.f32.mxu0 %v2290
        %3037 = vmatmul.mubr.f32.gmra.mrb[0].mxu0 %v2289
        %v3038 = vpop.f32.mrb[0].mxu0
        %v3039 = vadd.f32 %v2558, %v3038
        %v3040 = vpop.f32.mrb[0].mxu0
        %v3041 = vadd.f32 %v2558, %v3040
        %3042 = vmatprep.mubr.f32.mxu0 %v2294
        %3043 = vmatmul.mubr.f32.gmra.mrb[0].mxu0 %v2293
        %v3044 = vpop.f32.mrb[0].mxu0
        %v3045 = vadd.f32 %v2563, %v3044
        %v3046 = vpop.f32.mrb[0].mxu0
        %v3047 = vadd.f32 %v2563, %v3046
        %3048 = vmatprep.mubr.f32.mxu0 %v2298
        %3049 = vmatmul.mubr.f32.gmra.mrb[0].mxu0 %v2297
        %v3050 = vpop.f32.mrb[0].mxu0
        %v3051 = vadd.f32 %v2568, %v3050
        %v3052 = vpop.f32.mrb[0].mxu0
        %v3053 = vadd.f32 %v2568, %v3052
        %3054 = vmatprep.mubr.f32.mxu0 %v2302
        %3055 = vmatmul.mubr.f32.gmra.mrb[0].mxu0 %v2301
        %v3056 = vpop.f32.mrb[0].mxu0
        %v3057 = vadd.f32 %v2573, %v3056
        %v3058 = vpop.f32.mrb[0].mxu0
        %v3059 = vadd.f32 %v2573, %v3058
        %3060 = vmatprep.mubr.f32.mxu0 %v2306
        %3061 = vmatmul.mubr.f32.gmra.mrb[0].mxu0 %v2305
        %v3062 = vpop.f32.mrb[0].mxu0
        %v3063 = vadd.f32 %v2578, %v3062
        %v3064 = vpop.f32.mrb[0].mxu0
        %v3065 = vadd.f32 %v2578, %v3064
        %3066 = vmatprep.mubr.f32.mxu0 %v2310
        %3067 = vmatmul.mubr.f32.gmra.mrb[0].mxu0 %v2309
        %v3068 = vpop.f32.mrb[0].mxu0
        %v3069 = vadd.f32 %v2583, %v3068
        %v3070 = vpop.f32.mrb[0].mxu0
        %v3071 = vadd.f32 %v2583, %v3070
        %3072 = vmatprep.mubr.f32.mxu0 %v2314
        %3073 = vmatmul.mubr.f32.gmra.mrb[0].mxu0 %v2313
        %v3074 = vpop.f32.mrb[0].mxu0
        %v3075 = vadd.f32 %v2588, %v3074
        %v3076 = vpop.f32.mrb[0].mxu0
        %v3077 = vadd.f32 %v2588, %v3076
        %3078 = vmatprep.mubr.f32.mxu0 %v2318
        %3079 = vmatmul.mubr.f32.gmra.mrb[0].mxu0 %v2317
        %v3080 = vpop.f32.mrb[0].mxu0
        %v3081 = vadd.f32 %v2593, %v3080
        %v3082 = vpop.f32.mrb[0].mxu0
        %v3083 = vadd.f32 %v2593, %v3082
        %3084 = vmatprep.mubr.f32.mxu0 %v2322
        %3085 = vmatmul.mubr.f32.gmra.mrb[0].mxu0 %v2321
        %v3086 = vpop.f32.mrb[0].mxu0
        %v3087 = vadd.f32 %v2598, %v3086
        %v3088 = vpop.f32.mrb[0].mxu0
        %v3089 = vadd.f32 %v2598, %v3088
        %3090 = vmatprep.mubr.f32.mxu0 %v2326
        %3091 = vmatmul.mubr.f32.gmra.mrb[0].mxu0 %v2325
        %v3092 = vpop.f32.mrb[0].mxu0
        %v3093 = vadd.f32 %v2603, %v3092
        %v3094 = vpop.f32.mrb[0].mxu0
        %v3095 = vadd.f32 %v2603, %v3094
        %3096 = vmatprep.mubr.f32.mxu0 %v2330
        %3097 = vmatmul.mubr.f32.gmra.mrb[0].mxu0 %v2329
        %v3098 = vpop.f32.mrb[0].mxu0
        %v3099 = vadd.f32 %v2608, %v3098
        %v3100 = vpop.f32.mrb[0].mxu0
        %v3101 = vadd.f32 %v2608, %v3100
        %3102 = vmatprep.mubr.f32.mxu0 %v2334
        %3103 = vmatmul.mubr.f32.gmra.mrb[0].mxu0 %v2333
        %v3104 = vpop.f32.mrb[0].mxu0
        %v3105 = vadd.f32 %v2613, %v3104
        %v3106 = vpop.f32.mrb[0].mxu0
        %v3107 = vadd.f32 %v2613, %v3106
        %3108 = vmatprep.mubr.f32.mxu0 %v2338
        %3109 = vmatmul.mubr.f32.gmra.mrb[0].mxu0 %v2337
        %v3110 = vpop.f32.mrb[0].mxu0
        %v3111 = vadd.f32 %v2618, %v3110
        %v3112 = vpop.f32.mrb[0].mxu0
        %v3113 = vadd.f32 %v2618, %v3112
        %3114 = vmatprep.mubr.f32.mxu0 %v2342
        %3115 = vmatmul.mubr.f32.gmra.mrb[0].mxu0 %v2341
        %v3116 = vpop.f32.mrb[0].mxu0
        %v3117 = vadd.f32 %v2623, %v3116
        %v3118 = vpop.f32.mrb[0].mxu0
        %v3119 = vadd.f32 %v2623, %v3118
        %3120 = vmatprep.mubr.f32.mxu0 %v2346
        %3121 = vmatmul.mubr.f32.gmra.mrb[0].mxu0 %v2345
        %v3122 = vpop.f32.mrb[0].mxu0
        %v3123 = vadd.f32 %v2628, %v3122
        %v3124 = vpop.f32.mrb[0].mxu0
        %v3125 = vadd.f32 %v2628, %v3124
        %3126 = vmatprep.mubr.f32.mxu0 %v2350
        %3127 = vmatmul.mubr.f32.gmra.mrb[0].mxu0 %v2349
        %v3128 = vpop.f32.mrb[0].mxu0
        %v3129 = vadd.f32 %v2633, %v3128
        %v3130 = vpop.f32.mrb[0].mxu0
        %v3131 = vadd.f32 %v2633, %v3130
        %3132 = vmatprep.mubr.f32.mxu0 %v2354
        %3133 = vmatmul.mubr.f32.gmra.mrb[0].mxu0 %v2353
        %v3134 = vpop.f32.mrb[0].mxu0
        %v3135 = vadd.f32 %v2638, %v3134
        %v3136 = vpop.f32.mrb[0].mxu0
        %v3137 = vadd.f32 %v2638, %v3136
        %3138 = vmatprep.mubr.f32.mxu0 %v2358
        %3139 = vmatmul.mubr.f32.gmra.mrb[0].mxu0 %v2357
        %v3140 = vpop.f32.mrb[0].mxu0
        %v3141 = vadd.f32 %v2643, %v3140
        %v3142 = vpop.f32.mrb[0].mxu0
        %v3143 = vadd.f32 %v2643, %v3142
        %3144 = vmatprep.mubr.f32.mxu0 %v2362
        %3145 = vmatmul.mubr.f32.gmra.mrb[0].mxu0 %v2361
        %v3146 = vpop.f32.mrb[0].mxu0
        %v3147 = vadd.f32 %v2648, %v3146
        %v3148 = vpop.f32.mrb[0].mxu0
        %v3149 = vadd.f32 %v2648, %v3148
        %3150 = vmatprep.mubr.f32.mxu0 %v2366
        %3151 = vmatmul.mubr.f32.gmra.mrb[0].mxu0 %v2365
        %v3152 = vpop.f32.mrb[0].mxu0
        %v3153 = vadd.f32 %v2653, %v3152
        %v3154 = vpop.f32.mrb[0].mxu0
        %v3155 = vadd.f32 %v2653, %v3154
        %3156 = vmatprep.mubr.f32.mxu0 %v2370
        %3157 = vmatmul.mubr.f32.gmra.mrb[0].mxu0 %v2369
        %v3158 = vpop.f32.mrb[0].mxu0
        %v3159 = vadd.f32 %v2658, %v3158
        %v3160 = vpop.f32.mrb[0].mxu0
        %v3161 = vadd.f32 %v2658, %v3160
        %3162 = vmatprep.mubr.f32.mxu0 %v2374
        %3163 = vmatmul.mubr.f32.gmra.mrb[0].mxu0 %v2373
        %v3164 = vpop.f32.mrb[0].mxu0
        %v3165 = vadd.f32 %v2663, %v3164
        %v3166 = vpop.f32.mrb[0].mxu0
        %v3167 = vadd.f32 %v2663, %v3166
        %3168 = vmatprep.mubr.f32.mxu0 %v2378
        %3169 = vmatmul.mubr.f32.gmra.mrb[0].mxu0 %v2377
        %v3170 = vpop.f32.mrb[0].mxu0
        %v3171 = vadd.f32 %v2668, %v3170
        %v3172 = vpop.f32.mrb[0].mxu0
        %v3173 = vadd.f32 %v2668, %v3172
        %3174 = vmatprep.mubr.f32.mxu0 %v2382
        %3175 = vmatmul.mubr.f32.gmra.mrb[0].mxu0 %v2381
        %v3176 = vpop.f32.mrb[0].mxu0
        %v3177 = vadd.f32 %v2673, %v3176
        %v3178 = vpop.f32.mrb[0].mxu0
        %v3179 = vadd.f32 %v2673, %v3178
        %3180 = vmatprep.mubr.f32.mxu0 %v2386
        %3181 = vmatmul.mubr.f32.gmra.mrb[0].mxu0 %v2385
        %v3182 = vpop.f32.mrb[0].mxu0
        %v3183 = vadd.f32 %v2678, %v3182
        %v3184 = vpop.f32.mrb[0].mxu0
        %v3185 = vadd.f32 %v2678, %v3184
        %3186 = vmatprep.mubr.f32.mxu0 %v2390
        %3187 = vmatmul.mubr.f32.gmra.mrb[0].mxu0 %v2389
        %v3188 = vpop.f32.mrb[0].mxu0
        %v3189 = vadd.f32 %v2683, %v3188
        %v3190 = vpop.f32.mrb[0].mxu0
        %v3191 = vadd.f32 %v2683, %v3190
        %3192 = vmatprep.mubr.f32.mxu0 %v2394
        %3193 = vmatmul.mubr.f32.gmra.mrb[0].mxu0 %v2393
        %v3194 = vpop.f32.mrb[0].mxu0
        %v3195 = vadd.f32 %v2688, %v3194
        %v3196 = vpop.f32.mrb[0].mxu0
        %v3197 = vadd.f32 %v2688, %v3196
        %3198 = vmatprep.mubr.f32.mxu0 %v2398
        %3199 = vmatmul.mubr.f32.gmra.mrb[0].mxu0 %v2397
        %v3200 = vpop.f32.mrb[0].mxu0
        %v3201 = vadd.f32 %v2693, %v3200
        %v3202 = vpop.f32.mrb[0].mxu0
        %v3203 = vadd.f32 %v2693, %v3202
        %3204 = vmatprep.mubr.f32.mxu0 %v2402
        %3205 = vmatmul.mubr.f32.gmra.mrb[0].mxu0 %v2401
        %v3206 = vpop.f32.mrb[0].mxu0
        %v3207 = vadd.f32 %v2698, %v3206
        %v3208 = vpop.f32.mrb[0].mxu0
        %v3209 = vadd.f32 %v2698, %v3208
        %3210 = vmatprep.mubr.f32.mxu0 %v2406
        %3211 = vmatmul.mubr.f32.gmra.mrb[0].mxu0 %v2405
        %v3212 = vpop.f32.mrb[0].mxu0
        %v3213 = vadd.f32 %v2703, %v3212
        %v3214 = vpop.f32.mrb[0].mxu0
        %v3215 = vadd.f32 %v2703, %v3214
        %3216 = vmatprep.mubr.f32.mxu0 %v2410
        %3217 = vmatmul.mubr.f32.gmra.mrb[0].mxu0 %v2409
        %v3218 = vpop.f32.mrb[0].mxu0
        %v3219 = vadd.f32 %v2708, %v3218
        %v3220 = vpop.f32.mrb[0].mxu0
        %v3221 = vadd.f32 %v2708, %v3220
        %3222 = vmatprep.mubr.f32.mxu0 %v2414
        %3223 = vmatmul.mubr.f32.gmra.mrb[0].mxu0 %v2413
        %v3224 = vpop.f32.mrb[0].mxu0
        %v3225 = vadd.f32 %v2713, %v3224
        %v3226 = vpop.f32.mrb[0].mxu0
        %v3227 = vadd.f32 %v2713, %v3226
        %3228 = vmatprep.mubr.f32.mxu0 %v2418
        %3229 = vmatmul.mubr.f32.gmra.mrb[0].mxu0 %v2417
        %v3230 = vpop.f32.mrb[0].mxu0
        %v3231 = vadd.f32 %v2718, %v3230
        %v3232 = vpop.f32.mrb[0].mxu0
        %v3233 = vadd.f32 %v2718, %v3232
        %3234 = vmatprep.mubr.f32.mxu0 %v2422
        %3235 = vmatmul.mubr.f32.gmra.mrb[0].mxu0 %v2421
        %v3236 = vpop.f32.mrb[0].mxu0
        %v3237 = vadd.f32 %v2723, %v3236
        %v3238 = vpop.f32.mrb[0].mxu0
        %v3239 = vadd.f32 %v2723, %v3238
        %3240 = vdwg.mxu0
        %3241 = vmatprep.subr.mxu0 %v2154
        %3242 = vmatpush1.msra.mxu0 %v2153
        %3243 = vmatprep.subr.mxu0 %v2158
        %3244 = vmatpush1.msra.mxu0 %v2157
        %3245 = vmatprep.subr.mxu0 %v2162
        %3246 = vmatpush1.msra.mxu0 %v2161
        %3247 = vmatprep.subr.mxu0 %v2166
        %3248 = vmatpush1.msra.mxu0 %v2165
        %3249 = vmatprep.subr.mxu0 %v2170
        %3250 = vmatpush1.msra.mxu0 %v2169
        %3251 = vmatprep.subr.mxu0 %v2174
        %3252 = vmatpush1.msra.mxu0 %v2173
        %3253 = vmatprep.subr.mxu0 %v2178
        %3254 = vmatpush1.msra.mxu0 %v2177
        %3255 = vmatprep.subr.mxu0 %v2182
        %3256 = vmatpush1.msra.mxu0 %v2181
        %3257 = vmatprep.subr.mxu0 %v2186
        %3258 = vmatpush1.msra.mxu0 %v2185
        %3259 = vmatprep.subr.mxu0 %v2190
        %3260 = vmatpush1.msra.mxu0 %v2189
        %3261 = vmatprep.subr.mxu0 %v2194
        %3262 = vmatpush1.msra.mxu0 %v2193
        %3263 = vmatprep.subr.mxu0 %v2198
        %3264 = vmatpush1.msra.mxu0 %v2197
        %3265 = vmatprep.subr.mxu0 %v2202
        %3266 = vmatpush1.msra.mxu0 %v2201
        %3267 = vmatprep.subr.mxu0 %v2206
        %3268 = vmatpush1.msra.mxu0 %v2205
        %3269 = vmatprep.subr.mxu0 %v2210
        %3270 = vmatpush1.msra.mxu0 %v2209
        %3271 = vmatprep.subr.mxu0 %v2214
        %3272 = vmatpush1.msra.mxu0 %v2213
        %3273 = vmatprep.subr.mxu0 %v2218
        %3274 = vmatpush1.msra.mxu0 %v2217
        %3275 = vmatprep.subr.mxu0 %v2222
        %3276 = vmatpush1.msra.mxu0 %v2221
        %3277 = vmatprep.subr.mxu0 0.0
        %3278 = vmatpush1.msra.mxu0 0.0
        %3279 = vmatprep.subr.mxu0 0.0
        %3280 = vmatpush1.msra.mxu0 0.0
        %3281 = vmatprep.subr.mxu0 0.0
        %3282 = vmatpush1.msra.mxu0 0.0
        %3283 = vmatprep.subr.mxu0 0.0
        %3284 = vmatpush1.msra.mxu0 0.0
        %3285 = vmatprep.subr.mxu0 0.0
        %3286 = vmatpush1.msra.mxu0 0.0
        %3287 = vmatprep.subr.mxu0 0.0
        %3288 = vmatpush1.msra.mxu0 0.0
        %3289 = vmatprep.subr.mxu0 0.0
        %3290 = vmatpush1.msra.mxu0 0.0
        %3291 = vmatprep.subr.mxu0 0.0
        %3292 = vmatpush1.msra.mxu0 0.0
        %3293 = vmatprep.subr.mxu0 0.0
        %3294 = vmatpush1.msra.mxu0 0.0
        %3295 = vmatprep.subr.mxu0 0.0
        %3296 = vmatpush1.msra.mxu0 0.0
        %3297 = vmatprep.subr.mxu0 0.0
        %3298 = vmatpush1.msra.mxu0 0.0
        %3299 = vmatprep.subr.mxu0 0.0
        %3300 = vmatpush1.msra.mxu0 0.0
        %3301 = vmatprep.subr.mxu0 0.0
        %3302 = vmatpush1.msra.mxu0 0.0
        %3303 = vmatprep.subr.mxu0 0.0
        %3304 = vmatpush1.msra.mxu0 0.0
        %3305 = vmatprep.mubr.f32.mxu0 %v2727
        %3306 = vmatmul.mubr.f32.gmra.mrb[0].mxu0 %v2227
        %v3307 = vpop.f32.mrb[0].mxu0
        %v3308 = vadd.f32 %v2943, %v3307
        %v3309 = vpop.f32.mrb[0].mxu0
        %v3310 = vadd.f32 %v2945, %v3309
        %3311 = vmatprep.mubr.f32.mxu0 %v2730
        %3312 = vmatmul.mubr.f32.gmra.mrb[0].mxu0 %v2231
        %v3313 = vpop.f32.mrb[0].mxu0
        %v3314 = vadd.f32 %v2949, %v3313
        %v3315 = vpop.f32.mrb[0].mxu0
        %v3316 = vadd.f32 %v2951, %v3315
        %3317 = vmatprep.mubr.f32.mxu0 %v2733
        %3318 = vmatmul.mubr.f32.gmra.mrb[0].mxu0 %v2235
        %v3319 = vpop.f32.mrb[0].mxu0
        %v3320 = vadd.f32 %v2955, %v3319
        %v3321 = vpop.f32.mrb[0].mxu0
        %v3322 = vadd.f32 %v2957, %v3321
        %3323 = vmatprep.mubr.f32.mxu0 %v2736
        %3324 = vmatmul.mubr.f32.gmra.mrb[0].mxu0 %v2239
        %v3325 = vpop.f32.mrb[0].mxu0
        %v3326 = vadd.f32 %v2961, %v3325
        %v3327 = vpop.f32.mrb[0].mxu0
        %v3328 = vadd.f32 %v2963, %v3327
        %3329 = vmatprep.mubr.f32.mxu0 %v2739
        %3330 = vmatmul.mubr.f32.gmra.mrb[0].mxu0 %v2243
        %v3331 = vpop.f32.mrb[0].mxu0
        %v3332 = vadd.f32 %v2967, %v3331
        %v3333 = vpop.f32.mrb[0].mxu0
        %v3334 = vadd.f32 %v2969, %v3333
        %3335 = vmatprep.mubr.f32.mxu0 %v2742
        %3336 = vmatmul.mubr.f32.gmra.mrb[0].mxu0 %v2247
        %v3337 = vpop.f32.mrb[0].mxu0
        %v3338 = vadd.f32 %v2973, %v3337
        %v3339 = vpop.f32.mrb[0].mxu0
        %v3340 = vadd.f32 %v2975, %v3339
        %3341 = vmatprep.mubr.f32.mxu0 %v2745
        %3342 = vmatmul.mubr.f32.gmra.mrb[0].mxu0 %v2251
        %v3343 = vpop.f32.mrb[0].mxu0
        %v3344 = vadd.f32 %v2979, %v3343
        %v3345 = vpop.f32.mrb[0].mxu0
        %v3346 = vadd.f32 %v2981, %v3345
        %3347 = vmatprep.mubr.f32.mxu0 %v2748
        %3348 = vmatmul.mubr.f32.gmra.mrb[0].mxu0 %v2255
        %v3349 = vpop.f32.mrb[0].mxu0
        %v3350 = vadd.f32 %v2985, %v3349
        %v3351 = vpop.f32.mrb[0].mxu0
        %v3352 = vadd.f32 %v2987, %v3351
        %3353 = vmatprep.mubr.f32.mxu0 %v2751
        %3354 = vmatmul.mubr.f32.gmra.mrb[0].mxu0 %v2259
        %v3355 = vpop.f32.mrb[0].mxu0
        %v3356 = vadd.f32 %v2991, %v3355
        %v3357 = vpop.f32.mrb[0].mxu0
        %v3358 = vadd.f32 %v2993, %v3357
        %3359 = vmatprep.mubr.f32.mxu0 %v2754
        %3360 = vmatmul.mubr.f32.gmra.mrb[0].mxu0 %v2263
        %v3361 = vpop.f32.mrb[0].mxu0
        %v3362 = vadd.f32 %v2997, %v3361
        %v3363 = vpop.f32.mrb[0].mxu0
        %v3364 = vadd.f32 %v2999, %v3363
        %3365 = vmatprep.mubr.f32.mxu0 %v2757
        %3366 = vmatmul.mubr.f32.gmra.mrb[0].mxu0 %v2267
        %v3367 = vpop.f32.mrb[0].mxu0
        %v3368 = vadd.f32 %v3003, %v3367
        %v3369 = vpop.f32.mrb[0].mxu0
        %v3370 = vadd.f32 %v3005, %v3369
        %3371 = vmatprep.mubr.f32.mxu0 %v2760
        %3372 = vmatmul.mubr.f32.gmra.mrb[0].mxu0 %v2271
        %v3373 = vpop.f32.mrb[0].mxu0
        %v3374 = vadd.f32 %v3009, %v3373
        %v3375 = vpop.f32.mrb[0].mxu0
        %v3376 = vadd.f32 %v3011, %v3375
        %3377 = vmatprep.mubr.f32.mxu0 %v2763
        %3378 = vmatmul.mubr.f32.gmra.mrb[0].mxu0 %v2275
        %v3379 = vpop.f32.mrb[0].mxu0
        %v3380 = vadd.f32 %v3015, %v3379
        %v3381 = vpop.f32.mrb[0].mxu0
        %v3382 = vadd.f32 %v3017, %v3381
        %3383 = vmatprep.mubr.f32.mxu0 %v2766
        %3384 = vmatmul.mubr.f32.gmra.mrb[0].mxu0 %v2279
        %v3385 = vpop.f32.mrb[0].mxu0
        %v3386 = vadd.f32 %v3021, %v3385
        %v3387 = vpop.f32.mrb[0].mxu0
        %v3388 = vadd.f32 %v3023, %v3387
        %3389 = vmatprep.mubr.f32.mxu0 %v2769
        %3390 = vmatmul.mubr.f32.gmra.mrb[0].mxu0 %v2283
        %v3391 = vpop.f32.mrb[0].mxu0
        %v3392 = vadd.f32 %v3027, %v3391
        %v3393 = vpop.f32.mrb[0].mxu0
        %v3394 = vadd.f32 %v3029, %v3393
        %3395 = vmatprep.mubr.f32.mxu0 %v2772
        %3396 = vmatmul.mubr.f32.gmra.mrb[0].mxu0 %v2287
        %v3397 = vpop.f32.mrb[0].mxu0
        %v3398 = vadd.f32 %v3033, %v3397
        %v3399 = vpop.f32.mrb[0].mxu0
        %v3400 = vadd.f32 %v3035, %v3399
        %3401 = vmatprep.mubr.f32.mxu0 %v2775
        %3402 = vmatmul.mubr.f32.gmra.mrb[0].mxu0 %v2291
        %v3403 = vpop.f32.mrb[0].mxu0
        %v3404 = vadd.f32 %v3039, %v3403
        %v3405 = vpop.f32.mrb[0].mxu0
        %v3406 = vadd.f32 %v3041, %v3405
        %3407 = vmatprep.mubr.f32.mxu0 %v2778
        %3408 = vmatmul.mubr.f32.gmra.mrb[0].mxu0 %v2295
        %v3409 = vpop.f32.mrb[0].mxu0
        %v3410 = vadd.f32 %v3045, %v3409
        %v3411 = vpop.f32.mrb[0].mxu0
        %v3412 = vadd.f32 %v3047, %v3411
        %3413 = vmatprep.mubr.f32.mxu0 %v2781
        %3414 = vmatmul.mubr.f32.gmra.mrb[0].mxu0 %v2299
        %v3415 = vpop.f32.mrb[0].mxu0
        %v3416 = vadd.f32 %v3051, %v3415
        %v3417 = vpop.f32.mrb[0].mxu0
        %v3418 = vadd.f32 %v3053, %v3417
        %3419 = vmatprep.mubr.f32.mxu0 %v2784
        %3420 = vmatmul.mubr.f32.gmra.mrb[0].mxu0 %v2303
        %v3421 = vpop.f32.mrb[0].mxu0
        %v3422 = vadd.f32 %v3057, %v3421
        %v3423 = vpop.f32.mrb[0].mxu0
        %v3424 = vadd.f32 %v3059, %v3423
        %3425 = vmatprep.mubr.f32.mxu0 %v2787
        %3426 = vmatmul.mubr.f32.gmra.mrb[0].mxu0 %v2307
        %v3427 = vpop.f32.mrb[0].mxu0
        %v3428 = vadd.f32 %v3063, %v3427
        %v3429 = vpop.f32.mrb[0].mxu0
        %v3430 = vadd.f32 %v3065, %v3429
        %3431 = vmatprep.mubr.f32.mxu0 %v2790
        %3432 = vmatmul.mubr.f32.gmra.mrb[0].mxu0 %v2311
        %v3433 = vpop.f32.mrb[0].mxu0
        %v3434 = vadd.f32 %v3069, %v3433
        %v3435 = vpop.f32.mrb[0].mxu0
        %v3436 = vadd.f32 %v3071, %v3435
        %3437 = vmatprep.mubr.f32.mxu0 %v2793
        %3438 = vmatmul.mubr.f32.gmra.mrb[0].mxu0 %v2315
        %v3439 = vpop.f32.mrb[0].mxu0
        %v3440 = vadd.f32 %v3075, %v3439
        %v3441 = vpop.f32.mrb[0].mxu0
        %v3442 = vadd.f32 %v3077, %v3441
        %3443 = vmatprep.mubr.f32.mxu0 %v2796
        %3444 = vmatmul.mubr.f32.gmra.mrb[0].mxu0 %v2319
        %v3445 = vpop.f32.mrb[0].mxu0
        %v3446 = vadd.f32 %v3081, %v3445
        %v3447 = vpop.f32.mrb[0].mxu0
        %v3448 = vadd.f32 %v3083, %v3447
        %3449 = vmatprep.mubr.f32.mxu0 %v2799
        %3450 = vmatmul.mubr.f32.gmra.mrb[0].mxu0 %v2323
        %v3451 = vpop.f32.mrb[0].mxu0
        %v3452 = vadd.f32 %v3087, %v3451
        %v3453 = vpop.f32.mrb[0].mxu0
        %v3454 = vadd.f32 %v3089, %v3453
        %3455 = vmatprep.mubr.f32.mxu0 %v2802
        %3456 = vmatmul.mubr.f32.gmra.mrb[0].mxu0 %v2327
        %v3457 = vpop.f32.mrb[0].mxu0
        %v3458 = vadd.f32 %v3093, %v3457
        %v3459 = vpop.f32.mrb[0].mxu0
        %v3460 = vadd.f32 %v3095, %v3459
        %3461 = vmatprep.mubr.f32.mxu0 %v2805
        %3462 = vmatmul.mubr.f32.gmra.mrb[0].mxu0 %v2331
        %v3463 = vpop.f32.mrb[0].mxu0
        %v3464 = vadd.f32 %v3099, %v3463
        %v3465 = vpop.f32.mrb[0].mxu0
        %v3466 = vadd.f32 %v3101, %v3465
        %3467 = vmatprep.mubr.f32.mxu0 %v2808
        %3468 = vmatmul.mubr.f32.gmra.mrb[0].mxu0 %v2335
        %v3469 = vpop.f32.mrb[0].mxu0
        %v3470 = vadd.f32 %v3105, %v3469
        %v3471 = vpop.f32.mrb[0].mxu0
        %v3472 = vadd.f32 %v3107, %v3471
        %3473 = vmatprep.mubr.f32.mxu0 %v2811
        %3474 = vmatmul.mubr.f32.gmra.mrb[0].mxu0 %v2339
        %v3475 = vpop.f32.mrb[0].mxu0
        %v3476 = vadd.f32 %v3111, %v3475
        %v3477 = vpop.f32.mrb[0].mxu0
        %v3478 = vadd.f32 %v3113, %v3477
        %3479 = vmatprep.mubr.f32.mxu0 %v2814
        %3480 = vmatmul.mubr.f32.gmra.mrb[0].mxu0 %v2343
        %v3481 = vpop.f32.mrb[0].mxu0
        %v3482 = vadd.f32 %v3117, %v3481
        %v3483 = vpop.f32.mrb[0].mxu0
        %v3484 = vadd.f32 %v3119, %v3483
        %3485 = vmatprep.mubr.f32.mxu0 %v2817
        %3486 = vmatmul.mubr.f32.gmra.mrb[0].mxu0 %v2347
        %v3487 = vpop.f32.mrb[0].mxu0
        %v3488 = vadd.f32 %v3123, %v3487
        %v3489 = vpop.f32.mrb[0].mxu0
        %v3490 = vadd.f32 %v3125, %v3489
        %3491 = vmatprep.mubr.f32.mxu0 %v2820
        %3492 = vmatmul.mubr.f32.gmra.mrb[0].mxu0 %v2351
        %v3493 = vpop.f32.mrb[0].mxu0
        %v3494 = vadd.f32 %v3129, %v3493
        %v3495 = vpop.f32.mrb[0].mxu0
        %v3496 = vadd.f32 %v3131, %v3495
        %3497 = vmatprep.mubr.f32.mxu0 %v2823
        %3498 = vmatmul.mubr.f32.gmra.mrb[0].mxu0 %v2355
        %v3499 = vpop.f32.mrb[0].mxu0
        %v3500 = vadd.f32 %v3135, %v3499
        %v3501 = vpop.f32.mrb[0].mxu0
        %v3502 = vadd.f32 %v3137, %v3501
        %3503 = vmatprep.mubr.f32.mxu0 %v2826
        %3504 = vmatmul.mubr.f32.gmra.mrb[0].mxu0 %v2359
        %v3505 = vpop.f32.mrb[0].mxu0
        %v3506 = vadd.f32 %v3141, %v3505
        %v3507 = vpop.f32.mrb[0].mxu0
        %v3508 = vadd.f32 %v3143, %v3507
        %3509 = vmatprep.mubr.f32.mxu0 %v2829
        %3510 = vmatmul.mubr.f32.gmra.mrb[0].mxu0 %v2363
        %v3511 = vpop.f32.mrb[0].mxu0
        %v3512 = vadd.f32 %v3147, %v3511
        %v3513 = vpop.f32.mrb[0].mxu0
        %v3514 = vadd.f32 %v3149, %v3513
        %3515 = vmatprep.mubr.f32.mxu0 %v2832
        %3516 = vmatmul.mubr.f32.gmra.mrb[0].mxu0 %v2367
        %v3517 = vpop.f32.mrb[0].mxu0
        %v3518 = vadd.f32 %v3153, %v3517
        %v3519 = vpop.f32.mrb[0].mxu0
        %v3520 = vadd.f32 %v3155, %v3519
        %3521 = vmatprep.mubr.f32.mxu0 %v2835
        %3522 = vmatmul.mubr.f32.gmra.mrb[0].mxu0 %v2371
        %v3523 = vpop.f32.mrb[0].mxu0
        %v3524 = vadd.f32 %v3159, %v3523
        %v3525 = vpop.f32.mrb[0].mxu0
        %v3526 = vadd.f32 %v3161, %v3525
        %3527 = vmatprep.mubr.f32.mxu0 %v2838
        %3528 = vmatmul.mubr.f32.gmra.mrb[0].mxu0 %v2375
        %v3529 = vpop.f32.mrb[0].mxu0
        %v3530 = vadd.f32 %v3165, %v3529
        %v3531 = vpop.f32.mrb[0].mxu0
        %v3532 = vadd.f32 %v3167, %v3531
        %3533 = vmatprep.mubr.f32.mxu0 %v2841
        %3534 = vmatmul.mubr.f32.gmra.mrb[0].mxu0 %v2379
        %v3535 = vpop.f32.mrb[0].mxu0
        %v3536 = vadd.f32 %v3171, %v3535
        %v3537 = vpop.f32.mrb[0].mxu0
        %v3538 = vadd.f32 %v3173, %v3537
        %3539 = vmatprep.mubr.f32.mxu0 %v2844
        %3540 = vmatmul.mubr.f32.gmra.mrb[0].mxu0 %v2383
        %v3541 = vpop.f32.mrb[0].mxu0
        %v3542 = vadd.f32 %v3177, %v3541
        %v3543 = vpop.f32.mrb[0].mxu0
        %v3544 = vadd.f32 %v3179, %v3543
        %3545 = vmatprep.mubr.f32.mxu0 %v2847
        %3546 = vmatmul.mubr.f32.gmra.mrb[0].mxu0 %v2387
        %v3547 = vpop.f32.mrb[0].mxu0
        %v3548 = vadd.f32 %v3183, %v3547
        %v3549 = vpop.f32.mrb[0].mxu0
        %v3550 = vadd.f32 %v3185, %v3549
        %3551 = vmatprep.mubr.f32.mxu0 %v2850
        %3552 = vmatmul.mubr.f32.gmra.mrb[0].mxu0 %v2391
        %v3553 = vpop.f32.mrb[0].mxu0
        %v3554 = vadd.f32 %v3189, %v3553
        %v3555 = vpop.f32.mrb[0].mxu0
        %v3556 = vadd.f32 %v3191, %v3555
        %3557 = vmatprep.mubr.f32.mxu0 %v2853
        %3558 = vmatmul.mubr.f32.gmra.mrb[0].mxu0 %v2395
        %v3559 = vpop.f32.mrb[0].mxu0
        %v3560 = vadd.f32 %v3195, %v3559
        %v3561 = vpop.f32.mrb[0].mxu0
        %v3562 = vadd.f32 %v3197, %v3561
        %3563 = vmatprep.mubr.f32.mxu0 %v2856
        %3564 = vmatmul.mubr.f32.gmra.mrb[0].mxu0 %v2399
        %v3565 = vpop.f32.mrb[0].mxu0
        %v3566 = vadd.f32 %v3201, %v3565
        %v3567 = vpop.f32.mrb[0].mxu0
        %v3568 = vadd.f32 %v3203, %v3567
        %3569 = vmatprep.mubr.f32.mxu0 %v2859
        %3570 = vmatmul.mubr.f32.gmra.mrb[0].mxu0 %v2403
        %v3571 = vpop.f32.mrb[0].mxu0
        %v3572 = vadd.f32 %v3207, %v3571
        %v3573 = vpop.f32.mrb[0].mxu0
        %v3574 = vadd.f32 %v3209, %v3573
        %3575 = vmatprep.mubr.f32.mxu0 %v2862
        %3576 = vmatmul.mubr.f32.gmra.mrb[0].mxu0 %v2407
        %v3577 = vpop.f32.mrb[0].mxu0
        %v3578 = vadd.f32 %v3213, %v3577
        %v3579 = vpop.f32.mrb[0].mxu0
        %v3580 = vadd.f32 %v3215, %v3579
        %3581 = vmatprep.mubr.f32.mxu0 %v2865
        %3582 = vmatmul.mubr.f32.gmra.mrb[0].mxu0 %v2411
        %v3583 = vpop.f32.mrb[0].mxu0
        %v3584 = vadd.f32 %v3219, %v3583
        %v3585 = vpop.f32.mrb[0].mxu0
        %v3586 = vadd.f32 %v3221, %v3585
        %3587 = vmatprep.mubr.f32.mxu0 %v2868
        %3588 = vmatmul.mubr.f32.gmra.mrb[0].mxu0 %v2415
        %v3589 = vpop.f32.mrb[0].mxu0
        %v3590 = vadd.f32 %v3225, %v3589
        %v3591 = vpop.f32.mrb[0].mxu0
        %v3592 = vadd.f32 %v3227, %v3591
        %3593 = vmatprep.mubr.f32.mxu0 %v2871
        %3594 = vmatmul.mubr.f32.gmra.mrb[0].mxu0 %v2419
        %v3595 = vpop.f32.mrb[0].mxu0
        %v3596 = vadd.f32 %v3231, %v3595
        %v3597 = vpop.f32.mrb[0].mxu0
        %v3598 = vadd.f32 %v3233, %v3597
        %3599 = vmatprep.mubr.f32.mxu0 %v2874
        %3600 = vmatmul.mubr.f32.gmra.mrb[0].mxu0 %v2423
        %v3601 = vpop.f32.mrb[0].mxu0
        %v3602 = vadd.f32 %v3237, %v3601
        %v3603 = vpop.f32.mrb[0].mxu0
        %v3604 = vadd.f32 %v3239, %v3603
        %3605 = vdwg.mxu0
        %3606 = vmatprep.subr.mxu0 %v2028
        %3607 = vmatpush1.msra.mxu0 %v2027
        %3608 = vmatprep.subr.mxu0 %v2032
        %3609 = vmatpush1.msra.mxu0 %v2031
        %3610 = vmatprep.subr.mxu0 %v2036
        %3611 = vmatpush1.msra.mxu0 %v2035
        %3612 = vmatprep.subr.mxu0 %v2040
        %3613 = vmatpush1.msra.mxu0 %v2039
        %3614 = vmatprep.subr.mxu0 %v2044
        %3615 = vmatpush1.msra.mxu0 %v2043
        %3616 = vmatprep.subr.mxu0 %v2048
        %3617 = vmatpush1.msra.mxu0 %v2047
        %3618 = vmatprep.subr.mxu0 %v2052
        %3619 = vmatpush1.msra.mxu0 %v2051
        %3620 = vmatprep.subr.mxu0 %v2056
        %3621 = vmatpush1.msra.mxu0 %v2055
        %3622 = vmatprep.subr.mxu0 %v2060
        %3623 = vmatpush1.msra.mxu0 %v2059
        %3624 = vmatprep.subr.mxu0 %v2064
        %3625 = vmatpush1.msra.mxu0 %v2063
        %3626 = vmatprep.subr.mxu0 %v2068
        %3627 = vmatpush1.msra.mxu0 %v2067
        %3628 = vmatprep.subr.mxu0 %v2072
        %3629 = vmatpush1.msra.mxu0 %v2071
        %3630 = vmatprep.subr.mxu0 %v2076
        %3631 = vmatpush1.msra.mxu0 %v2075
        %3632 = vmatprep.subr.mxu0 %v2080
        %3633 = vmatpush1.msra.mxu0 %v2079
        %3634 = vmatprep.subr.mxu0 %v2084
        %3635 = vmatpush1.msra.mxu0 %v2083
        %3636 = vmatprep.subr.mxu0 %v2088
        %3637 = vmatpush1.msra.mxu0 %v2087
        %3638 = vmatprep.subr.mxu0 %v2092
        %3639 = vmatpush1.msra.mxu0 %v2091
        %3640 = vmatprep.subr.mxu0 %v2096
        %3641 = vmatpush1.msra.mxu0 %v2095
        %3642 = vmatprep.subr.mxu0 %v2100
        %3643 = vmatpush1.msra.mxu0 %v2099
        %3644 = vmatprep.subr.mxu0 %v2104
        %3645 = vmatpush1.msra.mxu0 %v2103
        %3646 = vmatprep.subr.mxu0 %v2108
        %3647 = vmatpush1.msra.mxu0 %v2107
        %3648 = vmatprep.subr.mxu0 %v2112
        %3649 = vmatpush1.msra.mxu0 %v2111
        %3650 = vmatprep.subr.mxu0 %v2116
        %3651 = vmatpush1.msra.mxu0 %v2115
        %3652 = vmatprep.subr.mxu0 %v2120
        %3653 = vmatpush1.msra.mxu0 %v2119
        %3654 = vmatprep.subr.mxu0 %v2124
        %3655 = vmatpush1.msra.mxu0 %v2123
        %3656 = vmatprep.subr.mxu0 %v2128
        %3657 = vmatpush1.msra.mxu0 %v2127
        %3658 = vmatprep.subr.mxu0 %v2132
        %3659 = vmatpush1.msra.mxu0 %v2131
        %3660 = vmatprep.subr.mxu0 %v2136
        %3661 = vmatpush1.msra.mxu0 %v2135
        %3662 = vmatprep.subr.mxu0 %v2140
        %3663 = vmatpush1.msra.mxu0 %v2139
        %3664 = vmatprep.subr.mxu0 %v2144
        %3665 = vmatpush1.msra.mxu0 %v2143
        %3666 = vmatprep.subr.mxu0 %v2148
        %3667 = vmatpush1.msra.mxu0 %v2147
        %3668 = vmatprep.subr.mxu0 %v2152
        %3669 = vmatpush1.msra.mxu0 %v2151
        %3670 = vmatprep.mubr.f32.mxu0 %v2226
        %3671 = vmatmul.mubr.f32.gmra.mrb[0].mxu0 %v2225
        %v3672 = vpop.f32.mrb[0].mxu0
        %v3673 = vadd.f32 %v2478, %v3672
        %v3674 = vpop.f32.mrb[0].mxu0
        %v3675 = vadd.f32 %v2478, %v3674
        %3676 = vmatprep.mubr.f32.mxu0 %v2230
        %3677 = vmatmul.mubr.f32.gmra.mrb[0].mxu0 %v2229
        %v3678 = vpop.f32.mrb[0].mxu0
        %v3679 = vadd.f32 %v2483, %v3678
        %v3680 = vpop.f32.mrb[0].mxu0
        %v3681 = vadd.f32 %v2483, %v3680
        %3682 = vmatprep.mubr.f32.mxu0 %v2234
        %3683 = vmatmul.mubr.f32.gmra.mrb[0].mxu0 %v2233
        %v3684 = vpop.f32.mrb[0].mxu0
        %v3685 = vadd.f32 %v2488, %v3684
        %v3686 = vpop.f32.mrb[0].mxu0
        %v3687 = vadd.f32 %v2488, %v3686
        %3688 = vmatprep.mubr.f32.mxu0 %v2238
        %3689 = vmatmul.mubr.f32.gmra.mrb[0].mxu0 %v2237
        %v3690 = vpop.f32.mrb[0].mxu0
        %v3691 = vadd.f32 %v2493, %v3690
        %v3692 = vpop.f32.mrb[0].mxu0
        %v3693 = vadd.f32 %v2493, %v3692
        %3694 = vmatprep.mubr.f32.mxu0 %v2242
        %3695 = vmatmul.mubr.f32.gmra.mrb[0].mxu0 %v2241
        %v3696 = vpop.f32.mrb[0].mxu0
        %v3697 = vadd.f32 %v2498, %v3696
        %v3698 = vpop.f32.mrb[0].mxu0
        %v3699 = vadd.f32 %v2498, %v3698
        %3700 = vmatprep.mubr.f32.mxu0 %v2246
        %3701 = vmatmul.mubr.f32.gmra.mrb[0].mxu0 %v2245
        %v3702 = vpop.f32.mrb[0].mxu0
        %v3703 = vadd.f32 %v2503, %v3702
        %v3704 = vpop.f32.mrb[0].mxu0
        %v3705 = vadd.f32 %v2503, %v3704
        %3706 = vmatprep.mubr.f32.mxu0 %v2250
        %3707 = vmatmul.mubr.f32.gmra.mrb[0].mxu0 %v2249
        %v3708 = vpop.f32.mrb[0].mxu0
        %v3709 = vadd.f32 %v2508, %v3708
        %v3710 = vpop.f32.mrb[0].mxu0
        %v3711 = vadd.f32 %v2508, %v3710
        %3712 = vmatprep.mubr.f32.mxu0 %v2254
        %3713 = vmatmul.mubr.f32.gmra.mrb[0].mxu0 %v2253
        %v3714 = vpop.f32.mrb[0].mxu0
        %v3715 = vadd.f32 %v2513, %v3714
        %v3716 = vpop.f32.mrb[0].mxu0
        %v3717 = vadd.f32 %v2513, %v3716
        %3718 = vmatprep.mubr.f32.mxu0 %v2258
        %3719 = vmatmul.mubr.f32.gmra.mrb[0].mxu0 %v2257
        %v3720 = vpop.f32.mrb[0].mxu0
        %v3721 = vadd.f32 %v2518, %v3720
        %v3722 = vpop.f32.mrb[0].mxu0
        %v3723 = vadd.f32 %v2518, %v3722
        %3724 = vmatprep.mubr.f32.mxu0 %v2262
        %3725 = vmatmul.mubr.f32.gmra.mrb[0].mxu0 %v2261
        %v3726 = vpop.f32.mrb[0].mxu0
        %v3727 = vadd.f32 %v2523, %v3726
        %v3728 = vpop.f32.mrb[0].mxu0
        %v3729 = vadd.f32 %v2523, %v3728
        %3730 = vmatprep.mubr.f32.mxu0 %v2266
        %3731 = vmatmul.mubr.f32.gmra.mrb[0].mxu0 %v2265
        %v3732 = vpop.f32.mrb[0].mxu0
        %v3733 = vadd.f32 %v2528, %v3732
        %v3734 = vpop.f32.mrb[0].mxu0
        %v3735 = vadd.f32 %v2528, %v3734
        %3736 = vmatprep.mubr.f32.mxu0 %v2270
        %3737 = vmatmul.mubr.f32.gmra.mrb[0].mxu0 %v2269
        %v3738 = vpop.f32.mrb[0].mxu0
        %v3739 = vadd.f32 %v2533, %v3738
        %v3740 = vpop.f32.mrb[0].mxu0
        %v3741 = vadd.f32 %v2533, %v3740
        %3742 = vmatprep.mubr.f32.mxu0 %v2274
        %3743 = vmatmul.mubr.f32.gmra.mrb[0].mxu0 %v2273
        %v3744 = vpop.f32.mrb[0].mxu0
        %v3745 = vadd.f32 %v2538, %v3744
        %v3746 = vpop.f32.mrb[0].mxu0
        %v3747 = vadd.f32 %v2538, %v3746
        %3748 = vmatprep.mubr.f32.mxu0 %v2278
        %3749 = vmatmul.mubr.f32.gmra.mrb[0].mxu0 %v2277
        %v3750 = vpop.f32.mrb[0].mxu0
        %v3751 = vadd.f32 %v2543, %v3750
        %v3752 = vpop.f32.mrb[0].mxu0
        %v3753 = vadd.f32 %v2543, %v3752
        %3754 = vmatprep.mubr.f32.mxu0 %v2282
        %3755 = vmatmul.mubr.f32.gmra.mrb[0].mxu0 %v2281
        %v3756 = vpop.f32.mrb[0].mxu0
        %v3757 = vadd.f32 %v2548, %v3756
        %v3758 = vpop.f32.mrb[0].mxu0
        %v3759 = vadd.f32 %v2548, %v3758
        %3760 = vmatprep.mubr.f32.mxu0 %v2286
        %3761 = vmatmul.mubr.f32.gmra.mrb[0].mxu0 %v2285
        %v3762 = vpop.f32.mrb[0].mxu0
        %v3763 = vadd.f32 %v2553, %v3762
        %v3764 = vpop.f32.mrb[0].mxu0
        %v3765 = vadd.f32 %v2553, %v3764
        %3766 = vmatprep.mubr.f32.mxu0 %v2290
        %3767 = vmatmul.mubr.f32.gmra.mrb[0].mxu0 %v2289
        %v3768 = vpop.f32.mrb[0].mxu0
        %v3769 = vadd.f32 %v2558, %v3768
        %v3770 = vpop.f32.mrb[0].mxu0
        %v3771 = vadd.f32 %v2558, %v3770
        %3772 = vmatprep.mubr.f32.mxu0 %v2294
        %3773 = vmatmul.mubr.f32.gmra.mrb[0].mxu0 %v2293
        %v3774 = vpop.f32.mrb[0].mxu0
        %v3775 = vadd.f32 %v2563, %v3774
        %v3776 = vpop.f32.mrb[0].mxu0
        %v3777 = vadd.f32 %v2563, %v3776
        %3778 = vmatprep.mubr.f32.mxu0 %v2298
        %3779 = vmatmul.mubr.f32.gmra.mrb[0].mxu0 %v2297
        %v3780 = vpop.f32.mrb[0].mxu0
        %v3781 = vadd.f32 %v2568, %v3780
        %v3782 = vpop.f32.mrb[0].mxu0
        %v3783 = vadd.f32 %v2568, %v3782
        %3784 = vmatprep.mubr.f32.mxu0 %v2302
        %3785 = vmatmul.mubr.f32.gmra.mrb[0].mxu0 %v2301
        %v3786 = vpop.f32.mrb[0].mxu0
        %v3787 = vadd.f32 %v2573, %v3786
        %v3788 = vpop.f32.mrb[0].mxu0
        %v3789 = vadd.f32 %v2573, %v3788
        %3790 = vmatprep.mubr.f32.mxu0 %v2306
        %3791 = vmatmul.mubr.f32.gmra.mrb[0].mxu0 %v2305
        %v3792 = vpop.f32.mrb[0].mxu0
        %v3793 = vadd.f32 %v2578, %v3792
        %v3794 = vpop.f32.mrb[0].mxu0
        %v3795 = vadd.f32 %v2578, %v3794
        %3796 = vmatprep.mubr.f32.mxu0 %v2310
        %3797 = vmatmul.mubr.f32.gmra.mrb[0].mxu0 %v2309
        %v3798 = vpop.f32.mrb[0].mxu0
        %v3799 = vadd.f32 %v2583, %v3798
        %v3800 = vpop.f32.mrb[0].mxu0
        %v3801 = vadd.f32 %v2583, %v3800
        %3802 = vmatprep.mubr.f32.mxu0 %v2314
        %3803 = vmatmul.mubr.f32.gmra.mrb[0].mxu0 %v2313
        %v3804 = vpop.f32.mrb[0].mxu0
        %v3805 = vadd.f32 %v2588, %v3804
        %v3806 = vpop.f32.mrb[0].mxu0
        %v3807 = vadd.f32 %v2588, %v3806
        %3808 = vmatprep.mubr.f32.mxu0 %v2318
        %3809 = vmatmul.mubr.f32.gmra.mrb[0].mxu0 %v2317
        %v3810 = vpop.f32.mrb[0].mxu0
        %v3811 = vadd.f32 %v2593, %v3810
        %v3812 = vpop.f32.mrb[0].mxu0
        %v3813 = vadd.f32 %v2593, %v3812
        %3814 = vmatprep.mubr.f32.mxu0 %v2322
        %3815 = vmatmul.mubr.f32.gmra.mrb[0].mxu0 %v2321
        %v3816 = vpop.f32.mrb[0].mxu0
        %v3817 = vadd.f32 %v2598, %v3816
        %v3818 = vpop.f32.mrb[0].mxu0
        %v3819 = vadd.f32 %v2598, %v3818
        %3820 = vmatprep.mubr.f32.mxu0 %v2326
        %3821 = vmatmul.mubr.f32.gmra.mrb[0].mxu0 %v2325
        %v3822 = vpop.f32.mrb[0].mxu0
        %v3823 = vadd.f32 %v2603, %v3822
        %v3824 = vpop.f32.mrb[0].mxu0
        %v3825 = vadd.f32 %v2603, %v3824
        %3826 = vmatprep.mubr.f32.mxu0 %v2330
        %3827 = vmatmul.mubr.f32.gmra.mrb[0].mxu0 %v2329
        %v3828 = vpop.f32.mrb[0].mxu0
        %v3829 = vadd.f32 %v2608, %v3828
        %v3830 = vpop.f32.mrb[0].mxu0
        %v3831 = vadd.f32 %v2608, %v3830
        %3832 = vmatprep.mubr.f32.mxu0 %v2334
        %3833 = vmatmul.mubr.f32.gmra.mrb[0].mxu0 %v2333
        %v3834 = vpop.f32.mrb[0].mxu0
        %v3835 = vadd.f32 %v2613, %v3834
        %v3836 = vpop.f32.mrb[0].mxu0
        %v3837 = vadd.f32 %v2613, %v3836
        %3838 = vmatprep.mubr.f32.mxu0 %v2338
        %3839 = vmatmul.mubr.f32.gmra.mrb[0].mxu0 %v2337
        %v3840 = vpop.f32.mrb[0].mxu0
        %v3841 = vadd.f32 %v2618, %v3840
        %v3842 = vpop.f32.mrb[0].mxu0
        %v3843 = vadd.f32 %v2618, %v3842
        %3844 = vmatprep.mubr.f32.mxu0 %v2342
        %3845 = vmatmul.mubr.f32.gmra.mrb[0].mxu0 %v2341
        %v3846 = vpop.f32.mrb[0].mxu0
        %v3847 = vadd.f32 %v2623, %v3846
        %v3848 = vpop.f32.mrb[0].mxu0
        %v3849 = vadd.f32 %v2623, %v3848
        %3850 = vmatprep.mubr.f32.mxu0 %v2346
        %3851 = vmatmul.mubr.f32.gmra.mrb[0].mxu0 %v2345
        %v3852 = vpop.f32.mrb[0].mxu0
        %v3853 = vadd.f32 %v2628, %v3852
        %v3854 = vpop.f32.mrb[0].mxu0
        %v3855 = vadd.f32 %v2628, %v3854
        %3856 = vmatprep.mubr.f32.mxu0 %v2350
        %3857 = vmatmul.mubr.f32.gmra.mrb[0].mxu0 %v2349
        %v3858 = vpop.f32.mrb[0].mxu0
        %v3859 = vadd.f32 %v2633, %v3858
        %v3860 = vpop.f32.mrb[0].mxu0
        %v3861 = vadd.f32 %v2633, %v3860
        %3862 = vmatprep.mubr.f32.mxu0 %v2354
        %3863 = vmatmul.mubr.f32.gmra.mrb[0].mxu0 %v2353
        %v3864 = vpop.f32.mrb[0].mxu0
        %v3865 = vadd.f32 %v2638, %v3864
        %v3866 = vpop.f32.mrb[0].mxu0
        %v3867 = vadd.f32 %v2638, %v3866
        %3868 = vmatprep.mubr.f32.mxu0 %v2358
        %3869 = vmatmul.mubr.f32.gmra.mrb[0].mxu0 %v2357
        %v3870 = vpop.f32.mrb[0].mxu0
        %v3871 = vadd.f32 %v2643, %v3870
        %v3872 = vpop.f32.mrb[0].mxu0
        %v3873 = vadd.f32 %v2643, %v3872
        %3874 = vmatprep.mubr.f32.mxu0 %v2362
        %3875 = vmatmul.mubr.f32.gmra.mrb[0].mxu0 %v2361
        %v3876 = vpop.f32.mrb[0].mxu0
        %v3877 = vadd.f32 %v2648, %v3876
        %v3878 = vpop.f32.mrb[0].mxu0
        %v3879 = vadd.f32 %v2648, %v3878
        %3880 = vmatprep.mubr.f32.mxu0 %v2366
        %3881 = vmatmul.mubr.f32.gmra.mrb[0].mxu0 %v2365
        %v3882 = vpop.f32.mrb[0].mxu0
        %v3883 = vadd.f32 %v2653, %v3882
        %v3884 = vpop.f32.mrb[0].mxu0
        %v3885 = vadd.f32 %v2653, %v3884
        %3886 = vmatprep.mubr.f32.mxu0 %v2370
        %3887 = vmatmul.mubr.f32.gmra.mrb[0].mxu0 %v2369
        %v3888 = vpop.f32.mrb[0].mxu0
        %v3889 = vadd.f32 %v2658, %v3888
        %v3890 = vpop.f32.mrb[0].mxu0
        %v3891 = vadd.f32 %v2658, %v3890
        %3892 = vmatprep.mubr.f32.mxu0 %v2374
        %3893 = vmatmul.mubr.f32.gmra.mrb[0].mxu0 %v2373
        %v3894 = vpop.f32.mrb[0].mxu0
        %v3895 = vadd.f32 %v2663, %v3894
        %v3896 = vpop.f32.mrb[0].mxu0
        %v3897 = vadd.f32 %v2663, %v3896
        %3898 = vmatprep.mubr.f32.mxu0 %v2378
        %3899 = vmatmul.mubr.f32.gmra.mrb[0].mxu0 %v2377
        %v3900 = vpop.f32.mrb[0].mxu0
        %v3901 = vadd.f32 %v2668, %v3900
        %v3902 = vpop.f32.mrb[0].mxu0
        %v3903 = vadd.f32 %v2668, %v3902
        %3904 = vmatprep.mubr.f32.mxu0 %v2382
        %3905 = vmatmul.mubr.f32.gmra.mrb[0].mxu0 %v2381
        %v3906 = vpop.f32.mrb[0].mxu0
        %v3907 = vadd.f32 %v2673, %v3906
        %v3908 = vpop.f32.mrb[0].mxu0
        %v3909 = vadd.f32 %v2673, %v3908
        %3910 = vmatprep.mubr.f32.mxu0 %v2386
        %3911 = vmatmul.mubr.f32.gmra.mrb[0].mxu0 %v2385
        %v3912 = vpop.f32.mrb[0].mxu0
        %v3913 = vadd.f32 %v2678, %v3912
        %v3914 = vpop.f32.mrb[0].mxu0
        %v3915 = vadd.f32 %v2678, %v3914
        %3916 = vmatprep.mubr.f32.mxu0 %v2390
        %3917 = vmatmul.mubr.f32.gmra.mrb[0].mxu0 %v2389
        %v3918 = vpop.f32.mrb[0].mxu0
        %v3919 = vadd.f32 %v2683, %v3918
        %v3920 = vpop.f32.mrb[0].mxu0
        %v3921 = vadd.f32 %v2683, %v3920
        %3922 = vmatprep.mubr.f32.mxu0 %v2394
        %3923 = vmatmul.mubr.f32.gmra.mrb[0].mxu0 %v2393
        %v3924 = vpop.f32.mrb[0].mxu0
        %v3925 = vadd.f32 %v2688, %v3924
        %v3926 = vpop.f32.mrb[0].mxu0
        %v3927 = vadd.f32 %v2688, %v3926
        %3928 = vmatprep.mubr.f32.mxu0 %v2398
        %3929 = vmatmul.mubr.f32.gmra.mrb[0].mxu0 %v2397
        %v3930 = vpop.f32.mrb[0].mxu0
        %v3931 = vadd.f32 %v2693, %v3930
        %v3932 = vpop.f32.mrb[0].mxu0
        %v3933 = vadd.f32 %v2693, %v3932
        %3934 = vmatprep.mubr.f32.mxu0 %v2402
        %3935 = vmatmul.mubr.f32.gmra.mrb[0].mxu0 %v2401
        %v3936 = vpop.f32.mrb[0].mxu0
        %v3937 = vadd.f32 %v2698, %v3936
        %v3938 = vpop.f32.mrb[0].mxu0
        %v3939 = vadd.f32 %v2698, %v3938
        %3940 = vmatprep.mubr.f32.mxu0 %v2406
        %3941 = vmatmul.mubr.f32.gmra.mrb[0].mxu0 %v2405
        %v3942 = vpop.f32.mrb[0].mxu0
        %v3943 = vadd.f32 %v2703, %v3942
        %v3944 = vpop.f32.mrb[0].mxu0
        %v3945 = vadd.f32 %v2703, %v3944
        %3946 = vmatprep.mubr.f32.mxu0 %v2410
        %3947 = vmatmul.mubr.f32.gmra.mrb[0].mxu0 %v2409
        %v3948 = vpop.f32.mrb[0].mxu0
        %v3949 = vadd.f32 %v2708, %v3948
        %v3950 = vpop.f32.mrb[0].mxu0
        %v3951 = vadd.f32 %v2708, %v3950
        %3952 = vmatprep.mubr.f32.mxu0 %v2414
        %3953 = vmatmul.mubr.f32.gmra.mrb[0].mxu0 %v2413
        %v3954 = vpop.f32.mrb[0].mxu0
        %v3955 = vadd.f32 %v2713, %v3954
        %v3956 = vpop.f32.mrb[0].mxu0
        %v3957 = vadd.f32 %v2713, %v3956
        %3958 = vmatprep.mubr.f32.mxu0 %v2418
        %3959 = vmatmul.mubr.f32.gmra.mrb[0].mxu0 %v2417
        %v3960 = vpop.f32.mrb[0].mxu0
        %v3961 = vadd.f32 %v2718, %v3960
        %v3962 = vpop.f32.mrb[0].mxu0
        %v3963 = vadd.f32 %v2718, %v3962
        %3964 = vmatprep.mubr.f32.mxu0 %v2422
        %3965 = vmatmul.mubr.f32.gmra.mrb[0].mxu0 %v2421
        %v3966 = vpop.f32.mrb[0].mxu0
        %v3967 = vadd.f32 %v2723, %v3966
        %v3968 = vpop.f32.mrb[0].mxu0
        %v3969 = vadd.f32 %v2723, %v3968
        %3970 = vdwg.mxu0
        %3971 = vmatprep.subr.mxu0 %v2156
        %3972 = vmatpush1.msra.mxu0 %v2155
        %3973 = vmatprep.subr.mxu0 %v2160
        %3974 = vmatpush1.msra.mxu0 %v2159
        %3975 = vmatprep.subr.mxu0 %v2164
        %3976 = vmatpush1.msra.mxu0 %v2163
        %3977 = vmatprep.subr.mxu0 %v2168
        %3978 = vmatpush1.msra.mxu0 %v2167
        %3979 = vmatprep.subr.mxu0 %v2172
        %3980 = vmatpush1.msra.mxu0 %v2171
        %3981 = vmatprep.subr.mxu0 %v2176
        %3982 = vmatpush1.msra.mxu0 %v2175
        %3983 = vmatprep.subr.mxu0 %v2180
        %3984 = vmatpush1.msra.mxu0 %v2179
        %3985 = vmatprep.subr.mxu0 %v2184
        %3986 = vmatpush1.msra.mxu0 %v2183
        %3987 = vmatprep.subr.mxu0 %v2188
        %3988 = vmatpush1.msra.mxu0 %v2187
        %3989 = vmatprep.subr.mxu0 %v2192
        %3990 = vmatpush1.msra.mxu0 %v2191
        %3991 = vmatprep.subr.mxu0 %v2196
        %3992 = vmatpush1.msra.mxu0 %v2195
        %3993 = vmatprep.subr.mxu0 %v2200
        %3994 = vmatpush1.msra.mxu0 %v2199
        %3995 = vmatprep.subr.mxu0 %v2204
        %3996 = vmatpush1.msra.mxu0 %v2203
        %3997 = vmatprep.subr.mxu0 %v2208
        %3998 = vmatpush1.msra.mxu0 %v2207
        %3999 = vmatprep.subr.mxu0 %v2212
        %4000 = vmatpush1.msra.mxu0 %v2211
        %4001 = vmatprep.subr.mxu0 %v2216
        %4002 = vmatpush1.msra.mxu0 %v2215
        %4003 = vmatprep.subr.mxu0 %v2220
        %4004 = vmatpush1.msra.mxu0 %v2219
        %4005 = vmatprep.subr.mxu0 %v2224
        %4006 = vmatpush1.msra.mxu0 %v2223
        %4007 = vmatprep.subr.mxu0 0.0
        %4008 = vmatpush1.msra.mxu0 0.0
        %4009 = vmatprep.subr.mxu0 0.0
        %4010 = vmatpush1.msra.mxu0 0.0
        %4011 = vmatprep.subr.mxu0 0.0
        %4012 = vmatpush1.msra.mxu0 0.0
        %4013 = vmatprep.subr.mxu0 0.0
        %4014 = vmatpush1.msra.mxu0 0.0
        %4015 = vmatprep.subr.mxu0 0.0
        %4016 = vmatpush1.msra.mxu0 0.0
        %4017 = vmatprep.subr.mxu0 0.0
        %4018 = vmatpush1.msra.mxu0 0.0
        %4019 = vmatprep.subr.mxu0 0.0
        %4020 = vmatpush1.msra.mxu0 0.0
        %4021 = vmatprep.subr.mxu0 0.0
        %4022 = vmatpush1.msra.mxu0 0.0
        %4023 = vmatprep.subr.mxu0 0.0
        %4024 = vmatpush1.msra.mxu0 0.0
        %4025 = vmatprep.subr.mxu0 0.0
        %4026 = vmatpush1.msra.mxu0 0.0
        %4027 = vmatprep.subr.mxu0 0.0
        %4028 = vmatpush1.msra.mxu0 0.0
        %4029 = vmatprep.subr.mxu0 0.0
        %4030 = vmatpush1.msra.mxu0 0.0
        %4031 = vmatprep.subr.mxu0 0.0
        %4032 = vmatpush1.msra.mxu0 0.0
        %4033 = vmatprep.subr.mxu0 0.0
        %4034 = vmatpush1.msra.mxu0 0.0
        %4035 = vmatprep.mubr.f32.mxu0 %v2727
        %4036 = vmatmul.mubr.f32.gmra.mrb[0].mxu0 %v2227
        %v4037 = vpop.f32.mrb[0].mxu0
        %v4038 = vadd.f32 %v3673, %v4037
        %v4039 = vpop.f32.mrb[0].mxu0
        %v4040 = vadd.f32 %v3675, %v4039
        %4041 = vmatprep.mubr.f32.mxu0 %v2730
        %4042 = vmatmul.mubr.f32.gmra.mrb[0].mxu0 %v2231
        %v4043 = vpop.f32.mrb[0].mxu0
        %v4044 = vadd.f32 %v3679, %v4043
        %v4045 = vpop.f32.mrb[0].mxu0
        %v4046 = vadd.f32 %v3681, %v4045
        %4047 = vmatprep.mubr.f32.mxu0 %v2733
        %4048 = vmatmul.mubr.f32.gmra.mrb[0].mxu0 %v2235
        %v4049 = vpop.f32.mrb[0].mxu0
        %v4050 = vadd.f32 %v3685, %v4049
        %v4051 = vpop.f32.mrb[0].mxu0
        %v4052 = vadd.f32 %v3687, %v4051
        %4053 = vmatprep.mubr.f32.mxu0 %v2736
        %4054 = vmatmul.mubr.f32.gmra.mrb[0].mxu0 %v2239
        %v4055 = vpop.f32.mrb[0].mxu0
        %v4056 = vadd.f32 %v3691, %v4055
        %v4057 = vpop.f32.mrb[0].mxu0
        %v4058 = vadd.f32 %v3693, %v4057
        %4059 = vmatprep.mubr.f32.mxu0 %v2739
        %4060 = vmatmul.mubr.f32.gmra.mrb[0].mxu0 %v2243
        %v4061 = vpop.f32.mrb[0].mxu0
        %v4062 = vadd.f32 %v3697, %v4061
        %v4063 = vpop.f32.mrb[0].mxu0
        %v4064 = vadd.f32 %v3699, %v4063
        %4065 = vmatprep.mubr.f32.mxu0 %v2742
        %4066 = vmatmul.mubr.f32.gmra.mrb[0].mxu0 %v2247
        %v4067 = vpop.f32.mrb[0].mxu0
        %v4068 = vadd.f32 %v3703, %v4067
        %v4069 = vpop.f32.mrb[0].mxu0
        %v4070 = vadd.f32 %v3705, %v4069
        %4071 = vmatprep.mubr.f32.mxu0 %v2745
        %4072 = vmatmul.mubr.f32.gmra.mrb[0].mxu0 %v2251
        %v4073 = vpop.f32.mrb[0].mxu0
        %v4074 = vadd.f32 %v3709, %v4073
        %v4075 = vpop.f32.mrb[0].mxu0
        %v4076 = vadd.f32 %v3711, %v4075
        %4077 = vmatprep.mubr.f32.mxu0 %v2748
        %4078 = vmatmul.mubr.f32.gmra.mrb[0].mxu0 %v2255
        %v4079 = vpop.f32.mrb[0].mxu0
        %v4080 = vadd.f32 %v3715, %v4079
        %v4081 = vpop.f32.mrb[0].mxu0
        %v4082 = vadd.f32 %v3717, %v4081
        %4083 = vmatprep.mubr.f32.mxu0 %v2751
        %4084 = vmatmul.mubr.f32.gmra.mrb[0].mxu0 %v2259
        %v4085 = vpop.f32.mrb[0].mxu0
        %v4086 = vadd.f32 %v3721, %v4085
        %v4087 = vpop.f32.mrb[0].mxu0
        %v4088 = vadd.f32 %v3723, %v4087
        %4089 = vmatprep.mubr.f32.mxu0 %v2754
        %4090 = vmatmul.mubr.f32.gmra.mrb[0].mxu0 %v2263
        %v4091 = vpop.f32.mrb[0].mxu0
        %v4092 = vadd.f32 %v3727, %v4091
        %v4093 = vpop.f32.mrb[0].mxu0
        %v4094 = vadd.f32 %v3729, %v4093
        %4095 = vmatprep.mubr.f32.mxu0 %v2757
        %4096 = vmatmul.mubr.f32.gmra.mrb[0].mxu0 %v2267
        %v4097 = vpop.f32.mrb[0].mxu0
        %v4098 = vadd.f32 %v3733, %v4097
        %v4099 = vpop.f32.mrb[0].mxu0
        %v4100 = vadd.f32 %v3735, %v4099
        %4101 = vmatprep.mubr.f32.mxu0 %v2760
        %4102 = vmatmul.mubr.f32.gmra.mrb[0].mxu0 %v2271
        %v4103 = vpop.f32.mrb[0].mxu0
        %v4104 = vadd.f32 %v3739, %v4103
        %v4105 = vpop.f32.mrb[0].mxu0
        %v4106 = vadd.f32 %v3741, %v4105
        %4107 = vmatprep.mubr.f32.mxu0 %v2763
        %4108 = vmatmul.mubr.f32.gmra.mrb[0].mxu0 %v2275
        %v4109 = vpop.f32.mrb[0].mxu0
        %v4110 = vadd.f32 %v3745, %v4109
        %v4111 = vpop.f32.mrb[0].mxu0
        %v4112 = vadd.f32 %v3747, %v4111
        %4113 = vmatprep.mubr.f32.mxu0 %v2766
        %4114 = vmatmul.mubr.f32.gmra.mrb[0].mxu0 %v2279
        %v4115 = vpop.f32.mrb[0].mxu0
        %v4116 = vadd.f32 %v3751, %v4115
        %v4117 = vpop.f32.mrb[0].mxu0
        %v4118 = vadd.f32 %v3753, %v4117
        %4119 = vmatprep.mubr.f32.mxu0 %v2769
        %4120 = vmatmul.mubr.f32.gmra.mrb[0].mxu0 %v2283
        %v4121 = vpop.f32.mrb[0].mxu0
        %v4122 = vadd.f32 %v3757, %v4121
        %v4123 = vpop.f32.mrb[0].mxu0
        %v4124 = vadd.f32 %v3759, %v4123
        %4125 = vmatprep.mubr.f32.mxu0 %v2772
        %4126 = vmatmul.mubr.f32.gmra.mrb[0].mxu0 %v2287
        %v4127 = vpop.f32.mrb[0].mxu0
        %v4128 = vadd.f32 %v3763, %v4127
        %v4129 = vpop.f32.mrb[0].mxu0
        %v4130 = vadd.f32 %v3765, %v4129
        %4131 = vmatprep.mubr.f32.mxu0 %v2775
        %4132 = vmatmul.mubr.f32.gmra.mrb[0].mxu0 %v2291
        %v4133 = vpop.f32.mrb[0].mxu0
        %v4134 = vadd.f32 %v3769, %v4133
        %v4135 = vpop.f32.mrb[0].mxu0
        %v4136 = vadd.f32 %v3771, %v4135
        %4137 = vmatprep.mubr.f32.mxu0 %v2778
        %4138 = vmatmul.mubr.f32.gmra.mrb[0].mxu0 %v2295
        %v4139 = vpop.f32.mrb[0].mxu0
        %v4140 = vadd.f32 %v3775, %v4139
        %v4141 = vpop.f32.mrb[0].mxu0
        %v4142 = vadd.f32 %v3777, %v4141
        %4143 = vmatprep.mubr.f32.mxu0 %v2781
        %4144 = vmatmul.mubr.f32.gmra.mrb[0].mxu0 %v2299
        %v4145 = vpop.f32.mrb[0].mxu0
        %v4146 = vadd.f32 %v3781, %v4145
        %v4147 = vpop.f32.mrb[0].mxu0
        %v4148 = vadd.f32 %v3783, %v4147
        %4149 = vmatprep.mubr.f32.mxu0 %v2784
        %4150 = vmatmul.mubr.f32.gmra.mrb[0].mxu0 %v2303
        %v4151 = vpop.f32.mrb[0].mxu0
        %v4152 = vadd.f32 %v3787, %v4151
        %v4153 = vpop.f32.mrb[0].mxu0
        %v4154 = vadd.f32 %v3789, %v4153
        %4155 = vmatprep.mubr.f32.mxu0 %v2787
        %4156 = vmatmul.mubr.f32.gmra.mrb[0].mxu0 %v2307
        %v4157 = vpop.f32.mrb[0].mxu0
        %v4158 = vadd.f32 %v3793, %v4157
        %v4159 = vpop.f32.mrb[0].mxu0
        %v4160 = vadd.f32 %v3795, %v4159
        %4161 = vmatprep.mubr.f32.mxu0 %v2790
        %4162 = vmatmul.mubr.f32.gmra.mrb[0].mxu0 %v2311
        %v4163 = vpop.f32.mrb[0].mxu0
        %v4164 = vadd.f32 %v3799, %v4163
        %v4165 = vpop.f32.mrb[0].mxu0
        %v4166 = vadd.f32 %v3801, %v4165
        %4167 = vmatprep.mubr.f32.mxu0 %v2793
        %4168 = vmatmul.mubr.f32.gmra.mrb[0].mxu0 %v2315
        %v4169 = vpop.f32.mrb[0].mxu0
        %v4170 = vadd.f32 %v3805, %v4169
        %v4171 = vpop.f32.mrb[0].mxu0
        %v4172 = vadd.f32 %v3807, %v4171
        %4173 = vmatprep.mubr.f32.mxu0 %v2796
        %4174 = vmatmul.mubr.f32.gmra.mrb[0].mxu0 %v2319
        %v4175 = vpop.f32.mrb[0].mxu0
        %v4176 = vadd.f32 %v3811, %v4175
        %v4177 = vpop.f32.mrb[0].mxu0
        %v4178 = vadd.f32 %v3813, %v4177
        %4179 = vmatprep.mubr.f32.mxu0 %v2799
        %4180 = vmatmul.mubr.f32.gmra.mrb[0].mxu0 %v2323
        %v4181 = vpop.f32.mrb[0].mxu0
        %v4182 = vadd.f32 %v3817, %v4181
        %v4183 = vpop.f32.mrb[0].mxu0
        %v4184 = vadd.f32 %v3819, %v4183
        %4185 = vmatprep.mubr.f32.mxu0 %v2802
        %4186 = vmatmul.mubr.f32.gmra.mrb[0].mxu0 %v2327
        %v4187 = vpop.f32.mrb[0].mxu0
        %v4188 = vadd.f32 %v3823, %v4187
        %v4189 = vpop.f32.mrb[0].mxu0
        %v4190 = vadd.f32 %v3825, %v4189
        %4191 = vmatprep.mubr.f32.mxu0 %v2805
        %4192 = vmatmul.mubr.f32.gmra.mrb[0].mxu0 %v2331
        %v4193 = vpop.f32.mrb[0].mxu0
        %v4194 = vadd.f32 %v3829, %v4193
        %v4195 = vpop.f32.mrb[0].mxu0
        %v4196 = vadd.f32 %v3831, %v4195
        %4197 = vmatprep.mubr.f32.mxu0 %v2808
        %4198 = vmatmul.mubr.f32.gmra.mrb[0].mxu0 %v2335
        %v4199 = vpop.f32.mrb[0].mxu0
        %v4200 = vadd.f32 %v3835, %v4199
        %v4201 = vpop.f32.mrb[0].mxu0
        %v4202 = vadd.f32 %v3837, %v4201
        %4203 = vmatprep.mubr.f32.mxu0 %v2811
        %4204 = vmatmul.mubr.f32.gmra.mrb[0].mxu0 %v2339
        %v4205 = vpop.f32.mrb[0].mxu0
        %v4206 = vadd.f32 %v3841, %v4205
        %v4207 = vpop.f32.mrb[0].mxu0
        %v4208 = vadd.f32 %v3843, %v4207
        %4209 = vmatprep.mubr.f32.mxu0 %v2814
        %4210 = vmatmul.mubr.f32.gmra.mrb[0].mxu0 %v2343
        %v4211 = vpop.f32.mrb[0].mxu0
        %v4212 = vadd.f32 %v3847, %v4211
        %v4213 = vpop.f32.mrb[0].mxu0
        %v4214 = vadd.f32 %v3849, %v4213
        %4215 = vmatprep.mubr.f32.mxu0 %v2817
        %4216 = vmatmul.mubr.f32.gmra.mrb[0].mxu0 %v2347
        %v4217 = vpop.f32.mrb[0].mxu0
        %v4218 = vadd.f32 %v3853, %v4217
        %v4219 = vpop.f32.mrb[0].mxu0
        %v4220 = vadd.f32 %v3855, %v4219
        %4221 = vmatprep.mubr.f32.mxu0 %v2820
        %4222 = vmatmul.mubr.f32.gmra.mrb[0].mxu0 %v2351
        %v4223 = vpop.f32.mrb[0].mxu0
        %v4224 = vadd.f32 %v3859, %v4223
        %v4225 = vpop.f32.mrb[0].mxu0
        %v4226 = vadd.f32 %v3861, %v4225
        %4227 = vmatprep.mubr.f32.mxu0 %v2823
        %4228 = vmatmul.mubr.f32.gmra.mrb[0].mxu0 %v2355
        %v4229 = vpop.f32.mrb[0].mxu0
        %v4230 = vadd.f32 %v3865, %v4229
        %v4231 = vpop.f32.mrb[0].mxu0
        %v4232 = vadd.f32 %v3867, %v4231
        %4233 = vmatprep.mubr.f32.mxu0 %v2826
        %4234 = vmatmul.mubr.f32.gmra.mrb[0].mxu0 %v2359
        %v4235 = vpop.f32.mrb[0].mxu0
        %v4236 = vadd.f32 %v3871, %v4235
        %v4237 = vpop.f32.mrb[0].mxu0
        %v4238 = vadd.f32 %v3873, %v4237
        %4239 = vmatprep.mubr.f32.mxu0 %v2829
        %4240 = vmatmul.mubr.f32.gmra.mrb[0].mxu0 %v2363
        %v4241 = vpop.f32.mrb[0].mxu0
        %v4242 = vadd.f32 %v3877, %v4241
        %v4243 = vpop.f32.mrb[0].mxu0
        %v4244 = vadd.f32 %v3879, %v4243
        %4245 = vmatprep.mubr.f32.mxu0 %v2832
        %4246 = vmatmul.mubr.f32.gmra.mrb[0].mxu0 %v2367
        %v4247 = vpop.f32.mrb[0].mxu0
        %v4248 = vadd.f32 %v3883, %v4247
        %v4249 = vpop.f32.mrb[0].mxu0
        %v4250 = vadd.f32 %v3885, %v4249
        %4251 = vmatprep.mubr.f32.mxu0 %v2835
        %4252 = vmatmul.mubr.f32.gmra.mrb[0].mxu0 %v2371
        %v4253 = vpop.f32.mrb[0].mxu0
        %v4254 = vadd.f32 %v3889, %v4253
        %v4255 = vpop.f32.mrb[0].mxu0
        %v4256 = vadd.f32 %v3891, %v4255
        %4257 = vmatprep.mubr.f32.mxu0 %v2838
        %4258 = vmatmul.mubr.f32.gmra.mrb[0].mxu0 %v2375
        %v4259 = vpop.f32.mrb[0].mxu0
        %v4260 = vadd.f32 %v3895, %v4259
        %v4261 = vpop.f32.mrb[0].mxu0
        %v4262 = vadd.f32 %v3897, %v4261
        %4263 = vmatprep.mubr.f32.mxu0 %v2841
        %4264 = vmatmul.mubr.f32.gmra.mrb[0].mxu0 %v2379
        %v4265 = vpop.f32.mrb[0].mxu0
        %v4266 = vadd.f32 %v3901, %v4265
        %v4267 = vpop.f32.mrb[0].mxu0
        %v4268 = vadd.f32 %v3903, %v4267
        %4269 = vmatprep.mubr.f32.mxu0 %v2844
        %4270 = vmatmul.mubr.f32.gmra.mrb[0].mxu0 %v2383
        %v4271 = vpop.f32.mrb[0].mxu0
        %v4272 = vadd.f32 %v3907, %v4271
        %v4273 = vpop.f32.mrb[0].mxu0
        %v4274 = vadd.f32 %v3909, %v4273
        %4275 = vmatprep.mubr.f32.mxu0 %v2847
        %4276 = vmatmul.mubr.f32.gmra.mrb[0].mxu0 %v2387
        %v4277 = vpop.f32.mrb[0].mxu0
        %v4278 = vadd.f32 %v3913, %v4277
        %v4279 = vpop.f32.mrb[0].mxu0
        %v4280 = vadd.f32 %v3915, %v4279
        %4281 = vmatprep.mubr.f32.mxu0 %v2850
        %4282 = vmatmul.mubr.f32.gmra.mrb[0].mxu0 %v2391
        %v4283 = vpop.f32.mrb[0].mxu0
        %v4284 = vadd.f32 %v3919, %v4283
        %v4285 = vpop.f32.mrb[0].mxu0
        %v4286 = vadd.f32 %v3921, %v4285
        %4287 = vmatprep.mubr.f32.mxu0 %v2853
        %4288 = vmatmul.mubr.f32.gmra.mrb[0].mxu0 %v2395
        %v4289 = vpop.f32.mrb[0].mxu0
        %v4290 = vadd.f32 %v3925, %v4289
        %v4291 = vpop.f32.mrb[0].mxu0
        %v4292 = vadd.f32 %v3927, %v4291
        %4293 = vmatprep.mubr.f32.mxu0 %v2856
        %4294 = vmatmul.mubr.f32.gmra.mrb[0].mxu0 %v2399
        %v4295 = vpop.f32.mrb[0].mxu0
        %v4296 = vadd.f32 %v3931, %v4295
        %v4297 = vpop.f32.mrb[0].mxu0
        %v4298 = vadd.f32 %v3933, %v4297
        %4299 = vmatprep.mubr.f32.mxu0 %v2859
        %4300 = vmatmul.mubr.f32.gmra.mrb[0].mxu0 %v2403
        %v4301 = vpop.f32.mrb[0].mxu0
        %v4302 = vadd.f32 %v3937, %v4301
        %v4303 = vpop.f32.mrb[0].mxu0
        %v4304 = vadd.f32 %v3939, %v4303
        %4305 = vmatprep.mubr.f32.mxu0 %v2862
        %4306 = vmatmul.mubr.f32.gmra.mrb[0].mxu0 %v2407
        %v4307 = vpop.f32.mrb[0].mxu0
        %v4308 = vadd.f32 %v3943, %v4307
        %v4309 = vpop.f32.mrb[0].mxu0
        %v4310 = vadd.f32 %v3945, %v4309
        %4311 = vmatprep.mubr.f32.mxu0 %v2865
        %4312 = vmatmul.mubr.f32.gmra.mrb[0].mxu0 %v2411
        %v4313 = vpop.f32.mrb[0].mxu0
        %v4314 = vadd.f32 %v3949, %v4313
        %v4315 = vpop.f32.mrb[0].mxu0
        %v4316 = vadd.f32 %v3951, %v4315
        %4317 = vmatprep.mubr.f32.mxu0 %v2868
        %4318 = vmatmul.mubr.f32.gmra.mrb[0].mxu0 %v2415
        %v4319 = vpop.f32.mrb[0].mxu0
        %v4320 = vadd.f32 %v3955, %v4319
        %v4321 = vpop.f32.mrb[0].mxu0
        %v4322 = vadd.f32 %v3957, %v4321
        %4323 = vmatprep.mubr.f32.mxu0 %v2871
        %4324 = vmatmul.mubr.f32.gmra.mrb[0].mxu0 %v2419
        %v4325 = vpop.f32.mrb[0].mxu0
        %v4326 = vadd.f32 %v3961, %v4325
        %v4327 = vpop.f32.mrb[0].mxu0
        %v4328 = vadd.f32 %v3963, %v4327
        %4329 = vmatprep.mubr.f32.mxu0 %v2874
        %4330 = vmatmul.mubr.f32.gmra.mrb[0].mxu0 %v2423
        %v4331 = vpop.f32.mrb[0].mxu0
        %v4332 = vadd.f32 %v3967, %v4331
        %v4333 = vpop.f32.mrb[0].mxu0
        %v4334 = vadd.f32 %v3969, %v4333
        %4335 = vdwg.mxu0
        %v4336 = vmax.f32 %v3308, 0.0
        %v4337 = vmax.f32 %v3310, 0.0
        %v4338 = vmax.f32 %v4038, 0.0
        %v4339 = vmax.f32 %v4040, 0.0
        %v4340 = vmax.f32 %v3314, 0.0
        %v4341 = vmax.f32 %v3316, 0.0
        %v4342 = vmax.f32 %v4044, 0.0
        %v4343 = vmax.f32 %v4046, 0.0
        %v4344 = vmax.f32 %v3320, 0.0
        %v4345 = vmax.f32 %v3322, 0.0
        %v4346 = vmax.f32 %v4050, 0.0
        %v4347 = vmax.f32 %v4052, 0.0
        %v4348 = vmax.f32 %v3326, 0.0
        %v4349 = vmax.f32 %v3328, 0.0
        %v4350 = vmax.f32 %v4056, 0.0
        %v4351 = vmax.f32 %v4058, 0.0
        %v4352 = vmax.f32 %v3332, 0.0
        %v4353 = vmax.f32 %v3334, 0.0
        %v4354 = vmax.f32 %v4062, 0.0
        %v4355 = vmax.f32 %v4064, 0.0
        %v4356 = vmax.f32 %v3338, 0.0
        %v4357 = vmax.f32 %v3340, 0.0
        %v4358 = vmax.f32 %v4068, 0.0
        %v4359 = vmax.f32 %v4070, 0.0
        %v4360 = vmax.f32 %v3344, 0.0
        %v4361 = vmax.f32 %v3346, 0.0
        %v4362 = vmax.f32 %v4074, 0.0
        %v4363 = vmax.f32 %v4076, 0.0
        %v4364 = vmax.f32 %v3350, 0.0
        %v4365 = vmax.f32 %v3352, 0.0
        %v4366 = vmax.f32 %v4080, 0.0
        %v4367 = vmax.f32 %v4082, 0.0
        %v4368 = vmax.f32 %v3356, 0.0
        %v4369 = vmax.f32 %v3358, 0.0
        %v4370 = vmax.f32 %v4086, 0.0
        %v4371 = vmax.f32 %v4088, 0.0
        %v4372 = vmax.f32 %v3362, 0.0
        %v4373 = vmax.f32 %v3364, 0.0
        %v4374 = vmax.f32 %v4092, 0.0
        %v4375 = vmax.f32 %v4094, 0.0
        %v4376 = vmax.f32 %v3368, 0.0
        %v4377 = vmax.f32 %v3370, 0.0
        %v4378 = vmax.f32 %v4098, 0.0
        %v4379 = vmax.f32 %v4100, 0.0
        %v4380 = vmax.f32 %v3374, 0.0
        %v4381 = vmax.f32 %v3376, 0.0
        %v4382 = vmax.f32 %v4104, 0.0
        %v4383 = vmax.f32 %v4106, 0.0
        %v4384 = vmax.f32 %v3380, 0.0
        %v4385 = vmax.f32 %v3382, 0.0
        %v4386 = vmax.f32 %v4110, 0.0
        %v4387 = vmax.f32 %v4112, 0.0
        %v4388 = vmax.f32 %v3386, 0.0
        %v4389 = vmax.f32 %v3388, 0.0
        %v4390 = vmax.f32 %v4116, 0.0
        %v4391 = vmax.f32 %v4118, 0.0
        %v4392 = vmax.f32 %v3392, 0.0
        %v4393 = vmax.f32 %v3394, 0.0
        %v4394 = vmax.f32 %v4122, 0.0
        %v4395 = vmax.f32 %v4124, 0.0
        %v4396 = vmax.f32 %v3398, 0.0
        %v4397 = vmax.f32 %v3400, 0.0
        %v4398 = vmax.f32 %v4128, 0.0
        %v4399 = vmax.f32 %v4130, 0.0
        %v4400 = vmax.f32 %v3404, 0.0
        %v4401 = vmax.f32 %v3406, 0.0
        %v4402 = vmax.f32 %v4134, 0.0
        %v4403 = vmax.f32 %v4136, 0.0
        %v4404 = vmax.f32 %v3410, 0.0
        %v4405 = vmax.f32 %v3412, 0.0
        %v4406 = vmax.f32 %v4140, 0.0
        %v4407 = vmax.f32 %v4142, 0.0
        %v4408 = vmax.f32 %v3416, 0.0
        %v4409 = vmax.f32 %v3418, 0.0
        %v4410 = vmax.f32 %v4146, 0.0
        %v4411 = vmax.f32 %v4148, 0.0
        %v4412 = vmax.f32 %v3422, 0.0
        %v4413 = vmax.f32 %v3424, 0.0
        %v4414 = vmax.f32 %v4152, 0.0
        %v4415 = vmax.f32 %v4154, 0.0
        %v4416 = vmax.f32 %v3428, 0.0
        %v4417 = vmax.f32 %v3430, 0.0
        %v4418 = vmax.f32 %v4158, 0.0
        %v4419 = vmax.f32 %v4160, 0.0
        %v4420 = vmax.f32 %v3434, 0.0
        %v4421 = vmax.f32 %v3436, 0.0
        %v4422 = vmax.f32 %v4164, 0.0
        %v4423 = vmax.f32 %v4166, 0.0
        %v4424 = vmax.f32 %v3440, 0.0
        %v4425 = vmax.f32 %v3442, 0.0
        %v4426 = vmax.f32 %v4170, 0.0
        %v4427 = vmax.f32 %v4172, 0.0
        %v4428 = vmax.f32 %v3446, 0.0
        %v4429 = vmax.f32 %v3448, 0.0
        %v4430 = vmax.f32 %v4176, 0.0
        %v4431 = vmax.f32 %v4178, 0.0
        %v4432 = vmax.f32 %v3452, 0.0
        %v4433 = vmax.f32 %v3454, 0.0
        %v4434 = vmax.f32 %v4182, 0.0
        %v4435 = vmax.f32 %v4184, 0.0
        %v4436 = vmax.f32 %v3458, 0.0
        %v4437 = vmax.f32 %v3460, 0.0
        %v4438 = vmax.f32 %v4188, 0.0
        %v4439 = vmax.f32 %v4190, 0.0
        %v4440 = vmax.f32 %v3464, 0.0
        %v4441 = vmax.f32 %v3466, 0.0
        %v4442 = vmax.f32 %v4194, 0.0
        %v4443 = vmax.f32 %v4196, 0.0
        %v4444 = vmax.f32 %v3470, 0.0
        %v4445 = vmax.f32 %v3472, 0.0
        %v4446 = vmax.f32 %v4200, 0.0
        %v4447 = vmax.f32 %v4202, 0.0
        %v4448 = vmax.f32 %v3476, 0.0
        %v4449 = vmax.f32 %v3478, 0.0
        %v4450 = vmax.f32 %v4206, 0.0
        %v4451 = vmax.f32 %v4208, 0.0
        %v4452 = vmax.f32 %v3482, 0.0
        %v4453 = vmax.f32 %v3484, 0.0
        %v4454 = vmax.f32 %v4212, 0.0
        %v4455 = vmax.f32 %v4214, 0.0
        %v4456 = vmax.f32 %v3488, 0.0
        %v4457 = vmax.f32 %v3490, 0.0
        %v4458 = vmax.f32 %v4218, 0.0
        %v4459 = vmax.f32 %v4220, 0.0
        %v4460 = vmax.f32 %v3494, 0.0
        %v4461 = vmax.f32 %v3496, 0.0
        %v4462 = vmax.f32 %v4224, 0.0
        %v4463 = vmax.f32 %v4226, 0.0
        %v4464 = vmax.f32 %v3500, 0.0
        %v4465 = vmax.f32 %v3502, 0.0
        %v4466 = vmax.f32 %v4230, 0.0
        %v4467 = vmax.f32 %v4232, 0.0
        %v4468 = vmax.f32 %v3506, 0.0
        %v4469 = vmax.f32 %v3508, 0.0
        %v4470 = vmax.f32 %v4236, 0.0
        %v4471 = vmax.f32 %v4238, 0.0
        %v4472 = vmax.f32 %v3512, 0.0
        %v4473 = vmax.f32 %v3514, 0.0
        %v4474 = vmax.f32 %v4242, 0.0
        %v4475 = vmax.f32 %v4244, 0.0
        %v4476 = vmax.f32 %v3518, 0.0
        %v4477 = vmax.f32 %v3520, 0.0
        %v4478 = vmax.f32 %v4248, 0.0
        %v4479 = vmax.f32 %v4250, 0.0
        %v4480 = vmax.f32 %v3524, 0.0
        %v4481 = vmax.f32 %v3526, 0.0
        %v4482 = vmax.f32 %v4254, 0.0
        %v4483 = vmax.f32 %v4256, 0.0
        %v4484 = vmax.f32 %v3530, 0.0
        %v4485 = vmax.f32 %v3532, 0.0
        %v4486 = vmax.f32 %v4260, 0.0
        %v4487 = vmax.f32 %v4262, 0.0
        %v4488 = vmax.f32 %v3536, 0.0
        %v4489 = vmax.f32 %v3538, 0.0
        %v4490 = vmax.f32 %v4266, 0.0
        %v4491 = vmax.f32 %v4268, 0.0
        %v4492 = vmax.f32 %v3542, 0.0
        %v4493 = vmax.f32 %v3544, 0.0
        %v4494 = vmax.f32 %v4272, 0.0
        %v4495 = vmax.f32 %v4274, 0.0
        %v4496 = vmax.f32 %v3548, 0.0
        %v4497 = vmax.f32 %v3550, 0.0
        %v4498 = vmax.f32 %v4278, 0.0
        %v4499 = vmax.f32 %v4280, 0.0
        %v4500 = vmax.f32 %v3554, 0.0
        %v4501 = vmax.f32 %v3556, 0.0
        %v4502 = vmax.f32 %v4284, 0.0
        %v4503 = vmax.f32 %v4286, 0.0
        %v4504 = vmax.f32 %v3560, 0.0
        %v4505 = vmax.f32 %v3562, 0.0
        %v4506 = vmax.f32 %v4290, 0.0
        %v4507 = vmax.f32 %v4292, 0.0
        %v4508 = vmax.f32 %v3566, 0.0
        %v4509 = vmax.f32 %v3568, 0.0
        %v4510 = vmax.f32 %v4296, 0.0
        %v4511 = vmax.f32 %v4298, 0.0
        %v4512 = vmax.f32 %v3572, 0.0
        %v4513 = vmax.f32 %v3574, 0.0
        %v4514 = vmax.f32 %v4302, 0.0
        %v4515 = vmax.f32 %v4304, 0.0
        %v4516 = vmax.f32 %v3578, 0.0
        %v4517 = vmax.f32 %v3580, 0.0
        %v4518 = vmax.f32 %v4308, 0.0
        %v4519 = vmax.f32 %v4310, 0.0
        %v4520 = vmax.f32 %v3584, 0.0
        %v4521 = vmax.f32 %v3586, 0.0
        %v4522 = vmax.f32 %v4314, 0.0
        %v4523 = vmax.f32 %v4316, 0.0
        %v4524 = vmax.f32 %v3590, 0.0
        %v4525 = vmax.f32 %v3592, 0.0
        %v4526 = vmax.f32 %v4320, 0.0
        %v4527 = vmax.f32 %v4322, 0.0
        %v4528 = vmax.f32 %v3596, 0.0
        %v4529 = vmax.f32 %v3598, 0.0
        %v4530 = vmax.f32 %v4326, 0.0
        %v4531 = vmax.f32 %v4328, 0.0
        %v4532 = vmax.f32 %v3602, 0.0
        %v4533 = vmax.f32 %v3604, 0.0
        %v4534 = vmax.f32 %v4332, 0.0
        %v4535 = vmax.f32 %v4334, 0.0
        %v4536 = vld [vmem:[#allocation3] sm:$0xff]
        %v4537 = vld [vmem:[#allocation3 + $0x8] sm:$0xff]
        %v4538 = vld [vmem:[#allocation3 + $0x10] sm:$0xff]
        %v4539 = vld [vmem:[#allocation3 + $0x18] sm:$0xff]
        %v4540 = vld [vmem:[#allocation3 + $0x20] sm:$0xff]
        %v4541 = vld [vmem:[#allocation3 + $0x28] sm:$0xff]
        %v4542 = vld [vmem:[#allocation3 + $0x30] sm:$0xff]
        %v4543 = vld [vmem:[#allocation3 + $0x38] sm:$0xff]
        %v4544 = vld [vmem:[#allocation3 + $0x40] sm:$0xff]
        %v4545 = vld [vmem:[#allocation3 + $0x48] sm:$0xff]
        %v4546 = vld [vmem:[#allocation3 + $0x50] sm:$0xff]
        %v4547 = vld [vmem:[#allocation3 + $0x58] sm:$0xff]
        %v4548 = vld [vmem:[#allocation3 + $0x60] sm:$0xff]
        %v4549 = vld [vmem:[#allocation3 + $0x68] sm:$0xff]
        %v4550 = vld [vmem:[#allocation3 + $0x70] sm:$0xff]
        %v4551 = vld [vmem:[#allocation3 + $0x78] sm:$0xff]
        %v4552 = vld [vmem:[#allocation3 + $0x80] sm:$0xff]
        %v4553 = vld [vmem:[#allocation3 + $0x88] sm:$0xff]
        %v4554 = vld [vmem:[#allocation3 + $0x90] sm:$0xff]
        %v4555 = vld [vmem:[#allocation3 + $0x98] sm:$0xff]
        %v4556 = vld [vmem:[#allocation3 + $0xa0] sm:$0xff]
        %v4557 = vld [vmem:[#allocation3 + $0xa8] sm:$0xff]
        %v4558 = vld [vmem:[#allocation3 + $0xb0] sm:$0xff]
        %v4559 = vld [vmem:[#allocation3 + $0xb8] sm:$0xff]
        %v4560 = vld [vmem:[#allocation3 + $0xc0] sm:$0xff]
        %v4561 = vld [vmem:[#allocation3 + $0xc8] sm:$0xff]
        %v4562 = vld [vmem:[#allocation3 + $0xd0] sm:$0xff]
        %v4563 = vld [vmem:[#allocation3 + $0xd8] sm:$0xff]
        %v4564 = vld [vmem:[#allocation3 + $0xe0] sm:$0xff]
        %v4565 = vld [vmem:[#allocation3 + $0xe8] sm:$0xff]
        %v4566 = vld [vmem:[#allocation3 + $0xf0] sm:$0xff]
        %v4567 = vld [vmem:[#allocation3 + $0xf8] sm:$0xff]
        %v4568 = vld [vmem:[#allocation3 + $0x100] sm:$0xff]
        %v4569 = vld [vmem:[#allocation3 + $0x108] sm:$0xff]
        %v4570 = vld [vmem:[#allocation3 + $0x110] sm:$0xff]
        %v4571 = vld [vmem:[#allocation3 + $0x118] sm:$0xff]
        %v4572 = vld [vmem:[#allocation3 + $0x120] sm:$0xff]
        %v4573 = vld [vmem:[#allocation3 + $0x128] sm:$0xff]
        %v4574 = vld [vmem:[#allocation3 + $0x130] sm:$0xff]
        %v4575 = vld [vmem:[#allocation3 + $0x138] sm:$0xff]
        %v4576 = vld [vmem:[#allocation3 + $0x140] sm:$0xff]
        %v4577 = vld [vmem:[#allocation3 + $0x148] sm:$0xff]
        %v4578 = vld [vmem:[#allocation3 + $0x150] sm:$0xff]
        %v4579 = vld [vmem:[#allocation3 + $0x158] sm:$0xff]
        %v4580 = vld [vmem:[#allocation3 + $0x160] sm:$0xff]
        %v4581 = vld [vmem:[#allocation3 + $0x168] sm:$0xff]
        %v4582 = vld [vmem:[#allocation3 + $0x170] sm:$0xff]
        %v4583 = vld [vmem:[#allocation3 + $0x178] sm:$0xff]
        %v4584 = vld [vmem:[#allocation3 + $0x180] sm:$0xff]
        %v4585 = vld [vmem:[#allocation3 + $0x188] sm:$0xff]
        %v4586 = vld [vmem:[#allocation3 + $0x190] sm:$0xff]
        %v4587 = vld [vmem:[#allocation3 + $0x198] sm:$0xff]
        %v4588 = vld [vmem:[#allocation3 + $0x1a0] sm:$0xff]
        %v4589 = vld [vmem:[#allocation3 + $0x1a8] sm:$0xff]
        %v4590 = vld [vmem:[#allocation3 + $0x1b0] sm:$0xff]
        %v4591 = vld [vmem:[#allocation3 + $0x1b8] sm:$0xff]
        %v4592 = vld [vmem:[#allocation3 + $0x1c0] sm:$0xff]
        %v4593 = vld [vmem:[#allocation3 + $0x1c8] sm:$0xff]
        %v4594 = vld [vmem:[#allocation3 + $0x1d0] sm:$0xff]
        %v4595 = vld [vmem:[#allocation3 + $0x1d8] sm:$0xff]
        %v4596 = vld [vmem:[#allocation3 + $0x1e0] sm:$0xff]
        %v4597 = vld [vmem:[#allocation3 + $0x1e8] sm:$0xff]
        %v4598 = vld [vmem:[#allocation3 + $0x1f0] sm:$0xff]
        %v4599 = vld [vmem:[#allocation3 + $0x1f8] sm:$0xff]
        %v4600 = vld [vmem:[#allocation3 + $0x200] sm:$0xff]
        %v4601 = vld [vmem:[#allocation3 + $0x208] sm:$0xff]
        %v4602 = vld [vmem:[#allocation3 + $0x210] sm:$0xff]
        %v4603 = vld [vmem:[#allocation3 + $0x218] sm:$0xff]
        %v4604 = vld [vmem:[#allocation3 + $0x220] sm:$0xff]
        %v4605 = vld [vmem:[#allocation3 + $0x228] sm:$0xff]
        %v4606 = vld [vmem:[#allocation3 + $0x230] sm:$0xff]
        %v4607 = vld [vmem:[#allocation3 + $0x238] sm:$0xff]
        %v4608 = vld [vmem:[#allocation3 + $0x240] sm:$0xff]
        %v4609 = vld [vmem:[#allocation3 + $0x248] sm:$0xff]
        %v4610 = vld [vmem:[#allocation3 + $0x250] sm:$0xff]
        %v4611 = vld [vmem:[#allocation3 + $0x258] sm:$0xff]
        %v4612 = vld [vmem:[#allocation3 + $0x260] sm:$0xff]
        %v4613 = vld [vmem:[#allocation3 + $0x268] sm:$0xff]
        %v4614 = vld [vmem:[#allocation3 + $0x270] sm:$0xff]
        %v4615 = vld [vmem:[#allocation3 + $0x278] sm:$0xff]
        %v4616 = vld [vmem:[#allocation3 + $0x280] sm:$0xff]
        %v4617 = vld [vmem:[#allocation3 + $0x288] sm:$0xff]
        %v4618 = vld [vmem:[#allocation3 + $0x290] sm:$0xff]
        %v4619 = vld [vmem:[#allocation3 + $0x298] sm:$0xff]
        %v4620 = vld [vmem:[#allocation3 + $0x2a0] sm:$0xff]
        %v4621 = vld [vmem:[#allocation3 + $0x2a8] sm:$0xff]
        %v4622 = vld [vmem:[#allocation3 + $0x2b0] sm:$0xff]
        %v4623 = vld [vmem:[#allocation3 + $0x2b8] sm:$0xff]
        %v4624 = vld [vmem:[#allocation3 + $0x2c0] sm:$0xff]
        %v4625 = vld [vmem:[#allocation3 + $0x2c8] sm:$0xff]
        %v4626 = vld [vmem:[#allocation3 + $0x2d0] sm:$0xff]
        %v4627 = vld [vmem:[#allocation3 + $0x2d8] sm:$0xff]
        %v4628 = vld [vmem:[#allocation3 + $0x2e0] sm:$0xff]
        %v4629 = vld [vmem:[#allocation3 + $0x2e8] sm:$0xff]
        %v4630 = vld [vmem:[#allocation3 + $0x2f0] sm:$0xff]
        %v4631 = vld [vmem:[#allocation3 + $0x2f8] sm:$0xff]
        %v4632 = vld [vmem:[#allocation3 + $0x300] sm:$0xff]
        %v4633 = vld [vmem:[#allocation3 + $0x308] sm:$0xff]
        %v4634 = vld [vmem:[#allocation3 + $0x310] sm:$0xff]
        %v4635 = vld [vmem:[#allocation3 + $0x318] sm:$0xff]
        %v4636 = vld [vmem:[#allocation3 + $0x320] sm:$0xff]
        %v4637 = vld [vmem:[#allocation3 + $0x328] sm:$0xff]
        %v4638 = vld [vmem:[#allocation3 + $0x330] sm:$0xff]
        %v4639 = vld [vmem:[#allocation3 + $0x338] sm:$0xff]
        %v4640 = vld [vmem:[#allocation3 + $0x340] sm:$0xff]
        %v4641 = vld [vmem:[#allocation3 + $0x348] sm:$0xff]
        %v4642 = vld [vmem:[#allocation3 + $0x350] sm:$0xff]
        %v4643 = vld [vmem:[#allocation3 + $0x358] sm:$0xff]
        %v4644 = vld [vmem:[#allocation3 + $0x360] sm:$0xff]
        %v4645 = vld [vmem:[#allocation3 + $0x368] sm:$0xff]
        %v4646 = vld [vmem:[#allocation3 + $0x370] sm:$0xff]
        %v4647 = vld [vmem:[#allocation3 + $0x378] sm:$0xff]
        %v4648 = vld [vmem:[#allocation3 + $0x380] sm:$0xff]
        %v4649 = vld [vmem:[#allocation3 + $0x388] sm:$0xff]
        %v4650 = vld [vmem:[#allocation3 + $0x390] sm:$0xff]
        %v4651 = vld [vmem:[#allocation3 + $0x398] sm:$0xff]
        %v4652 = vld [vmem:[#allocation3 + $0x3a0] sm:$0xff]
        %v4653 = vld [vmem:[#allocation3 + $0x3a8] sm:$0xff]
        %v4654 = vld [vmem:[#allocation3 + $0x3b0] sm:$0xff]
        %v4655 = vld [vmem:[#allocation3 + $0x3b8] sm:$0xff]
        %v4656 = vld [vmem:[#allocation3 + $0x3c0] sm:$0xff]
        %v4657 = vld [vmem:[#allocation3 + $0x3c8] sm:$0xff]
        %v4658 = vld [vmem:[#allocation3 + $0x3d0] sm:$0xff]
        %v4659 = vld [vmem:[#allocation3 + $0x3d8] sm:$0xff]
        %v4660 = vld [vmem:[#allocation3 + $0x3e0] sm:$0xff]
        %v4661 = vld [vmem:[#allocation3 + $0x3e8] sm:$0xff]
        %v4662 = vld [vmem:[#allocation3 + $0x3f0] sm:$0xff]
        %v4663 = vld [vmem:[#allocation3 + $0x3f8] sm:$0xff]
        %v4664 = vld [vmem:[#allocation3 + $0x400] sm:$0xff]
        %v4665 = vld [vmem:[#allocation3 + $0x408] sm:$0xff]
        %v4666 = vld [vmem:[#allocation3 + $0x410] sm:$0xff]
        %v4667 = vld [vmem:[#allocation3 + $0x418] sm:$0xff]
        %v4668 = vld [vmem:[#allocation3 + $0x420] sm:$0xff]
        %v4669 = vld [vmem:[#allocation3 + $0x428] sm:$0xff]
        %v4670 = vld [vmem:[#allocation3 + $0x430] sm:$0xff]
        %v4671 = vld [vmem:[#allocation3 + $0x438] sm:$0xff]
        %v4672 = vld [vmem:[#allocation3 + $0x440] sm:$0xff]
        %v4673 = vld [vmem:[#allocation3 + $0x448] sm:$0xff]
        %v4674 = vld [vmem:[#allocation3 + $0x450] sm:$0xff]
        %v4675 = vld [vmem:[#allocation3 + $0x458] sm:$0xff]
        %v4676 = vld [vmem:[#allocation3 + $0x460] sm:$0xff]
        %v4677 = vld [vmem:[#allocation3 + $0x468] sm:$0xff]
        %v4678 = vld [vmem:[#allocation3 + $0x470] sm:$0xff]
        %v4679 = vld [vmem:[#allocation3 + $0x478] sm:$0xff]
        %v4680 = vld [vmem:[#allocation3 + $0x480] sm:$0xff]
        %v4681 = vld [vmem:[#allocation3 + $0x488] sm:$0xff]
        %v4682 = vld [vmem:[#allocation3 + $0x490] sm:$0xff]
        %v4683 = vld [vmem:[#allocation3 + $0x498] sm:$0xff]
        %v4684 = vld [vmem:[#allocation3 + $0x4a0] sm:$0xff]
        %v4685 = vld [vmem:[#allocation3 + $0x4a8] sm:$0xff]
        %v4686 = vld [vmem:[#allocation3 + $0x4b0] sm:$0xff]
        %v4687 = vld [vmem:[#allocation3 + $0x4b8] sm:$0xff]
        %v4688 = vld [vmem:[#allocation3 + $0x4c0] sm:$0xff]
        %v4689 = vld [vmem:[#allocation3 + $0x4c8] sm:$0xff]
        %v4690 = vld [vmem:[#allocation3 + $0x4d0] sm:$0xff]
        %v4691 = vld [vmem:[#allocation3 + $0x4d8] sm:$0xff]
        %v4692 = vld [vmem:[#allocation3 + $0x4e0] sm:$0xff]
        %v4693 = vld [vmem:[#allocation3 + $0x4e8] sm:$0xff]
        %v4694 = vld [vmem:[#allocation3 + $0x4f0] sm:$0xff]
        %v4695 = vld [vmem:[#allocation3 + $0x4f8] sm:$0xff]
        %v4696 = vld [vmem:[#allocation3 + $0x500] sm:$0xff]
        %v4697 = vld [vmem:[#allocation3 + $0x508] sm:$0xff]
        %v4698 = vld [vmem:[#allocation3 + $0x510] sm:$0xff]
        %v4699 = vld [vmem:[#allocation3 + $0x518] sm:$0xff]
        %v4700 = vld [vmem:[#allocation3 + $0x520] sm:$0xff]
        %v4701 = vld [vmem:[#allocation3 + $0x528] sm:$0xff]
        %v4702 = vld [vmem:[#allocation3 + $0x530] sm:$0xff]
        %v4703 = vld [vmem:[#allocation3 + $0x538] sm:$0xff]
        %v4704 = vld [vmem:[#allocation3 + $0x540] sm:$0xff]
        %v4705 = vld [vmem:[#allocation3 + $0x548] sm:$0xff]
        %v4706 = vld [vmem:[#allocation3 + $0x550] sm:$0xff]
        %v4707 = vld [vmem:[#allocation3 + $0x558] sm:$0xff]
        %v4708 = vld [vmem:[#allocation3 + $0x560] sm:$0xff]
        %v4709 = vld [vmem:[#allocation3 + $0x568] sm:$0xff]
        %v4710 = vld [vmem:[#allocation3 + $0x570] sm:$0xff]
        %v4711 = vld [vmem:[#allocation3 + $0x578] sm:$0xff]
        %v4712 = vld [vmem:[#allocation3 + $0x580] sm:$0xff]
        %v4713 = vld [vmem:[#allocation3 + $0x588] sm:$0xff]
        %v4714 = vld [vmem:[#allocation3 + $0x590] sm:$0xff]
        %v4715 = vld [vmem:[#allocation3 + $0x598] sm:$0xff]
        %v4716 = vld [vmem:[#allocation3 + $0x5a0] sm:$0xff]
        %v4717 = vld [vmem:[#allocation3 + $0x5a8] sm:$0xff]
        %v4718 = vld [vmem:[#allocation3 + $0x5b0] sm:$0xff]
        %v4719 = vld [vmem:[#allocation3 + $0x5b8] sm:$0xff]
        %v4720 = vld [vmem:[#allocation3 + $0x5c0] sm:$0xff]
        %v4721 = vld [vmem:[#allocation3 + $0x5c8] sm:$0xff]
        %v4722 = vld [vmem:[#allocation3 + $0x5d0] sm:$0xff]
        %v4723 = vld [vmem:[#allocation3 + $0x5d8] sm:$0xff]
        %v4724 = vld [vmem:[#allocation3 + $0x5e0] sm:$0xff]
        %v4725 = vld [vmem:[#allocation3 + $0x5e8] sm:$0xff]
        %v4726 = vld [vmem:[#allocation3 + $0x5f0] sm:$0xff]
        %v4727 = vld [vmem:[#allocation3 + $0x5f8] sm:$0xff]
        %v4728 = vld [vmem:[#allocation3 + $0x600] sm:$0xff]
        %v4729 = vld [vmem:[#allocation3 + $0x608] sm:$0xff]
        %v4730 = vld [vmem:[#allocation3 + $0x610] sm:$0xff]
        %v4731 = vld [vmem:[#allocation3 + $0x618] sm:$0xff]
        %v4732 = vld [vmem:[#allocation3 + $0x620] sm:$0xff]
        %v4733 = vld [vmem:[#allocation3 + $0x628] sm:$0xff]
        %v4734 = vld [vmem:[#allocation3 + $0x630] sm:$0xff]
        %v4735 = vld [vmem:[#allocation3 + $0x638] sm:$0xff]
        %v4736 = vld [vmem:[%s6] sm:$0xff]
        %v4737 = vld [vmem:[%s6 + $0x8] sm:$0xff]
        %v4738 = vld [vmem:[%s6 + $0x10] sm:$0xff]
        %v4739 = vld [vmem:[%s6 + $0x18] sm:$0xff]
        %v4740 = vld [vmem:[%s6 + $0x20] sm:$0xff]
        %v4741 = vld [vmem:[%s6 + $0x28] sm:$0xff]
        %v4742 = vld [vmem:[%s6 + $0x30] sm:$0xff]
        %v4743 = vld [vmem:[%s6 + $0x38] sm:$0xff]
        %v4744 = vld [vmem:[%s6 + $0x40] sm:$0xff]
        %v4745 = vld [vmem:[%s6 + $0x48] sm:$0xff]
        %v4746 = vld [vmem:[%s6 + $0x50] sm:$0xff]
        %v4747 = vld [vmem:[%s6 + $0x58] sm:$0xff]
        %v4748 = vld [vmem:[%s6 + $0x60] sm:$0xff]
        %v4749 = vld [vmem:[%s6 + $0x68] sm:$0xff]
        %v4750 = vld [vmem:[%s6 + $0x70] sm:$0xff]
        %v4751 = vld [vmem:[%s6 + $0x78] sm:$0xff]
        %v4752 = vld [vmem:[%s6 + $0x80] sm:$0xff]
        %v4753 = vld [vmem:[%s6 + $0x88] sm:$0xff]
        %v4754 = vld [vmem:[%s6 + $0x90] sm:$0xff]
        %v4755 = vld [vmem:[%s6 + $0x98] sm:$0xff]
        %v4756 = vld [vmem:[%s6 + $0xa0] sm:$0xff]
        %v4757 = vld [vmem:[%s6 + $0xa8] sm:$0xff]
        %v4758 = vld [vmem:[%s6 + $0xb0] sm:$0xff]
        %v4759 = vld [vmem:[%s6 + $0xb8] sm:$0xff]
        %v4760 = vld [vmem:[%s6 + $0xc0] sm:$0xff]
        %v4761 = vld [vmem:[%s6 + $0xc8] sm:$0xff]
        %v4762 = vld [vmem:[%s6 + $0xd0] sm:$0xff]
        %v4763 = vld [vmem:[%s6 + $0xd8] sm:$0xff]
        %v4764 = vld [vmem:[%s6 + $0xe0] sm:$0xff]
        %v4765 = vld [vmem:[%s6 + $0xe8] sm:$0xff]
        %v4766 = vld [vmem:[%s6 + $0xf0] sm:$0xff]
        %v4767 = vld [vmem:[%s6 + $0xf8] sm:$0xff]
        %v4768 = vld [vmem:[%s6 + $0x100] sm:$0xff]
        %v4769 = vld [vmem:[%s6 + $0x108] sm:$0xff]
        %v4770 = vld [vmem:[%s6 + $0x110] sm:$0xff]
        %v4771 = vld [vmem:[%s6 + $0x118] sm:$0xff]
        %v4772 = vld [vmem:[%s6 + $0x120] sm:$0xff]
        %v4773 = vld [vmem:[%s6 + $0x128] sm:$0xff]
        %v4774 = vld [vmem:[%s6 + $0x130] sm:$0xff]
        %v4775 = vld [vmem:[%s6 + $0x138] sm:$0xff]
        %v4776 = vld [vmem:[%s6 + $0x140] sm:$0xff]
        %v4777 = vld [vmem:[%s6 + $0x148] sm:$0xff]
        %v4778 = vld [vmem:[%s6 + $0x150] sm:$0xff]
        %v4779 = vld [vmem:[%s6 + $0x158] sm:$0xff]
        %v4780 = vld [vmem:[%s6 + $0x160] sm:$0xff]
        %v4781 = vld [vmem:[%s6 + $0x168] sm:$0xff]
        %v4782 = vld [vmem:[%s6 + $0x170] sm:$0xff]
        %v4783 = vld [vmem:[%s6 + $0x178] sm:$0xff]
        %v4784 = vld [vmem:[%s6 + $0x180] sm:$0xff]
        %v4785 = vld [vmem:[%s6 + $0x188] sm:$0xff]
        %4787 = vset.pattern.permute.xlu0 0
        %4788 = vperm.xlu0 %4787, %v4736
        %v4789 = vpop.permute.xlu0 %4788
        %4792 = vset.pattern.permute.xlu0 0
        %4793 = vperm.xlu0 %4792, %v4737
        %v4794 = vpop.permute.xlu0 %4793
        %4797 = vset.pattern.permute.xlu0 0
        %4798 = vperm.xlu0 %4797, %v4738
        %v4799 = vpop.permute.xlu0 %4798
        %4802 = vset.pattern.permute.xlu0 0
        %4803 = vperm.xlu0 %4802, %v4739
        %v4804 = vpop.permute.xlu0 %4803
        %4807 = vset.pattern.permute.xlu0 0
        %4808 = vperm.xlu0 %4807, %v4740
        %v4809 = vpop.permute.xlu0 %4808
        %4812 = vset.pattern.permute.xlu0 0
        %4813 = vperm.xlu0 %4812, %v4741
        %v4814 = vpop.permute.xlu0 %4813
        %4817 = vset.pattern.permute.xlu0 0
        %4818 = vperm.xlu0 %4817, %v4742
        %v4819 = vpop.permute.xlu0 %4818
        %4822 = vset.pattern.permute.xlu0 0
        %4823 = vperm.xlu0 %4822, %v4743
        %v4824 = vpop.permute.xlu0 %4823
        %4827 = vset.pattern.permute.xlu0 0
        %4828 = vperm.xlu0 %4827, %v4744
        %v4829 = vpop.permute.xlu0 %4828
        %4832 = vset.pattern.permute.xlu0 0
        %4833 = vperm.xlu0 %4832, %v4745
        %v4834 = vpop.permute.xlu0 %4833
        %4837 = vset.pattern.permute.xlu0 0
        %4838 = vperm.xlu0 %4837, %v4746
        %v4839 = vpop.permute.xlu0 %4838
        %4842 = vset.pattern.permute.xlu0 0
        %4843 = vperm.xlu0 %4842, %v4747
        %v4844 = vpop.permute.xlu0 %4843
        %4847 = vset.pattern.permute.xlu0 0
        %4848 = vperm.xlu0 %4847, %v4748
        %v4849 = vpop.permute.xlu0 %4848
        %4852 = vset.pattern.permute.xlu0 0
        %4853 = vperm.xlu0 %4852, %v4749
        %v4854 = vpop.permute.xlu0 %4853
        %4857 = vset.pattern.permute.xlu0 0
        %4858 = vperm.xlu0 %4857, %v4750
        %v4859 = vpop.permute.xlu0 %4858
        %4862 = vset.pattern.permute.xlu0 0
        %4863 = vperm.xlu0 %4862, %v4751
        %v4864 = vpop.permute.xlu0 %4863
        %4867 = vset.pattern.permute.xlu0 0
        %4868 = vperm.xlu0 %4867, %v4752
        %v4869 = vpop.permute.xlu0 %4868
        %4872 = vset.pattern.permute.xlu0 0
        %4873 = vperm.xlu0 %4872, %v4753
        %v4874 = vpop.permute.xlu0 %4873
        %4877 = vset.pattern.permute.xlu0 0
        %4878 = vperm.xlu0 %4877, %v4754
        %v4879 = vpop.permute.xlu0 %4878
        %4882 = vset.pattern.permute.xlu0 0
        %4883 = vperm.xlu0 %4882, %v4755
        %v4884 = vpop.permute.xlu0 %4883
        %4887 = vset.pattern.permute.xlu0 0
        %4888 = vperm.xlu0 %4887, %v4756
        %v4889 = vpop.permute.xlu0 %4888
        %4892 = vset.pattern.permute.xlu0 0
        %4893 = vperm.xlu0 %4892, %v4757
        %v4894 = vpop.permute.xlu0 %4893
        %4897 = vset.pattern.permute.xlu0 0
        %4898 = vperm.xlu0 %4897, %v4758
        %v4899 = vpop.permute.xlu0 %4898
        %4902 = vset.pattern.permute.xlu0 0
        %4903 = vperm.xlu0 %4902, %v4759
        %v4904 = vpop.permute.xlu0 %4903
        %4907 = vset.pattern.permute.xlu0 0
        %4908 = vperm.xlu0 %4907, %v4760
        %v4909 = vpop.permute.xlu0 %4908
        %4912 = vset.pattern.permute.xlu0 0
        %4913 = vperm.xlu0 %4912, %v4761
        %v4914 = vpop.permute.xlu0 %4913
        %4917 = vset.pattern.permute.xlu0 0
        %4918 = vperm.xlu0 %4917, %v4762
        %v4919 = vpop.permute.xlu0 %4918
        %4922 = vset.pattern.permute.xlu0 0
        %4923 = vperm.xlu0 %4922, %v4763
        %v4924 = vpop.permute.xlu0 %4923
        %4927 = vset.pattern.permute.xlu0 0
        %4928 = vperm.xlu0 %4927, %v4764
        %v4929 = vpop.permute.xlu0 %4928
        %4932 = vset.pattern.permute.xlu0 0
        %4933 = vperm.xlu0 %4932, %v4765
        %v4934 = vpop.permute.xlu0 %4933
        %4937 = vset.pattern.permute.xlu0 0
        %4938 = vperm.xlu0 %4937, %v4766
        %v4939 = vpop.permute.xlu0 %4938
        %4942 = vset.pattern.permute.xlu0 0
        %4943 = vperm.xlu0 %4942, %v4767
        %v4944 = vpop.permute.xlu0 %4943
        %4947 = vset.pattern.permute.xlu0 0
        %4948 = vperm.xlu0 %4947, %v4768
        %v4949 = vpop.permute.xlu0 %4948
        %4952 = vset.pattern.permute.xlu0 0
        %4953 = vperm.xlu0 %4952, %v4769
        %v4954 = vpop.permute.xlu0 %4953
        %4957 = vset.pattern.permute.xlu0 0
        %4958 = vperm.xlu0 %4957, %v4770
        %v4959 = vpop.permute.xlu0 %4958
        %4962 = vset.pattern.permute.xlu0 0
        %4963 = vperm.xlu0 %4962, %v4771
        %v4964 = vpop.permute.xlu0 %4963
        %4967 = vset.pattern.permute.xlu0 0
        %4968 = vperm.xlu0 %4967, %v4772
        %v4969 = vpop.permute.xlu0 %4968
        %4972 = vset.pattern.permute.xlu0 0
        %4973 = vperm.xlu0 %4972, %v4773
        %v4974 = vpop.permute.xlu0 %4973
        %4977 = vset.pattern.permute.xlu0 0
        %4978 = vperm.xlu0 %4977, %v4774
        %v4979 = vpop.permute.xlu0 %4978
        %4982 = vset.pattern.permute.xlu0 0
        %4983 = vperm.xlu0 %4982, %v4775
        %v4984 = vpop.permute.xlu0 %4983
        %4987 = vset.pattern.permute.xlu0 0
        %4988 = vperm.xlu0 %4987, %v4776
        %v4989 = vpop.permute.xlu0 %4988
        %4992 = vset.pattern.permute.xlu0 0
        %4993 = vperm.xlu0 %4992, %v4777
        %v4994 = vpop.permute.xlu0 %4993
        %4997 = vset.pattern.permute.xlu0 0
        %4998 = vperm.xlu0 %4997, %v4778
        %v4999 = vpop.permute.xlu0 %4998
        %5002 = vset.pattern.permute.xlu0 0
        %5003 = vperm.xlu0 %5002, %v4779
        %v5004 = vpop.permute.xlu0 %5003
        %5007 = vset.pattern.permute.xlu0 0
        %5008 = vperm.xlu0 %5007, %v4780
        %v5009 = vpop.permute.xlu0 %5008
        %5012 = vset.pattern.permute.xlu0 0
        %5013 = vperm.xlu0 %5012, %v4781
        %v5014 = vpop.permute.xlu0 %5013
        %5017 = vset.pattern.permute.xlu0 0
        %5018 = vperm.xlu0 %5017, %v4782
        %v5019 = vpop.permute.xlu0 %5018
        %5022 = vset.pattern.permute.xlu0 0
        %5023 = vperm.xlu0 %5022, %v4783
        %v5024 = vpop.permute.xlu0 %5023
        %5027 = vset.pattern.permute.xlu0 0
        %5028 = vperm.xlu0 %5027, %v4784
        %v5029 = vpop.permute.xlu0 %5028
        %5032 = vset.pattern.permute.xlu0 0
        %5033 = vperm.xlu0 %5032, %v4785
        %v5034 = vpop.permute.xlu0 %5033
        %v5037 = vsel %vm2725, %v4539, 0
        %v5040 = vsel %vm2725, %v4543, 0
        %v5043 = vsel %vm2725, %v4547, 0
        %v5046 = vsel %vm2725, %v4551, 0
        %v5049 = vsel %vm2725, %v4555, 0
        %v5052 = vsel %vm2725, %v4559, 0
        %v5055 = vsel %vm2725, %v4563, 0
        %v5058 = vsel %vm2725, %v4567, 0
        %v5061 = vsel %vm2725, %v4571, 0
        %v5064 = vsel %vm2725, %v4575, 0
        %v5067 = vsel %vm2725, %v4579, 0
        %v5070 = vsel %vm2725, %v4583, 0
        %v5073 = vsel %vm2725, %v4587, 0
        %v5076 = vsel %vm2725, %v4591, 0
        %v5079 = vsel %vm2725, %v4595, 0
        %v5082 = vsel %vm2725, %v4599, 0
        %v5085 = vsel %vm2725, %v4603, 0
        %v5088 = vsel %vm2725, %v4607, 0
        %v5091 = vsel %vm2725, %v4611, 0
        %v5094 = vsel %vm2725, %v4615, 0
        %v5097 = vsel %vm2725, %v4619, 0
        %v5100 = vsel %vm2725, %v4623, 0
        %v5103 = vsel %vm2725, %v4627, 0
        %v5106 = vsel %vm2725, %v4631, 0
        %v5109 = vsel %vm2725, %v4635, 0
        %v5112 = vsel %vm2725, %v4639, 0
        %v5115 = vsel %vm2725, %v4643, 0
        %v5118 = vsel %vm2725, %v4647, 0
        %v5121 = vsel %vm2725, %v4651, 0
        %v5124 = vsel %vm2725, %v4655, 0
        %v5127 = vsel %vm2725, %v4659, 0
        %v5130 = vsel %vm2725, %v4663, 0
        %v5133 = vsel %vm2725, %v4667, 0
        %v5136 = vsel %vm2725, %v4671, 0
        %v5139 = vsel %vm2725, %v4675, 0
        %v5142 = vsel %vm2725, %v4679, 0
        %v5145 = vsel %vm2725, %v4683, 0
        %v5148 = vsel %vm2725, %v4687, 0
        %v5151 = vsel %vm2725, %v4691, 0
        %v5154 = vsel %vm2725, %v4695, 0
        %v5157 = vsel %vm2725, %v4699, 0
        %v5160 = vsel %vm2725, %v4703, 0
        %v5163 = vsel %vm2725, %v4707, 0
        %v5166 = vsel %vm2725, %v4711, 0
        %v5169 = vsel %vm2725, %v4715, 0
        %v5172 = vsel %vm2725, %v4719, 0
        %v5175 = vsel %vm2725, %v4723, 0
        %v5178 = vsel %vm2725, %v4727, 0
        %v5181 = vsel %vm2725, %v4731, 0
        %v5184 = vsel %vm2725, %v4735, 0
        %5186 = vmatprep.subr.mxu0 %v4337
        %5187 = vmatpush1.msra.mxu0 %v4336
        %5188 = vmatprep.subr.mxu0 %v4341
        %5189 = vmatpush1.msra.mxu0 %v4340
        %5190 = vmatprep.subr.mxu0 %v4345
        %5191 = vmatpush1.msra.mxu0 %v4344
        %5192 = vmatprep.subr.mxu0 %v4349
        %5193 = vmatpush1.msra.mxu0 %v4348
        %5194 = vmatprep.subr.mxu0 %v4353
        %5195 = vmatpush1.msra.mxu0 %v4352
        %5196 = vmatprep.subr.mxu0 %v4357
        %5197 = vmatpush1.msra.mxu0 %v4356
        %5198 = vmatprep.subr.mxu0 %v4361
        %5199 = vmatpush1.msra.mxu0 %v4360
        %5200 = vmatprep.subr.mxu0 %v4365
        %5201 = vmatpush1.msra.mxu0 %v4364
        %5202 = vmatprep.subr.mxu0 %v4369
        %5203 = vmatpush1.msra.mxu0 %v4368
        %5204 = vmatprep.subr.mxu0 %v4373
        %5205 = vmatpush1.msra.mxu0 %v4372
        %5206 = vmatprep.subr.mxu0 %v4377
        %5207 = vmatpush1.msra.mxu0 %v4376
        %5208 = vmatprep.subr.mxu0 %v4381
        %5209 = vmatpush1.msra.mxu0 %v4380
        %5210 = vmatprep.subr.mxu0 %v4385
        %5211 = vmatpush1.msra.mxu0 %v4384
        %5212 = vmatprep.subr.mxu0 %v4389
        %5213 = vmatpush1.msra.mxu0 %v4388
        %5214 = vmatprep.subr.mxu0 %v4393
        %5215 = vmatpush1.msra.mxu0 %v4392
        %5216 = vmatprep.subr.mxu0 %v4397
        %5217 = vmatpush1.msra.mxu0 %v4396
        %5218 = vmatprep.subr.mxu0 %v4401
        %5219 = vmatpush1.msra.mxu0 %v4400
        %5220 = vmatprep.subr.mxu0 %v4405
        %5221 = vmatpush1.msra.mxu0 %v4404
        %5222 = vmatprep.subr.mxu0 %v4409
        %5223 = vmatpush1.msra.mxu0 %v4408
        %5224 = vmatprep.subr.mxu0 %v4413
        %5225 = vmatpush1.msra.mxu0 %v4412
        %5226 = vmatprep.subr.mxu0 %v4417
        %5227 = vmatpush1.msra.mxu0 %v4416
        %5228 = vmatprep.subr.mxu0 %v4421
        %5229 = vmatpush1.msra.mxu0 %v4420
        %5230 = vmatprep.subr.mxu0 %v4425
        %5231 = vmatpush1.msra.mxu0 %v4424
        %5232 = vmatprep.subr.mxu0 %v4429
        %5233 = vmatpush1.msra.mxu0 %v4428
        %5234 = vmatprep.subr.mxu0 %v4433
        %5235 = vmatpush1.msra.mxu0 %v4432
        %5236 = vmatprep.subr.mxu0 %v4437
        %5237 = vmatpush1.msra.mxu0 %v4436
        %5238 = vmatprep.subr.mxu0 %v4441
        %5239 = vmatpush1.msra.mxu0 %v4440
        %5240 = vmatprep.subr.mxu0 %v4445
        %5241 = vmatpush1.msra.mxu0 %v4444
        %5242 = vmatprep.subr.mxu0 %v4449
        %5243 = vmatpush1.msra.mxu0 %v4448
        %5244 = vmatprep.subr.mxu0 %v4453
        %5245 = vmatpush1.msra.mxu0 %v4452
        %5246 = vmatprep.subr.mxu0 %v4457
        %5247 = vmatpush1.msra.mxu0 %v4456
        %5248 = vmatprep.subr.mxu0 %v4461
        %5249 = vmatpush1.msra.mxu0 %v4460
        %5250 = vmatprep.mubr.f32.mxu0 %v4537
        %5251 = vmatmul.mubr.f32.gmra.mrb[0].mxu0 %v4536
        %v5252 = vpop.f32.mrb[0].mxu0
        %v5253 = vadd.f32 %v4789, %v5252
        %v5254 = vpop.f32.mrb[0].mxu0
        %v5255 = vadd.f32 %v4789, %v5254
        %5256 = vmatprep.mubr.f32.mxu0 %v4541
        %5257 = vmatmul.mubr.f32.gmra.mrb[0].mxu0 %v4540
        %v5258 = vpop.f32.mrb[0].mxu0
        %v5259 = vadd.f32 %v4794, %v5258
        %v5260 = vpop.f32.mrb[0].mxu0
        %v5261 = vadd.f32 %v4794, %v5260
        %5262 = vmatprep.mubr.f32.mxu0 %v4545
        %5263 = vmatmul.mubr.f32.gmra.mrb[0].mxu0 %v4544
        %v5264 = vpop.f32.mrb[0].mxu0
        %v5265 = vadd.f32 %v4799, %v5264
        %v5266 = vpop.f32.mrb[0].mxu0
        %v5267 = vadd.f32 %v4799, %v5266
        %5268 = vmatprep.mubr.f32.mxu0 %v4549
        %5269 = vmatmul.mubr.f32.gmra.mrb[0].mxu0 %v4548
        %v5270 = vpop.f32.mrb[0].mxu0
        %v5271 = vadd.f32 %v4804, %v5270
        %v5272 = vpop.f32.mrb[0].mxu0
        %v5273 = vadd.f32 %v4804, %v5272
        %5274 = vmatprep.mubr.f32.mxu0 %v4553
        %5275 = vmatmul.mubr.f32.gmra.mrb[0].mxu0 %v4552
        %v5276 = vpop.f32.mrb[0].mxu0
        %v5277 = vadd.f32 %v4809, %v5276
        %v5278 = vpop.f32.mrb[0].mxu0
        %v5279 = vadd.f32 %v4809, %v5278
        %5280 = vmatprep.mubr.f32.mxu0 %v4557
        %5281 = vmatmul.mubr.f32.gmra.mrb[0].mxu0 %v4556
        %v5282 = vpop.f32.mrb[0].mxu0
        %v5283 = vadd.f32 %v4814, %v5282
        %v5284 = vpop.f32.mrb[0].mxu0
        %v5285 = vadd.f32 %v4814, %v5284
        %5286 = vmatprep.mubr.f32.mxu0 %v4561
        %5287 = vmatmul.mubr.f32.gmra.mrb[0].mxu0 %v4560
        %v5288 = vpop.f32.mrb[0].mxu0
        %v5289 = vadd.f32 %v4819, %v5288
        %v5290 = vpop.f32.mrb[0].mxu0
        %v5291 = vadd.f32 %v4819, %v5290
        %5292 = vmatprep.mubr.f32.mxu0 %v4565
        %5293 = vmatmul.mubr.f32.gmra.mrb[0].mxu0 %v4564
        %v5294 = vpop.f32.mrb[0].mxu0
        %v5295 = vadd.f32 %v4824, %v5294
        %v5296 = vpop.f32.mrb[0].mxu0
        %v5297 = vadd.f32 %v4824, %v5296
        %5298 = vmatprep.mubr.f32.mxu0 %v4569
        %5299 = vmatmul.mubr.f32.gmra.mrb[0].mxu0 %v4568
        %v5300 = vpop.f32.mrb[0].mxu0
        %v5301 = vadd.f32 %v4829, %v5300
        %v5302 = vpop.f32.mrb[0].mxu0
        %v5303 = vadd.f32 %v4829, %v5302
        %5304 = vmatprep.mubr.f32.mxu0 %v4573
        %5305 = vmatmul.mubr.f32.gmra.mrb[0].mxu0 %v4572
        %v5306 = vpop.f32.mrb[0].mxu0
        %v5307 = vadd.f32 %v4834, %v5306
        %v5308 = vpop.f32.mrb[0].mxu0
        %v5309 = vadd.f32 %v4834, %v5308
        %5310 = vmatprep.mubr.f32.mxu0 %v4577
        %5311 = vmatmul.mubr.f32.gmra.mrb[0].mxu0 %v4576
        %v5312 = vpop.f32.mrb[0].mxu0
        %v5313 = vadd.f32 %v4839, %v5312
        %v5314 = vpop.f32.mrb[0].mxu0
        %v5315 = vadd.f32 %v4839, %v5314
        %5316 = vmatprep.mubr.f32.mxu0 %v4581
        %5317 = vmatmul.mubr.f32.gmra.mrb[0].mxu0 %v4580
        %v5318 = vpop.f32.mrb[0].mxu0
        %v5319 = vadd.f32 %v4844, %v5318
        %v5320 = vpop.f32.mrb[0].mxu0
        %v5321 = vadd.f32 %v4844, %v5320
        %5322 = vmatprep.mubr.f32.mxu0 %v4585
        %5323 = vmatmul.mubr.f32.gmra.mrb[0].mxu0 %v4584
        %v5324 = vpop.f32.mrb[0].mxu0
        %v5325 = vadd.f32 %v4849, %v5324
        %v5326 = vpop.f32.mrb[0].mxu0
        %v5327 = vadd.f32 %v4849, %v5326
        %5328 = vmatprep.mubr.f32.mxu0 %v4589
        %5329 = vmatmul.mubr.f32.gmra.mrb[0].mxu0 %v4588
        %v5330 = vpop.f32.mrb[0].mxu0
        %v5331 = vadd.f32 %v4854, %v5330
        %v5332 = vpop.f32.mrb[0].mxu0
        %v5333 = vadd.f32 %v4854, %v5332
        %5334 = vmatprep.mubr.f32.mxu0 %v4593
        %5335 = vmatmul.mubr.f32.gmra.mrb[0].mxu0 %v4592
        %v5336 = vpop.f32.mrb[0].mxu0
        %v5337 = vadd.f32 %v4859, %v5336
        %v5338 = vpop.f32.mrb[0].mxu0
        %v5339 = vadd.f32 %v4859, %v5338
        %5340 = vmatprep.mubr.f32.mxu0 %v4597
        %5341 = vmatmul.mubr.f32.gmra.mrb[0].mxu0 %v4596
        %v5342 = vpop.f32.mrb[0].mxu0
        %v5343 = vadd.f32 %v4864, %v5342
        %v5344 = vpop.f32.mrb[0].mxu0
        %v5345 = vadd.f32 %v4864, %v5344
        %5346 = vmatprep.mubr.f32.mxu0 %v4601
        %5347 = vmatmul.mubr.f32.gmra.mrb[0].mxu0 %v4600
        %v5348 = vpop.f32.mrb[0].mxu0
        %v5349 = vadd.f32 %v4869, %v5348
        %v5350 = vpop.f32.mrb[0].mxu0
        %v5351 = vadd.f32 %v4869, %v5350
        %5352 = vmatprep.mubr.f32.mxu0 %v4605
        %5353 = vmatmul.mubr.f32.gmra.mrb[0].mxu0 %v4604
        %v5354 = vpop.f32.mrb[0].mxu0
        %v5355 = vadd.f32 %v4874, %v5354
        %v5356 = vpop.f32.mrb[0].mxu0
        %v5357 = vadd.f32 %v4874, %v5356
        %5358 = vmatprep.mubr.f32.mxu0 %v4609
        %5359 = vmatmul.mubr.f32.gmra.mrb[0].mxu0 %v4608
        %v5360 = vpop.f32.mrb[0].mxu0
        %v5361 = vadd.f32 %v4879, %v5360
        %v5362 = vpop.f32.mrb[0].mxu0
        %v5363 = vadd.f32 %v4879, %v5362
        %5364 = vmatprep.mubr.f32.mxu0 %v4613
        %5365 = vmatmul.mubr.f32.gmra.mrb[0].mxu0 %v4612
        %v5366 = vpop.f32.mrb[0].mxu0
        %v5367 = vadd.f32 %v4884, %v5366
        %v5368 = vpop.f32.mrb[0].mxu0
        %v5369 = vadd.f32 %v4884, %v5368
        %5370 = vmatprep.mubr.f32.mxu0 %v4617
        %5371 = vmatmul.mubr.f32.gmra.mrb[0].mxu0 %v4616
        %v5372 = vpop.f32.mrb[0].mxu0
        %v5373 = vadd.f32 %v4889, %v5372
        %v5374 = vpop.f32.mrb[0].mxu0
        %v5375 = vadd.f32 %v4889, %v5374
        %5376 = vmatprep.mubr.f32.mxu0 %v4621
        %5377 = vmatmul.mubr.f32.gmra.mrb[0].mxu0 %v4620
        %v5378 = vpop.f32.mrb[0].mxu0
        %v5379 = vadd.f32 %v4894, %v5378
        %v5380 = vpop.f32.mrb[0].mxu0
        %v5381 = vadd.f32 %v4894, %v5380
        %5382 = vmatprep.mubr.f32.mxu0 %v4625
        %5383 = vmatmul.mubr.f32.gmra.mrb[0].mxu0 %v4624
        %v5384 = vpop.f32.mrb[0].mxu0
        %v5385 = vadd.f32 %v4899, %v5384
        %v5386 = vpop.f32.mrb[0].mxu0
        %v5387 = vadd.f32 %v4899, %v5386
        %5388 = vmatprep.mubr.f32.mxu0 %v4629
        %5389 = vmatmul.mubr.f32.gmra.mrb[0].mxu0 %v4628
        %v5390 = vpop.f32.mrb[0].mxu0
        %v5391 = vadd.f32 %v4904, %v5390
        %v5392 = vpop.f32.mrb[0].mxu0
        %v5393 = vadd.f32 %v4904, %v5392
        %5394 = vmatprep.mubr.f32.mxu0 %v4633
        %5395 = vmatmul.mubr.f32.gmra.mrb[0].mxu0 %v4632
        %v5396 = vpop.f32.mrb[0].mxu0
        %v5397 = vadd.f32 %v4909, %v5396
        %v5398 = vpop.f32.mrb[0].mxu0
        %v5399 = vadd.f32 %v4909, %v5398
        %5400 = vmatprep.mubr.f32.mxu0 %v4637
        %5401 = vmatmul.mubr.f32.gmra.mrb[0].mxu0 %v4636
        %v5402 = vpop.f32.mrb[0].mxu0
        %v5403 = vadd.f32 %v4914, %v5402
        %v5404 = vpop.f32.mrb[0].mxu0
        %v5405 = vadd.f32 %v4914, %v5404
        %5406 = vmatprep.mubr.f32.mxu0 %v4641
        %5407 = vmatmul.mubr.f32.gmra.mrb[0].mxu0 %v4640
        %v5408 = vpop.f32.mrb[0].mxu0
        %v5409 = vadd.f32 %v4919, %v5408
        %v5410 = vpop.f32.mrb[0].mxu0
        %v5411 = vadd.f32 %v4919, %v5410
        %5412 = vmatprep.mubr.f32.mxu0 %v4645
        %5413 = vmatmul.mubr.f32.gmra.mrb[0].mxu0 %v4644
        %v5414 = vpop.f32.mrb[0].mxu0
        %v5415 = vadd.f32 %v4924, %v5414
        %v5416 = vpop.f32.mrb[0].mxu0
        %v5417 = vadd.f32 %v4924, %v5416
        %5418 = vmatprep.mubr.f32.mxu0 %v4649
        %5419 = vmatmul.mubr.f32.gmra.mrb[0].mxu0 %v4648
        %v5420 = vpop.f32.mrb[0].mxu0
        %v5421 = vadd.f32 %v4929, %v5420
        %v5422 = vpop.f32.mrb[0].mxu0
        %v5423 = vadd.f32 %v4929, %v5422
        %5424 = vmatprep.mubr.f32.mxu0 %v4653
        %5425 = vmatmul.mubr.f32.gmra.mrb[0].mxu0 %v4652
        %v5426 = vpop.f32.mrb[0].mxu0
        %v5427 = vadd.f32 %v4934, %v5426
        %v5428 = vpop.f32.mrb[0].mxu0
        %v5429 = vadd.f32 %v4934, %v5428
        %5430 = vmatprep.mubr.f32.mxu0 %v4657
        %5431 = vmatmul.mubr.f32.gmra.mrb[0].mxu0 %v4656
        %v5432 = vpop.f32.mrb[0].mxu0
        %v5433 = vadd.f32 %v4939, %v5432
        %v5434 = vpop.f32.mrb[0].mxu0
        %v5435 = vadd.f32 %v4939, %v5434
        %5436 = vmatprep.mubr.f32.mxu0 %v4661
        %5437 = vmatmul.mubr.f32.gmra.mrb[0].mxu0 %v4660
        %v5438 = vpop.f32.mrb[0].mxu0
        %v5439 = vadd.f32 %v4944, %v5438
        %v5440 = vpop.f32.mrb[0].mxu0
        %v5441 = vadd.f32 %v4944, %v5440
        %5442 = vmatprep.mubr.f32.mxu0 %v4665
        %5443 = vmatmul.mubr.f32.gmra.mrb[0].mxu0 %v4664
        %v5444 = vpop.f32.mrb[0].mxu0
        %v5445 = vadd.f32 %v4949, %v5444
        %v5446 = vpop.f32.mrb[0].mxu0
        %v5447 = vadd.f32 %v4949, %v5446
        %5448 = vmatprep.mubr.f32.mxu0 %v4669
        %5449 = vmatmul.mubr.f32.gmra.mrb[0].mxu0 %v4668
        %v5450 = vpop.f32.mrb[0].mxu0
        %v5451 = vadd.f32 %v4954, %v5450
        %v5452 = vpop.f32.mrb[0].mxu0
        %v5453 = vadd.f32 %v4954, %v5452
        %5454 = vmatprep.mubr.f32.mxu0 %v4673
        %5455 = vmatmul.mubr.f32.gmra.mrb[0].mxu0 %v4672
        %v5456 = vpop.f32.mrb[0].mxu0
        %v5457 = vadd.f32 %v4959, %v5456
        %v5458 = vpop.f32.mrb[0].mxu0
        %v5459 = vadd.f32 %v4959, %v5458
        %5460 = vmatprep.mubr.f32.mxu0 %v4677
        %5461 = vmatmul.mubr.f32.gmra.mrb[0].mxu0 %v4676
        %v5462 = vpop.f32.mrb[0].mxu0
        %v5463 = vadd.f32 %v4964, %v5462
        %v5464 = vpop.f32.mrb[0].mxu0
        %v5465 = vadd.f32 %v4964, %v5464
        %5466 = vmatprep.mubr.f32.mxu0 %v4681
        %5467 = vmatmul.mubr.f32.gmra.mrb[0].mxu0 %v4680
        %v5468 = vpop.f32.mrb[0].mxu0
        %v5469 = vadd.f32 %v4969, %v5468
        %v5470 = vpop.f32.mrb[0].mxu0
        %v5471 = vadd.f32 %v4969, %v5470
        %5472 = vmatprep.mubr.f32.mxu0 %v4685
        %5473 = vmatmul.mubr.f32.gmra.mrb[0].mxu0 %v4684
        %v5474 = vpop.f32.mrb[0].mxu0
        %v5475 = vadd.f32 %v4974, %v5474
        %v5476 = vpop.f32.mrb[0].mxu0
        %v5477 = vadd.f32 %v4974, %v5476
        %5478 = vmatprep.mubr.f32.mxu0 %v4689
        %5479 = vmatmul.mubr.f32.gmra.mrb[0].mxu0 %v4688
        %v5480 = vpop.f32.mrb[0].mxu0
        %v5481 = vadd.f32 %v4979, %v5480
        %v5482 = vpop.f32.mrb[0].mxu0
        %v5483 = vadd.f32 %v4979, %v5482
        %5484 = vmatprep.mubr.f32.mxu0 %v4693
        %5485 = vmatmul.mubr.f32.gmra.mrb[0].mxu0 %v4692
        %v5486 = vpop.f32.mrb[0].mxu0
        %v5487 = vadd.f32 %v4984, %v5486
        %v5488 = vpop.f32.mrb[0].mxu0
        %v5489 = vadd.f32 %v4984, %v5488
        %5490 = vmatprep.mubr.f32.mxu0 %v4697
        %5491 = vmatmul.mubr.f32.gmra.mrb[0].mxu0 %v4696
        %v5492 = vpop.f32.mrb[0].mxu0
        %v5493 = vadd.f32 %v4989, %v5492
        %v5494 = vpop.f32.mrb[0].mxu0
        %v5495 = vadd.f32 %v4989, %v5494
        %5496 = vmatprep.mubr.f32.mxu0 %v4701
        %5497 = vmatmul.mubr.f32.gmra.mrb[0].mxu0 %v4700
        %v5498 = vpop.f32.mrb[0].mxu0
        %v5499 = vadd.f32 %v4994, %v5498
        %v5500 = vpop.f32.mrb[0].mxu0
        %v5501 = vadd.f32 %v4994, %v5500
        %5502 = vmatprep.mubr.f32.mxu0 %v4705
        %5503 = vmatmul.mubr.f32.gmra.mrb[0].mxu0 %v4704
        %v5504 = vpop.f32.mrb[0].mxu0
        %v5505 = vadd.f32 %v4999, %v5504
        %v5506 = vpop.f32.mrb[0].mxu0
        %v5507 = vadd.f32 %v4999, %v5506
        %5508 = vmatprep.mubr.f32.mxu0 %v4709
        %5509 = vmatmul.mubr.f32.gmra.mrb[0].mxu0 %v4708
        %v5510 = vpop.f32.mrb[0].mxu0
        %v5511 = vadd.f32 %v5004, %v5510
        %v5512 = vpop.f32.mrb[0].mxu0
        %v5513 = vadd.f32 %v5004, %v5512
        %5514 = vmatprep.mubr.f32.mxu0 %v4713
        %5515 = vmatmul.mubr.f32.gmra.mrb[0].mxu0 %v4712
        %v5516 = vpop.f32.mrb[0].mxu0
        %v5517 = vadd.f32 %v5009, %v5516
        %v5518 = vpop.f32.mrb[0].mxu0
        %v5519 = vadd.f32 %v5009, %v5518
        %5520 = vmatprep.mubr.f32.mxu0 %v4717
        %5521 = vmatmul.mubr.f32.gmra.mrb[0].mxu0 %v4716
        %v5522 = vpop.f32.mrb[0].mxu0
        %v5523 = vadd.f32 %v5014, %v5522
        %v5524 = vpop.f32.mrb[0].mxu0
        %v5525 = vadd.f32 %v5014, %v5524
        %5526 = vmatprep.mubr.f32.mxu0 %v4721
        %5527 = vmatmul.mubr.f32.gmra.mrb[0].mxu0 %v4720
        %v5528 = vpop.f32.mrb[0].mxu0
        %v5529 = vadd.f32 %v5019, %v5528
        %v5530 = vpop.f32.mrb[0].mxu0
        %v5531 = vadd.f32 %v5019, %v5530
        %5532 = vmatprep.mubr.f32.mxu0 %v4725
        %5533 = vmatmul.mubr.f32.gmra.mrb[0].mxu0 %v4724
        %v5534 = vpop.f32.mrb[0].mxu0
        %v5535 = vadd.f32 %v5024, %v5534
        %v5536 = vpop.f32.mrb[0].mxu0
        %v5537 = vadd.f32 %v5024, %v5536
        %5538 = vmatprep.mubr.f32.mxu0 %v4729
        %5539 = vmatmul.mubr.f32.gmra.mrb[0].mxu0 %v4728
        %v5540 = vpop.f32.mrb[0].mxu0
        %v5541 = vadd.f32 %v5029, %v5540
        %v5542 = vpop.f32.mrb[0].mxu0
        %v5543 = vadd.f32 %v5029, %v5542
        %5544 = vmatprep.mubr.f32.mxu0 %v4733
        %5545 = vmatmul.mubr.f32.gmra.mrb[0].mxu0 %v4732
        %v5546 = vpop.f32.mrb[0].mxu0
        %v5547 = vadd.f32 %v5034, %v5546
        %v5548 = vpop.f32.mrb[0].mxu0
        %v5549 = vadd.f32 %v5034, %v5548
        %5550 = vdwg.mxu0
        %5551 = vmatprep.subr.mxu0 %v4465
        %5552 = vmatpush1.msra.mxu0 %v4464
        %5553 = vmatprep.subr.mxu0 %v4469
        %5554 = vmatpush1.msra.mxu0 %v4468
        %5555 = vmatprep.subr.mxu0 %v4473
        %5556 = vmatpush1.msra.mxu0 %v4472
        %5557 = vmatprep.subr.mxu0 %v4477
        %5558 = vmatpush1.msra.mxu0 %v4476
        %5559 = vmatprep.subr.mxu0 %v4481
        %5560 = vmatpush1.msra.mxu0 %v4480
        %5561 = vmatprep.subr.mxu0 %v4485
        %5562 = vmatpush1.msra.mxu0 %v4484
        %5563 = vmatprep.subr.mxu0 %v4489
        %5564 = vmatpush1.msra.mxu0 %v4488
        %5565 = vmatprep.subr.mxu0 %v4493
        %5566 = vmatpush1.msra.mxu0 %v4492
        %5567 = vmatprep.subr.mxu0 %v4497
        %5568 = vmatpush1.msra.mxu0 %v4496
        %5569 = vmatprep.subr.mxu0 %v4501
        %5570 = vmatpush1.msra.mxu0 %v4500
        %5571 = vmatprep.subr.mxu0 %v4505
        %5572 = vmatpush1.msra.mxu0 %v4504
        %5573 = vmatprep.subr.mxu0 %v4509
        %5574 = vmatpush1.msra.mxu0 %v4508
        %5575 = vmatprep.subr.mxu0 %v4513
        %5576 = vmatpush1.msra.mxu0 %v4512
        %5577 = vmatprep.subr.mxu0 %v4517
        %5578 = vmatpush1.msra.mxu0 %v4516
        %5579 = vmatprep.subr.mxu0 %v4521
        %5580 = vmatpush1.msra.mxu0 %v4520
        %5581 = vmatprep.subr.mxu0 %v4525
        %5582 = vmatpush1.msra.mxu0 %v4524
        %5583 = vmatprep.subr.mxu0 %v4529
        %5584 = vmatpush1.msra.mxu0 %v4528
        %5585 = vmatprep.subr.mxu0 %v4533
        %5586 = vmatpush1.msra.mxu0 %v4532
        %5587 = vmatprep.subr.mxu0 0.0
        %5588 = vmatpush1.msra.mxu0 0.0
        %5589 = vmatprep.subr.mxu0 0.0
        %5590 = vmatpush1.msra.mxu0 0.0
        %5591 = vmatprep.subr.mxu0 0.0
        %5592 = vmatpush1.msra.mxu0 0.0
        %5593 = vmatprep.subr.mxu0 0.0
        %5594 = vmatpush1.msra.mxu0 0.0
        %5595 = vmatprep.subr.mxu0 0.0
        %5596 = vmatpush1.msra.mxu0 0.0
        %5597 = vmatprep.subr.mxu0 0.0
        %5598 = vmatpush1.msra.mxu0 0.0
        %5599 = vmatprep.subr.mxu0 0.0
        %5600 = vmatpush1.msra.mxu0 0.0
        %5601 = vmatprep.subr.mxu0 0.0
        %5602 = vmatpush1.msra.mxu0 0.0
        %5603 = vmatprep.subr.mxu0 0.0
        %5604 = vmatpush1.msra.mxu0 0.0
        %5605 = vmatprep.subr.mxu0 0.0
        %5606 = vmatpush1.msra.mxu0 0.0
        %5607 = vmatprep.subr.mxu0 0.0
        %5608 = vmatpush1.msra.mxu0 0.0
        %5609 = vmatprep.subr.mxu0 0.0
        %5610 = vmatpush1.msra.mxu0 0.0
        %5611 = vmatprep.subr.mxu0 0.0
        %5612 = vmatpush1.msra.mxu0 0.0
        %5613 = vmatprep.subr.mxu0 0.0
        %5614 = vmatpush1.msra.mxu0 0.0
        %5615 = vmatprep.mubr.f32.mxu0 %v5037
        %5616 = vmatmul.mubr.f32.gmra.mrb[0].mxu0 %v4538
        %v5617 = vpop.f32.mrb[0].mxu0
        %v5618 = vadd.f32 %v5253, %v5617
        %v5619 = vpop.f32.mrb[0].mxu0
        %v5620 = vadd.f32 %v5255, %v5619
        %5621 = vmatprep.mubr.f32.mxu0 %v5040
        %5622 = vmatmul.mubr.f32.gmra.mrb[0].mxu0 %v4542
        %v5623 = vpop.f32.mrb[0].mxu0
        %v5624 = vadd.f32 %v5259, %v5623
        %v5625 = vpop.f32.mrb[0].mxu0
        %v5626 = vadd.f32 %v5261, %v5625
        %5627 = vmatprep.mubr.f32.mxu0 %v5043
        %5628 = vmatmul.mubr.f32.gmra.mrb[0].mxu0 %v4546
        %v5629 = vpop.f32.mrb[0].mxu0
        %v5630 = vadd.f32 %v5265, %v5629
        %v5631 = vpop.f32.mrb[0].mxu0
        %v5632 = vadd.f32 %v5267, %v5631
        %5633 = vmatprep.mubr.f32.mxu0 %v5046
        %5634 = vmatmul.mubr.f32.gmra.mrb[0].mxu0 %v4550
        %v5635 = vpop.f32.mrb[0].mxu0
        %v5636 = vadd.f32 %v5271, %v5635
        %v5637 = vpop.f32.mrb[0].mxu0
        %v5638 = vadd.f32 %v5273, %v5637
        %5639 = vmatprep.mubr.f32.mxu0 %v5049
        %5640 = vmatmul.mubr.f32.gmra.mrb[0].mxu0 %v4554
        %v5641 = vpop.f32.mrb[0].mxu0
        %v5642 = vadd.f32 %v5277, %v5641
        %v5643 = vpop.f32.mrb[0].mxu0
        %v5644 = vadd.f32 %v5279, %v5643
        %5645 = vmatprep.mubr.f32.mxu0 %v5052
        %5646 = vmatmul.mubr.f32.gmra.mrb[0].mxu0 %v4558
        %v5647 = vpop.f32.mrb[0].mxu0
        %v5648 = vadd.f32 %v5283, %v5647
        %v5649 = vpop.f32.mrb[0].mxu0
        %v5650 = vadd.f32 %v5285, %v5649
        %5651 = vmatprep.mubr.f32.mxu0 %v5055
        %5652 = vmatmul.mubr.f32.gmra.mrb[0].mxu0 %v4562
        %v5653 = vpop.f32.mrb[0].mxu0
        %v5654 = vadd.f32 %v5289, %v5653
        %v5655 = vpop.f32.mrb[0].mxu0
        %v5656 = vadd.f32 %v5291, %v5655
        %5657 = vmatprep.mubr.f32.mxu0 %v5058
        %5658 = vmatmul.mubr.f32.gmra.mrb[0].mxu0 %v4566
        %v5659 = vpop.f32.mrb[0].mxu0
        %v5660 = vadd.f32 %v5295, %v5659
        %v5661 = vpop.f32.mrb[0].mxu0
        %v5662 = vadd.f32 %v5297, %v5661
        %5663 = vmatprep.mubr.f32.mxu0 %v5061
        %5664 = vmatmul.mubr.f32.gmra.mrb[0].mxu0 %v4570
        %v5665 = vpop.f32.mrb[0].mxu0
        %v5666 = vadd.f32 %v5301, %v5665
        %v5667 = vpop.f32.mrb[0].mxu0
        %v5668 = vadd.f32 %v5303, %v5667
        %5669 = vmatprep.mubr.f32.mxu0 %v5064
        %5670 = vmatmul.mubr.f32.gmra.mrb[0].mxu0 %v4574
        %v5671 = vpop.f32.mrb[0].mxu0
        %v5672 = vadd.f32 %v5307, %v5671
        %v5673 = vpop.f32.mrb[0].mxu0
        %v5674 = vadd.f32 %v5309, %v5673
        %5675 = vmatprep.mubr.f32.mxu0 %v5067
        %5676 = vmatmul.mubr.f32.gmra.mrb[0].mxu0 %v4578
        %v5677 = vpop.f32.mrb[0].mxu0
        %v5678 = vadd.f32 %v5313, %v5677
        %v5679 = vpop.f32.mrb[0].mxu0
        %v5680 = vadd.f32 %v5315, %v5679
        %5681 = vmatprep.mubr.f32.mxu0 %v5070
        %5682 = vmatmul.mubr.f32.gmra.mrb[0].mxu0 %v4582
        %v5683 = vpop.f32.mrb[0].mxu0
        %v5684 = vadd.f32 %v5319, %v5683
        %v5685 = vpop.f32.mrb[0].mxu0
        %v5686 = vadd.f32 %v5321, %v5685
        %5687 = vmatprep.mubr.f32.mxu0 %v5073
        %5688 = vmatmul.mubr.f32.gmra.mrb[0].mxu0 %v4586
        %v5689 = vpop.f32.mrb[0].mxu0
        %v5690 = vadd.f32 %v5325, %v5689
        %v5691 = vpop.f32.mrb[0].mxu0
        %v5692 = vadd.f32 %v5327, %v5691
        %5693 = vmatprep.mubr.f32.mxu0 %v5076
        %5694 = vmatmul.mubr.f32.gmra.mrb[0].mxu0 %v4590
        %v5695 = vpop.f32.mrb[0].mxu0
        %v5696 = vadd.f32 %v5331, %v5695
        %v5697 = vpop.f32.mrb[0].mxu0
        %v5698 = vadd.f32 %v5333, %v5697
        %5699 = vmatprep.mubr.f32.mxu0 %v5079
        %5700 = vmatmul.mubr.f32.gmra.mrb[0].mxu0 %v4594
        %v5701 = vpop.f32.mrb[0].mxu0
        %v5702 = vadd.f32 %v5337, %v5701
        %v5703 = vpop.f32.mrb[0].mxu0
        %v5704 = vadd.f32 %v5339, %v5703
        %5705 = vmatprep.mubr.f32.mxu0 %v5082
        %5706 = vmatmul.mubr.f32.gmra.mrb[0].mxu0 %v4598
        %v5707 = vpop.f32.mrb[0].mxu0
        %v5708 = vadd.f32 %v5343, %v5707
        %v5709 = vpop.f32.mrb[0].mxu0
        %v5710 = vadd.f32 %v5345, %v5709
        %5711 = vmatprep.mubr.f32.mxu0 %v5085
        %5712 = vmatmul.mubr.f32.gmra.mrb[0].mxu0 %v4602
        %v5713 = vpop.f32.mrb[0].mxu0
        %v5714 = vadd.f32 %v5349, %v5713
        %v5715 = vpop.f32.mrb[0].mxu0
        %v5716 = vadd.f32 %v5351, %v5715
        %5717 = vmatprep.mubr.f32.mxu0 %v5088
        %5718 = vmatmul.mubr.f32.gmra.mrb[0].mxu0 %v4606
        %v5719 = vpop.f32.mrb[0].mxu0
        %v5720 = vadd.f32 %v5355, %v5719
        %v5721 = vpop.f32.mrb[0].mxu0
        %v5722 = vadd.f32 %v5357, %v5721
        %5723 = vmatprep.mubr.f32.mxu0 %v5091
        %5724 = vmatmul.mubr.f32.gmra.mrb[0].mxu0 %v4610
        %v5725 = vpop.f32.mrb[0].mxu0
        %v5726 = vadd.f32 %v5361, %v5725
        %v5727 = vpop.f32.mrb[0].mxu0
        %v5728 = vadd.f32 %v5363, %v5727
        %5729 = vmatprep.mubr.f32.mxu0 %v5094
        %5730 = vmatmul.mubr.f32.gmra.mrb[0].mxu0 %v4614
        %v5731 = vpop.f32.mrb[0].mxu0
        %v5732 = vadd.f32 %v5367, %v5731
        %v5733 = vpop.f32.mrb[0].mxu0
        %v5734 = vadd.f32 %v5369, %v5733
        %5735 = vmatprep.mubr.f32.mxu0 %v5097
        %5736 = vmatmul.mubr.f32.gmra.mrb[0].mxu0 %v4618
        %v5737 = vpop.f32.mrb[0].mxu0
        %v5738 = vadd.f32 %v5373, %v5737
        %v5739 = vpop.f32.mrb[0].mxu0
        %v5740 = vadd.f32 %v5375, %v5739
        %5741 = vmatprep.mubr.f32.mxu0 %v5100
        %5742 = vmatmul.mubr.f32.gmra.mrb[0].mxu0 %v4622
        %v5743 = vpop.f32.mrb[0].mxu0
        %v5744 = vadd.f32 %v5379, %v5743
        %v5745 = vpop.f32.mrb[0].mxu0
        %v5746 = vadd.f32 %v5381, %v5745
        %5747 = vmatprep.mubr.f32.mxu0 %v5103
        %5748 = vmatmul.mubr.f32.gmra.mrb[0].mxu0 %v4626
        %v5749 = vpop.f32.mrb[0].mxu0
        %v5750 = vadd.f32 %v5385, %v5749
        %v5751 = vpop.f32.mrb[0].mxu0
        %v5752 = vadd.f32 %v5387, %v5751
        %5753 = vmatprep.mubr.f32.mxu0 %v5106
        %5754 = vmatmul.mubr.f32.gmra.mrb[0].mxu0 %v4630
        %v5755 = vpop.f32.mrb[0].mxu0
        %v5756 = vadd.f32 %v5391, %v5755
        %v5757 = vpop.f32.mrb[0].mxu0
        %v5758 = vadd.f32 %v5393, %v5757
        %5759 = vmatprep.mubr.f32.mxu0 %v5109
        %5760 = vmatmul.mubr.f32.gmra.mrb[0].mxu0 %v4634
        %v5761 = vpop.f32.mrb[0].mxu0
        %v5762 = vadd.f32 %v5397, %v5761
        %v5763 = vpop.f32.mrb[0].mxu0
        %v5764 = vadd.f32 %v5399, %v5763
        %5765 = vmatprep.mubr.f32.mxu0 %v5112
        %5766 = vmatmul.mubr.f32.gmra.mrb[0].mxu0 %v4638
        %v5767 = vpop.f32.mrb[0].mxu0
        %v5768 = vadd.f32 %v5403, %v5767
        %v5769 = vpop.f32.mrb[0].mxu0
        %v5770 = vadd.f32 %v5405, %v5769
        %5771 = vmatprep.mubr.f32.mxu0 %v5115
        %5772 = vmatmul.mubr.f32.gmra.mrb[0].mxu0 %v4642
        %v5773 = vpop.f32.mrb[0].mxu0
        %v5774 = vadd.f32 %v5409, %v5773
        %v5775 = vpop.f32.mrb[0].mxu0
        %v5776 = vadd.f32 %v5411, %v5775
        %5777 = vmatprep.mubr.f32.mxu0 %v5118
        %5778 = vmatmul.mubr.f32.gmra.mrb[0].mxu0 %v4646
        %v5779 = vpop.f32.mrb[0].mxu0
        %v5780 = vadd.f32 %v5415, %v5779
        %v5781 = vpop.f32.mrb[0].mxu0
        %v5782 = vadd.f32 %v5417, %v5781
        %5783 = vmatprep.mubr.f32.mxu0 %v5121
        %5784 = vmatmul.mubr.f32.gmra.mrb[0].mxu0 %v4650
        %v5785 = vpop.f32.mrb[0].mxu0
        %v5786 = vadd.f32 %v5421, %v5785
        %v5787 = vpop.f32.mrb[0].mxu0
        %v5788 = vadd.f32 %v5423, %v5787
        %5789 = vmatprep.mubr.f32.mxu0 %v5124
        %5790 = vmatmul.mubr.f32.gmra.mrb[0].mxu0 %v4654
        %v5791 = vpop.f32.mrb[0].mxu0
        %v5792 = vadd.f32 %v5427, %v5791
        %v5793 = vpop.f32.mrb[0].mxu0
        %v5794 = vadd.f32 %v5429, %v5793
        %5795 = vmatprep.mubr.f32.mxu0 %v5127
        %5796 = vmatmul.mubr.f32.gmra.mrb[0].mxu0 %v4658
        %v5797 = vpop.f32.mrb[0].mxu0
        %v5798 = vadd.f32 %v5433, %v5797
        %v5799 = vpop.f32.mrb[0].mxu0
        %v5800 = vadd.f32 %v5435, %v5799
        %5801 = vmatprep.mubr.f32.mxu0 %v5130
        %5802 = vmatmul.mubr.f32.gmra.mrb[0].mxu0 %v4662
        %v5803 = vpop.f32.mrb[0].mxu0
        %v5804 = vadd.f32 %v5439, %v5803
        %v5805 = vpop.f32.mrb[0].mxu0
        %v5806 = vadd.f32 %v5441, %v5805
        %5807 = vmatprep.mubr.f32.mxu0 %v5133
        %5808 = vmatmul.mubr.f32.gmra.mrb[0].mxu0 %v4666
        %v5809 = vpop.f32.mrb[0].mxu0
        %v5810 = vadd.f32 %v5445, %v5809
        %v5811 = vpop.f32.mrb[0].mxu0
        %v5812 = vadd.f32 %v5447, %v5811
        %5813 = vmatprep.mubr.f32.mxu0 %v5136
        %5814 = vmatmul.mubr.f32.gmra.mrb[0].mxu0 %v4670
        %v5815 = vpop.f32.mrb[0].mxu0
        %v5816 = vadd.f32 %v5451, %v5815
        %v5817 = vpop.f32.mrb[0].mxu0
        %v5818 = vadd.f32 %v5453, %v5817
        %5819 = vmatprep.mubr.f32.mxu0 %v5139
        %5820 = vmatmul.mubr.f32.gmra.mrb[0].mxu0 %v4674
        %v5821 = vpop.f32.mrb[0].mxu0
        %v5822 = vadd.f32 %v5457, %v5821
        %v5823 = vpop.f32.mrb[0].mxu0
        %v5824 = vadd.f32 %v5459, %v5823
        %5825 = vmatprep.mubr.f32.mxu0 %v5142
        %5826 = vmatmul.mubr.f32.gmra.mrb[0].mxu0 %v4678
        %v5827 = vpop.f32.mrb[0].mxu0
        %v5828 = vadd.f32 %v5463, %v5827
        %v5829 = vpop.f32.mrb[0].mxu0
        %v5830 = vadd.f32 %v5465, %v5829
        %5831 = vmatprep.mubr.f32.mxu0 %v5145
        %5832 = vmatmul.mubr.f32.gmra.mrb[0].mxu0 %v4682
        %v5833 = vpop.f32.mrb[0].mxu0
        %v5834 = vadd.f32 %v5469, %v5833
        %v5835 = vpop.f32.mrb[0].mxu0
        %v5836 = vadd.f32 %v5471, %v5835
        %5837 = vmatprep.mubr.f32.mxu0 %v5148
        %5838 = vmatmul.mubr.f32.gmra.mrb[0].mxu0 %v4686
        %v5839 = vpop.f32.mrb[0].mxu0
        %v5840 = vadd.f32 %v5475, %v5839
        %v5841 = vpop.f32.mrb[0].mxu0
        %v5842 = vadd.f32 %v5477, %v5841
        %5843 = vmatprep.mubr.f32.mxu0 %v5151
        %5844 = vmatmul.mubr.f32.gmra.mrb[0].mxu0 %v4690
        %v5845 = vpop.f32.mrb[0].mxu0
        %v5846 = vadd.f32 %v5481, %v5845
        %v5847 = vpop.f32.mrb[0].mxu0
        %v5848 = vadd.f32 %v5483, %v5847
        %5849 = vmatprep.mubr.f32.mxu0 %v5154
        %5850 = vmatmul.mubr.f32.gmra.mrb[0].mxu0 %v4694
        %v5851 = vpop.f32.mrb[0].mxu0
        %v5852 = vadd.f32 %v5487, %v5851
        %v5853 = vpop.f32.mrb[0].mxu0
        %v5854 = vadd.f32 %v5489, %v5853
        %5855 = vmatprep.mubr.f32.mxu0 %v5157
        %5856 = vmatmul.mubr.f32.gmra.mrb[0].mxu0 %v4698
        %v5857 = vpop.f32.mrb[0].mxu0
        %v5858 = vadd.f32 %v5493, %v5857
        %v5859 = vpop.f32.mrb[0].mxu0
        %v5860 = vadd.f32 %v5495, %v5859
        %5861 = vmatprep.mubr.f32.mxu0 %v5160
        %5862 = vmatmul.mubr.f32.gmra.mrb[0].mxu0 %v4702
        %v5863 = vpop.f32.mrb[0].mxu0
        %v5864 = vadd.f32 %v5499, %v5863
        %v5865 = vpop.f32.mrb[0].mxu0
        %v5866 = vadd.f32 %v5501, %v5865
        %5867 = vmatprep.mubr.f32.mxu0 %v5163
        %5868 = vmatmul.mubr.f32.gmra.mrb[0].mxu0 %v4706
        %v5869 = vpop.f32.mrb[0].mxu0
        %v5870 = vadd.f32 %v5505, %v5869
        %v5871 = vpop.f32.mrb[0].mxu0
        %v5872 = vadd.f32 %v5507, %v5871
        %5873 = vmatprep.mubr.f32.mxu0 %v5166
        %5874 = vmatmul.mubr.f32.gmra.mrb[0].mxu0 %v4710
        %v5875 = vpop.f32.mrb[0].mxu0
        %v5876 = vadd.f32 %v5511, %v5875
        %v5877 = vpop.f32.mrb[0].mxu0
        %v5878 = vadd.f32 %v5513, %v5877
        %5879 = vmatprep.mubr.f32.mxu0 %v5169
        %5880 = vmatmul.mubr.f32.gmra.mrb[0].mxu0 %v4714
        %v5881 = vpop.f32.mrb[0].mxu0
        %v5882 = vadd.f32 %v5517, %v5881
        %v5883 = vpop.f32.mrb[0].mxu0
        %v5884 = vadd.f32 %v5519, %v5883
        %5885 = vmatprep.mubr.f32.mxu0 %v5172
        %5886 = vmatmul.mubr.f32.gmra.mrb[0].mxu0 %v4718
        %v5887 = vpop.f32.mrb[0].mxu0
        %v5888 = vadd.f32 %v5523, %v5887
        %v5889 = vpop.f32.mrb[0].mxu0
        %v5890 = vadd.f32 %v5525, %v5889
        %5891 = vmatprep.mubr.f32.mxu0 %v5175
        %5892 = vmatmul.mubr.f32.gmra.mrb[0].mxu0 %v4722
        %v5893 = vpop.f32.mrb[0].mxu0
        %v5894 = vadd.f32 %v5529, %v5893
        %v5895 = vpop.f32.mrb[0].mxu0
        %v5896 = vadd.f32 %v5531, %v5895
        %5897 = vmatprep.mubr.f32.mxu0 %v5178
        %5898 = vmatmul.mubr.f32.gmra.mrb[0].mxu0 %v4726
        %v5899 = vpop.f32.mrb[0].mxu0
        %v5900 = vadd.f32 %v5535, %v5899
        %v5901 = vpop.f32.mrb[0].mxu0
        %v5902 = vadd.f32 %v5537, %v5901
        %5903 = vmatprep.mubr.f32.mxu0 %v5181
        %5904 = vmatmul.mubr.f32.gmra.mrb[0].mxu0 %v4730
        %v5905 = vpop.f32.mrb[0].mxu0
        %v5906 = vadd.f32 %v5541, %v5905
        %v5907 = vpop.f32.mrb[0].mxu0
        %v5908 = vadd.f32 %v5543, %v5907
        %5909 = vmatprep.mubr.f32.mxu0 %v5184
        %5910 = vmatmul.mubr.f32.gmra.mrb[0].mxu0 %v4734
        %v5911 = vpop.f32.mrb[0].mxu0
        %v5912 = vadd.f32 %v5547, %v5911
        %v5913 = vpop.f32.mrb[0].mxu0
        %v5914 = vadd.f32 %v5549, %v5913
        %5915 = vdwg.mxu0
        %5916 = vmatprep.subr.mxu0 %v4339
        %5917 = vmatpush1.msra.mxu0 %v4338
        %5918 = vmatprep.subr.mxu0 %v4343
        %5919 = vmatpush1.msra.mxu0 %v4342
        %5920 = vmatprep.subr.mxu0 %v4347
        %5921 = vmatpush1.msra.mxu0 %v4346
        %5922 = vmatprep.subr.mxu0 %v4351
        %5923 = vmatpush1.msra.mxu0 %v4350
        %5924 = vmatprep.subr.mxu0 %v4355
        %5925 = vmatpush1.msra.mxu0 %v4354
        %5926 = vmatprep.subr.mxu0 %v4359
        %5927 = vmatpush1.msra.mxu0 %v4358
        %5928 = vmatprep.subr.mxu0 %v4363
        %5929 = vmatpush1.msra.mxu0 %v4362
        %5930 = vmatprep.subr.mxu0 %v4367
        %5931 = vmatpush1.msra.mxu0 %v4366
        %5932 = vmatprep.subr.mxu0 %v4371
        %5933 = vmatpush1.msra.mxu0 %v4370
        %5934 = vmatprep.subr.mxu0 %v4375
        %5935 = vmatpush1.msra.mxu0 %v4374
        %5936 = vmatprep.subr.mxu0 %v4379
        %5937 = vmatpush1.msra.mxu0 %v4378
        %5938 = vmatprep.subr.mxu0 %v4383
        %5939 = vmatpush1.msra.mxu0 %v4382
        %5940 = vmatprep.subr.mxu0 %v4387
        %5941 = vmatpush1.msra.mxu0 %v4386
        %5942 = vmatprep.subr.mxu0 %v4391
        %5943 = vmatpush1.msra.mxu0 %v4390
        %5944 = vmatprep.subr.mxu0 %v4395
        %5945 = vmatpush1.msra.mxu0 %v4394
        %5946 = vmatprep.subr.mxu0 %v4399
        %5947 = vmatpush1.msra.mxu0 %v4398
        %5948 = vmatprep.subr.mxu0 %v4403
        %5949 = vmatpush1.msra.mxu0 %v4402
        %5950 = vmatprep.subr.mxu0 %v4407
        %5951 = vmatpush1.msra.mxu0 %v4406
        %5952 = vmatprep.subr.mxu0 %v4411
        %5953 = vmatpush1.msra.mxu0 %v4410
        %5954 = vmatprep.subr.mxu0 %v4415
        %5955 = vmatpush1.msra.mxu0 %v4414
        %5956 = vmatprep.subr.mxu0 %v4419
        %5957 = vmatpush1.msra.mxu0 %v4418
        %5958 = vmatprep.subr.mxu0 %v4423
        %5959 = vmatpush1.msra.mxu0 %v4422
        %5960 = vmatprep.subr.mxu0 %v4427
        %5961 = vmatpush1.msra.mxu0 %v4426
        %5962 = vmatprep.subr.mxu0 %v4431
        %5963 = vmatpush1.msra.mxu0 %v4430
        %5964 = vmatprep.subr.mxu0 %v4435
        %5965 = vmatpush1.msra.mxu0 %v4434
        %5966 = vmatprep.subr.mxu0 %v4439
        %5967 = vmatpush1.msra.mxu0 %v4438
        %5968 = vmatprep.subr.mxu0 %v4443
        %5969 = vmatpush1.msra.mxu0 %v4442
        %5970 = vmatprep.subr.mxu0 %v4447
        %5971 = vmatpush1.msra.mxu0 %v4446
        %5972 = vmatprep.subr.mxu0 %v4451
        %5973 = vmatpush1.msra.mxu0 %v4450
        %5974 = vmatprep.subr.mxu0 %v4455
        %5975 = vmatpush1.msra.mxu0 %v4454
        %5976 = vmatprep.subr.mxu0 %v4459
        %5977 = vmatpush1.msra.mxu0 %v4458
        %5978 = vmatprep.subr.mxu0 %v4463
        %5979 = vmatpush1.msra.mxu0 %v4462
        %5980 = vmatprep.mubr.f32.mxu0 %v4537
        %5981 = vmatmul.mubr.f32.gmra.mrb[0].mxu0 %v4536
        %v5982 = vpop.f32.mrb[0].mxu0
        %v5983 = vadd.f32 %v4789, %v5982
        %v5984 = vpop.f32.mrb[0].mxu0
        %v5985 = vadd.f32 %v4789, %v5984
        %5986 = vmatprep.mubr.f32.mxu0 %v4541
        %5987 = vmatmul.mubr.f32.gmra.mrb[0].mxu0 %v4540
        %v5988 = vpop.f32.mrb[0].mxu0
        %v5989 = vadd.f32 %v4794, %v5988
        %v5990 = vpop.f32.mrb[0].mxu0
        %v5991 = vadd.f32 %v4794, %v5990
        %5992 = vmatprep.mubr.f32.mxu0 %v4545
        %5993 = vmatmul.mubr.f32.gmra.mrb[0].mxu0 %v4544
        %v5994 = vpop.f32.mrb[0].mxu0
        %v5995 = vadd.f32 %v4799, %v5994
        %v5996 = vpop.f32.mrb[0].mxu0
        %v5997 = vadd.f32 %v4799, %v5996
        %5998 = vmatprep.mubr.f32.mxu0 %v4549
        %5999 = vmatmul.mubr.f32.gmra.mrb[0].mxu0 %v4548
        %v6000 = vpop.f32.mrb[0].mxu0
        %v6001 = vadd.f32 %v4804, %v6000
        %v6002 = vpop.f32.mrb[0].mxu0
        %v6003 = vadd.f32 %v4804, %v6002
        %6004 = vmatprep.mubr.f32.mxu0 %v4553
        %6005 = vmatmul.mubr.f32.gmra.mrb[0].mxu0 %v4552
        %v6006 = vpop.f32.mrb[0].mxu0
        %v6007 = vadd.f32 %v4809, %v6006
        %v6008 = vpop.f32.mrb[0].mxu0
        %v6009 = vadd.f32 %v4809, %v6008
        %6010 = vmatprep.mubr.f32.mxu0 %v4557
        %6011 = vmatmul.mubr.f32.gmra.mrb[0].mxu0 %v4556
        %v6012 = vpop.f32.mrb[0].mxu0
        %v6013 = vadd.f32 %v4814, %v6012
        %v6014 = vpop.f32.mrb[0].mxu0
        %v6015 = vadd.f32 %v4814, %v6014
        %6016 = vmatprep.mubr.f32.mxu0 %v4561
        %6017 = vmatmul.mubr.f32.gmra.mrb[0].mxu0 %v4560
        %v6018 = vpop.f32.mrb[0].mxu0
        %v6019 = vadd.f32 %v4819, %v6018
        %v6020 = vpop.f32.mrb[0].mxu0
        %v6021 = vadd.f32 %v4819, %v6020
        %6022 = vmatprep.mubr.f32.mxu0 %v4565
        %6023 = vmatmul.mubr.f32.gmra.mrb[0].mxu0 %v4564
        %v6024 = vpop.f32.mrb[0].mxu0
        %v6025 = vadd.f32 %v4824, %v6024
        %v6026 = vpop.f32.mrb[0].mxu0
        %v6027 = vadd.f32 %v4824, %v6026
        %6028 = vmatprep.mubr.f32.mxu0 %v4569
        %6029 = vmatmul.mubr.f32.gmra.mrb[0].mxu0 %v4568
        %v6030 = vpop.f32.mrb[0].mxu0
        %v6031 = vadd.f32 %v4829, %v6030
        %v6032 = vpop.f32.mrb[0].mxu0
        %v6033 = vadd.f32 %v4829, %v6032
        %6034 = vmatprep.mubr.f32.mxu0 %v4573
        %6035 = vmatmul.mubr.f32.gmra.mrb[0].mxu0 %v4572
        %v6036 = vpop.f32.mrb[0].mxu0
        %v6037 = vadd.f32 %v4834, %v6036
        %v6038 = vpop.f32.mrb[0].mxu0
        %v6039 = vadd.f32 %v4834, %v6038
        %6040 = vmatprep.mubr.f32.mxu0 %v4577
        %6041 = vmatmul.mubr.f32.gmra.mrb[0].mxu0 %v4576
        %v6042 = vpop.f32.mrb[0].mxu0
        %v6043 = vadd.f32 %v4839, %v6042
        %v6044 = vpop.f32.mrb[0].mxu0
        %v6045 = vadd.f32 %v4839, %v6044
        %6046 = vmatprep.mubr.f32.mxu0 %v4581
        %6047 = vmatmul.mubr.f32.gmra.mrb[0].mxu0 %v4580
        %v6048 = vpop.f32.mrb[0].mxu0
        %v6049 = vadd.f32 %v4844, %v6048
        %v6050 = vpop.f32.mrb[0].mxu0
        %v6051 = vadd.f32 %v4844, %v6050
        %6052 = vmatprep.mubr.f32.mxu0 %v4585
        %6053 = vmatmul.mubr.f32.gmra.mrb[0].mxu0 %v4584
        %v6054 = vpop.f32.mrb[0].mxu0
        %v6055 = vadd.f32 %v4849, %v6054
        %v6056 = vpop.f32.mrb[0].mxu0
        %v6057 = vadd.f32 %v4849, %v6056
        %6058 = vmatprep.mubr.f32.mxu0 %v4589
        %6059 = vmatmul.mubr.f32.gmra.mrb[0].mxu0 %v4588
        %v6060 = vpop.f32.mrb[0].mxu0
        %v6061 = vadd.f32 %v4854, %v6060
        %v6062 = vpop.f32.mrb[0].mxu0
        %v6063 = vadd.f32 %v4854, %v6062
        %6064 = vmatprep.mubr.f32.mxu0 %v4593
        %6065 = vmatmul.mubr.f32.gmra.mrb[0].mxu0 %v4592
        %v6066 = vpop.f32.mrb[0].mxu0
        %v6067 = vadd.f32 %v4859, %v6066
        %v6068 = vpop.f32.mrb[0].mxu0
        %v6069 = vadd.f32 %v4859, %v6068
        %6070 = vmatprep.mubr.f32.mxu0 %v4597
        %6071 = vmatmul.mubr.f32.gmra.mrb[0].mxu0 %v4596
        %v6072 = vpop.f32.mrb[0].mxu0
        %v6073 = vadd.f32 %v4864, %v6072
        %v6074 = vpop.f32.mrb[0].mxu0
        %v6075 = vadd.f32 %v4864, %v6074
        %6076 = vmatprep.mubr.f32.mxu0 %v4601
        %6077 = vmatmul.mubr.f32.gmra.mrb[0].mxu0 %v4600
        %v6078 = vpop.f32.mrb[0].mxu0
        %v6079 = vadd.f32 %v4869, %v6078
        %v6080 = vpop.f32.mrb[0].mxu0
        %v6081 = vadd.f32 %v4869, %v6080
        %6082 = vmatprep.mubr.f32.mxu0 %v4605
        %6083 = vmatmul.mubr.f32.gmra.mrb[0].mxu0 %v4604
        %v6084 = vpop.f32.mrb[0].mxu0
        %v6085 = vadd.f32 %v4874, %v6084
        %v6086 = vpop.f32.mrb[0].mxu0
        %v6087 = vadd.f32 %v4874, %v6086
        %6088 = vmatprep.mubr.f32.mxu0 %v4609
        %6089 = vmatmul.mubr.f32.gmra.mrb[0].mxu0 %v4608
        %v6090 = vpop.f32.mrb[0].mxu0
        %v6091 = vadd.f32 %v4879, %v6090
        %v6092 = vpop.f32.mrb[0].mxu0
        %v6093 = vadd.f32 %v4879, %v6092
        %6094 = vmatprep.mubr.f32.mxu0 %v4613
        %6095 = vmatmul.mubr.f32.gmra.mrb[0].mxu0 %v4612
        %v6096 = vpop.f32.mrb[0].mxu0
        %v6097 = vadd.f32 %v4884, %v6096
        %v6098 = vpop.f32.mrb[0].mxu0
        %v6099 = vadd.f32 %v4884, %v6098
        %6100 = vmatprep.mubr.f32.mxu0 %v4617
        %6101 = vmatmul.mubr.f32.gmra.mrb[0].mxu0 %v4616
        %v6102 = vpop.f32.mrb[0].mxu0
        %v6103 = vadd.f32 %v4889, %v6102
        %v6104 = vpop.f32.mrb[0].mxu0
        %v6105 = vadd.f32 %v4889, %v6104
        %6106 = vmatprep.mubr.f32.mxu0 %v4621
        %6107 = vmatmul.mubr.f32.gmra.mrb[0].mxu0 %v4620
        %v6108 = vpop.f32.mrb[0].mxu0
        %v6109 = vadd.f32 %v4894, %v6108
        %v6110 = vpop.f32.mrb[0].mxu0
        %v6111 = vadd.f32 %v4894, %v6110
        %6112 = vmatprep.mubr.f32.mxu0 %v4625
        %6113 = vmatmul.mubr.f32.gmra.mrb[0].mxu0 %v4624
        %v6114 = vpop.f32.mrb[0].mxu0
        %v6115 = vadd.f32 %v4899, %v6114
        %v6116 = vpop.f32.mrb[0].mxu0
        %v6117 = vadd.f32 %v4899, %v6116
        %6118 = vmatprep.mubr.f32.mxu0 %v4629
        %6119 = vmatmul.mubr.f32.gmra.mrb[0].mxu0 %v4628
        %v6120 = vpop.f32.mrb[0].mxu0
        %v6121 = vadd.f32 %v4904, %v6120
        %v6122 = vpop.f32.mrb[0].mxu0
        %v6123 = vadd.f32 %v4904, %v6122
        %6124 = vmatprep.mubr.f32.mxu0 %v4633
        %6125 = vmatmul.mubr.f32.gmra.mrb[0].mxu0 %v4632
        %v6126 = vpop.f32.mrb[0].mxu0
        %v6127 = vadd.f32 %v4909, %v6126
        %v6128 = vpop.f32.mrb[0].mxu0
        %v6129 = vadd.f32 %v4909, %v6128
        %6130 = vmatprep.mubr.f32.mxu0 %v4637
        %6131 = vmatmul.mubr.f32.gmra.mrb[0].mxu0 %v4636
        %v6132 = vpop.f32.mrb[0].mxu0
        %v6133 = vadd.f32 %v4914, %v6132
        %v6134 = vpop.f32.mrb[0].mxu0
        %v6135 = vadd.f32 %v4914, %v6134
        %6136 = vmatprep.mubr.f32.mxu0 %v4641
        %6137 = vmatmul.mubr.f32.gmra.mrb[0].mxu0 %v4640
        %v6138 = vpop.f32.mrb[0].mxu0
        %v6139 = vadd.f32 %v4919, %v6138
        %v6140 = vpop.f32.mrb[0].mxu0
        %v6141 = vadd.f32 %v4919, %v6140
        %6142 = vmatprep.mubr.f32.mxu0 %v4645
        %6143 = vmatmul.mubr.f32.gmra.mrb[0].mxu0 %v4644
        %v6144 = vpop.f32.mrb[0].mxu0
        %v6145 = vadd.f32 %v4924, %v6144
        %v6146 = vpop.f32.mrb[0].mxu0
        %v6147 = vadd.f32 %v4924, %v6146
        %6148 = vmatprep.mubr.f32.mxu0 %v4649
        %6149 = vmatmul.mubr.f32.gmra.mrb[0].mxu0 %v4648
        %v6150 = vpop.f32.mrb[0].mxu0
        %v6151 = vadd.f32 %v4929, %v6150
        %v6152 = vpop.f32.mrb[0].mxu0
        %v6153 = vadd.f32 %v4929, %v6152
        %6154 = vmatprep.mubr.f32.mxu0 %v4653
        %6155 = vmatmul.mubr.f32.gmra.mrb[0].mxu0 %v4652
        %v6156 = vpop.f32.mrb[0].mxu0
        %v6157 = vadd.f32 %v4934, %v6156
        %v6158 = vpop.f32.mrb[0].mxu0
        %v6159 = vadd.f32 %v4934, %v6158
        %6160 = vmatprep.mubr.f32.mxu0 %v4657
        %6161 = vmatmul.mubr.f32.gmra.mrb[0].mxu0 %v4656
        %v6162 = vpop.f32.mrb[0].mxu0
        %v6163 = vadd.f32 %v4939, %v6162
        %v6164 = vpop.f32.mrb[0].mxu0
        %v6165 = vadd.f32 %v4939, %v6164
        %6166 = vmatprep.mubr.f32.mxu0 %v4661
        %6167 = vmatmul.mubr.f32.gmra.mrb[0].mxu0 %v4660
        %v6168 = vpop.f32.mrb[0].mxu0
        %v6169 = vadd.f32 %v4944, %v6168
        %v6170 = vpop.f32.mrb[0].mxu0
        %v6171 = vadd.f32 %v4944, %v6170
        %6172 = vmatprep.mubr.f32.mxu0 %v4665
        %6173 = vmatmul.mubr.f32.gmra.mrb[0].mxu0 %v4664
        %v6174 = vpop.f32.mrb[0].mxu0
        %v6175 = vadd.f32 %v4949, %v6174
        %v6176 = vpop.f32.mrb[0].mxu0
        %v6177 = vadd.f32 %v4949, %v6176
        %6178 = vmatprep.mubr.f32.mxu0 %v4669
        %6179 = vmatmul.mubr.f32.gmra.mrb[0].mxu0 %v4668
        %v6180 = vpop.f32.mrb[0].mxu0
        %v6181 = vadd.f32 %v4954, %v6180
        %v6182 = vpop.f32.mrb[0].mxu0
        %v6183 = vadd.f32 %v4954, %v6182
        %6184 = vmatprep.mubr.f32.mxu0 %v4673
        %6185 = vmatmul.mubr.f32.gmra.mrb[0].mxu0 %v4672
        %v6186 = vpop.f32.mrb[0].mxu0
        %v6187 = vadd.f32 %v4959, %v6186
        %v6188 = vpop.f32.mrb[0].mxu0
        %v6189 = vadd.f32 %v4959, %v6188
        %6190 = vmatprep.mubr.f32.mxu0 %v4677
        %6191 = vmatmul.mubr.f32.gmra.mrb[0].mxu0 %v4676
        %v6192 = vpop.f32.mrb[0].mxu0
        %v6193 = vadd.f32 %v4964, %v6192
        %v6194 = vpop.f32.mrb[0].mxu0
        %v6195 = vadd.f32 %v4964, %v6194
        %6196 = vmatprep.mubr.f32.mxu0 %v4681
        %6197 = vmatmul.mubr.f32.gmra.mrb[0].mxu0 %v4680
        %v6198 = vpop.f32.mrb[0].mxu0
        %v6199 = vadd.f32 %v4969, %v6198
        %v6200 = vpop.f32.mrb[0].mxu0
        %v6201 = vadd.f32 %v4969, %v6200
        %6202 = vmatprep.mubr.f32.mxu0 %v4685
        %6203 = vmatmul.mubr.f32.gmra.mrb[0].mxu0 %v4684
        %v6204 = vpop.f32.mrb[0].mxu0
        %v6205 = vadd.f32 %v4974, %v6204
        %v6206 = vpop.f32.mrb[0].mxu0
        %v6207 = vadd.f32 %v4974, %v6206
        %6208 = vmatprep.mubr.f32.mxu0 %v4689
        %6209 = vmatmul.mubr.f32.gmra.mrb[0].mxu0 %v4688
        %v6210 = vpop.f32.mrb[0].mxu0
        %v6211 = vadd.f32 %v4979, %v6210
        %v6212 = vpop.f32.mrb[0].mxu0
        %v6213 = vadd.f32 %v4979, %v6212
        %6214 = vmatprep.mubr.f32.mxu0 %v4693
        %6215 = vmatmul.mubr.f32.gmra.mrb[0].mxu0 %v4692
        %v6216 = vpop.f32.mrb[0].mxu0
        %v6217 = vadd.f32 %v4984, %v6216
        %v6218 = vpop.f32.mrb[0].mxu0
        %v6219 = vadd.f32 %v4984, %v6218
        %6220 = vmatprep.mubr.f32.mxu0 %v4697
        %6221 = vmatmul.mubr.f32.gmra.mrb[0].mxu0 %v4696
        %v6222 = vpop.f32.mrb[0].mxu0
        %v6223 = vadd.f32 %v4989, %v6222
        %v6224 = vpop.f32.mrb[0].mxu0
        %v6225 = vadd.f32 %v4989, %v6224
        %6226 = vmatprep.mubr.f32.mxu0 %v4701
        %6227 = vmatmul.mubr.f32.gmra.mrb[0].mxu0 %v4700
        %v6228 = vpop.f32.mrb[0].mxu0
        %v6229 = vadd.f32 %v4994, %v6228
        %v6230 = vpop.f32.mrb[0].mxu0
        %v6231 = vadd.f32 %v4994, %v6230
        %6232 = vmatprep.mubr.f32.mxu0 %v4705
        %6233 = vmatmul.mubr.f32.gmra.mrb[0].mxu0 %v4704
        %v6234 = vpop.f32.mrb[0].mxu0
        %v6235 = vadd.f32 %v4999, %v6234
        %v6236 = vpop.f32.mrb[0].mxu0
        %v6237 = vadd.f32 %v4999, %v6236
        %6238 = vmatprep.mubr.f32.mxu0 %v4709
        %6239 = vmatmul.mubr.f32.gmra.mrb[0].mxu0 %v4708
        %v6240 = vpop.f32.mrb[0].mxu0
        %v6241 = vadd.f32 %v5004, %v6240
        %v6242 = vpop.f32.mrb[0].mxu0
        %v6243 = vadd.f32 %v5004, %v6242
        %6244 = vmatprep.mubr.f32.mxu0 %v4713
        %6245 = vmatmul.mubr.f32.gmra.mrb[0].mxu0 %v4712
        %v6246 = vpop.f32.mrb[0].mxu0
        %v6247 = vadd.f32 %v5009, %v6246
        %v6248 = vpop.f32.mrb[0].mxu0
        %v6249 = vadd.f32 %v5009, %v6248
        %6250 = vmatprep.mubr.f32.mxu0 %v4717
        %6251 = vmatmul.mubr.f32.gmra.mrb[0].mxu0 %v4716
        %v6252 = vpop.f32.mrb[0].mxu0
        %v6253 = vadd.f32 %v5014, %v6252
        %v6254 = vpop.f32.mrb[0].mxu0
        %v6255 = vadd.f32 %v5014, %v6254
        %6256 = vmatprep.mubr.f32.mxu0 %v4721
        %6257 = vmatmul.mubr.f32.gmra.mrb[0].mxu0 %v4720
        %v6258 = vpop.f32.mrb[0].mxu0
        %v6259 = vadd.f32 %v5019, %v6258
        %v6260 = vpop.f32.mrb[0].mxu0
        %v6261 = vadd.f32 %v5019, %v6260
        %6262 = vmatprep.mubr.f32.mxu0 %v4725
        %6263 = vmatmul.mubr.f32.gmra.mrb[0].mxu0 %v4724
        %v6264 = vpop.f32.mrb[0].mxu0
        %v6265 = vadd.f32 %v5024, %v6264
        %v6266 = vpop.f32.mrb[0].mxu0
        %v6267 = vadd.f32 %v5024, %v6266
        %6268 = vmatprep.mubr.f32.mxu0 %v4729
        %6269 = vmatmul.mubr.f32.gmra.mrb[0].mxu0 %v4728
        %v6270 = vpop.f32.mrb[0].mxu0
        %v6271 = vadd.f32 %v5029, %v6270
        %v6272 = vpop.f32.mrb[0].mxu0
        %v6273 = vadd.f32 %v5029, %v6272
        %6274 = vmatprep.mubr.f32.mxu0 %v4733
        %6275 = vmatmul.mubr.f32.gmra.mrb[0].mxu0 %v4732
        %v6276 = vpop.f32.mrb[0].mxu0
        %v6277 = vadd.f32 %v5034, %v6276
        %v6278 = vpop.f32.mrb[0].mxu0
        %v6279 = vadd.f32 %v5034, %v6278
        %6280 = vdwg.mxu0
        %6281 = vmatprep.subr.mxu0 %v4467
        %6282 = vmatpush1.msra.mxu0 %v4466
        %6283 = vmatprep.subr.mxu0 %v4471
        %6284 = vmatpush1.msra.mxu0 %v4470
        %6285 = vmatprep.subr.mxu0 %v4475
        %6286 = vmatpush1.msra.mxu0 %v4474
        %6287 = vmatprep.subr.mxu0 %v4479
        %6288 = vmatpush1.msra.mxu0 %v4478
        %6289 = vmatprep.subr.mxu0 %v4483
        %6290 = vmatpush1.msra.mxu0 %v4482
        %6291 = vmatprep.subr.mxu0 %v4487
        %6292 = vmatpush1.msra.mxu0 %v4486
        %6293 = vmatprep.subr.mxu0 %v4491
        %6294 = vmatpush1.msra.mxu0 %v4490
        %6295 = vmatprep.subr.mxu0 %v4495
        %6296 = vmatpush1.msra.mxu0 %v4494
        %6297 = vmatprep.subr.mxu0 %v4499
        %6298 = vmatpush1.msra.mxu0 %v4498
        %6299 = vmatprep.subr.mxu0 %v4503
        %6300 = vmatpush1.msra.mxu0 %v4502
        %6301 = vmatprep.subr.mxu0 %v4507
        %6302 = vmatpush1.msra.mxu0 %v4506
        %6303 = vmatprep.subr.mxu0 %v4511
        %6304 = vmatpush1.msra.mxu0 %v4510
        %6305 = vmatprep.subr.mxu0 %v4515
        %6306 = vmatpush1.msra.mxu0 %v4514
        %6307 = vmatprep.subr.mxu0 %v4519
        %6308 = vmatpush1.msra.mxu0 %v4518
        %6309 = vmatprep.subr.mxu0 %v4523
        %6310 = vmatpush1.msra.mxu0 %v4522
        %6311 = vmatprep.subr.mxu0 %v4527
        %6312 = vmatpush1.msra.mxu0 %v4526
        %6313 = vmatprep.subr.mxu0 %v4531
        %6314 = vmatpush1.msra.mxu0 %v4530
        %6315 = vmatprep.subr.mxu0 %v4535
        %6316 = vmatpush1.msra.mxu0 %v4534
        %6317 = vmatprep.subr.mxu0 0.0
        %6318 = vmatpush1.msra.mxu0 0.0
        %6319 = vmatprep.subr.mxu0 0.0
        %6320 = vmatpush1.msra.mxu0 0.0
        %6321 = vmatprep.subr.mxu0 0.0
        %6322 = vmatpush1.msra.mxu0 0.0
        %6323 = vmatprep.subr.mxu0 0.0
        %6324 = vmatpush1.msra.mxu0 0.0
        %6325 = vmatprep.subr.mxu0 0.0
        %6326 = vmatpush1.msra.mxu0 0.0
        %6327 = vmatprep.subr.mxu0 0.0
        %6328 = vmatpush1.msra.mxu0 0.0
        %6329 = vmatprep.subr.mxu0 0.0
        %6330 = vmatpush1.msra.mxu0 0.0
        %6331 = vmatprep.subr.mxu0 0.0
        %6332 = vmatpush1.msra.mxu0 0.0
        %6333 = vmatprep.subr.mxu0 0.0
        %6334 = vmatpush1.msra.mxu0 0.0
        %6335 = vmatprep.subr.mxu0 0.0
        %6336 = vmatpush1.msra.mxu0 0.0
        %6337 = vmatprep.subr.mxu0 0.0
        %6338 = vmatpush1.msra.mxu0 0.0
        %6339 = vmatprep.subr.mxu0 0.0
        %6340 = vmatpush1.msra.mxu0 0.0
        %6341 = vmatprep.subr.mxu0 0.0
        %6342 = vmatpush1.msra.mxu0 0.0
        %6343 = vmatprep.subr.mxu0 0.0
        %6344 = vmatpush1.msra.mxu0 0.0
        %6345 = vmatprep.mubr.f32.mxu0 %v5037
        %6346 = vmatmul.mubr.f32.gmra.mrb[0].mxu0 %v4538
        %v6347 = vpop.f32.mrb[0].mxu0
        %v6348 = vadd.f32 %v5983, %v6347
        %v6349 = vpop.f32.mrb[0].mxu0
        %v6350 = vadd.f32 %v5985, %v6349
        %6351 = vmatprep.mubr.f32.mxu0 %v5040
        %6352 = vmatmul.mubr.f32.gmra.mrb[0].mxu0 %v4542
        %v6353 = vpop.f32.mrb[0].mxu0
        %v6354 = vadd.f32 %v5989, %v6353
        %v6355 = vpop.f32.mrb[0].mxu0
        %v6356 = vadd.f32 %v5991, %v6355
        %6357 = vmatprep.mubr.f32.mxu0 %v5043
        %6358 = vmatmul.mubr.f32.gmra.mrb[0].mxu0 %v4546
        %v6359 = vpop.f32.mrb[0].mxu0
        %v6360 = vadd.f32 %v5995, %v6359
        %v6361 = vpop.f32.mrb[0].mxu0
        %v6362 = vadd.f32 %v5997, %v6361
        %6363 = vmatprep.mubr.f32.mxu0 %v5046
        %6364 = vmatmul.mubr.f32.gmra.mrb[0].mxu0 %v4550
        %v6365 = vpop.f32.mrb[0].mxu0
        %v6366 = vadd.f32 %v6001, %v6365
        %v6367 = vpop.f32.mrb[0].mxu0
        %v6368 = vadd.f32 %v6003, %v6367
        %6369 = vmatprep.mubr.f32.mxu0 %v5049
        %6370 = vmatmul.mubr.f32.gmra.mrb[0].mxu0 %v4554
        %v6371 = vpop.f32.mrb[0].mxu0
        %v6372 = vadd.f32 %v6007, %v6371
        %v6373 = vpop.f32.mrb[0].mxu0
        %v6374 = vadd.f32 %v6009, %v6373
        %6375 = vmatprep.mubr.f32.mxu0 %v5052
        %6376 = vmatmul.mubr.f32.gmra.mrb[0].mxu0 %v4558
        %v6377 = vpop.f32.mrb[0].mxu0
        %v6378 = vadd.f32 %v6013, %v6377
        %v6379 = vpop.f32.mrb[0].mxu0
        %v6380 = vadd.f32 %v6015, %v6379
        %6381 = vmatprep.mubr.f32.mxu0 %v5055
        %6382 = vmatmul.mubr.f32.gmra.mrb[0].mxu0 %v4562
        %v6383 = vpop.f32.mrb[0].mxu0
        %v6384 = vadd.f32 %v6019, %v6383
        %v6385 = vpop.f32.mrb[0].mxu0
        %v6386 = vadd.f32 %v6021, %v6385
        %6387 = vmatprep.mubr.f32.mxu0 %v5058
        %6388 = vmatmul.mubr.f32.gmra.mrb[0].mxu0 %v4566
        %v6389 = vpop.f32.mrb[0].mxu0
        %v6390 = vadd.f32 %v6025, %v6389
        %v6391 = vpop.f32.mrb[0].mxu0
        %v6392 = vadd.f32 %v6027, %v6391
        %6393 = vmatprep.mubr.f32.mxu0 %v5061
        %6394 = vmatmul.mubr.f32.gmra.mrb[0].mxu0 %v4570
        %v6395 = vpop.f32.mrb[0].mxu0
        %v6396 = vadd.f32 %v6031, %v6395
        %v6397 = vpop.f32.mrb[0].mxu0
        %v6398 = vadd.f32 %v6033, %v6397
        %6399 = vmatprep.mubr.f32.mxu0 %v5064
        %6400 = vmatmul.mubr.f32.gmra.mrb[0].mxu0 %v4574
        %v6401 = vpop.f32.mrb[0].mxu0
        %v6402 = vadd.f32 %v6037, %v6401
        %v6403 = vpop.f32.mrb[0].mxu0
        %v6404 = vadd.f32 %v6039, %v6403
        %6405 = vmatprep.mubr.f32.mxu0 %v5067
        %6406 = vmatmul.mubr.f32.gmra.mrb[0].mxu0 %v4578
        %v6407 = vpop.f32.mrb[0].mxu0
        %v6408 = vadd.f32 %v6043, %v6407
        %v6409 = vpop.f32.mrb[0].mxu0
        %v6410 = vadd.f32 %v6045, %v6409
        %6411 = vmatprep.mubr.f32.mxu0 %v5070
        %6412 = vmatmul.mubr.f32.gmra.mrb[0].mxu0 %v4582
        %v6413 = vpop.f32.mrb[0].mxu0
        %v6414 = vadd.f32 %v6049, %v6413
        %v6415 = vpop.f32.mrb[0].mxu0
        %v6416 = vadd.f32 %v6051, %v6415
        %6417 = vmatprep.mubr.f32.mxu0 %v5073
        %6418 = vmatmul.mubr.f32.gmra.mrb[0].mxu0 %v4586
        %v6419 = vpop.f32.mrb[0].mxu0
        %v6420 = vadd.f32 %v6055, %v6419
        %v6421 = vpop.f32.mrb[0].mxu0
        %v6422 = vadd.f32 %v6057, %v6421
        %6423 = vmatprep.mubr.f32.mxu0 %v5076
        %6424 = vmatmul.mubr.f32.gmra.mrb[0].mxu0 %v4590
        %v6425 = vpop.f32.mrb[0].mxu0
        %v6426 = vadd.f32 %v6061, %v6425
        %v6427 = vpop.f32.mrb[0].mxu0
        %v6428 = vadd.f32 %v6063, %v6427
        %6429 = vmatprep.mubr.f32.mxu0 %v5079
        %6430 = vmatmul.mubr.f32.gmra.mrb[0].mxu0 %v4594
        %v6431 = vpop.f32.mrb[0].mxu0
        %v6432 = vadd.f32 %v6067, %v6431
        %v6433 = vpop.f32.mrb[0].mxu0
        %v6434 = vadd.f32 %v6069, %v6433
        %6435 = vmatprep.mubr.f32.mxu0 %v5082
        %6436 = vmatmul.mubr.f32.gmra.mrb[0].mxu0 %v4598
        %v6437 = vpop.f32.mrb[0].mxu0
        %v6438 = vadd.f32 %v6073, %v6437
        %v6439 = vpop.f32.mrb[0].mxu0
        %v6440 = vadd.f32 %v6075, %v6439
        %6441 = vmatprep.mubr.f32.mxu0 %v5085
        %6442 = vmatmul.mubr.f32.gmra.mrb[0].mxu0 %v4602
        %v6443 = vpop.f32.mrb[0].mxu0
        %v6444 = vadd.f32 %v6079, %v6443
        %v6445 = vpop.f32.mrb[0].mxu0
        %v6446 = vadd.f32 %v6081, %v6445
        %6447 = vmatprep.mubr.f32.mxu0 %v5088
        %6448 = vmatmul.mubr.f32.gmra.mrb[0].mxu0 %v4606
        %v6449 = vpop.f32.mrb[0].mxu0
        %v6450 = vadd.f32 %v6085, %v6449
        %v6451 = vpop.f32.mrb[0].mxu0
        %v6452 = vadd.f32 %v6087, %v6451
        %6453 = vmatprep.mubr.f32.mxu0 %v5091
        %6454 = vmatmul.mubr.f32.gmra.mrb[0].mxu0 %v4610
        %v6455 = vpop.f32.mrb[0].mxu0
        %v6456 = vadd.f32 %v6091, %v6455
        %v6457 = vpop.f32.mrb[0].mxu0
        %v6458 = vadd.f32 %v6093, %v6457
        %6459 = vmatprep.mubr.f32.mxu0 %v5094
        %6460 = vmatmul.mubr.f32.gmra.mrb[0].mxu0 %v4614
        %v6461 = vpop.f32.mrb[0].mxu0
        %v6462 = vadd.f32 %v6097, %v6461
        %v6463 = vpop.f32.mrb[0].mxu0
        %v6464 = vadd.f32 %v6099, %v6463
        %6465 = vmatprep.mubr.f32.mxu0 %v5097
        %6466 = vmatmul.mubr.f32.gmra.mrb[0].mxu0 %v4618
        %v6467 = vpop.f32.mrb[0].mxu0
        %v6468 = vadd.f32 %v6103, %v6467
        %v6469 = vpop.f32.mrb[0].mxu0
        %v6470 = vadd.f32 %v6105, %v6469
        %6471 = vmatprep.mubr.f32.mxu0 %v5100
        %6472 = vmatmul.mubr.f32.gmra.mrb[0].mxu0 %v4622
        %v6473 = vpop.f32.mrb[0].mxu0
        %v6474 = vadd.f32 %v6109, %v6473
        %v6475 = vpop.f32.mrb[0].mxu0
        %v6476 = vadd.f32 %v6111, %v6475
        %6477 = vmatprep.mubr.f32.mxu0 %v5103
        %6478 = vmatmul.mubr.f32.gmra.mrb[0].mxu0 %v4626
        %v6479 = vpop.f32.mrb[0].mxu0
        %v6480 = vadd.f32 %v6115, %v6479
        %v6481 = vpop.f32.mrb[0].mxu0
        %v6482 = vadd.f32 %v6117, %v6481
        %6483 = vmatprep.mubr.f32.mxu0 %v5106
        %6484 = vmatmul.mubr.f32.gmra.mrb[0].mxu0 %v4630
        %v6485 = vpop.f32.mrb[0].mxu0
        %v6486 = vadd.f32 %v6121, %v6485
        %v6487 = vpop.f32.mrb[0].mxu0
        %v6488 = vadd.f32 %v6123, %v6487
        %6489 = vmatprep.mubr.f32.mxu0 %v5109
        %6490 = vmatmul.mubr.f32.gmra.mrb[0].mxu0 %v4634
        %v6491 = vpop.f32.mrb[0].mxu0
        %v6492 = vadd.f32 %v6127, %v6491
        %v6493 = vpop.f32.mrb[0].mxu0
        %v6494 = vadd.f32 %v6129, %v6493
        %6495 = vmatprep.mubr.f32.mxu0 %v5112
        %6496 = vmatmul.mubr.f32.gmra.mrb[0].mxu0 %v4638
        %v6497 = vpop.f32.mrb[0].mxu0
        %v6498 = vadd.f32 %v6133, %v6497
        %v6499 = vpop.f32.mrb[0].mxu0
        %v6500 = vadd.f32 %v6135, %v6499
        %6501 = vmatprep.mubr.f32.mxu0 %v5115
        %6502 = vmatmul.mubr.f32.gmra.mrb[0].mxu0 %v4642
        %v6503 = vpop.f32.mrb[0].mxu0
        %v6504 = vadd.f32 %v6139, %v6503
        %v6505 = vpop.f32.mrb[0].mxu0
        %v6506 = vadd.f32 %v6141, %v6505
        %6507 = vmatprep.mubr.f32.mxu0 %v5118
        %6508 = vmatmul.mubr.f32.gmra.mrb[0].mxu0 %v4646
        %v6509 = vpop.f32.mrb[0].mxu0
        %v6510 = vadd.f32 %v6145, %v6509
        %v6511 = vpop.f32.mrb[0].mxu0
        %v6512 = vadd.f32 %v6147, %v6511
        %6513 = vmatprep.mubr.f32.mxu0 %v5121
        %6514 = vmatmul.mubr.f32.gmra.mrb[0].mxu0 %v4650
        %v6515 = vpop.f32.mrb[0].mxu0
        %v6516 = vadd.f32 %v6151, %v6515
        %v6517 = vpop.f32.mrb[0].mxu0
        %v6518 = vadd.f32 %v6153, %v6517
        %6519 = vmatprep.mubr.f32.mxu0 %v5124
        %6520 = vmatmul.mubr.f32.gmra.mrb[0].mxu0 %v4654
        %v6521 = vpop.f32.mrb[0].mxu0
        %v6522 = vadd.f32 %v6157, %v6521
        %v6523 = vpop.f32.mrb[0].mxu0
        %v6524 = vadd.f32 %v6159, %v6523
        %6525 = vmatprep.mubr.f32.mxu0 %v5127
        %6526 = vmatmul.mubr.f32.gmra.mrb[0].mxu0 %v4658
        %v6527 = vpop.f32.mrb[0].mxu0
        %v6528 = vadd.f32 %v6163, %v6527
        %v6529 = vpop.f32.mrb[0].mxu0
        %v6530 = vadd.f32 %v6165, %v6529
        %6531 = vmatprep.mubr.f32.mxu0 %v5130
        %6532 = vmatmul.mubr.f32.gmra.mrb[0].mxu0 %v4662
        %v6533 = vpop.f32.mrb[0].mxu0
        %v6534 = vadd.f32 %v6169, %v6533
        %v6535 = vpop.f32.mrb[0].mxu0
        %v6536 = vadd.f32 %v6171, %v6535
        %6537 = vmatprep.mubr.f32.mxu0 %v5133
        %6538 = vmatmul.mubr.f32.gmra.mrb[0].mxu0 %v4666
        %v6539 = vpop.f32.mrb[0].mxu0
        %v6540 = vadd.f32 %v6175, %v6539
        %v6541 = vpop.f32.mrb[0].mxu0
        %v6542 = vadd.f32 %v6177, %v6541
        %6543 = vmatprep.mubr.f32.mxu0 %v5136
        %6544 = vmatmul.mubr.f32.gmra.mrb[0].mxu0 %v4670
        %v6545 = vpop.f32.mrb[0].mxu0
        %v6546 = vadd.f32 %v6181, %v6545
        %v6547 = vpop.f32.mrb[0].mxu0
        %v6548 = vadd.f32 %v6183, %v6547
        %6549 = vmatprep.mubr.f32.mxu0 %v5139
        %6550 = vmatmul.mubr.f32.gmra.mrb[0].mxu0 %v4674
        %v6551 = vpop.f32.mrb[0].mxu0
        %v6552 = vadd.f32 %v6187, %v6551
        %v6553 = vpop.f32.mrb[0].mxu0
        %v6554 = vadd.f32 %v6189, %v6553
        %6555 = vmatprep.mubr.f32.mxu0 %v5142
        %6556 = vmatmul.mubr.f32.gmra.mrb[0].mxu0 %v4678
        %v6557 = vpop.f32.mrb[0].mxu0
        %v6558 = vadd.f32 %v6193, %v6557
        %v6559 = vpop.f32.mrb[0].mxu0
        %v6560 = vadd.f32 %v6195, %v6559
        %6561 = vmatprep.mubr.f32.mxu0 %v5145
        %6562 = vmatmul.mubr.f32.gmra.mrb[0].mxu0 %v4682
        %v6563 = vpop.f32.mrb[0].mxu0
        %v6564 = vadd.f32 %v6199, %v6563
        %v6565 = vpop.f32.mrb[0].mxu0
        %v6566 = vadd.f32 %v6201, %v6565
        %6567 = vmatprep.mubr.f32.mxu0 %v5148
        %6568 = vmatmul.mubr.f32.gmra.mrb[0].mxu0 %v4686
        %v6569 = vpop.f32.mrb[0].mxu0
        %v6570 = vadd.f32 %v6205, %v6569
        %v6571 = vpop.f32.mrb[0].mxu0
        %v6572 = vadd.f32 %v6207, %v6571
        %6573 = vmatprep.mubr.f32.mxu0 %v5151
        %6574 = vmatmul.mubr.f32.gmra.mrb[0].mxu0 %v4690
        %v6575 = vpop.f32.mrb[0].mxu0
        %v6576 = vadd.f32 %v6211, %v6575
        %v6577 = vpop.f32.mrb[0].mxu0
        %v6578 = vadd.f32 %v6213, %v6577
        %6579 = vmatprep.mubr.f32.mxu0 %v5154
        %6580 = vmatmul.mubr.f32.gmra.mrb[0].mxu0 %v4694
        %v6581 = vpop.f32.mrb[0].mxu0
        %v6582 = vadd.f32 %v6217, %v6581
        %v6583 = vpop.f32.mrb[0].mxu0
        %v6584 = vadd.f32 %v6219, %v6583
        %6585 = vmatprep.mubr.f32.mxu0 %v5157
        %6586 = vmatmul.mubr.f32.gmra.mrb[0].mxu0 %v4698
        %v6587 = vpop.f32.mrb[0].mxu0
        %v6588 = vadd.f32 %v6223, %v6587
        %v6589 = vpop.f32.mrb[0].mxu0
        %v6590 = vadd.f32 %v6225, %v6589
        %6591 = vmatprep.mubr.f32.mxu0 %v5160
        %6592 = vmatmul.mubr.f32.gmra.mrb[0].mxu0 %v4702
        %v6593 = vpop.f32.mrb[0].mxu0
        %v6594 = vadd.f32 %v6229, %v6593
        %v6595 = vpop.f32.mrb[0].mxu0
        %v6596 = vadd.f32 %v6231, %v6595
        %6597 = vmatprep.mubr.f32.mxu0 %v5163
        %6598 = vmatmul.mubr.f32.gmra.mrb[0].mxu0 %v4706
        %v6599 = vpop.f32.mrb[0].mxu0
        %v6600 = vadd.f32 %v6235, %v6599
        %v6601 = vpop.f32.mrb[0].mxu0
        %v6602 = vadd.f32 %v6237, %v6601
        %6603 = vmatprep.mubr.f32.mxu0 %v5166
        %6604 = vmatmul.mubr.f32.gmra.mrb[0].mxu0 %v4710
        %v6605 = vpop.f32.mrb[0].mxu0
        %v6606 = vadd.f32 %v6241, %v6605
        %v6607 = vpop.f32.mrb[0].mxu0
        %v6608 = vadd.f32 %v6243, %v6607
        %6609 = vmatprep.mubr.f32.mxu0 %v5169
        %6610 = vmatmul.mubr.f32.gmra.mrb[0].mxu0 %v4714
        %v6611 = vpop.f32.mrb[0].mxu0
        %v6612 = vadd.f32 %v6247, %v6611
        %v6613 = vpop.f32.mrb[0].mxu0
        %v6614 = vadd.f32 %v6249, %v6613
        %6615 = vmatprep.mubr.f32.mxu0 %v5172
        %6616 = vmatmul.mubr.f32.gmra.mrb[0].mxu0 %v4718
        %v6617 = vpop.f32.mrb[0].mxu0
        %v6618 = vadd.f32 %v6253, %v6617
        %v6619 = vpop.f32.mrb[0].mxu0
        %v6620 = vadd.f32 %v6255, %v6619
        %6621 = vmatprep.mubr.f32.mxu0 %v5175
        %6622 = vmatmul.mubr.f32.gmra.mrb[0].mxu0 %v4722
        %v6623 = vpop.f32.mrb[0].mxu0
        %v6624 = vadd.f32 %v6259, %v6623
        %v6625 = vpop.f32.mrb[0].mxu0
        %v6626 = vadd.f32 %v6261, %v6625
        %6627 = vmatprep.mubr.f32.mxu0 %v5178
        %6628 = vmatmul.mubr.f32.gmra.mrb[0].mxu0 %v4726
        %v6629 = vpop.f32.mrb[0].mxu0
        %v6630 = vadd.f32 %v6265, %v6629
        %v6631 = vpop.f32.mrb[0].mxu0
        %v6632 = vadd.f32 %v6267, %v6631
        %6633 = vmatprep.mubr.f32.mxu0 %v5181
        %6634 = vmatmul.mubr.f32.gmra.mrb[0].mxu0 %v4730
        %v6635 = vpop.f32.mrb[0].mxu0
        %v6636 = vadd.f32 %v6271, %v6635
        %v6637 = vpop.f32.mrb[0].mxu0
        %v6638 = vadd.f32 %v6273, %v6637
        %6639 = vmatprep.mubr.f32.mxu0 %v5184
        %6640 = vmatmul.mubr.f32.gmra.mrb[0].mxu0 %v4734
        %v6641 = vpop.f32.mrb[0].mxu0
        %v6642 = vadd.f32 %v6277, %v6641
        %v6643 = vpop.f32.mrb[0].mxu0
        %v6644 = vadd.f32 %v6279, %v6643
        %6645 = vdwg.mxu0
        %v6646 = vmax.f32 %v5618, 0.0
        %v6647 = vmax.f32 %v5620, 0.0
        %v6648 = vmax.f32 %v6348, 0.0
        %v6649 = vmax.f32 %v6350, 0.0
        %v6650 = vmax.f32 %v5624, 0.0
        %v6651 = vmax.f32 %v5626, 0.0
        %v6652 = vmax.f32 %v6354, 0.0
        %v6653 = vmax.f32 %v6356, 0.0
        %v6654 = vmax.f32 %v5630, 0.0
        %v6655 = vmax.f32 %v5632, 0.0
        %v6656 = vmax.f32 %v6360, 0.0
        %v6657 = vmax.f32 %v6362, 0.0
        %v6658 = vmax.f32 %v5636, 0.0
        %v6659 = vmax.f32 %v5638, 0.0
        %v6660 = vmax.f32 %v6366, 0.0
        %v6661 = vmax.f32 %v6368, 0.0
        %v6662 = vmax.f32 %v5642, 0.0
        %v6663 = vmax.f32 %v5644, 0.0
        %v6664 = vmax.f32 %v6372, 0.0
        %v6665 = vmax.f32 %v6374, 0.0
        %v6666 = vmax.f32 %v5648, 0.0
        %v6667 = vmax.f32 %v5650, 0.0
        %v6668 = vmax.f32 %v6378, 0.0
        %v6669 = vmax.f32 %v6380, 0.0
        %v6670 = vmax.f32 %v5654, 0.0
        %v6671 = vmax.f32 %v5656, 0.0
        %v6672 = vmax.f32 %v6384, 0.0
        %v6673 = vmax.f32 %v6386, 0.0
        %v6674 = vmax.f32 %v5660, 0.0
        %v6675 = vmax.f32 %v5662, 0.0
        %v6676 = vmax.f32 %v6390, 0.0
        %v6677 = vmax.f32 %v6392, 0.0
        %v6678 = vmax.f32 %v5666, 0.0
        %v6679 = vmax.f32 %v5668, 0.0
        %v6680 = vmax.f32 %v6396, 0.0
        %v6681 = vmax.f32 %v6398, 0.0
        %v6682 = vmax.f32 %v5672, 0.0
        %v6683 = vmax.f32 %v5674, 0.0
        %v6684 = vmax.f32 %v6402, 0.0
        %v6685 = vmax.f32 %v6404, 0.0
        %v6686 = vmax.f32 %v5678, 0.0
        %v6687 = vmax.f32 %v5680, 0.0
        %v6688 = vmax.f32 %v6408, 0.0
        %v6689 = vmax.f32 %v6410, 0.0
        %v6690 = vmax.f32 %v5684, 0.0
        %v6691 = vmax.f32 %v5686, 0.0
        %v6692 = vmax.f32 %v6414, 0.0
        %v6693 = vmax.f32 %v6416, 0.0
        %v6694 = vmax.f32 %v5690, 0.0
        %v6695 = vmax.f32 %v5692, 0.0
        %v6696 = vmax.f32 %v6420, 0.0
        %v6697 = vmax.f32 %v6422, 0.0
        %v6698 = vmax.f32 %v5696, 0.0
        %v6699 = vmax.f32 %v5698, 0.0
        %v6700 = vmax.f32 %v6426, 0.0
        %v6701 = vmax.f32 %v6428, 0.0
        %v6702 = vmax.f32 %v5702, 0.0
        %v6703 = vmax.f32 %v5704, 0.0
        %v6704 = vmax.f32 %v6432, 0.0
        %v6705 = vmax.f32 %v6434, 0.0
        %v6706 = vmax.f32 %v5708, 0.0
        %v6707 = vmax.f32 %v5710, 0.0
        %v6708 = vmax.f32 %v6438, 0.0
        %v6709 = vmax.f32 %v6440, 0.0
        %v6710 = vmax.f32 %v5714, 0.0
        %v6711 = vmax.f32 %v5716, 0.0
        %v6712 = vmax.f32 %v6444, 0.0
        %v6713 = vmax.f32 %v6446, 0.0
        %v6714 = vmax.f32 %v5720, 0.0
        %v6715 = vmax.f32 %v5722, 0.0
        %v6716 = vmax.f32 %v6450, 0.0
        %v6717 = vmax.f32 %v6452, 0.0
        %v6718 = vmax.f32 %v5726, 0.0
        %v6719 = vmax.f32 %v5728, 0.0
        %v6720 = vmax.f32 %v6456, 0.0
        %v6721 = vmax.f32 %v6458, 0.0
        %v6722 = vmax.f32 %v5732, 0.0
        %v6723 = vmax.f32 %v5734, 0.0
        %v6724 = vmax.f32 %v6462, 0.0
        %v6725 = vmax.f32 %v6464, 0.0
        %v6726 = vmax.f32 %v5738, 0.0
        %v6727 = vmax.f32 %v5740, 0.0
        %v6728 = vmax.f32 %v6468, 0.0
        %v6729 = vmax.f32 %v6470, 0.0
        %v6730 = vmax.f32 %v5744, 0.0
        %v6731 = vmax.f32 %v5746, 0.0
        %v6732 = vmax.f32 %v6474, 0.0
        %v6733 = vmax.f32 %v6476, 0.0
        %v6734 = vmax.f32 %v5750, 0.0
        %v6735 = vmax.f32 %v5752, 0.0
        %v6736 = vmax.f32 %v6480, 0.0
        %v6737 = vmax.f32 %v6482, 0.0
        %v6738 = vmax.f32 %v5756, 0.0
        %v6739 = vmax.f32 %v5758, 0.0
        %v6740 = vmax.f32 %v6486, 0.0
        %v6741 = vmax.f32 %v6488, 0.0
        %v6742 = vmax.f32 %v5762, 0.0
        %v6743 = vmax.f32 %v5764, 0.0
        %v6744 = vmax.f32 %v6492, 0.0
        %v6745 = vmax.f32 %v6494, 0.0
        %v6746 = vmax.f32 %v5768, 0.0
        %v6747 = vmax.f32 %v5770, 0.0
        %v6748 = vmax.f32 %v6498, 0.0
        %v6749 = vmax.f32 %v6500, 0.0
        %v6750 = vmax.f32 %v5774, 0.0
        %v6751 = vmax.f32 %v5776, 0.0
        %v6752 = vmax.f32 %v6504, 0.0
        %v6753 = vmax.f32 %v6506, 0.0
        %v6754 = vmax.f32 %v5780, 0.0
        %v6755 = vmax.f32 %v5782, 0.0
        %v6756 = vmax.f32 %v6510, 0.0
        %v6757 = vmax.f32 %v6512, 0.0
        %v6758 = vmax.f32 %v5786, 0.0
        %v6759 = vmax.f32 %v5788, 0.0
        %v6760 = vmax.f32 %v6516, 0.0
        %v6761 = vmax.f32 %v6518, 0.0
        %v6762 = vmax.f32 %v5792, 0.0
        %v6763 = vmax.f32 %v5794, 0.0
        %v6764 = vmax.f32 %v6522, 0.0
        %v6765 = vmax.f32 %v6524, 0.0
        %v6766 = vmax.f32 %v5798, 0.0
        %v6767 = vmax.f32 %v5800, 0.0
        %v6768 = vmax.f32 %v6528, 0.0
        %v6769 = vmax.f32 %v6530, 0.0
        %v6770 = vmax.f32 %v5804, 0.0
        %v6771 = vmax.f32 %v5806, 0.0
        %v6772 = vmax.f32 %v6534, 0.0
        %v6773 = vmax.f32 %v6536, 0.0
        %v6774 = vmax.f32 %v5810, 0.0
        %v6775 = vmax.f32 %v5812, 0.0
        %v6776 = vmax.f32 %v6540, 0.0
        %v6777 = vmax.f32 %v6542, 0.0
        %v6778 = vmax.f32 %v5816, 0.0
        %v6779 = vmax.f32 %v5818, 0.0
        %v6780 = vmax.f32 %v6546, 0.0
        %v6781 = vmax.f32 %v6548, 0.0
        %v6782 = vmax.f32 %v5822, 0.0
        %v6783 = vmax.f32 %v5824, 0.0
        %v6784 = vmax.f32 %v6552, 0.0
        %v6785 = vmax.f32 %v6554, 0.0
        %v6786 = vmax.f32 %v5828, 0.0
        %v6787 = vmax.f32 %v5830, 0.0
        %v6788 = vmax.f32 %v6558, 0.0
        %v6789 = vmax.f32 %v6560, 0.0
        %v6790 = vmax.f32 %v5834, 0.0
        %v6791 = vmax.f32 %v5836, 0.0
        %v6792 = vmax.f32 %v6564, 0.0
        %v6793 = vmax.f32 %v6566, 0.0
        %v6794 = vmax.f32 %v5840, 0.0
        %v6795 = vmax.f32 %v5842, 0.0
        %v6796 = vmax.f32 %v6570, 0.0
        %v6797 = vmax.f32 %v6572, 0.0
        %v6798 = vmax.f32 %v5846, 0.0
        %v6799 = vmax.f32 %v5848, 0.0
        %v6800 = vmax.f32 %v6576, 0.0
        %v6801 = vmax.f32 %v6578, 0.0
        %v6802 = vmax.f32 %v5852, 0.0
        %v6803 = vmax.f32 %v5854, 0.0
        %v6804 = vmax.f32 %v6582, 0.0
        %v6805 = vmax.f32 %v6584, 0.0
        %v6806 = vmax.f32 %v5858, 0.0
        %v6807 = vmax.f32 %v5860, 0.0
        %v6808 = vmax.f32 %v6588, 0.0
        %v6809 = vmax.f32 %v6590, 0.0
        %v6810 = vmax.f32 %v5864, 0.0
        %v6811 = vmax.f32 %v5866, 0.0
        %v6812 = vmax.f32 %v6594, 0.0
        %v6813 = vmax.f32 %v6596, 0.0
        %v6814 = vmax.f32 %v5870, 0.0
        %v6815 = vmax.f32 %v5872, 0.0
        %v6816 = vmax.f32 %v6600, 0.0
        %v6817 = vmax.f32 %v6602, 0.0
        %v6818 = vmax.f32 %v5876, 0.0
        %v6819 = vmax.f32 %v5878, 0.0
        %v6820 = vmax.f32 %v6606, 0.0
        %v6821 = vmax.f32 %v6608, 0.0
        %v6822 = vmax.f32 %v5882, 0.0
        %v6823 = vmax.f32 %v5884, 0.0
        %v6824 = vmax.f32 %v6612, 0.0
        %v6825 = vmax.f32 %v6614, 0.0
        %v6826 = vmax.f32 %v5888, 0.0
        %v6827 = vmax.f32 %v5890, 0.0
        %v6828 = vmax.f32 %v6618, 0.0
        %v6829 = vmax.f32 %v6620, 0.0
        %v6830 = vmax.f32 %v5894, 0.0
        %v6831 = vmax.f32 %v5896, 0.0
        %v6832 = vmax.f32 %v6624, 0.0
        %v6833 = vmax.f32 %v6626, 0.0
        %v6834 = vmax.f32 %v5900, 0.0
        %v6835 = vmax.f32 %v5902, 0.0
        %v6836 = vmax.f32 %v6630, 0.0
        %v6837 = vmax.f32 %v6632, 0.0
        %v6838 = vmax.f32 %v5906, 0.0
        %v6839 = vmax.f32 %v5908, 0.0
        %v6840 = vmax.f32 %v6636, 0.0
        %v6841 = vmax.f32 %v6638, 0.0
        %v6842 = vmax.f32 %v5912, 0.0
        %v6843 = vmax.f32 %v5914, 0.0
        %v6844 = vmax.f32 %v6642, 0.0
        %v6845 = vmax.f32 %v6644, 0.0
        %v6846 = vld [vmem:[%s7] sm:$0xff]
        %v6847 = vld [vmem:[%s7 + $0x8] sm:$0xff]
        %v6848 = vld [vmem:[%s7 + $0x10] sm:$0xff]
        %v6849 = vld [vmem:[%s7 + $0x18] sm:$0xff]
        %v6850 = vld [vmem:[%s7 + $0x20] sm:$0xff]
        %v6851 = vld [vmem:[%s7 + $0x28] sm:$0xff]
        %v6852 = vld [vmem:[%s7 + $0x30] sm:$0xff]
        %v6853 = vld [vmem:[%s7 + $0x38] sm:$0xff]
        %v6854 = vld [vmem:[%s7 + $0x40] sm:$0xff]
        %v6855 = vld [vmem:[%s7 + $0x48] sm:$0xff]
        %v6856 = vld [vmem:[%s7 + $0x50] sm:$0xff]
        %v6857 = vld [vmem:[%s7 + $0x58] sm:$0xff]
        %v6858 = vld [vmem:[%s7 + $0x60] sm:$0xff]
        %v6859 = vld [vmem:[%s7 + $0x68] sm:$0xff]
        %v6860 = vld [vmem:[%s7 + $0x70] sm:$0xff]
        %v6861 = vld [vmem:[%s7 + $0x78] sm:$0xff]
        %v6862 = vld [vmem:[%s7 + $0x80] sm:$0xff]
        %v6863 = vld [vmem:[%s7 + $0x88] sm:$0xff]
        %v6864 = vld [vmem:[%s7 + $0x90] sm:$0xff]
        %v6865 = vld [vmem:[%s7 + $0x98] sm:$0xff]
        %v6866 = vld [vmem:[%s7 + $0xa0] sm:$0xff]
        %v6867 = vld [vmem:[%s7 + $0xa8] sm:$0xff]
        %v6868 = vld [vmem:[%s7 + $0xb0] sm:$0xff]
        %v6869 = vld [vmem:[%s7 + $0xb8] sm:$0xff]
        %v6870 = vld [vmem:[%s7 + $0xc0] sm:$0xff]
        %v6871 = vld [vmem:[%s7 + $0xc8] sm:$0xff]
        %v6872 = vld [vmem:[%s7 + $0xd0] sm:$0xff]
        %v6873 = vld [vmem:[%s7 + $0xd8] sm:$0xff]
        %v6874 = vld [vmem:[%s7 + $0xe0] sm:$0xff]
        %v6875 = vld [vmem:[%s7 + $0xe8] sm:$0xff]
        %v6876 = vld [vmem:[%s7 + $0xf0] sm:$0xff]
        %v6877 = vld [vmem:[%s7 + $0xf8] sm:$0xff]
        %v6878 = vld [vmem:[%s7 + $0x100] sm:$0xff]
        %v6879 = vld [vmem:[%s7 + $0x108] sm:$0xff]
        %v6880 = vld [vmem:[%s7 + $0x110] sm:$0xff]
        %v6881 = vld [vmem:[%s7 + $0x118] sm:$0xff]
        %v6882 = vld [vmem:[%s7 + $0x120] sm:$0xff]
        %v6883 = vld [vmem:[%s7 + $0x128] sm:$0xff]
        %v6884 = vld [vmem:[%s7 + $0x130] sm:$0xff]
        %v6885 = vld [vmem:[%s7 + $0x138] sm:$0xff]
        %v6886 = vld [vmem:[%s7 + $0x140] sm:$0xff]
        %v6887 = vld [vmem:[%s7 + $0x148] sm:$0xff]
        %v6888 = vld [vmem:[%s7 + $0x150] sm:$0xff]
        %v6889 = vld [vmem:[%s7 + $0x158] sm:$0xff]
        %v6890 = vld [vmem:[%s7 + $0x160] sm:$0xff]
        %v6891 = vld [vmem:[%s7 + $0x168] sm:$0xff]
        %v6892 = vld [vmem:[%s7 + $0x170] sm:$0xff]
        %v6893 = vld [vmem:[%s7 + $0x178] sm:$0xff]
        %v6894 = vld [vmem:[%s7 + $0x180] sm:$0xff]
        %v6895 = vld [vmem:[%s7 + $0x188] sm:$0xff]
        %6897 = vset.pattern.permute.xlu0 0
        %6898 = vperm.xlu0 %6897, %v6846
        %v6899 = vpop.permute.xlu0 %6898
        %6902 = vset.pattern.permute.xlu0 0
        %6903 = vperm.xlu0 %6902, %v6847
        %v6904 = vpop.permute.xlu0 %6903
        %6907 = vset.pattern.permute.xlu0 0
        %6908 = vperm.xlu0 %6907, %v6848
        %v6909 = vpop.permute.xlu0 %6908
        %6912 = vset.pattern.permute.xlu0 0
        %6913 = vperm.xlu0 %6912, %v6849
        %v6914 = vpop.permute.xlu0 %6913
        %6917 = vset.pattern.permute.xlu0 0
        %6918 = vperm.xlu0 %6917, %v6850
        %v6919 = vpop.permute.xlu0 %6918
        %6922 = vset.pattern.permute.xlu0 0
        %6923 = vperm.xlu0 %6922, %v6851
        %v6924 = vpop.permute.xlu0 %6923
        %6927 = vset.pattern.permute.xlu0 0
        %6928 = vperm.xlu0 %6927, %v6852
        %v6929 = vpop.permute.xlu0 %6928
        %6932 = vset.pattern.permute.xlu0 0
        %6933 = vperm.xlu0 %6932, %v6853
        %v6934 = vpop.permute.xlu0 %6933
        %6937 = vset.pattern.permute.xlu0 0
        %6938 = vperm.xlu0 %6937, %v6854
        %v6939 = vpop.permute.xlu0 %6938
        %6942 = vset.pattern.permute.xlu0 0
        %6943 = vperm.xlu0 %6942, %v6855
        %v6944 = vpop.permute.xlu0 %6943
        %6947 = vset.pattern.permute.xlu0 0
        %6948 = vperm.xlu0 %6947, %v6856
        %v6949 = vpop.permute.xlu0 %6948
        %6952 = vset.pattern.permute.xlu0 0
        %6953 = vperm.xlu0 %6952, %v6857
        %v6954 = vpop.permute.xlu0 %6953
        %6957 = vset.pattern.permute.xlu0 0
        %6958 = vperm.xlu0 %6957, %v6858
        %v6959 = vpop.permute.xlu0 %6958
        %6962 = vset.pattern.permute.xlu0 0
        %6963 = vperm.xlu0 %6962, %v6859
        %v6964 = vpop.permute.xlu0 %6963
        %6967 = vset.pattern.permute.xlu0 0
        %6968 = vperm.xlu0 %6967, %v6860
        %v6969 = vpop.permute.xlu0 %6968
        %6972 = vset.pattern.permute.xlu0 0
        %6973 = vperm.xlu0 %6972, %v6861
        %v6974 = vpop.permute.xlu0 %6973
        %6977 = vset.pattern.permute.xlu0 0
        %6978 = vperm.xlu0 %6977, %v6862
        %v6979 = vpop.permute.xlu0 %6978
        %6982 = vset.pattern.permute.xlu0 0
        %6983 = vperm.xlu0 %6982, %v6863
        %v6984 = vpop.permute.xlu0 %6983
        %6987 = vset.pattern.permute.xlu0 0
        %6988 = vperm.xlu0 %6987, %v6864
        %v6989 = vpop.permute.xlu0 %6988
        %6992 = vset.pattern.permute.xlu0 0
        %6993 = vperm.xlu0 %6992, %v6865
        %v6994 = vpop.permute.xlu0 %6993
        %6997 = vset.pattern.permute.xlu0 0
        %6998 = vperm.xlu0 %6997, %v6866
        %v6999 = vpop.permute.xlu0 %6998
        %7002 = vset.pattern.permute.xlu0 0
        %7003 = vperm.xlu0 %7002, %v6867
        %v7004 = vpop.permute.xlu0 %7003
        %7007 = vset.pattern.permute.xlu0 0
        %7008 = vperm.xlu0 %7007, %v6868
        %v7009 = vpop.permute.xlu0 %7008
        %7012 = vset.pattern.permute.xlu0 0
        %7013 = vperm.xlu0 %7012, %v6869
        %v7014 = vpop.permute.xlu0 %7013
        %7017 = vset.pattern.permute.xlu0 0
        %7018 = vperm.xlu0 %7017, %v6870
        %v7019 = vpop.permute.xlu0 %7018
        %7022 = vset.pattern.permute.xlu0 0
        %7023 = vperm.xlu0 %7022, %v6871
        %v7024 = vpop.permute.xlu0 %7023
        %7027 = vset.pattern.permute.xlu0 0
        %7028 = vperm.xlu0 %7027, %v6872
        %v7029 = vpop.permute.xlu0 %7028
        %7032 = vset.pattern.permute.xlu0 0
        %7033 = vperm.xlu0 %7032, %v6873
        %v7034 = vpop.permute.xlu0 %7033
        %7037 = vset.pattern.permute.xlu0 0
        %7038 = vperm.xlu0 %7037, %v6874
        %v7039 = vpop.permute.xlu0 %7038
        %7042 = vset.pattern.permute.xlu0 0
        %7043 = vperm.xlu0 %7042, %v6875
        %v7044 = vpop.permute.xlu0 %7043
        %7047 = vset.pattern.permute.xlu0 0
        %7048 = vperm.xlu0 %7047, %v6876
        %v7049 = vpop.permute.xlu0 %7048
        %7052 = vset.pattern.permute.xlu0 0
        %7053 = vperm.xlu0 %7052, %v6877
        %v7054 = vpop.permute.xlu0 %7053
        %7057 = vset.pattern.permute.xlu0 0
        %7058 = vperm.xlu0 %7057, %v6878
        %v7059 = vpop.permute.xlu0 %7058
        %7062 = vset.pattern.permute.xlu0 0
        %7063 = vperm.xlu0 %7062, %v6879
        %v7064 = vpop.permute.xlu0 %7063
        %7067 = vset.pattern.permute.xlu0 0
        %7068 = vperm.xlu0 %7067, %v6880
        %v7069 = vpop.permute.xlu0 %7068
        %7072 = vset.pattern.permute.xlu0 0
        %7073 = vperm.xlu0 %7072, %v6881
        %v7074 = vpop.permute.xlu0 %7073
        %7077 = vset.pattern.permute.xlu0 0
        %7078 = vperm.xlu0 %7077, %v6882
        %v7079 = vpop.permute.xlu0 %7078
        %7082 = vset.pattern.permute.xlu0 0
        %7083 = vperm.xlu0 %7082, %v6883
        %v7084 = vpop.permute.xlu0 %7083
        %7087 = vset.pattern.permute.xlu0 0
        %7088 = vperm.xlu0 %7087, %v6884
        %v7089 = vpop.permute.xlu0 %7088
        %7092 = vset.pattern.permute.xlu0 0
        %7093 = vperm.xlu0 %7092, %v6885
        %v7094 = vpop.permute.xlu0 %7093
        %7097 = vset.pattern.permute.xlu0 0
        %7098 = vperm.xlu0 %7097, %v6886
        %v7099 = vpop.permute.xlu0 %7098
        %7102 = vset.pattern.permute.xlu0 0
        %7103 = vperm.xlu0 %7102, %v6887
        %v7104 = vpop.permute.xlu0 %7103
        %7107 = vset.pattern.permute.xlu0 0
        %7108 = vperm.xlu0 %7107, %v6888
        %v7109 = vpop.permute.xlu0 %7108
        %7112 = vset.pattern.permute.xlu0 0
        %7113 = vperm.xlu0 %7112, %v6889
        %v7114 = vpop.permute.xlu0 %7113
        %7117 = vset.pattern.permute.xlu0 0
        %7118 = vperm.xlu0 %7117, %v6890
        %v7119 = vpop.permute.xlu0 %7118
        %7122 = vset.pattern.permute.xlu0 0
        %7123 = vperm.xlu0 %7122, %v6891
        %v7124 = vpop.permute.xlu0 %7123
        %7127 = vset.pattern.permute.xlu0 0
        %7128 = vperm.xlu0 %7127, %v6892
        %v7129 = vpop.permute.xlu0 %7128
        %7132 = vset.pattern.permute.xlu0 0
        %7133 = vperm.xlu0 %7132, %v6893
        %v7134 = vpop.permute.xlu0 %7133
        %7137 = vset.pattern.permute.xlu0 0
        %7138 = vperm.xlu0 %7137, %v6894
        %v7139 = vpop.permute.xlu0 %7138
        %7142 = vset.pattern.permute.xlu0 0
        %7143 = vperm.xlu0 %7142, %v6895
        %v7144 = vpop.permute.xlu0 %7143
        %v7146 = vmul.f32 %v6646, %v6899
        %v7147 = vmul.f32 %v6647, %v6899
        %v7148 = vmul.f32 %v6648, %v6899
        %v7149 = vmul.f32 %v6649, %v6899
        %v7150 = vmul.f32 %v6650, %v6904
        %v7151 = vmul.f32 %v6651, %v6904
        %v7152 = vmul.f32 %v6652, %v6904
        %v7153 = vmul.f32 %v6653, %v6904
        %v7154 = vmul.f32 %v6654, %v6909
        %v7155 = vmul.f32 %v6655, %v6909
        %v7156 = vmul.f32 %v6656, %v6909
        %v7157 = vmul.f32 %v6657, %v6909
        %v7158 = vmul.f32 %v6658, %v6914
        %v7159 = vmul.f32 %v6659, %v6914
        %v7160 = vmul.f32 %v6660, %v6914
        %v7161 = vmul.f32 %v6661, %v6914
        %v7162 = vmul.f32 %v6662, %v6919
        %v7163 = vmul.f32 %v6663, %v6919
        %v7164 = vmul.f32 %v6664, %v6919
        %v7165 = vmul.f32 %v6665, %v6919
        %v7166 = vmul.f32 %v6666, %v6924
        %v7167 = vmul.f32 %v6667, %v6924
        %v7168 = vmul.f32 %v6668, %v6924
        %v7169 = vmul.f32 %v6669, %v6924
        %v7170 = vmul.f32 %v6670, %v6929
        %v7171 = vmul.f32 %v6671, %v6929
        %v7172 = vmul.f32 %v6672, %v6929
        %v7173 = vmul.f32 %v6673, %v6929
        %v7174 = vmul.f32 %v6674, %v6934
        %v7175 = vmul.f32 %v6675, %v6934
        %v7176 = vmul.f32 %v6676, %v6934
        %v7177 = vmul.f32 %v6677, %v6934
        %v7178 = vmul.f32 %v6678, %v6939
        %v7179 = vmul.f32 %v6679, %v6939
        %v7180 = vmul.f32 %v6680, %v6939
        %v7181 = vmul.f32 %v6681, %v6939
        %v7182 = vmul.f32 %v6682, %v6944
        %v7183 = vmul.f32 %v6683, %v6944
        %v7184 = vmul.f32 %v6684, %v6944
        %v7185 = vmul.f32 %v6685, %v6944
        %v7186 = vmul.f32 %v6686, %v6949
        %v7187 = vmul.f32 %v6687, %v6949
        %v7188 = vmul.f32 %v6688, %v6949
        %v7189 = vmul.f32 %v6689, %v6949
        %v7190 = vmul.f32 %v6690, %v6954
        %v7191 = vmul.f32 %v6691, %v6954
        %v7192 = vmul.f32 %v6692, %v6954
        %v7193 = vmul.f32 %v6693, %v6954
        %v7194 = vmul.f32 %v6694, %v6959
        %v7195 = vmul.f32 %v6695, %v6959
        %v7196 = vmul.f32 %v6696, %v6959
        %v7197 = vmul.f32 %v6697, %v6959
        %v7198 = vmul.f32 %v6698, %v6964
        %v7199 = vmul.f32 %v6699, %v6964
        %v7200 = vmul.f32 %v6700, %v6964
        %v7201 = vmul.f32 %v6701, %v6964
        %v7202 = vmul.f32 %v6702, %v6969
        %v7203 = vmul.f32 %v6703, %v6969
        %v7204 = vmul.f32 %v6704, %v6969
        %v7205 = vmul.f32 %v6705, %v6969
        %v7206 = vmul.f32 %v6706, %v6974
        %v7207 = vmul.f32 %v6707, %v6974
        %v7208 = vmul.f32 %v6708, %v6974
        %v7209 = vmul.f32 %v6709, %v6974
        %v7210 = vmul.f32 %v6710, %v6979
        %v7211 = vmul.f32 %v6711, %v6979
        %v7212 = vmul.f32 %v6712, %v6979
        %v7213 = vmul.f32 %v6713, %v6979
        %v7214 = vmul.f32 %v6714, %v6984
        %v7215 = vmul.f32 %v6715, %v6984
        %v7216 = vmul.f32 %v6716, %v6984
        %v7217 = vmul.f32 %v6717, %v6984
        %v7218 = vmul.f32 %v6718, %v6989
        %v7219 = vmul.f32 %v6719, %v6989
        %v7220 = vmul.f32 %v6720, %v6989
        %v7221 = vmul.f32 %v6721, %v6989
        %v7222 = vmul.f32 %v6722, %v6994
        %v7223 = vmul.f32 %v6723, %v6994
        %v7224 = vmul.f32 %v6724, %v6994
        %v7225 = vmul.f32 %v6725, %v6994
        %v7226 = vmul.f32 %v6726, %v6999
        %v7227 = vmul.f32 %v6727, %v6999
        %v7228 = vmul.f32 %v6728, %v6999
        %v7229 = vmul.f32 %v6729, %v6999
        %v7230 = vmul.f32 %v6730, %v7004
        %v7231 = vmul.f32 %v6731, %v7004
        %v7232 = vmul.f32 %v6732, %v7004
        %v7233 = vmul.f32 %v6733, %v7004
        %v7234 = vmul.f32 %v6734, %v7009
        %v7235 = vmul.f32 %v6735, %v7009
        %v7236 = vmul.f32 %v6736, %v7009
        %v7237 = vmul.f32 %v6737, %v7009
        %v7238 = vmul.f32 %v6738, %v7014
        %v7239 = vmul.f32 %v6739, %v7014
        %v7240 = vmul.f32 %v6740, %v7014
        %v7241 = vmul.f32 %v6741, %v7014
        %v7242 = vmul.f32 %v6742, %v7019
        %v7243 = vmul.f32 %v6743, %v7019
        %v7244 = vmul.f32 %v6744, %v7019
        %v7245 = vmul.f32 %v6745, %v7019
        %v7246 = vmul.f32 %v6746, %v7024
        %v7247 = vmul.f32 %v6747, %v7024
        %v7248 = vmul.f32 %v6748, %v7024
        %v7249 = vmul.f32 %v6749, %v7024
        %v7250 = vmul.f32 %v6750, %v7029
        %v7251 = vmul.f32 %v6751, %v7029
        %v7252 = vmul.f32 %v6752, %v7029
        %v7253 = vmul.f32 %v6753, %v7029
        %v7254 = vmul.f32 %v6754, %v7034
        %v7255 = vmul.f32 %v6755, %v7034
        %v7256 = vmul.f32 %v6756, %v7034
        %v7257 = vmul.f32 %v6757, %v7034
        %v7258 = vmul.f32 %v6758, %v7039
        %v7259 = vmul.f32 %v6759, %v7039
        %v7260 = vmul.f32 %v6760, %v7039
        %v7261 = vmul.f32 %v6761, %v7039
        %v7262 = vmul.f32 %v6762, %v7044
        %v7263 = vmul.f32 %v6763, %v7044
        %v7264 = vmul.f32 %v6764, %v7044
        %v7265 = vmul.f32 %v6765, %v7044
        %v7266 = vmul.f32 %v6766, %v7049
        %v7267 = vmul.f32 %v6767, %v7049
        %v7268 = vmul.f32 %v6768, %v7049
        %v7269 = vmul.f32 %v6769, %v7049
        %v7270 = vmul.f32 %v6770, %v7054
        %v7271 = vmul.f32 %v6771, %v7054
        %v7272 = vmul.f32 %v6772, %v7054
        %v7273 = vmul.f32 %v6773, %v7054
        %v7274 = vmul.f32 %v6774, %v7059
        %v7275 = vmul.f32 %v6775, %v7059
        %v7276 = vmul.f32 %v6776, %v7059
        %v7277 = vmul.f32 %v6777, %v7059
        %v7278 = vmul.f32 %v6778, %v7064
        %v7279 = vmul.f32 %v6779, %v7064
        %v7280 = vmul.f32 %v6780, %v7064
        %v7281 = vmul.f32 %v6781, %v7064
        %v7282 = vmul.f32 %v6782, %v7069
        %v7283 = vmul.f32 %v6783, %v7069
        %v7284 = vmul.f32 %v6784, %v7069
        %v7285 = vmul.f32 %v6785, %v7069
        %v7286 = vmul.f32 %v6786, %v7074
        %v7287 = vmul.f32 %v6787, %v7074
        %v7288 = vmul.f32 %v6788, %v7074
        %v7289 = vmul.f32 %v6789, %v7074
        %v7290 = vmul.f32 %v6790, %v7079
        %v7291 = vmul.f32 %v6791, %v7079
        %v7292 = vmul.f32 %v6792, %v7079
        %v7293 = vmul.f32 %v6793, %v7079
        %v7294 = vmul.f32 %v6794, %v7084
        %v7295 = vmul.f32 %v6795, %v7084
        %v7296 = vmul.f32 %v6796, %v7084
        %v7297 = vmul.f32 %v6797, %v7084
        %v7298 = vmul.f32 %v6798, %v7089
        %v7299 = vmul.f32 %v6799, %v7089
        %v7300 = vmul.f32 %v6800, %v7089
        %v7301 = vmul.f32 %v6801, %v7089
        %v7302 = vmul.f32 %v6802, %v7094
        %v7303 = vmul.f32 %v6803, %v7094
        %v7304 = vmul.f32 %v6804, %v7094
        %v7305 = vmul.f32 %v6805, %v7094
        %v7306 = vmul.f32 %v6806, %v7099
        %v7307 = vmul.f32 %v6807, %v7099
        %v7308 = vmul.f32 %v6808, %v7099
        %v7309 = vmul.f32 %v6809, %v7099
        %v7310 = vmul.f32 %v6810, %v7104
        %v7311 = vmul.f32 %v6811, %v7104
        %v7312 = vmul.f32 %v6812, %v7104
        %v7313 = vmul.f32 %v6813, %v7104
        %v7314 = vmul.f32 %v6814, %v7109
        %v7315 = vmul.f32 %v6815, %v7109
        %v7316 = vmul.f32 %v6816, %v7109
        %v7317 = vmul.f32 %v6817, %v7109
        %v7318 = vmul.f32 %v6818, %v7114
        %v7319 = vmul.f32 %v6819, %v7114
        %v7320 = vmul.f32 %v6820, %v7114
        %v7321 = vmul.f32 %v6821, %v7114
        %v7322 = vmul.f32 %v6822, %v7119
        %v7323 = vmul.f32 %v6823, %v7119
        %v7324 = vmul.f32 %v6824, %v7119
        %v7325 = vmul.f32 %v6825, %v7119
        %v7326 = vmul.f32 %v6826, %v7124
        %v7327 = vmul.f32 %v6827, %v7124
        %v7328 = vmul.f32 %v6828, %v7124
        %v7329 = vmul.f32 %v6829, %v7124
        %v7330 = vmul.f32 %v6830, %v7129
        %v7331 = vmul.f32 %v6831, %v7129
        %v7332 = vmul.f32 %v6832, %v7129
        %v7333 = vmul.f32 %v6833, %v7129
        %v7334 = vmul.f32 %v6834, %v7134
        %v7335 = vmul.f32 %v6835, %v7134
        %v7336 = vmul.f32 %v6836, %v7134
        %v7337 = vmul.f32 %v6837, %v7134
        %v7338 = vmul.f32 %v6838, %v7139
        %v7339 = vmul.f32 %v6839, %v7139
        %v7340 = vmul.f32 %v6840, %v7139
        %v7341 = vmul.f32 %v6841, %v7139
        %v7342 = vmul.f32 %v6842, %v7144
        %v7343 = vmul.f32 %v6843, %v7144
        %v7344 = vmul.f32 %v6844, %v7144
        %v7345 = vmul.f32 %v6845, %v7144
        %v7346 = vadd.f32 %v7146, %v7150
        %v7347 = vadd.f32 %v7346, %v7154
        %v7348 = vadd.f32 %v7347, %v7158
        %v7349 = vadd.f32 %v7348, %v7162
        %v7350 = vadd.f32 %v7349, %v7166
        %v7351 = vadd.f32 %v7350, %v7170
        %v7352 = vadd.f32 %v7351, %v7174
        %v7353 = vadd.f32 %v7352, %v7178
        %v7354 = vadd.f32 %v7353, %v7182
        %v7355 = vadd.f32 %v7354, %v7186
        %v7356 = vadd.f32 %v7355, %v7190
        %v7357 = vadd.f32 %v7356, %v7194
        %v7358 = vadd.f32 %v7357, %v7198
        %v7359 = vadd.f32 %v7358, %v7202
        %v7360 = vadd.f32 %v7359, %v7206
        %v7361 = vadd.f32 %v7360, %v7210
        %v7362 = vadd.f32 %v7361, %v7214
        %v7363 = vadd.f32 %v7362, %v7218
        %v7364 = vadd.f32 %v7363, %v7222
        %v7365 = vadd.f32 %v7364, %v7226
        %v7366 = vadd.f32 %v7365, %v7230
        %v7367 = vadd.f32 %v7366, %v7234
        %v7368 = vadd.f32 %v7367, %v7238
        %v7369 = vadd.f32 %v7368, %v7242
        %v7370 = vadd.f32 %v7369, %v7246
        %v7371 = vadd.f32 %v7370, %v7250
        %v7372 = vadd.f32 %v7371, %v7254
        %v7373 = vadd.f32 %v7372, %v7258
        %v7374 = vadd.f32 %v7373, %v7262
        %v7375 = vadd.f32 %v7374, %v7266
        %v7376 = vadd.f32 %v7375, %v7270
        %v7377 = vadd.f32 %v7376, %v7274
        %v7378 = vadd.f32 %v7377, %v7278
        %v7379 = vadd.f32 %v7378, %v7282
        %v7380 = vadd.f32 %v7379, %v7286
        %v7381 = vadd.f32 %v7380, %v7290
        %v7382 = vadd.f32 %v7381, %v7294
        %v7383 = vadd.f32 %v7382, %v7298
        %v7384 = vadd.f32 %v7383, %v7302
        %v7385 = vadd.f32 %v7384, %v7306
        %v7386 = vadd.f32 %v7385, %v7310
        %v7387 = vadd.f32 %v7386, %v7314
        %v7388 = vadd.f32 %v7387, %v7318
        %v7389 = vadd.f32 %v7388, %v7322
        %v7390 = vadd.f32 %v7389, %v7326
        %v7391 = vadd.f32 %v7390, %v7330
        %v7392 = vadd.f32 %v7391, %v7334
        %v7393 = vadd.f32 %v7392, %v7338
        %v7394 = vadd.f32 %v7393, %v7342
        %v7395 = vrot.slane %v7394, 4
        %v7396 = vadd.f32 %v7394, %v7395
        %v7397 = vrot.slane %v7396, 2
        %v7398 = vadd.f32 %v7396, %v7397
        %v7399 = vrot.slane %v7398, 1
        %v7400 = vadd.f32 %v7398, %v7399
        %v7401 = vadd.f32 %v7147, %v7151
        %v7402 = vadd.f32 %v7401, %v7155
        %v7403 = vadd.f32 %v7402, %v7159
        %v7404 = vadd.f32 %v7403, %v7163
        %v7405 = vadd.f32 %v7404, %v7167
        %v7406 = vadd.f32 %v7405, %v7171
        %v7407 = vadd.f32 %v7406, %v7175
        %v7408 = vadd.f32 %v7407, %v7179
        %v7409 = vadd.f32 %v7408, %v7183
        %v7410 = vadd.f32 %v7409, %v7187
        %v7411 = vadd.f32 %v7410, %v7191
        %v7412 = vadd.f32 %v7411, %v7195
        %v7413 = vadd.f32 %v7412, %v7199
        %v7414 = vadd.f32 %v7413, %v7203
        %v7415 = vadd.f32 %v7414, %v7207
        %v7416 = vadd.f32 %v7415, %v7211
        %v7417 = vadd.f32 %v7416, %v7215
        %v7418 = vadd.f32 %v7417, %v7219
        %v7419 = vadd.f32 %v7418, %v7223
        %v7420 = vadd.f32 %v7419, %v7227
        %v7421 = vadd.f32 %v7420, %v7231
        %v7422 = vadd.f32 %v7421, %v7235
        %v7423 = vadd.f32 %v7422, %v7239
        %v7424 = vadd.f32 %v7423, %v7243
        %v7425 = vadd.f32 %v7424, %v7247
        %v7426 = vadd.f32 %v7425, %v7251
        %v7427 = vadd.f32 %v7426, %v7255
        %v7428 = vadd.f32 %v7427, %v7259
        %v7429 = vadd.f32 %v7428, %v7263
        %v7430 = vadd.f32 %v7429, %v7267
        %v7431 = vadd.f32 %v7430, %v7271
        %v7432 = vadd.f32 %v7431, %v7275
        %v7433 = vadd.f32 %v7432, %v7279
        %v7434 = vadd.f32 %v7433, %v7283
        %v7435 = vadd.f32 %v7434, %v7287
        %v7436 = vadd.f32 %v7435, %v7291
        %v7437 = vadd.f32 %v7436, %v7295
        %v7438 = vadd.f32 %v7437, %v7299
        %v7439 = vadd.f32 %v7438, %v7303
        %v7440 = vadd.f32 %v7439, %v7307
        %v7441 = vadd.f32 %v7440, %v7311
        %v7442 = vadd.f32 %v7441, %v7315
        %v7443 = vadd.f32 %v7442, %v7319
        %v7444 = vadd.f32 %v7443, %v7323
        %v7445 = vadd.f32 %v7444, %v7327
        %v7446 = vadd.f32 %v7445, %v7331
        %v7447 = vadd.f32 %v7446, %v7335
        %v7448 = vadd.f32 %v7447, %v7339
        %v7449 = vadd.f32 %v7448, %v7343
        %v7450 = vrot.slane %v7449, 4
        %v7451 = vadd.f32 %v7449, %v7450
        %v7452 = vrot.slane %v7451, 2
        %v7453 = vadd.f32 %v7451, %v7452
        %v7454 = vrot.slane %v7453, 1
        %v7455 = vadd.f32 %v7453, %v7454
        %v7456 = vadd.f32 %v7148, %v7152
        %v7457 = vadd.f32 %v7456, %v7156
        %v7458 = vadd.f32 %v7457, %v7160
        %v7459 = vadd.f32 %v7458, %v7164
        %v7460 = vadd.f32 %v7459, %v7168
        %v7461 = vadd.f32 %v7460, %v7172
        %v7462 = vadd.f32 %v7461, %v7176
        %v7463 = vadd.f32 %v7462, %v7180
        %v7464 = vadd.f32 %v7463, %v7184
        %v7465 = vadd.f32 %v7464, %v7188
        %v7466 = vadd.f32 %v7465, %v7192
        %v7467 = vadd.f32 %v7466, %v7196
        %v7468 = vadd.f32 %v7467, %v7200
        %v7469 = vadd.f32 %v7468, %v7204
        %v7470 = vadd.f32 %v7469, %v7208
        %v7471 = vadd.f32 %v7470, %v7212
        %v7472 = vadd.f32 %v7471, %v7216
        %v7473 = vadd.f32 %v7472, %v7220
        %v7474 = vadd.f32 %v7473, %v7224
        %v7475 = vadd.f32 %v7474, %v7228
        %v7476 = vadd.f32 %v7475, %v7232
        %v7477 = vadd.f32 %v7476, %v7236
        %v7478 = vadd.f32 %v7477, %v7240
        %v7479 = vadd.f32 %v7478, %v7244
        %v7480 = vadd.f32 %v7479, %v7248
        %v7481 = vadd.f32 %v7480, %v7252
        %v7482 = vadd.f32 %v7481, %v7256
        %v7483 = vadd.f32 %v7482, %v7260
        %v7484 = vadd.f32 %v7483, %v7264
        %v7485 = vadd.f32 %v7484, %v7268
        %v7486 = vadd.f32 %v7485, %v7272
        %v7487 = vadd.f32 %v7486, %v7276
        %v7488 = vadd.f32 %v7487, %v7280
        %v7489 = vadd.f32 %v7488, %v7284
        %v7490 = vadd.f32 %v7489, %v7288
        %v7491 = vadd.f32 %v7490, %v7292
        %v7492 = vadd.f32 %v7491, %v7296
        %v7493 = vadd.f32 %v7492, %v7300
        %v7494 = vadd.f32 %v7493, %v7304
        %v7495 = vadd.f32 %v7494, %v7308
        %v7496 = vadd.f32 %v7495, %v7312
        %v7497 = vadd.f32 %v7496, %v7316
        %v7498 = vadd.f32 %v7497, %v7320
        %v7499 = vadd.f32 %v7498, %v7324
        %v7500 = vadd.f32 %v7499, %v7328
        %v7501 = vadd.f32 %v7500, %v7332
        %v7502 = vadd.f32 %v7501, %v7336
        %v7503 = vadd.f32 %v7502, %v7340
        %v7504 = vadd.f32 %v7503, %v7344
        %v7505 = vrot.slane %v7504, 4
        %v7506 = vadd.f32 %v7504, %v7505
        %v7507 = vrot.slane %v7506, 2
        %v7508 = vadd.f32 %v7506, %v7507
        %v7509 = vrot.slane %v7508, 1
        %v7510 = vadd.f32 %v7508, %v7509
        %v7511 = vadd.f32 %v7149, %v7153
        %v7512 = vadd.f32 %v7511, %v7157
        %v7513 = vadd.f32 %v7512, %v7161
        %v7514 = vadd.f32 %v7513, %v7165
        %v7515 = vadd.f32 %v7514, %v7169
        %v7516 = vadd.f32 %v7515, %v7173
        %v7517 = vadd.f32 %v7516, %v7177
        %v7518 = vadd.f32 %v7517, %v7181
        %v7519 = vadd.f32 %v7518, %v7185
        %v7520 = vadd.f32 %v7519, %v7189
        %v7521 = vadd.f32 %v7520, %v7193
        %v7522 = vadd.f32 %v7521, %v7197
        %v7523 = vadd.f32 %v7522, %v7201
        %v7524 = vadd.f32 %v7523, %v7205
        %v7525 = vadd.f32 %v7524, %v7209
        %v7526 = vadd.f32 %v7525, %v7213
        %v7527 = vadd.f32 %v7526, %v7217
        %v7528 = vadd.f32 %v7527, %v7221
        %v7529 = vadd.f32 %v7528, %v7225
        %v7530 = vadd.f32 %v7529, %v7229
        %v7531 = vadd.f32 %v7530, %v7233
        %v7532 = vadd.f32 %v7531, %v7237
        %v7533 = vadd.f32 %v7532, %v7241
        %v7534 = vadd.f32 %v7533, %v7245
        %v7535 = vadd.f32 %v7534, %v7249
        %v7536 = vadd.f32 %v7535, %v7253
        %v7537 = vadd.f32 %v7536, %v7257
        %v7538 = vadd.f32 %v7537, %v7261
        %v7539 = vadd.f32 %v7538, %v7265
        %v7540 = vadd.f32 %v7539, %v7269
        %v7541 = vadd.f32 %v7540, %v7273
        %v7542 = vadd.f32 %v7541, %v7277
        %v7543 = vadd.f32 %v7542, %v7281
        %v7544 = vadd.f32 %v7543, %v7285
        %v7545 = vadd.f32 %v7544, %v7289
        %v7546 = vadd.f32 %v7545, %v7293
        %v7547 = vadd.f32 %v7546, %v7297
        %v7548 = vadd.f32 %v7547, %v7301
        %v7549 = vadd.f32 %v7548, %v7305
        %v7550 = vadd.f32 %v7549, %v7309
        %v7551 = vadd.f32 %v7550, %v7313
        %v7552 = vadd.f32 %v7551, %v7317
        %v7553 = vadd.f32 %v7552, %v7321
        %v7554 = vadd.f32 %v7553, %v7325
        %v7555 = vadd.f32 %v7554, %v7329
        %v7556 = vadd.f32 %v7555, %v7333
        %v7557 = vadd.f32 %v7556, %v7337
        %v7558 = vadd.f32 %v7557, %v7341
        %v7559 = vadd.f32 %v7558, %v7345
        %v7560 = vrot.slane %v7559, 4
        %v7561 = vadd.f32 %v7559, %v7560
        %v7562 = vrot.slane %v7561, 2
        %v7563 = vadd.f32 %v7561, %v7562
        %v7564 = vrot.slane %v7563, 1
        %v7565 = vadd.f32 %v7563, %v7564
        %v7566 = vld [vmem:[#allocation2] sm:$0x1]
        %7568 = vset.pattern.permute.xlu0 0
        %7569 = vperm.xlu0 %7568, %v7566
        %v7570 = vpop.permute.xlu0 %7569
        %v7572 = vlaneseq
        %v7573 = vshrl.u32 %v7572, 7
        %v7574 = vsub.s32 0, %v7573
        %v7575 = vrot.slane %v7570, %v7574
        %v7576 = vadd.f32 %v7400, %v7575
        %v7577 = vadd.f32 %v7455, %v7575
        %v7578 = vadd.f32 %v7510, %v7575
        %v7579 = vadd.f32 %v7565, %v7575
        %v7580 = vxor.u32 %v7576, 2147483648
        %v7581 = vxor.u32 %v7577, 2147483648
        %v7582 = vxor.u32 %v7578, 2147483648
        %v7583 = vxor.u32 %v7579, 2147483648
        %v7584 = vmul.f32 %v7580, 1.442695
        %v7585 = vpow.pop %v7584
        %v7586 = vmul.f32 %v7581, 1.442695
        %v7587 = vpow.pop %v7586
        %v7588 = vmul.f32 %v7582, 1.442695
        %v7589 = vpow.pop %v7588
        %v7590 = vmul.f32 %v7583, 1.442695
        %v7591 = vpow.pop %v7590
        %v7592 = vadd.f32 %v7585, 1.0
        %v7593 = vadd.f32 %v7587, 1.0
        %v7594 = vadd.f32 %v7589, 1.0
        %v7595 = vadd.f32 %v7591, 1.0
        %v7596 = vrcp.pop %v7592
        %v7597 = vmul.f32 1.0, %v7596
        %v7598 = vrcp.pop %v7593
        %v7599 = vmul.f32 1.0, %v7598
        %v7600 = vrcp.pop %v7594
        %v7601 = vmul.f32 1.0, %v7600
        %v7602 = vrcp.pop %v7595
        %v7603 = vmul.f32 1.0, %v7602
        %v7608 = vcombine.low %v7597, %v7599
        %v7609 = vcombine.low %v7601, %v7603
        %v7611 = vunpack.c.l.s4 1966171168
        %v7612 = vunpack.c.0.s8 %v7611
        %v7613 = vlaneseq
        %v7614 = vshrl.u32 %v7613, 7
        %v7615 = vsub.s32 %v7612, %v7614
        %v7616 = vrot.slane %v7608, %v7615
        %v7618 = vunpack.c.l.s4 1966171168
        %v7619 = vunpack.c.0.s8 %v7618
        %v7620 = vlaneseq
        %v7621 = vshrl.u32 %v7620, 7
        %v7622 = vsub.s32 %v7619, %v7621
        %v7623 = vrot.slane %v7609, %v7622
        %v7624 = vcombine.low %v7616, %v7623
        %v7626 = vunpack.c.l.s4 1966171168
        %v7627 = vunpack.c.0.s8 %v7626
        %v7628 = vlaneseq
        %v7629 = vshrl.u32 %v7628, 7
        %v7630 = vsub.s32 %v7627, %v7629
        %v7631 = vrot.slane %v7624, %v7630
        %v7633 = vlaneseq
        %vm7634 = vcmp.ge.s32.totalorder %v7633, 0
        %vm7635 = vcmp.lt.s32.totalorder %v7633, 512
        %vm7636 = vmand %vm7634, %vm7635
        %7637 = vst.msk [vmem:[%s343] sm:$0xf] %vm7636, %v7631
        %s7638 = sand.u32 %s228, 1
        %s7639 = scalar_lea.sflag [#allocation5], %s7638
        %s7640 = sand.u32 %s228, 1
        %s7641 = smul.addr %s7640, 4
        %s7642 = scalar_lea.vmem [#allocation6], %s7641
        // Predicated region
        $region61: #{tpu_custom_call.1} parent=55 // pred_check
          %p7643 = pneg %p238
        $region62: #{tpu_custom_call.1} parent=55 // pred_check_branch
          %7645 = sbr.rel (%p7643) target = $region64
        $region63: #{tpu_custom_call.1} parent=55 // pred_region
          %s7646 = smul.u32 4, %s26
          %s7648 = ssub.s32 64, 64
          %7649 = vsyncadd %s7639, %s7648
          %s7650 = smul.addr %s7646, 16
          %s7651 = scalar_lea.hbm %s9, %s7650
          %s7653 = sshll.u32 %s7642, 4
          %s7654 = int_to_ptr.vmem [resolvable:$true] %s7653
          %7656 = dma.vmem_to_hbm [thread:$0]  %s7654, 64, %s7651, %s7639
        $region64: #{tpu_custom_call.1} parent=55 // pred_fallthru
          _
      $region56: #{tpu_custom_call.1} parent=5 // pred_fallthru
        _
      %p7657 = scmp.le.s32.totalorder 2, %s21
      // Predicated region
      $region65: #{tpu_custom_call.1} parent=5 // pred_check
        %p7658 = pneg %p7657
      $region66: #{tpu_custom_call.1} parent=5 // pred_check_branch
        %7660 = sbr.rel (%p7658) target = $region68
      $region67: #{tpu_custom_call.1} parent=5 // pred_region
        %s7661 = ssub.s32 %s21, 2
        // Predicated region
        $region69: #{tpu_custom_call.1} parent=67 // pred_check
          %p7662 = pneg %p244
        $region70: #{tpu_custom_call.1} parent=67 // pred_check_branch
          %7664 = sbr.rel (%p7662) target = $region72
        $region71: #{tpu_custom_call.1} parent=67 // pred_region
          %s7665 = sand.u32 %s229, 1
          %s7666 = scalar_lea.sflag [#allocation5], %s7665
          %s7667 = sand.u32 %s229, 1
          %s7668 = smul.addr %s7667, 4
          %s7669 = scalar_lea.vmem [#allocation6], %s7668
          %7670 = dma.done %s7666, 64
        $region72: #{tpu_custom_call.1} parent=67 // pred_fallthru
          _
      $region68: #{tpu_custom_call.1} parent=5 // pred_fallthru
        _
    $region6: #{tpu_custom_call.1} parent=1 // loop_footer
      %s25 = sadd.s32 1, %s21
    $region7: #{tpu_custom_call.1} parent=1 // loop_footer_branch
      %20 = sbr.rel target = $region3
    $region8: #{tpu_custom_call.1} parent=1 // loop_exit
      _
    %7671 = vsyncpa [#allocation4], 1
    %s7672 = scalar_lea.sflag [#allocation4], 1
    %7673 = vsyncpa %s7672, 1
    %7674 = vsyncpa [#allocation5], 1
    %s7675 = scalar_lea.sflag [#allocation5], 1
    %7676 = vsyncpa %s7675, 1

</llo_original>
